<compile_context>
chip_gen: v6e
topology: v6e:2x2x1
jax: 0.10.0
libtpu: 0.0.40
codegen_flags: <defaults>
</compile_context>

<pallas_src>
import jax
import jax.numpy as jnp
from jax.experimental import pallas as pl


# ----------------------------- Pallas kernel -------------------------------

def _rnn_fused_kernel(pt_ref, w1_ref, b1_ref, w2_ref, b2_ref,
                      wf1_ref, bf1_ref, wf2_ref, bf2_ref, out_ref):
    f32 = jnp.float32
    B = out_ref.shape[0]
    L = B * 128                       # lanes per conv2 tap: (example, spatial)

    # ---- conv1 (transposed orientation), one matmul for all taps/examples --
    # y1t[ci, t*L + b*128 + s] = tanh(conv1(x))[b, 2*oh2+kh2, 2*ow2+kw2, ci]
    # where t = kh2*3 + kw2 and s = oh2*11 + ow2 (s in [121,128) is padding).
    y1t = jnp.tanh(
        jnp.dot(w1_ref[...], pt_ref[...], preferred_element_type=f32)
        + b1_ref[...])                                        # (16, 9*B*128)

    # ---- conv2 as a 9-tap accumulation (no im2col assembly) ----------------
    acc2 = None
    for t in range(9):
        contrib = jnp.dot(w2_ref[t], y1t[:, t * L:(t + 1) * L],
                          preferred_element_type=f32)         # (32, B*128)
        acc2 = contrib if acc2 is None else acc2 + contrib
    y2t = jnp.tanh(acc2 + b2_ref[...])                        # (32, B*128)

    # ---- fc1, batched over the batch, chunked over the 32 channels ---------
    #   h = sum_c Xc @ G[c],  Xc[b, s] = y2t[c, b*128 + s]
    # PyTorch's channel-major flatten is baked into G's row layout and the
    # padded spatial rows (s in [121,128)) of G are zero, so the padded lanes
    # of y2t contribute nothing.  wf1 stays bf16 into the MXU.
    per_ex = [y2t[:, b * 128:(b + 1) * 128] for b in range(B)]  # each (32,128)
    h = None
    for c in range(32):
        xc = jnp.concatenate([per_ex[b][c:c + 1, :] for b in range(B)],
                             axis=0)                          # (B, 128)
        contrib = jnp.dot(xc.astype(jnp.bfloat16), wf1_ref[c],
                          preferred_element_type=f32)         # (B, 256)
        h = contrib if h is None else h + contrib
    h = jnp.maximum(h + bf1_ref[...], 0.0)                    # relu(fc1)

    # ---- fc2 ---------------------------------------------------------------
    out_ref[...] = (jnp.dot(h, wf2_ref[...], preferred_element_type=f32)
                    + bf2_ref[...])


# ------------------------------ JAX glue -----------------------------------

def _conv1_tap_patches_T(x):
    """(B,3,47,47) -> (27, 9*B*128) transposed, conv2-tap-expanded conv1 im2col.

    Row   f = kh1*9 + kw1*3 + ci                 (conv1 kernel offset, in-chan)
    Col   t*(B*128) + b*128 + r,  t = kh2*3+kw2  (conv2 tap),
          r = oh2*11 + ow2        (conv2 output position), r in [121,128) = 0.
    Entry = x[b, ci, 4*oh2 + 2*kh2 + kh1, 4*ow2 + 2*kw2 + kw1], i.e. the conv1
    patch element feeding the conv1 output pixel read by conv2 tap t at its
    output position (oh2, ow2).  Only touches the ~53 KiB input; no padding of
    the input is ever needed (max index = 46).
    """
    B = x.shape[0]
    outer = []
    for kh1 in range(3):
        for kw1 in range(3):
            taps = []
            for kh2 in range(3):
                for kw2 in range(3):
                    h0, w0 = 2 * kh2 + kh1, 2 * kw2 + kw1
                    blk = x[:, :, h0:h0 + 41:4, w0:w0 + 41:4]   # (B,3,11,11)
                    blk = blk.reshape(B, 3, 121)
                    taps.append(jnp.pad(blk, ((0, 0), (0, 0), (0, 7))))
            outer.append(jnp.stack(taps, axis=0))               # (9,B,3,128)
    a = jnp.stack(outer, axis=0).reshape(3, 3, 9, B, 3, 128)    # kh1,kw1,t,b,ci,r
    a = a.transpose(0, 1, 4, 2, 3, 5)                           # kh1,kw1,ci,t,b,r
    return a.reshape(27, 9 * B * 128)


def rnn_forward(x, kp):
    """Forward pass of the RNN module as a single fused Pallas kernel."""
    B = x.shape[0]
    pt = _conv1_tap_patches_T(x)
    # Gridless: every operand (weights ~2.3 MiB + 250 KiB patches) lives whole
    # in VMEM; no intermediate HBM round-trips.
    return pl.pallas_call(
        _rnn_fused_kernel,
        out_shape=jax.ShapeDtypeStruct((B, 6), jnp.float32),
    )(pt, kp["w1"], kp["b1"], kp["w2"], kp["b2"],
      kp["wf1"], kp["bf1"], kp["wf2"], kp["bf2"])


def init_params(key):
    """Canonical PyTorch-layout parameters (Conv2d OIHW, Linear (out, in))."""
    ks = jax.random.split(key, 8)

    def u(k, shape, fan_in):
        bound = fan_in ** -0.5
        return jax.random.uniform(k, shape, jnp.float32, -bound, bound)

    p = {
        "conv1_w": u(ks[0], (16, 3, 3, 3), 27),
        "conv1_b": u(ks[1], (16,), 27),
        "conv2_w": u(ks[2], (32, 16, 3, 3), 144),
        "conv2_b": u(ks[3], (32,), 144),
        "fc1_w":   u(ks[4], (256, 3872), 3872),
        "fc1_b":   u(ks[5], (256,), 3872),
        "fc2_w":   u(ks[6], (6, 256), 256),
        "fc2_b":   u(ks[7], (6,), 256),
    }
    # fc1 weights are fed to the MXU in bf16; round them here so the kernel
    # and the reference use numerically identical weight values.
    p["fc1_w"] = p["fc1_w"].astype(jnp.bfloat16).astype(jnp.float32)
    return p


def prepare_kernel_params(p):
    """One-time repack of PyTorch-layout weights into the kernel layout."""
    w1 = p["conv1_w"].transpose(0, 2, 3, 1).reshape(16, 27)     # (co, kh1*9+kw1*3+ci)
    w2 = p["conv2_w"].transpose(2, 3, 0, 1).reshape(9, 32, 16)  # (tap, co, ci)
    # fc1: PyTorch flat index c*121 + (oh2*11+ow2)  ->  G[c, s, n], s padded
    # 121 -> 128 with ZERO rows (the padded activation lanes then drop out).
    g = p["fc1_w"].reshape(256, 32, 121).transpose(1, 2, 0)     # (32, 121, 256)
    g = jnp.pad(g, ((0, 0), (0, 7), (0, 0)))                    # (32, 128, 256)
    return {
        "w1": w1, "b1": p["conv1_b"].reshape(16, 1),
        "w2": w2, "b2": p["conv2_b"].reshape(32, 1),
        "wf1": g.astype(jnp.bfloat16), "bf1": p["fc1_b"].reshape(1, 256),
        "wf2": p["fc2_w"].T, "bf2": p["fc2_b"].reshape(1, 6),
    }


def rnn_forward_ref(x, p):
    """Pure-JAX (XLA) reference that mirrors the PyTorch module exactly."""
    dn = ("NCHW", "OIHW", "NCHW")
    hi = jax.lax.Precision.HIGHEST
    y = jax.lax.conv_general_dilated(x, p["conv1_w"], (2, 2), "VALID",
                                     dimension_numbers=dn, precision=hi)
    y = jnp.tanh(y + p["conv1_b"][None, :, None, None])
    y = jax.lax.conv_general_dilated(y, p["conv2_w"], (2, 2), "VALID",
                                     dimension_numbers=dn, precision=hi)
    y = jnp.tanh(y + p["conv2_b"][None, :, None, None])
    flat = y.reshape(y.shape[0], -1)          # channel-major == torch .view
    h = jnp.maximum(jnp.dot(flat, p["fc1_w"].T, precision=hi) + p["fc1_b"], 0.0)
    return jnp.dot(h, p["fc2_w"].T, precision=hi) + p["fc2_b"]


if __name__ == "__main__":
    key = jax.random.PRNGKey(0)
    kx, kparam = jax.random.split(key)
    # Input must be 47x47 so conv2's output is 11x11 (matches fc1 in_features).
    x = jax.random.normal(kx, (2, 3, 47, 47), dtype=jnp.float32)

    params = init_params(kparam)
    kparams = prepare_kernel_params(params)

    out = jax.jit(rnn_forward)(x, kparams)
    out = jax.block_until_ready(out)
    assert out.shape == (2, 6), out.shape

    ref = rnn_forward_ref(x, params)
    # fc1 runs with bf16 operands in the kernel (weights identical to the
    # reference, activations bf16-rounded); analytic error is ~1e-4, tolerance
    # kept with headroom and documented as intentional.
    err = float(jnp.max(jnp.abs(out - ref)))
    assert jnp.allclose(out, ref, atol=2e-3, rtol=1e-3), (
        "max abs diff = %e" % err)

    print("KERNEL_OK")
</pallas_src>

<mosaic_0001>
module attributes {stable_mosaic.version = 11 : i64} {
  func.func @_rnn_fused_kernel(%arg0: memref<27x2304xf32, #tpu.memory_space<vmem>>, %arg1: memref<16x27xf32, #tpu.memory_space<vmem>>, %arg2: memref<16x1xf32, #tpu.memory_space<vmem>>, %arg3: memref<9x32x16xf32, #tpu.memory_space<vmem>>, %arg4: memref<32x1xf32, #tpu.memory_space<vmem>>, %arg5: memref<32x128x256xbf16, #tpu.memory_space<vmem>>, %arg6: memref<1x256xf32, #tpu.memory_space<vmem>>, %arg7: memref<256x6xf32, #tpu.memory_space<vmem>>, %arg8: memref<1x6xf32, #tpu.memory_space<vmem>>, %arg9: memref<2x6xf32, #tpu.memory_space<vmem>>) attributes {dimension_semantics = [], scalar_prefetch = 0 : i64, scratch_operands = 0 : i64, tpu.core_type = #tpu.core_type<tc>} {
    %c0 = arith.constant 0 : index
    %c0_0 = arith.constant 0 : index
    %0 = vector.load %arg1[%c0, %c0_0] : memref<16x27xf32, #tpu.memory_space<vmem>>, vector<16x27xf32>
    %c0_1 = arith.constant 0 : index
    %c0_2 = arith.constant 0 : index
    %1 = vector.load %arg0[%c0_1, %c0_2] : memref<27x2304xf32, #tpu.memory_space<vmem>>, vector<27x2304xf32>
    %cst = arith.constant dense<0.000000e+00> : vector<16x2304xf32>
    %2 = tpu.matmul %0, %1, %cst {dimension_numbers = #tpu.dot_dimension_numbers<[1], [0], [0], [1], [0, 0, 1, 1], [], []>} : vector<16x27xf32>, vector<27x2304xf32>, vector<16x2304xf32> -> vector<16x2304xf32>
    %c0_3 = arith.constant 0 : index
    %c0_4 = arith.constant 0 : index
    %3 = vector.load %arg2[%c0_3, %c0_4] : memref<16x1xf32, #tpu.memory_space<vmem>>, vector<16x1xf32>
    %4 = vector.broadcast %3 : vector<16x1xf32> to vector<16x2304xf32>
    %5 = arith.addf %2, %4 : vector<16x2304xf32>
    %6 = math.tanh %5 : vector<16x2304xf32>
    %c0_5 = arith.constant 0 : index
    %c0_6 = arith.constant 0 : index
    %c0_7 = arith.constant 0 : index
    %7 = vector.load %arg3[%c0_5, %c0_6, %c0_7] : memref<9x32x16xf32, #tpu.memory_space<vmem>>, vector<1x32x16xf32>
    %8 = vector.shape_cast %7 : vector<1x32x16xf32> to vector<32x16xf32>
    %9 = vector.extract_strided_slice %6 {offsets = [0, 0], sizes = [16, 256], strides = [1, 1]} : vector<16x2304xf32> to vector<16x256xf32>
    %cst_8 = arith.constant dense<0.000000e+00> : vector<32x256xf32>
    %10 = tpu.matmul %8, %9, %cst_8 {dimension_numbers = #tpu.dot_dimension_numbers<[1], [0], [0], [1], [0, 0, 1, 1], [], []>} : vector<32x16xf32>, vector<16x256xf32>, vector<32x256xf32> -> vector<32x256xf32>
    %c1 = arith.constant 1 : index
    %c0_9 = arith.constant 0 : index
    %c0_10 = arith.constant 0 : index
    %11 = vector.load %arg3[%c1, %c0_9, %c0_10] : memref<9x32x16xf32, #tpu.memory_space<vmem>>, vector<1x32x16xf32>
    %12 = vector.shape_cast %11 : vector<1x32x16xf32> to vector<32x16xf32>
    %13 = vector.extract_strided_slice %6 {offsets = [0, 256], sizes = [16, 256], strides = [1, 1]} : vector<16x2304xf32> to vector<16x256xf32>
    %cst_11 = arith.constant dense<0.000000e+00> : vector<32x256xf32>
    %14 = tpu.matmul %12, %13, %cst_11 {dimension_numbers = #tpu.dot_dimension_numbers<[1], [0], [0], [1], [0, 0, 1, 1], [], []>} : vector<32x16xf32>, vector<16x256xf32>, vector<32x256xf32> -> vector<32x256xf32>
    %15 = arith.addf %10, %14 : vector<32x256xf32>
    %c2 = arith.constant 2 : index
    %c0_12 = arith.constant 0 : index
    %c0_13 = arith.constant 0 : index
    %16 = vector.load %arg3[%c2, %c0_12, %c0_13] : memref<9x32x16xf32, #tpu.memory_space<vmem>>, vector<1x32x16xf32>
    %17 = vector.shape_cast %16 : vector<1x32x16xf32> to vector<32x16xf32>
    %18 = vector.extract_strided_slice %6 {offsets = [0, 512], sizes = [16, 256], strides = [1, 1]} : vector<16x2304xf32> to vector<16x256xf32>
    %cst_14 = arith.constant dense<0.000000e+00> : vector<32x256xf32>
    %19 = tpu.matmul %17, %18, %cst_14 {dimension_numbers = #tpu.dot_dimension_numbers<[1], [0], [0], [1], [0, 0, 1, 1], [], []>} : vector<32x16xf32>, vector<16x256xf32>, vector<32x256xf32> -> vector<32x256xf32>
    %20 = arith.addf %15, %19 : vector<32x256xf32>
    %c3 = arith.constant 3 : index
    %c0_15 = arith.constant 0 : index
    %c0_16 = arith.constant 0 : index
    %21 = vector.load %arg3[%c3, %c0_15, %c0_16] : memref<9x32x16xf32, #tpu.memory_space<vmem>>, vector<1x32x16xf32>
    %22 = vector.shape_cast %21 : vector<1x32x16xf32> to vector<32x16xf32>
    %23 = vector.extract_strided_slice %6 {offsets = [0, 768], sizes = [16, 256], strides = [1, 1]} : vector<16x2304xf32> to vector<16x256xf32>
    %cst_17 = arith.constant dense<0.000000e+00> : vector<32x256xf32>
    %24 = tpu.matmul %22, %23, %cst_17 {dimension_numbers = #tpu.dot_dimension_numbers<[1], [0], [0], [1], [0, 0, 1, 1], [], []>} : vector<32x16xf32>, vector<16x256xf32>, vector<32x256xf32> -> vector<32x256xf32>
    %25 = arith.addf %20, %24 : vector<32x256xf32>
    %c4 = arith.constant 4 : index
    %c0_18 = arith.constant 0 : index
    %c0_19 = arith.constant 0 : index
    %26 = vector.load %arg3[%c4, %c0_18, %c0_19] : memref<9x32x16xf32, #tpu.memory_space<vmem>>, vector<1x32x16xf32>
    %27 = vector.shape_cast %26 : vector<1x32x16xf32> to vector<32x16xf32>
    %28 = vector.extract_strided_slice %6 {offsets = [0, 1024], sizes = [16, 256], strides = [1, 1]} : vector<16x2304xf32> to vector<16x256xf32>
    %cst_20 = arith.constant dense<0.000000e+00> : vector<32x256xf32>
    %29 = tpu.matmul %27, %28, %cst_20 {dimension_numbers = #tpu.dot_dimension_numbers<[1], [0], [0], [1], [0, 0, 1, 1], [], []>} : vector<32x16xf32>, vector<16x256xf32>, vector<32x256xf32> -> vector<32x256xf32>
    %30 = arith.addf %25, %29 : vector<32x256xf32>
    %c5 = arith.constant 5 : index
    %c0_21 = arith.constant 0 : index
    %c0_22 = arith.constant 0 : index
    %31 = vector.load %arg3[%c5, %c0_21, %c0_22] : memref<9x32x16xf32, #tpu.memory_space<vmem>>, vector<1x32x16xf32>
    %32 = vector.shape_cast %31 : vector<1x32x16xf32> to vector<32x16xf32>
    %33 = vector.extract_strided_slice %6 {offsets = [0, 1280], sizes = [16, 256], strides = [1, 1]} : vector<16x2304xf32> to vector<16x256xf32>
    %cst_23 = arith.constant dense<0.000000e+00> : vector<32x256xf32>
    %34 = tpu.matmul %32, %33, %cst_23 {dimension_numbers = #tpu.dot_dimension_numbers<[1], [0], [0], [1], [0, 0, 1, 1], [], []>} : vector<32x16xf32>, vector<16x256xf32>, vector<32x256xf32> -> vector<32x256xf32>
    %35 = arith.addf %30, %34 : vector<32x256xf32>
    %c6 = arith.constant 6 : index
    %c0_24 = arith.constant 0 : index
    %c0_25 = arith.constant 0 : index
    %36 = vector.load %arg3[%c6, %c0_24, %c0_25] : memref<9x32x16xf32, #tpu.memory_space<vmem>>, vector<1x32x16xf32>
    %37 = vector.shape_cast %36 : vector<1x32x16xf32> to vector<32x16xf32>
    %38 = vector.extract_strided_slice %6 {offsets = [0, 1536], sizes = [16, 256], strides = [1, 1]} : vector<16x2304xf32> to vector<16x256xf32>
    %cst_26 = arith.constant dense<0.000000e+00> : vector<32x256xf32>
    %39 = tpu.matmul %37, %38, %cst_26 {dimension_numbers = #tpu.dot_dimension_numbers<[1], [0], [0], [1], [0, 0, 1, 1], [], []>} : vector<32x16xf32>, vector<16x256xf32>, vector<32x256xf32> -> vector<32x256xf32>
    %40 = arith.addf %35, %39 : vector<32x256xf32>
    %c7 = arith.constant 7 : index
    %c0_27 = arith.constant 0 : index
    %c0_28 = arith.constant 0 : index
    %41 = vector.load %arg3[%c7, %c0_27, %c0_28] : memref<9x32x16xf32, #tpu.memory_space<vmem>>, vector<1x32x16xf32>
    %42 = vector.shape_cast %41 : vector<1x32x16xf32> to vector<32x16xf32>
    %43 = vector.extract_strided_slice %6 {offsets = [0, 1792], sizes = [16, 256], strides = [1, 1]} : vector<16x2304xf32> to vector<16x256xf32>
    %cst_29 = arith.constant dense<0.000000e+00> : vector<32x256xf32>
    %44 = tpu.matmul %42, %43, %cst_29 {dimension_numbers = #tpu.dot_dimension_numbers<[1], [0], [0], [1], [0, 0, 1, 1], [], []>} : vector<32x16xf32>, vector<16x256xf32>, vector<32x256xf32> -> vector<32x256xf32>
    %45 = arith.addf %40, %44 : vector<32x256xf32>
    %c8 = arith.constant 8 : index
    %c0_30 = arith.constant 0 : index
    %c0_31 = arith.constant 0 : index
    %46 = vector.load %arg3[%c8, %c0_30, %c0_31] : memref<9x32x16xf32, #tpu.memory_space<vmem>>, vector<1x32x16xf32>
    %47 = vector.shape_cast %46 : vector<1x32x16xf32> to vector<32x16xf32>
    %48 = vector.extract_strided_slice %6 {offsets = [0, 2048], sizes = [16, 256], strides = [1, 1]} : vector<16x2304xf32> to vector<16x256xf32>
    %cst_32 = arith.constant dense<0.000000e+00> : vector<32x256xf32>
    %49 = tpu.matmul %47, %48, %cst_32 {dimension_numbers = #tpu.dot_dimension_numbers<[1], [0], [0], [1], [0, 0, 1, 1], [], []>} : vector<32x16xf32>, vector<16x256xf32>, vector<32x256xf32> -> vector<32x256xf32>
    %50 = arith.addf %45, %49 : vector<32x256xf32>
    %c0_33 = arith.constant 0 : index
    %c0_34 = arith.constant 0 : index
    %51 = vector.load %arg4[%c0_33, %c0_34] : memref<32x1xf32, #tpu.memory_space<vmem>>, vector<32x1xf32>
    %52 = vector.broadcast %51 : vector<32x1xf32> to vector<32x256xf32>
    %53 = arith.addf %50, %52 : vector<32x256xf32>
    %54 = math.tanh %53 : vector<32x256xf32>
    %55 = vector.extract_strided_slice %54 {offsets = [0, 0], sizes = [32, 128], strides = [1, 1]} : vector<32x256xf32> to vector<32x128xf32>
    %56 = vector.extract_strided_slice %54 {offsets = [0, 128], sizes = [32, 128], strides = [1, 1]} : vector<32x256xf32> to vector<32x128xf32>
    %57 = vector.extract_strided_slice %55 {offsets = [0, 0], sizes = [1, 128], strides = [1, 1]} : vector<32x128xf32> to vector<1x128xf32>
    %58 = vector.extract_strided_slice %56 {offsets = [0, 0], sizes = [1, 128], strides = [1, 1]} : vector<32x128xf32> to vector<1x128xf32>
    %59 = tpu.concatenate %57, %58 in 0 : vector<1x128xf32>, vector<1x128xf32> -> vector<2x128xf32>
    %60 = arith.truncf %59 : vector<2x128xf32> to vector<2x128xbf16>
    %c0_35 = arith.constant 0 : index
    %c0_36 = arith.constant 0 : index
    %c0_37 = arith.constant 0 : index
    %61 = vector.load %arg5[%c0_35, %c0_36, %c0_37] : memref<32x128x256xbf16, #tpu.memory_space<vmem>>, vector<1x128x256xbf16>
    %62 = vector.shape_cast %61 : vector<1x128x256xbf16> to vector<128x256xbf16>
    %cst_38 = arith.constant dense<0.000000e+00> : vector<2x256xf32>
    %63 = tpu.matmul %60, %62, %cst_38 {dimension_numbers = #tpu.dot_dimension_numbers<[1], [0], [0], [1], [0, 0, 1, 1], [], []>} : vector<2x128xbf16>, vector<128x256xbf16>, vector<2x256xf32> -> vector<2x256xf32>
    %64 = vector.extract_strided_slice %55 {offsets = [1, 0], sizes = [1, 128], strides = [1, 1]} : vector<32x128xf32> to vector<1x128xf32>
    %65 = vector.extract_strided_slice %56 {offsets = [1, 0], sizes = [1, 128], strides = [1, 1]} : vector<32x128xf32> to vector<1x128xf32>
    %66 = tpu.concatenate %64, %65 in 0 : vector<1x128xf32>, vector<1x128xf32> -> vector<2x128xf32>
    %67 = arith.truncf %66 : vector<2x128xf32> to vector<2x128xbf16>
    %c1_39 = arith.constant 1 : index
    %c0_40 = arith.constant 0 : index
    %c0_41 = arith.constant 0 : index
    %68 = vector.load %arg5[%c1_39, %c0_40, %c0_41] : memref<32x128x256xbf16, #tpu.memory_space<vmem>>, vector<1x128x256xbf16>
    %69 = vector.shape_cast %68 : vector<1x128x256xbf16> to vector<128x256xbf16>
    %cst_42 = arith.constant dense<0.000000e+00> : vector<2x256xf32>
    %70 = tpu.matmul %67, %69, %cst_42 {dimension_numbers = #tpu.dot_dimension_numbers<[1], [0], [0], [1], [0, 0, 1, 1], [], []>} : vector<2x128xbf16>, vector<128x256xbf16>, vector<2x256xf32> -> vector<2x256xf32>
    %71 = arith.addf %63, %70 : vector<2x256xf32>
    %72 = vector.extract_strided_slice %55 {offsets = [2, 0], sizes = [1, 128], strides = [1, 1]} : vector<32x128xf32> to vector<1x128xf32>
    %73 = vector.extract_strided_slice %56 {offsets = [2, 0], sizes = [1, 128], strides = [1, 1]} : vector<32x128xf32> to vector<1x128xf32>
    %74 = tpu.concatenate %72, %73 in 0 : vector<1x128xf32>, vector<1x128xf32> -> vector<2x128xf32>
    %75 = arith.truncf %74 : vector<2x128xf32> to vector<2x128xbf16>
    %c2_43 = arith.constant 2 : index
    %c0_44 = arith.constant 0 : index
    %c0_45 = arith.constant 0 : index
    %76 = vector.load %arg5[%c2_43, %c0_44, %c0_45] : memref<32x128x256xbf16, #tpu.memory_space<vmem>>, vector<1x128x256xbf16>
    %77 = vector.shape_cast %76 : vector<1x128x256xbf16> to vector<128x256xbf16>
    %cst_46 = arith.constant dense<0.000000e+00> : vector<2x256xf32>
    %78 = tpu.matmul %75, %77, %cst_46 {dimension_numbers = #tpu.dot_dimension_numbers<[1], [0], [0], [1], [0, 0, 1, 1], [], []>} : vector<2x128xbf16>, vector<128x256xbf16>, vector<2x256xf32> -> vector<2x256xf32>
    %79 = arith.addf %71, %78 : vector<2x256xf32>
    %80 = vector.extract_strided_slice %55 {offsets = [3, 0], sizes = [1, 128], strides = [1, 1]} : vector<32x128xf32> to vector<1x128xf32>
    %81 = vector.extract_strided_slice %56 {offsets = [3, 0], sizes = [1, 128], strides = [1, 1]} : vector<32x128xf32> to vector<1x128xf32>
    %82 = tpu.concatenate %80, %81 in 0 : vector<1x128xf32>, vector<1x128xf32> -> vector<2x128xf32>
    %83 = arith.truncf %82 : vector<2x128xf32> to vector<2x128xbf16>
    %c3_47 = arith.constant 3 : index
    %c0_48 = arith.constant 0 : index
    %c0_49 = arith.constant 0 : index
    %84 = vector.load %arg5[%c3_47, %c0_48, %c0_49] : memref<32x128x256xbf16, #tpu.memory_space<vmem>>, vector<1x128x256xbf16>
    %85 = vector.shape_cast %84 : vector<1x128x256xbf16> to vector<128x256xbf16>
    %cst_50 = arith.constant dense<0.000000e+00> : vector<2x256xf32>
    %86 = tpu.matmul %83, %85, %cst_50 {dimension_numbers = #tpu.dot_dimension_numbers<[1], [0], [0], [1], [0, 0, 1, 1], [], []>} : vector<2x128xbf16>, vector<128x256xbf16>, vector<2x256xf32> -> vector<2x256xf32>
    %87 = arith.addf %79, %86 : vector<2x256xf32>
    %88 = vector.extract_strided_slice %55 {offsets = [4, 0], sizes = [1, 128], strides = [1, 1]} : vector<32x128xf32> to vector<1x128xf32>
    %89 = vector.extract_strided_slice %56 {offsets = [4, 0], sizes = [1, 128], strides = [1, 1]} : vector<32x128xf32> to vector<1x128xf32>
    %90 = tpu.concatenate %88, %89 in 0 : vector<1x128xf32>, vector<1x128xf32> -> vector<2x128xf32>
    %91 = arith.truncf %90 : vector<2x128xf32> to vector<2x128xbf16>
    %c4_51 = arith.constant 4 : index
    %c0_52 = arith.constant 0 : index
    %c0_53 = arith.constant 0 : index
    %92 = vector.load %arg5[%c4_51, %c0_52, %c0_53] : memref<32x128x256xbf16, #tpu.memory_space<vmem>>, vector<1x128x256xbf16>
    %93 = vector.shape_cast %92 : vector<1x128x256xbf16> to vector<128x256xbf16>
    %cst_54 = arith.constant dense<0.000000e+00> : vector<2x256xf32>
    %94 = tpu.matmul %91, %93, %cst_54 {dimension_numbers = #tpu.dot_dimension_numbers<[1], [0], [0], [1], [0, 0, 1, 1], [], []>} : vector<2x128xbf16>, vector<128x256xbf16>, vector<2x256xf32> -> vector<2x256xf32>
    %95 = arith.addf %87, %94 : vector<2x256xf32>
    %96 = vector.extract_strided_slice %55 {offsets = [5, 0], sizes = [1, 128], strides = [1, 1]} : vector<32x128xf32> to vector<1x128xf32>
    %97 = vector.extract_strided_slice %56 {offsets = [5, 0], sizes = [1, 128], strides = [1, 1]} : vector<32x128xf32> to vector<1x128xf32>
    %98 = tpu.concatenate %96, %97 in 0 : vector<1x128xf32>, vector<1x128xf32> -> vector<2x128xf32>
    %99 = arith.truncf %98 : vector<2x128xf32> to vector<2x128xbf16>
    %c5_55 = arith.constant 5 : index
    %c0_56 = arith.constant 0 : index
    %c0_57 = arith.constant 0 : index
    %100 = vector.load %arg5[%c5_55, %c0_56, %c0_57] : memref<32x128x256xbf16, #tpu.memory_space<vmem>>, vector<1x128x256xbf16>
    %101 = vector.shape_cast %100 : vector<1x128x256xbf16> to vector<128x256xbf16>
    %cst_58 = arith.constant dense<0.000000e+00> : vector<2x256xf32>
    %102 = tpu.matmul %99, %101, %cst_58 {dimension_numbers = #tpu.dot_dimension_numbers<[1], [0], [0], [1], [0, 0, 1, 1], [], []>} : vector<2x128xbf16>, vector<128x256xbf16>, vector<2x256xf32> -> vector<2x256xf32>
    %103 = arith.addf %95, %102 : vector<2x256xf32>
    %104 = vector.extract_strided_slice %55 {offsets = [6, 0], sizes = [1, 128], strides = [1, 1]} : vector<32x128xf32> to vector<1x128xf32>
    %105 = vector.extract_strided_slice %56 {offsets = [6, 0], sizes = [1, 128], strides = [1, 1]} : vector<32x128xf32> to vector<1x128xf32>
    %106 = tpu.concatenate %104, %105 in 0 : vector<1x128xf32>, vector<1x128xf32> -> vector<2x128xf32>
    %107 = arith.truncf %106 : vector<2x128xf32> to vector<2x128xbf16>
    %c6_59 = arith.constant 6 : index
    %c0_60 = arith.constant 0 : index
    %c0_61 = arith.constant 0 : index
    %108 = vector.load %arg5[%c6_59, %c0_60, %c0_61] : memref<32x128x256xbf16, #tpu.memory_space<vmem>>, vector<1x128x256xbf16>
    %109 = vector.shape_cast %108 : vector<1x128x256xbf16> to vector<128x256xbf16>
    %cst_62 = arith.constant dense<0.000000e+00> : vector<2x256xf32>
    %110 = tpu.matmul %107, %109, %cst_62 {dimension_numbers = #tpu.dot_dimension_numbers<[1], [0], [0], [1], [0, 0, 1, 1], [], []>} : vector<2x128xbf16>, vector<128x256xbf16>, vector<2x256xf32> -> vector<2x256xf32>
    %111 = arith.addf %103, %110 : vector<2x256xf32>
    %112 = vector.extract_strided_slice %55 {offsets = [7, 0], sizes = [1, 128], strides = [1, 1]} : vector<32x128xf32> to vector<1x128xf32>
    %113 = vector.extract_strided_slice %56 {offsets = [7, 0], sizes = [1, 128], strides = [1, 1]} : vector<32x128xf32> to vector<1x128xf32>
    %114 = tpu.concatenate %112, %113 in 0 : vector<1x128xf32>, vector<1x128xf32> -> vector<2x128xf32>
    %115 = arith.truncf %114 : vector<2x128xf32> to vector<2x128xbf16>
    %c7_63 = arith.constant 7 : index
    %c0_64 = arith.constant 0 : index
    %c0_65 = arith.constant 0 : index
    %116 = vector.load %arg5[%c7_63, %c0_64, %c0_65] : memref<32x128x256xbf16, #tpu.memory_space<vmem>>, vector<1x128x256xbf16>
    %117 = vector.shape_cast %116 : vector<1x128x256xbf16> to vector<128x256xbf16>
    %cst_66 = arith.constant dense<0.000000e+00> : vector<2x256xf32>
    %118 = tpu.matmul %115, %117, %cst_66 {dimension_numbers = #tpu.dot_dimension_numbers<[1], [0], [0], [1], [0, 0, 1, 1], [], []>} : vector<2x128xbf16>, vector<128x256xbf16>, vector<2x256xf32> -> vector<2x256xf32>
    %119 = arith.addf %111, %118 : vector<2x256xf32>
    %120 = vector.extract_strided_slice %55 {offsets = [8, 0], sizes = [1, 128], strides = [1, 1]} : vector<32x128xf32> to vector<1x128xf32>
    %121 = vector.extract_strided_slice %56 {offsets = [8, 0], sizes = [1, 128], strides = [1, 1]} : vector<32x128xf32> to vector<1x128xf32>
    %122 = tpu.concatenate %120, %121 in 0 : vector<1x128xf32>, vector<1x128xf32> -> vector<2x128xf32>
    %123 = arith.truncf %122 : vector<2x128xf32> to vector<2x128xbf16>
    %c8_67 = arith.constant 8 : index
    %c0_68 = arith.constant 0 : index
    %c0_69 = arith.constant 0 : index
    %124 = vector.load %arg5[%c8_67, %c0_68, %c0_69] : memref<32x128x256xbf16, #tpu.memory_space<vmem>>, vector<1x128x256xbf16>
    %125 = vector.shape_cast %124 : vector<1x128x256xbf16> to vector<128x256xbf16>
    %cst_70 = arith.constant dense<0.000000e+00> : vector<2x256xf32>
    %126 = tpu.matmul %123, %125, %cst_70 {dimension_numbers = #tpu.dot_dimension_numbers<[1], [0], [0], [1], [0, 0, 1, 1], [], []>} : vector<2x128xbf16>, vector<128x256xbf16>, vector<2x256xf32> -> vector<2x256xf32>
    %127 = arith.addf %119, %126 : vector<2x256xf32>
    %128 = vector.extract_strided_slice %55 {offsets = [9, 0], sizes = [1, 128], strides = [1, 1]} : vector<32x128xf32> to vector<1x128xf32>
    %129 = vector.extract_strided_slice %56 {offsets = [9, 0], sizes = [1, 128], strides = [1, 1]} : vector<32x128xf32> to vector<1x128xf32>
    %130 = tpu.concatenate %128, %129 in 0 : vector<1x128xf32>, vector<1x128xf32> -> vector<2x128xf32>
    %131 = arith.truncf %130 : vector<2x128xf32> to vector<2x128xbf16>
    %c9 = arith.constant 9 : index
    %c0_71 = arith.constant 0 : index
    %c0_72 = arith.constant 0 : index
    %132 = vector.load %arg5[%c9, %c0_71, %c0_72] : memref<32x128x256xbf16, #tpu.memory_space<vmem>>, vector<1x128x256xbf16>
    %133 = vector.shape_cast %132 : vector<1x128x256xbf16> to vector<128x256xbf16>
    %cst_73 = arith.constant dense<0.000000e+00> : vector<2x256xf32>
    %134 = tpu.matmul %131, %133, %cst_73 {dimension_numbers = #tpu.dot_dimension_numbers<[1], [0], [0], [1], [0, 0, 1, 1], [], []>} : vector<2x128xbf16>, vector<128x256xbf16>, vector<2x256xf32> -> vector<2x256xf32>
    %135 = arith.addf %127, %134 : vector<2x256xf32>
    %136 = vector.extract_strided_slice %55 {offsets = [10, 0], sizes = [1, 128], strides = [1, 1]} : vector<32x128xf32> to vector<1x128xf32>
    %137 = vector.extract_strided_slice %56 {offsets = [10, 0], sizes = [1, 128], strides = [1, 1]} : vector<32x128xf32> to vector<1x128xf32>
    %138 = tpu.concatenate %136, %137 in 0 : vector<1x128xf32>, vector<1x128xf32> -> vector<2x128xf32>
    %139 = arith.truncf %138 : vector<2x128xf32> to vector<2x128xbf16>
    %c10 = arith.constant 10 : index
    %c0_74 = arith.constant 0 : index
    %c0_75 = arith.constant 0 : index
    %140 = vector.load %arg5[%c10, %c0_74, %c0_75] : memref<32x128x256xbf16, #tpu.memory_space<vmem>>, vector<1x128x256xbf16>
    %141 = vector.shape_cast %140 : vector<1x128x256xbf16> to vector<128x256xbf16>
    %cst_76 = arith.constant dense<0.000000e+00> : vector<2x256xf32>
    %142 = tpu.matmul %139, %141, %cst_76 {dimension_numbers = #tpu.dot_dimension_numbers<[1], [0], [0], [1], [0, 0, 1, 1], [], []>} : vector<2x128xbf16>, vector<128x256xbf16>, vector<2x256xf32> -> vector<2x256xf32>
    %143 = arith.addf %135, %142 : vector<2x256xf32>
    %144 = vector.extract_strided_slice %55 {offsets = [11, 0], sizes = [1, 128], strides = [1, 1]} : vector<32x128xf32> to vector<1x128xf32>
    %145 = vector.extract_strided_slice %56 {offsets = [11, 0], sizes = [1, 128], strides = [1, 1]} : vector<32x128xf32> to vector<1x128xf32>
    %146 = tpu.concatenate %144, %145 in 0 : vector<1x128xf32>, vector<1x128xf32> -> vector<2x128xf32>
    %147 = arith.truncf %146 : vector<2x128xf32> to vector<2x128xbf16>
    %c11 = arith.constant 11 : index
    %c0_77 = arith.constant 0 : index
    %c0_78 = arith.constant 0 : index
    %148 = vector.load %arg5[%c11, %c0_77, %c0_78] : memref<32x128x256xbf16, #tpu.memory_space<vmem>>, vector<1x128x256xbf16>
    %149 = vector.shape_cast %148 : vector<1x128x256xbf16> to vector<128x256xbf16>
    %cst_79 = arith.constant dense<0.000000e+00> : vector<2x256xf32>
    %150 = tpu.matmul %147, %149, %cst_79 {dimension_numbers = #tpu.dot_dimension_numbers<[1], [0], [0], [1], [0, 0, 1, 1], [], []>} : vector<2x128xbf16>, vector<128x256xbf16>, vector<2x256xf32> -> vector<2x256xf32>
    %151 = arith.addf %143, %150 : vector<2x256xf32>
    %152 = vector.extract_strided_slice %55 {offsets = [12, 0], sizes = [1, 128], strides = [1, 1]} : vector<32x128xf32> to vector<1x128xf32>
    %153 = vector.extract_strided_slice %56 {offsets = [12, 0], sizes = [1, 128], strides = [1, 1]} : vector<32x128xf32> to vector<1x128xf32>
    %154 = tpu.concatenate %152, %153 in 0 : vector<1x128xf32>, vector<1x128xf32> -> vector<2x128xf32>
    %155 = arith.truncf %154 : vector<2x128xf32> to vector<2x128xbf16>
    %c12 = arith.constant 12 : index
    %c0_80 = arith.constant 0 : index
    %c0_81 = arith.constant 0 : index
    %156 = vector.load %arg5[%c12, %c0_80, %c0_81] : memref<32x128x256xbf16, #tpu.memory_space<vmem>>, vector<1x128x256xbf16>
    %157 = vector.shape_cast %156 : vector<1x128x256xbf16> to vector<128x256xbf16>
    %cst_82 = arith.constant dense<0.000000e+00> : vector<2x256xf32>
    %158 = tpu.matmul %155, %157, %cst_82 {dimension_numbers = #tpu.dot_dimension_numbers<[1], [0], [0], [1], [0, 0, 1, 1], [], []>} : vector<2x128xbf16>, vector<128x256xbf16>, vector<2x256xf32> -> vector<2x256xf32>
    %159 = arith.addf %151, %158 : vector<2x256xf32>
    %160 = vector.extract_strided_slice %55 {offsets = [13, 0], sizes = [1, 128], strides = [1, 1]} : vector<32x128xf32> to vector<1x128xf32>
    %161 = vector.extract_strided_slice %56 {offsets = [13, 0], sizes = [1, 128], strides = [1, 1]} : vector<32x128xf32> to vector<1x128xf32>
    %162 = tpu.concatenate %160, %161 in 0 : vector<1x128xf32>, vector<1x128xf32> -> vector<2x128xf32>
    %163 = arith.truncf %162 : vector<2x128xf32> to vector<2x128xbf16>
    %c13 = arith.constant 13 : index
    %c0_83 = arith.constant 0 : index
    %c0_84 = arith.constant 0 : index
    %164 = vector.load %arg5[%c13, %c0_83, %c0_84] : memref<32x128x256xbf16, #tpu.memory_space<vmem>>, vector<1x128x256xbf16>
    %165 = vector.shape_cast %164 : vector<1x128x256xbf16> to vector<128x256xbf16>
    %cst_85 = arith.constant dense<0.000000e+00> : vector<2x256xf32>
    %166 = tpu.matmul %163, %165, %cst_85 {dimension_numbers = #tpu.dot_dimension_numbers<[1], [0], [0], [1], [0, 0, 1, 1], [], []>} : vector<2x128xbf16>, vector<128x256xbf16>, vector<2x256xf32> -> vector<2x256xf32>
    %167 = arith.addf %159, %166 : vector<2x256xf32>
    %168 = vector.extract_strided_slice %55 {offsets = [14, 0], sizes = [1, 128], strides = [1, 1]} : vector<32x128xf32> to vector<1x128xf32>
    %169 = vector.extract_strided_slice %56 {offsets = [14, 0], sizes = [1, 128], strides = [1, 1]} : vector<32x128xf32> to vector<1x128xf32>
    %170 = tpu.concatenate %168, %169 in 0 : vector<1x128xf32>, vector<1x128xf32> -> vector<2x128xf32>
    %171 = arith.truncf %170 : vector<2x128xf32> to vector<2x128xbf16>
    %c14 = arith.constant 14 : index
    %c0_86 = arith.constant 0 : index
    %c0_87 = arith.constant 0 : index
    %172 = vector.load %arg5[%c14, %c0_86, %c0_87] : memref<32x128x256xbf16, #tpu.memory_space<vmem>>, vector<1x128x256xbf16>
    %173 = vector.shape_cast %172 : vector<1x128x256xbf16> to vector<128x256xbf16>
    %cst_88 = arith.constant dense<0.000000e+00> : vector<2x256xf32>
    %174 = tpu.matmul %171, %173, %cst_88 {dimension_numbers = #tpu.dot_dimension_numbers<[1], [0], [0], [1], [0, 0, 1, 1], [], []>} : vector<2x128xbf16>, vector<128x256xbf16>, vector<2x256xf32> -> vector<2x256xf32>
    %175 = arith.addf %167, %174 : vector<2x256xf32>
    %176 = vector.extract_strided_slice %55 {offsets = [15, 0], sizes = [1, 128], strides = [1, 1]} : vector<32x128xf32> to vector<1x128xf32>
    %177 = vector.extract_strided_slice %56 {offsets = [15, 0], sizes = [1, 128], strides = [1, 1]} : vector<32x128xf32> to vector<1x128xf32>
    %178 = tpu.concatenate %176, %177 in 0 : vector<1x128xf32>, vector<1x128xf32> -> vector<2x128xf32>
    %179 = arith.truncf %178 : vector<2x128xf32> to vector<2x128xbf16>
    %c15 = arith.constant 15 : index
    %c0_89 = arith.constant 0 : index
    %c0_90 = arith.constant 0 : index
    %180 = vector.load %arg5[%c15, %c0_89, %c0_90] : memref<32x128x256xbf16, #tpu.memory_space<vmem>>, vector<1x128x256xbf16>
    %181 = vector.shape_cast %180 : vector<1x128x256xbf16> to vector<128x256xbf16>
    %cst_91 = arith.constant dense<0.000000e+00> : vector<2x256xf32>
    %182 = tpu.matmul %179, %181, %cst_91 {dimension_numbers = #tpu.dot_dimension_numbers<[1], [0], [0], [1], [0, 0, 1, 1], [], []>} : vector<2x128xbf16>, vector<128x256xbf16>, vector<2x256xf32> -> vector<2x256xf32>
    %183 = arith.addf %175, %182 : vector<2x256xf32>
    %184 = vector.extract_strided_slice %55 {offsets = [16, 0], sizes = [1, 128], strides = [1, 1]} : vector<32x128xf32> to vector<1x128xf32>
    %185 = vector.extract_strided_slice %56 {offsets = [16, 0], sizes = [1, 128], strides = [1, 1]} : vector<32x128xf32> to vector<1x128xf32>
    %186 = tpu.concatenate %184, %185 in 0 : vector<1x128xf32>, vector<1x128xf32> -> vector<2x128xf32>
    %187 = arith.truncf %186 : vector<2x128xf32> to vector<2x128xbf16>
    %c16 = arith.constant 16 : index
    %c0_92 = arith.constant 0 : index
    %c0_93 = arith.constant 0 : index
    %188 = vector.load %arg5[%c16, %c0_92, %c0_93] : memref<32x128x256xbf16, #tpu.memory_space<vmem>>, vector<1x128x256xbf16>
    %189 = vector.shape_cast %188 : vector<1x128x256xbf16> to vector<128x256xbf16>
    %cst_94 = arith.constant dense<0.000000e+00> : vector<2x256xf32>
    %190 = tpu.matmul %187, %189, %cst_94 {dimension_numbers = #tpu.dot_dimension_numbers<[1], [0], [0], [1], [0, 0, 1, 1], [], []>} : vector<2x128xbf16>, vector<128x256xbf16>, vector<2x256xf32> -> vector<2x256xf32>
    %191 = arith.addf %183, %190 : vector<2x256xf32>
    %192 = vector.extract_strided_slice %55 {offsets = [17, 0], sizes = [1, 128], strides = [1, 1]} : vector<32x128xf32> to vector<1x128xf32>
    %193 = vector.extract_strided_slice %56 {offsets = [17, 0], sizes = [1, 128], strides = [1, 1]} : vector<32x128xf32> to vector<1x128xf32>
    %194 = tpu.concatenate %192, %193 in 0 : vector<1x128xf32>, vector<1x128xf32> -> vector<2x128xf32>
    %195 = arith.truncf %194 : vector<2x128xf32> to vector<2x128xbf16>
    %c17 = arith.constant 17 : index
    %c0_95 = arith.constant 0 : index
    %c0_96 = arith.constant 0 : index
    %196 = vector.load %arg5[%c17, %c0_95, %c0_96] : memref<32x128x256xbf16, #tpu.memory_space<vmem>>, vector<1x128x256xbf16>
    %197 = vector.shape_cast %196 : vector<1x128x256xbf16> to vector<128x256xbf16>
    %cst_97 = arith.constant dense<0.000000e+00> : vector<2x256xf32>
    %198 = tpu.matmul %195, %197, %cst_97 {dimension_numbers = #tpu.dot_dimension_numbers<[1], [0], [0], [1], [0, 0, 1, 1], [], []>} : vector<2x128xbf16>, vector<128x256xbf16>, vector<2x256xf32> -> vector<2x256xf32>
    %199 = arith.addf %191, %198 : vector<2x256xf32>
    %200 = vector.extract_strided_slice %55 {offsets = [18, 0], sizes = [1, 128], strides = [1, 1]} : vector<32x128xf32> to vector<1x128xf32>
    %201 = vector.extract_strided_slice %56 {offsets = [18, 0], sizes = [1, 128], strides = [1, 1]} : vector<32x128xf32> to vector<1x128xf32>
    %202 = tpu.concatenate %200, %201 in 0 : vector<1x128xf32>, vector<1x128xf32> -> vector<2x128xf32>
    %203 = arith.truncf %202 : vector<2x128xf32> to vector<2x128xbf16>
    %c18 = arith.constant 18 : index
    %c0_98 = arith.constant 0 : index
    %c0_99 = arith.constant 0 : index
    %204 = vector.load %arg5[%c18, %c0_98, %c0_99] : memref<32x128x256xbf16, #tpu.memory_space<vmem>>, vector<1x128x256xbf16>
    %205 = vector.shape_cast %204 : vector<1x128x256xbf16> to vector<128x256xbf16>
    %cst_100 = arith.constant dense<0.000000e+00> : vector<2x256xf32>
    %206 = tpu.matmul %203, %205, %cst_100 {dimension_numbers = #tpu.dot_dimension_numbers<[1], [0], [0], [1], [0, 0, 1, 1], [], []>} : vector<2x128xbf16>, vector<128x256xbf16>, vector<2x256xf32> -> vector<2x256xf32>
    %207 = arith.addf %199, %206 : vector<2x256xf32>
    %208 = vector.extract_strided_slice %55 {offsets = [19, 0], sizes = [1, 128], strides = [1, 1]} : vector<32x128xf32> to vector<1x128xf32>
    %209 = vector.extract_strided_slice %56 {offsets = [19, 0], sizes = [1, 128], strides = [1, 1]} : vector<32x128xf32> to vector<1x128xf32>
    %210 = tpu.concatenate %208, %209 in 0 : vector<1x128xf32>, vector<1x128xf32> -> vector<2x128xf32>
    %211 = arith.truncf %210 : vector<2x128xf32> to vector<2x128xbf16>
    %c19 = arith.constant 19 : index
    %c0_101 = arith.constant 0 : index
    %c0_102 = arith.constant 0 : index
    %212 = vector.load %arg5[%c19, %c0_101, %c0_102] : memref<32x128x256xbf16, #tpu.memory_space<vmem>>, vector<1x128x256xbf16>
    %213 = vector.shape_cast %212 : vector<1x128x256xbf16> to vector<128x256xbf16>
    %cst_103 = arith.constant dense<0.000000e+00> : vector<2x256xf32>
    %214 = tpu.matmul %211, %213, %cst_103 {dimension_numbers = #tpu.dot_dimension_numbers<[1], [0], [0], [1], [0, 0, 1, 1], [], []>} : vector<2x128xbf16>, vector<128x256xbf16>, vector<2x256xf32> -> vector<2x256xf32>
    %215 = arith.addf %207, %214 : vector<2x256xf32>
    %216 = vector.extract_strided_slice %55 {offsets = [20, 0], sizes = [1, 128], strides = [1, 1]} : vector<32x128xf32> to vector<1x128xf32>
    %217 = vector.extract_strided_slice %56 {offsets = [20, 0], sizes = [1, 128], strides = [1, 1]} : vector<32x128xf32> to vector<1x128xf32>
    %218 = tpu.concatenate %216, %217 in 0 : vector<1x128xf32>, vector<1x128xf32> -> vector<2x128xf32>
    %219 = arith.truncf %218 : vector<2x128xf32> to vector<2x128xbf16>
    %c20 = arith.constant 20 : index
    %c0_104 = arith.constant 0 : index
    %c0_105 = arith.constant 0 : index
    %220 = vector.load %arg5[%c20, %c0_104, %c0_105] : memref<32x128x256xbf16, #tpu.memory_space<vmem>>, vector<1x128x256xbf16>
    %221 = vector.shape_cast %220 : vector<1x128x256xbf16> to vector<128x256xbf16>
    %cst_106 = arith.constant dense<0.000000e+00> : vector<2x256xf32>
    %222 = tpu.matmul %219, %221, %cst_106 {dimension_numbers = #tpu.dot_dimension_numbers<[1], [0], [0], [1], [0, 0, 1, 1], [], []>} : vector<2x128xbf16>, vector<128x256xbf16>, vector<2x256xf32> -> vector<2x256xf32>
    %223 = arith.addf %215, %222 : vector<2x256xf32>
    %224 = vector.extract_strided_slice %55 {offsets = [21, 0], sizes = [1, 128], strides = [1, 1]} : vector<32x128xf32> to vector<1x128xf32>
    %225 = vector.extract_strided_slice %56 {offsets = [21, 0], sizes = [1, 128], strides = [1, 1]} : vector<32x128xf32> to vector<1x128xf32>
    %226 = tpu.concatenate %224, %225 in 0 : vector<1x128xf32>, vector<1x128xf32> -> vector<2x128xf32>
    %227 = arith.truncf %226 : vector<2x128xf32> to vector<2x128xbf16>
    %c21 = arith.constant 21 : index
    %c0_107 = arith.constant 0 : index
    %c0_108 = arith.constant 0 : index
    %228 = vector.load %arg5[%c21, %c0_107, %c0_108] : memref<32x128x256xbf16, #tpu.memory_space<vmem>>, vector<1x128x256xbf16>
    %229 = vector.shape_cast %228 : vector<1x128x256xbf16> to vector<128x256xbf16>
    %cst_109 = arith.constant dense<0.000000e+00> : vector<2x256xf32>
    %230 = tpu.matmul %227, %229, %cst_109 {dimension_numbers = #tpu.dot_dimension_numbers<[1], [0], [0], [1], [0, 0, 1, 1], [], []>} : vector<2x128xbf16>, vector<128x256xbf16>, vector<2x256xf32> -> vector<2x256xf32>
    %231 = arith.addf %223, %230 : vector<2x256xf32>
    %232 = vector.extract_strided_slice %55 {offsets = [22, 0], sizes = [1, 128], strides = [1, 1]} : vector<32x128xf32> to vector<1x128xf32>
    %233 = vector.extract_strided_slice %56 {offsets = [22, 0], sizes = [1, 128], strides = [1, 1]} : vector<32x128xf32> to vector<1x128xf32>
    %234 = tpu.concatenate %232, %233 in 0 : vector<1x128xf32>, vector<1x128xf32> -> vector<2x128xf32>
    %235 = arith.truncf %234 : vector<2x128xf32> to vector<2x128xbf16>
    %c22 = arith.constant 22 : index
    %c0_110 = arith.constant 0 : index
    %c0_111 = arith.constant 0 : index
    %236 = vector.load %arg5[%c22, %c0_110, %c0_111] : memref<32x128x256xbf16, #tpu.memory_space<vmem>>, vector<1x128x256xbf16>
    %237 = vector.shape_cast %236 : vector<1x128x256xbf16> to vector<128x256xbf16>
    %cst_112 = arith.constant dense<0.000000e+00> : vector<2x256xf32>
    %238 = tpu.matmul %235, %237, %cst_112 {dimension_numbers = #tpu.dot_dimension_numbers<[1], [0], [0], [1], [0, 0, 1, 1], [], []>} : vector<2x128xbf16>, vector<128x256xbf16>, vector<2x256xf32> -> vector<2x256xf32>
    %239 = arith.addf %231, %238 : vector<2x256xf32>
    %240 = vector.extract_strided_slice %55 {offsets = [23, 0], sizes = [1, 128], strides = [1, 1]} : vector<32x128xf32> to vector<1x128xf32>
    %241 = vector.extract_strided_slice %56 {offsets = [23, 0], sizes = [1, 128], strides = [1, 1]} : vector<32x128xf32> to vector<1x128xf32>
    %242 = tpu.concatenate %240, %241 in 0 : vector<1x128xf32>, vector<1x128xf32> -> vector<2x128xf32>
    %243 = arith.truncf %242 : vector<2x128xf32> to vector<2x128xbf16>
    %c23 = arith.constant 23 : index
    %c0_113 = arith.constant 0 : index
    %c0_114 = arith.constant 0 : index
    %244 = vector.load %arg5[%c23, %c0_113, %c0_114] : memref<32x128x256xbf16, #tpu.memory_space<vmem>>, vector<1x128x256xbf16>
    %245 = vector.shape_cast %244 : vector<1x128x256xbf16> to vector<128x256xbf16>
    %cst_115 = arith.constant dense<0.000000e+00> : vector<2x256xf32>
    %246 = tpu.matmul %243, %245, %cst_115 {dimension_numbers = #tpu.dot_dimension_numbers<[1], [0], [0], [1], [0, 0, 1, 1], [], []>} : vector<2x128xbf16>, vector<128x256xbf16>, vector<2x256xf32> -> vector<2x256xf32>
    %247 = arith.addf %239, %246 : vector<2x256xf32>
    %248 = vector.extract_strided_slice %55 {offsets = [24, 0], sizes = [1, 128], strides = [1, 1]} : vector<32x128xf32> to vector<1x128xf32>
    %249 = vector.extract_strided_slice %56 {offsets = [24, 0], sizes = [1, 128], strides = [1, 1]} : vector<32x128xf32> to vector<1x128xf32>
    %250 = tpu.concatenate %248, %249 in 0 : vector<1x128xf32>, vector<1x128xf32> -> vector<2x128xf32>
    %251 = arith.truncf %250 : vector<2x128xf32> to vector<2x128xbf16>
    %c24 = arith.constant 24 : index
    %c0_116 = arith.constant 0 : index
    %c0_117 = arith.constant 0 : index
    %252 = vector.load %arg5[%c24, %c0_116, %c0_117] : memref<32x128x256xbf16, #tpu.memory_space<vmem>>, vector<1x128x256xbf16>
    %253 = vector.shape_cast %252 : vector<1x128x256xbf16> to vector<128x256xbf16>
    %cst_118 = arith.constant dense<0.000000e+00> : vector<2x256xf32>
    %254 = tpu.matmul %251, %253, %cst_118 {dimension_numbers = #tpu.dot_dimension_numbers<[1], [0], [0], [1], [0, 0, 1, 1], [], []>} : vector<2x128xbf16>, vector<128x256xbf16>, vector<2x256xf32> -> vector<2x256xf32>
    %255 = arith.addf %247, %254 : vector<2x256xf32>
    %256 = vector.extract_strided_slice %55 {offsets = [25, 0], sizes = [1, 128], strides = [1, 1]} : vector<32x128xf32> to vector<1x128xf32>
    %257 = vector.extract_strided_slice %56 {offsets = [25, 0], sizes = [1, 128], strides = [1, 1]} : vector<32x128xf32> to vector<1x128xf32>
    %258 = tpu.concatenate %256, %257 in 0 : vector<1x128xf32>, vector<1x128xf32> -> vector<2x128xf32>
    %259 = arith.truncf %258 : vector<2x128xf32> to vector<2x128xbf16>
    %c25 = arith.constant 25 : index
    %c0_119 = arith.constant 0 : index
    %c0_120 = arith.constant 0 : index
    %260 = vector.load %arg5[%c25, %c0_119, %c0_120] : memref<32x128x256xbf16, #tpu.memory_space<vmem>>, vector<1x128x256xbf16>
    %261 = vector.shape_cast %260 : vector<1x128x256xbf16> to vector<128x256xbf16>
    %cst_121 = arith.constant dense<0.000000e+00> : vector<2x256xf32>
    %262 = tpu.matmul %259, %261, %cst_121 {dimension_numbers = #tpu.dot_dimension_numbers<[1], [0], [0], [1], [0, 0, 1, 1], [], []>} : vector<2x128xbf16>, vector<128x256xbf16>, vector<2x256xf32> -> vector<2x256xf32>
    %263 = arith.addf %255, %262 : vector<2x256xf32>
    %264 = vector.extract_strided_slice %55 {offsets = [26, 0], sizes = [1, 128], strides = [1, 1]} : vector<32x128xf32> to vector<1x128xf32>
    %265 = vector.extract_strided_slice %56 {offsets = [26, 0], sizes = [1, 128], strides = [1, 1]} : vector<32x128xf32> to vector<1x128xf32>
    %266 = tpu.concatenate %264, %265 in 0 : vector<1x128xf32>, vector<1x128xf32> -> vector<2x128xf32>
    %267 = arith.truncf %266 : vector<2x128xf32> to vector<2x128xbf16>
    %c26 = arith.constant 26 : index
    %c0_122 = arith.constant 0 : index
    %c0_123 = arith.constant 0 : index
    %268 = vector.load %arg5[%c26, %c0_122, %c0_123] : memref<32x128x256xbf16, #tpu.memory_space<vmem>>, vector<1x128x256xbf16>
    %269 = vector.shape_cast %268 : vector<1x128x256xbf16> to vector<128x256xbf16>
    %cst_124 = arith.constant dense<0.000000e+00> : vector<2x256xf32>
    %270 = tpu.matmul %267, %269, %cst_124 {dimension_numbers = #tpu.dot_dimension_numbers<[1], [0], [0], [1], [0, 0, 1, 1], [], []>} : vector<2x128xbf16>, vector<128x256xbf16>, vector<2x256xf32> -> vector<2x256xf32>
    %271 = arith.addf %263, %270 : vector<2x256xf32>
    %272 = vector.extract_strided_slice %55 {offsets = [27, 0], sizes = [1, 128], strides = [1, 1]} : vector<32x128xf32> to vector<1x128xf32>
    %273 = vector.extract_strided_slice %56 {offsets = [27, 0], sizes = [1, 128], strides = [1, 1]} : vector<32x128xf32> to vector<1x128xf32>
    %274 = tpu.concatenate %272, %273 in 0 : vector<1x128xf32>, vector<1x128xf32> -> vector<2x128xf32>
    %275 = arith.truncf %274 : vector<2x128xf32> to vector<2x128xbf16>
    %c27 = arith.constant 27 : index
    %c0_125 = arith.constant 0 : index
    %c0_126 = arith.constant 0 : index
    %276 = vector.load %arg5[%c27, %c0_125, %c0_126] : memref<32x128x256xbf16, #tpu.memory_space<vmem>>, vector<1x128x256xbf16>
    %277 = vector.shape_cast %276 : vector<1x128x256xbf16> to vector<128x256xbf16>
    %cst_127 = arith.constant dense<0.000000e+00> : vector<2x256xf32>
    %278 = tpu.matmul %275, %277, %cst_127 {dimension_numbers = #tpu.dot_dimension_numbers<[1], [0], [0], [1], [0, 0, 1, 1], [], []>} : vector<2x128xbf16>, vector<128x256xbf16>, vector<2x256xf32> -> vector<2x256xf32>
    %279 = arith.addf %271, %278 : vector<2x256xf32>
    %280 = vector.extract_strided_slice %55 {offsets = [28, 0], sizes = [1, 128], strides = [1, 1]} : vector<32x128xf32> to vector<1x128xf32>
    %281 = vector.extract_strided_slice %56 {offsets = [28, 0], sizes = [1, 128], strides = [1, 1]} : vector<32x128xf32> to vector<1x128xf32>
    %282 = tpu.concatenate %280, %281 in 0 : vector<1x128xf32>, vector<1x128xf32> -> vector<2x128xf32>
    %283 = arith.truncf %282 : vector<2x128xf32> to vector<2x128xbf16>
    %c28 = arith.constant 28 : index
    %c0_128 = arith.constant 0 : index
    %c0_129 = arith.constant 0 : index
    %284 = vector.load %arg5[%c28, %c0_128, %c0_129] : memref<32x128x256xbf16, #tpu.memory_space<vmem>>, vector<1x128x256xbf16>
    %285 = vector.shape_cast %284 : vector<1x128x256xbf16> to vector<128x256xbf16>
    %cst_130 = arith.constant dense<0.000000e+00> : vector<2x256xf32>
    %286 = tpu.matmul %283, %285, %cst_130 {dimension_numbers = #tpu.dot_dimension_numbers<[1], [0], [0], [1], [0, 0, 1, 1], [], []>} : vector<2x128xbf16>, vector<128x256xbf16>, vector<2x256xf32> -> vector<2x256xf32>
    %287 = arith.addf %279, %286 : vector<2x256xf32>
    %288 = vector.extract_strided_slice %55 {offsets = [29, 0], sizes = [1, 128], strides = [1, 1]} : vector<32x128xf32> to vector<1x128xf32>
    %289 = vector.extract_strided_slice %56 {offsets = [29, 0], sizes = [1, 128], strides = [1, 1]} : vector<32x128xf32> to vector<1x128xf32>
    %290 = tpu.concatenate %288, %289 in 0 : vector<1x128xf32>, vector<1x128xf32> -> vector<2x128xf32>
    %291 = arith.truncf %290 : vector<2x128xf32> to vector<2x128xbf16>
    %c29 = arith.constant 29 : index
    %c0_131 = arith.constant 0 : index
    %c0_132 = arith.constant 0 : index
    %292 = vector.load %arg5[%c29, %c0_131, %c0_132] : memref<32x128x256xbf16, #tpu.memory_space<vmem>>, vector<1x128x256xbf16>
    %293 = vector.shape_cast %292 : vector<1x128x256xbf16> to vector<128x256xbf16>
    %cst_133 = arith.constant dense<0.000000e+00> : vector<2x256xf32>
    %294 = tpu.matmul %291, %293, %cst_133 {dimension_numbers = #tpu.dot_dimension_numbers<[1], [0], [0], [1], [0, 0, 1, 1], [], []>} : vector<2x128xbf16>, vector<128x256xbf16>, vector<2x256xf32> -> vector<2x256xf32>
    %295 = arith.addf %287, %294 : vector<2x256xf32>
    %296 = vector.extract_strided_slice %55 {offsets = [30, 0], sizes = [1, 128], strides = [1, 1]} : vector<32x128xf32> to vector<1x128xf32>
    %297 = vector.extract_strided_slice %56 {offsets = [30, 0], sizes = [1, 128], strides = [1, 1]} : vector<32x128xf32> to vector<1x128xf32>
    %298 = tpu.concatenate %296, %297 in 0 : vector<1x128xf32>, vector<1x128xf32> -> vector<2x128xf32>
    %299 = arith.truncf %298 : vector<2x128xf32> to vector<2x128xbf16>
    %c30 = arith.constant 30 : index
    %c0_134 = arith.constant 0 : index
    %c0_135 = arith.constant 0 : index
    %300 = vector.load %arg5[%c30, %c0_134, %c0_135] : memref<32x128x256xbf16, #tpu.memory_space<vmem>>, vector<1x128x256xbf16>
    %301 = vector.shape_cast %300 : vector<1x128x256xbf16> to vector<128x256xbf16>
    %cst_136 = arith.constant dense<0.000000e+00> : vector<2x256xf32>
    %302 = tpu.matmul %299, %301, %cst_136 {dimension_numbers = #tpu.dot_dimension_numbers<[1], [0], [0], [1], [0, 0, 1, 1], [], []>} : vector<2x128xbf16>, vector<128x256xbf16>, vector<2x256xf32> -> vector<2x256xf32>
    %303 = arith.addf %295, %302 : vector<2x256xf32>
    %304 = vector.extract_strided_slice %55 {offsets = [31, 0], sizes = [1, 128], strides = [1, 1]} : vector<32x128xf32> to vector<1x128xf32>
    %305 = vector.extract_strided_slice %56 {offsets = [31, 0], sizes = [1, 128], strides = [1, 1]} : vector<32x128xf32> to vector<1x128xf32>
    %306 = tpu.concatenate %304, %305 in 0 : vector<1x128xf32>, vector<1x128xf32> -> vector<2x128xf32>
    %307 = arith.truncf %306 : vector<2x128xf32> to vector<2x128xbf16>
    %c31 = arith.constant 31 : index
    %c0_137 = arith.constant 0 : index
    %c0_138 = arith.constant 0 : index
    %308 = vector.load %arg5[%c31, %c0_137, %c0_138] : memref<32x128x256xbf16, #tpu.memory_space<vmem>>, vector<1x128x256xbf16>
    %309 = vector.shape_cast %308 : vector<1x128x256xbf16> to vector<128x256xbf16>
    %cst_139 = arith.constant dense<0.000000e+00> : vector<2x256xf32>
    %310 = tpu.matmul %307, %309, %cst_139 {dimension_numbers = #tpu.dot_dimension_numbers<[1], [0], [0], [1], [0, 0, 1, 1], [], []>} : vector<2x128xbf16>, vector<128x256xbf16>, vector<2x256xf32> -> vector<2x256xf32>
    %311 = arith.addf %303, %310 : vector<2x256xf32>
    %c0_140 = arith.constant 0 : index
    %c0_141 = arith.constant 0 : index
    %312 = vector.load %arg6[%c0_140, %c0_141] : memref<1x256xf32, #tpu.memory_space<vmem>>, vector<1x256xf32>
    %313 = vector.broadcast %312 : vector<1x256xf32> to vector<2x256xf32>
    %314 = arith.addf %311, %313 : vector<2x256xf32>
    %cst_142 = arith.constant 0.000000e+00 : f32
    %315 = vector.broadcast %cst_142 : f32 to vector<2x256xf32>
    %316 = arith.maximumf %314, %315 : vector<2x256xf32>
    %c0_143 = arith.constant 0 : index
    %c0_144 = arith.constant 0 : index
    %317 = vector.load %arg7[%c0_143, %c0_144] : memref<256x6xf32, #tpu.memory_space<vmem>>, vector<256x6xf32>
    %cst_145 = arith.constant dense<0.000000e+00> : vector<2x6xf32>
    %318 = tpu.matmul %316, %317, %cst_145 {dimension_numbers = #tpu.dot_dimension_numbers<[1], [0], [0], [1], [0, 0, 1, 1], [], []>} : vector<2x256xf32>, vector<256x6xf32>, vector<2x6xf32> -> vector<2x6xf32>
    %c0_146 = arith.constant 0 : index
    %c0_147 = arith.constant 0 : index
    %319 = vector.load %arg8[%c0_146, %c0_147] : memref<1x6xf32, #tpu.memory_space<vmem>>, vector<1x6xf32>
    %320 = vector.broadcast %319 : vector<1x6xf32> to vector<2x6xf32>
    %321 = arith.addf %318, %320 : vector<2x6xf32>
    %c0_148 = arith.constant 0 : index
    %c0_149 = arith.constant 0 : index
    %322 = vector.load %arg9[%c0_148, %c0_149] : memref<2x6xf32, #tpu.memory_space<vmem>>, vector<2x6xf32>
    tpu.vector_store %arg9[%c0_148, %c0_149], %321 {strides = array<i32>} : memref<2x6xf32, #tpu.memory_space<vmem>>, vector<2x6xf32>,
    return
  }
}

</mosaic_0001>

<llo_original>
// kernel: rnn_forward.1
$region0: #{rnn_forward.1}
  #allocation0 [shape = 'u32[]', space=smem, size = 0x4, offset = 0x4, fixed_abs, tag = 'smem constant byte address 0x4 - core index']
  #allocation1 [shape = 'u32[144,128]{1,0:T(1,128)}', space=vmem, size = 0x12000, scoped, tag = 'internal scratch']
  %s0 = inlined_call_operand.vmem [shape: f32[27,2304], index: 0, kind: input, shape index: {}]
  %s1 = inlined_call_operand.vmem [shape: f32[16,27], index: 1, kind: input, shape index: {}]
  %s2 = inlined_call_operand.vmem [shape: f32[16,1], index: 2, kind: input, shape index: {}]
  %s3 = inlined_call_operand.vmem [shape: f32[9,32,16], index: 3, kind: input, shape index: {}]
  %s4 = inlined_call_operand.vmem [shape: f32[32,1], index: 4, kind: input, shape index: {}]
  %s5 = inlined_call_operand.vmem [shape: bf16[32,128,256], index: 5, kind: input, shape index: {}]
  %s6 = inlined_call_operand.vmem [shape: f32[1,256], index: 6, kind: input, shape index: {}]
  %s7 = inlined_call_operand.vmem [shape: f32[256,6], index: 7, kind: input, shape index: {}]
  %s8 = inlined_call_operand.vmem [shape: f32[1,6], index: 8, kind: input, shape index: {}]
  %s9 = inlined_call_operand.hbm [shape: f32[2,6], index: 9, kind: output, shape index: {}]
  %s10 = sld [smem:[#allocation0]]
  $region46: #{rnn_forward.1} parent=0
    _
  %s12 = ssub.s32 1, %s10
  %s13 = scalar_select 0, %s12, %s10
  $region1: #{rnn_forward.1} parent=0
    #allocation2 [shape = 'u8[1024]{0}', space=vmem, size = 0x400, scoped, tag = 'output window, operand 0, single buffered']
    #allocation3 [shape = 's32[1]{0}', space=sflag, size = 0x4, scoped, tag = 'scoped memory for rnn_forward.1']
    %14 = vsyncpa [#allocation3], 0
    // Predicated region
    $region2: #{rnn_forward.1} parent=1 // pred_check
      _
    $region3: #{rnn_forward.1} parent=1 // pred_check_branch
      %16 = sbr.rel (0) target = $region5
    $region4: #{rnn_forward.1} parent=1 // pred_region
      _
    $region5: #{rnn_forward.1} parent=1 // pred_fallthru
      _
    // Predicated region
    $region6: #{rnn_forward.1} parent=1 // pred_check
      _
    $region7: #{rnn_forward.1} parent=1 // pred_check_branch
      %18 = sbr.rel (0) target = $region9
    $region8: #{rnn_forward.1} parent=1 // pred_region
      _
    $region9: #{rnn_forward.1} parent=1 // pred_fallthru
      _
    // Predicated region
    $region10: #{rnn_forward.1} parent=1 // pred_check
      _
    $region11: #{rnn_forward.1} parent=1 // pred_check_branch
      %20 = sbr.rel (0) target = $region13
    $region12: #{rnn_forward.1} parent=1 // pred_region
      _
    $region13: #{rnn_forward.1} parent=1 // pred_fallthru
      _
    // Predicated region
    $region14: #{rnn_forward.1} parent=1 // pred_check
      _
    $region15: #{rnn_forward.1} parent=1 // pred_check_branch
      %22 = sbr.rel (0) target = $region17
    $region16: #{rnn_forward.1} parent=1 // pred_region
      _
    $region17: #{rnn_forward.1} parent=1 // pred_fallthru
      _
    // Predicated region
    $region18: #{rnn_forward.1} parent=1 // pred_check
      _
    $region19: #{rnn_forward.1} parent=1 // pred_check_branch
      %24 = sbr.rel (0) target = $region21
    $region20: #{rnn_forward.1} parent=1 // pred_region
      _
    $region21: #{rnn_forward.1} parent=1 // pred_fallthru
      _
    // Predicated region
    $region22: #{rnn_forward.1} parent=1 // pred_check
      _
    $region23: #{rnn_forward.1} parent=1 // pred_check_branch
      %26 = sbr.rel (0) target = $region25
    $region24: #{rnn_forward.1} parent=1 // pred_region
      _
    $region25: #{rnn_forward.1} parent=1 // pred_fallthru
      _
    // Predicated region
    $region26: #{rnn_forward.1} parent=1 // pred_check
      _
    $region27: #{rnn_forward.1} parent=1 // pred_check_branch
      %28 = sbr.rel (0) target = $region29
    $region28: #{rnn_forward.1} parent=1 // pred_region
      _
    $region29: #{rnn_forward.1} parent=1 // pred_fallthru
      _
    // Predicated region
    $region30: #{rnn_forward.1} parent=1 // pred_check
      _
    $region31: #{rnn_forward.1} parent=1 // pred_check_branch
      %30 = sbr.rel (0) target = $region33
    $region32: #{rnn_forward.1} parent=1 // pred_region
      _
    $region33: #{rnn_forward.1} parent=1 // pred_fallthru
      _
    // Predicated region
    $region34: #{rnn_forward.1} parent=1 // pred_check
      _
    $region35: #{rnn_forward.1} parent=1 // pred_check_branch
      %32 = sbr.rel (0) target = $region37
    $region36: #{rnn_forward.1} parent=1 // pred_region
      _
    $region37: #{rnn_forward.1} parent=1 // pred_fallthru
      _
    %v34 = vld [vmem:[%s1] sm:$0xff]
    %v35 = vld [vmem:[%s1 + $0x8] sm:$0xff]
    %v36 = vld [vmem:[%s0] sm:$0xff]
    %v37 = vld [vmem:[%s0 + $0x8] sm:$0xff]
    %v38 = vld [vmem:[%s0 + $0x10] sm:$0xff]
    %v39 = vld [vmem:[%s0 + $0x18] sm:$0xff]
    %v40 = vld [vmem:[%s0 + $0x20] sm:$0xff]
    %v41 = vld [vmem:[%s0 + $0x28] sm:$0xff]
    %v42 = vld [vmem:[%s0 + $0x30] sm:$0xff]
    %v43 = vld [vmem:[%s0 + $0x38] sm:$0xff]
    %v44 = vld [vmem:[%s0 + $0x40] sm:$0xff]
    %v45 = vld [vmem:[%s0 + $0x48] sm:$0xff]
    %v46 = vld [vmem:[%s0 + $0x50] sm:$0xff]
    %v47 = vld [vmem:[%s0 + $0x58] sm:$0xff]
    %v48 = vld [vmem:[%s0 + $0x60] sm:$0xff]
    %v49 = vld [vmem:[%s0 + $0x68] sm:$0xff]
    %v50 = vld [vmem:[%s0 + $0x70] sm:$0xff]
    %v51 = vld [vmem:[%s0 + $0x78] sm:$0xff]
    %v52 = vld [vmem:[%s0 + $0x80] sm:$0xff]
    %v53 = vld [vmem:[%s0 + $0x88] sm:$0xff]
    %v54 = vld [vmem:[%s0 + $0x90] sm:$0xff]
    %v55 = vld [vmem:[%s0 + $0x98] sm:$0xff]
    %v56 = vld [vmem:[%s0 + $0xa0] sm:$0xff]
    %v57 = vld [vmem:[%s0 + $0xa8] sm:$0xff]
    %v58 = vld [vmem:[%s0 + $0xb0] sm:$0xff]
    %v59 = vld [vmem:[%s0 + $0xb8] sm:$0xff]
    %v60 = vld [vmem:[%s0 + $0xc0] sm:$0xff]
    %v61 = vld [vmem:[%s0 + $0xc8] sm:$0xff]
    %v62 = vld [vmem:[%s0 + $0xd0] sm:$0xff]
    %v63 = vld [vmem:[%s0 + $0xd8] sm:$0xff]
    %v64 = vld [vmem:[%s0 + $0xe0] sm:$0xff]
    %v65 = vld [vmem:[%s0 + $0xe8] sm:$0xff]
    %v66 = vld [vmem:[%s0 + $0xf0] sm:$0xff]
    %v67 = vld [vmem:[%s0 + $0xf8] sm:$0xff]
    %v68 = vld [vmem:[%s0 + $0x100] sm:$0xff]
    %v69 = vld [vmem:[%s0 + $0x108] sm:$0xff]
    %v70 = vld [vmem:[%s0 + $0x110] sm:$0xff]
    %v71 = vld [vmem:[%s0 + $0x118] sm:$0xff]
    %v72 = vld [vmem:[%s0 + $0x120] sm:$0xff]
    %v73 = vld [vmem:[%s0 + $0x128] sm:$0xff]
    %v74 = vld [vmem:[%s0 + $0x130] sm:$0xff]
    %v75 = vld [vmem:[%s0 + $0x138] sm:$0xff]
    %v76 = vld [vmem:[%s0 + $0x140] sm:$0xff]
    %v77 = vld [vmem:[%s0 + $0x148] sm:$0xff]
    %v78 = vld [vmem:[%s0 + $0x150] sm:$0xff]
    %v79 = vld [vmem:[%s0 + $0x158] sm:$0xff]
    %v80 = vld [vmem:[%s0 + $0x160] sm:$0xff]
    %v81 = vld [vmem:[%s0 + $0x168] sm:$0xff]
    %v82 = vld [vmem:[%s0 + $0x170] sm:$0xff]
    %v83 = vld [vmem:[%s0 + $0x178] sm:$0xff]
    %v84 = vld [vmem:[%s0 + $0x180] sm:$0xff]
    %v85 = vld [vmem:[%s0 + $0x188] sm:$0xff]
    %v86 = vld [vmem:[%s0 + $0x190] sm:$0xff]
    %v87 = vld [vmem:[%s0 + $0x198] sm:$0xff]
    %v88 = vld [vmem:[%s0 + $0x1a0] sm:$0xff]
    %v89 = vld [vmem:[%s0 + $0x1a8] sm:$0xff]
    %v90 = vld [vmem:[%s0 + $0x1b0] sm:$0x7]
    %v91 = vld [vmem:[%s0 + $0x1b8] sm:$0x7]
    %v92 = vld [vmem:[%s0 + $0x1c0] sm:$0x7]
    %v93 = vld [vmem:[%s0 + $0x1c8] sm:$0x7]
    %v94 = vld [vmem:[%s0 + $0x1d0] sm:$0x7]
    %v95 = vld [vmem:[%s0 + $0x1d8] sm:$0x7]
    %v96 = vld [vmem:[%s0 + $0x1e0] sm:$0x7]
    %v97 = vld [vmem:[%s0 + $0x1e8] sm:$0x7]
    %v98 = vld [vmem:[%s0 + $0x1f0] sm:$0x7]
    %v99 = vld [vmem:[%s0 + $0x1f8] sm:$0x7]
    %v100 = vld [vmem:[%s0 + $0x200] sm:$0x7]
    %v101 = vld [vmem:[%s0 + $0x208] sm:$0x7]
    %v102 = vld [vmem:[%s0 + $0x210] sm:$0x7]
    %v103 = vld [vmem:[%s0 + $0x218] sm:$0x7]
    %v104 = vld [vmem:[%s0 + $0x220] sm:$0x7]
    %v105 = vld [vmem:[%s0 + $0x228] sm:$0x7]
    %v106 = vld [vmem:[%s0 + $0x230] sm:$0x7]
    %v107 = vld [vmem:[%s0 + $0x238] sm:$0x7]
    %v108 = vld [vmem:[%s2] sm:$0xff]
    %v109 = vld [vmem:[%s2 + $0x8] sm:$0xff]
    %111 = vset.pattern.permute.xlu0 0
    %112 = vperm.xlu0 %111, %v108
    %v113 = vpop.permute.xlu0 %112
    %116 = vset.pattern.permute.xlu0 0
    %117 = vperm.xlu0 %116, %v109
    %v118 = vpop.permute.xlu0 %117
    %vm120 = vcmask 220160
    %v122 = vsel %vm120, %v34, 0
    %v125 = vsel %vm120, %v35, 0
    %vm127 = vcmask 1042432
    %v129 = vsel %vm127, %v90, 0
    %v132 = vsel %vm127, %v91, 0
    %v135 = vsel %vm127, %v92, 0
    %v138 = vsel %vm127, %v93, 0
    %v141 = vsel %vm127, %v94, 0
    %v144 = vsel %vm127, %v95, 0
    %v147 = vsel %vm127, %v96, 0
    %v150 = vsel %vm127, %v97, 0
    %v153 = vsel %vm127, %v98, 0
    %v156 = vsel %vm127, %v99, 0
    %v159 = vsel %vm127, %v100, 0
    %v162 = vsel %vm127, %v101, 0
    %v165 = vsel %vm127, %v102, 0
    %v168 = vsel %vm127, %v103, 0
    %v171 = vsel %vm127, %v104, 0
    %v174 = vsel %vm127, %v105, 0
    %v177 = vsel %vm127, %v106, 0
    %v180 = vsel %vm127, %v107, 0
    %182 = vmatprep.subr.mxu0 0.0
    %183 = vmatpush1.msra.mxu0 0.0
    %184 = vmatprep.subr.mxu0 0.0
    %185 = vmatpush1.msra.mxu0 0.0
    %186 = vmatprep.subr.mxu0 0.0
    %187 = vmatpush1.msra.mxu0 0.0
    %188 = vmatprep.subr.mxu0 0.0
    %189 = vmatpush1.msra.mxu0 0.0
    %190 = vmatprep.subr.mxu0 0.0
    %191 = vmatpush1.msra.mxu0 0.0
    %192 = vmatprep.subr.mxu0 0.0
    %193 = vmatpush1.msra.mxu0 0.0
    %194 = vmatprep.subr.mxu0 0.0
    %195 = vmatpush1.msra.mxu0 0.0
    %196 = vmatprep.subr.mxu0 0.0
    %197 = vmatpush1.msra.mxu0 0.0
    %198 = vmatprep.subr.mxu0 0.0
    %199 = vmatpush1.msra.mxu0 0.0
    %200 = vmatprep.subr.mxu0 0.0
    %201 = vmatpush1.msra.mxu0 0.0
    %202 = vmatprep.subr.mxu0 0.0
    %203 = vmatpush1.msra.mxu0 0.0
    %204 = vmatprep.subr.mxu0 0.0
    %205 = vmatpush1.msra.mxu0 0.0
    %206 = vmatprep.subr.mxu0 %v132
    %207 = vmatpush1.msra.mxu0 %v129
    %208 = vmatprep.subr.mxu0 %v73
    %209 = vmatpush1.msra.mxu0 %v72
    %210 = vmatprep.subr.mxu0 %v55
    %211 = vmatpush1.msra.mxu0 %v54
    %212 = vmatprep.subr.mxu0 %v37
    %213 = vmatpush1.msra.mxu0 %v36
    %214 = vmatprep.subr.mxu0 0.0
    %215 = vmatpush2.msra.mxu0 0.0
    %216 = vmatprep.subr.mxu0 0.0
    %217 = vmatpush2.msra.mxu0 0.0
    %218 = vmatprep.subr.mxu0 0.0
    %219 = vmatpush2.msra.mxu0 0.0
    %220 = vmatprep.subr.mxu0 0.0
    %221 = vmatpush2.msra.mxu0 0.0
    %222 = vmatprep.subr.mxu0 0.0
    %223 = vmatpush2.msra.mxu0 0.0
    %224 = vmatprep.subr.mxu0 0.0
    %225 = vmatpush2.msra.mxu0 0.0
    %226 = vmatprep.subr.mxu0 0.0
    %227 = vmatpush2.msra.mxu0 0.0
    %228 = vmatprep.subr.mxu0 0.0
    %229 = vmatpush2.msra.mxu0 0.0
    %230 = vmatprep.subr.mxu0 0.0
    %231 = vmatpush2.msra.mxu0 0.0
    %232 = vmatprep.subr.mxu0 0.0
    %233 = vmatpush2.msra.mxu0 0.0
    %234 = vmatprep.subr.mxu0 0.0
    %235 = vmatpush2.msra.mxu0 0.0
    %236 = vmatprep.subr.mxu0 0.0
    %237 = vmatpush2.msra.mxu0 0.0
    %238 = vmatprep.subr.mxu0 0.0
    %239 = vmatpush2.msra.mxu0 0.0
    %240 = vmatprep.subr.mxu0 0.0
    %241 = vmatpush2.msra.mxu0 0.0
    %242 = vmatprep.subr.mxu0 0.0
    %243 = vmatpush2.msra.mxu0 0.0
    %244 = vmatprep.subr.mxu0 0.0
    %245 = vmatpush2.msra.mxu0 0.0
    %246 = vmatprep.mubr.f32.mxu0 0.0
    %247 = vmatmul.mubr.f32.gmra.mxu0 %v122
    %v248 = vpop.f32.mrf.mxu0
    %v249 = vadd.f32 %v113, %v248
    %v250 = vpop.f32.mrf.mxu0
    %v251 = vadd.f32 %v113, %v250
    %252 = vmatprep.mubr.f32.mxu0 0.0
    %253 = vmatmul.mubr.f32.gmra.mxu0 %v125
    %v254 = vpop.f32.mrf.mxu0
    %v255 = vadd.f32 %v118, %v254
    %v256 = vpop.f32.mrf.mxu0
    %v257 = vadd.f32 %v118, %v256
    %258 = vdwg.mxu0
    %259 = vmatprep.subr.mxu0 0.0
    %260 = vmatpush1.msra.mxu0 0.0
    %261 = vmatprep.subr.mxu0 0.0
    %262 = vmatpush1.msra.mxu0 0.0
    %263 = vmatprep.subr.mxu0 0.0
    %264 = vmatpush1.msra.mxu0 0.0
    %265 = vmatprep.subr.mxu0 0.0
    %266 = vmatpush1.msra.mxu0 0.0
    %267 = vmatprep.subr.mxu0 0.0
    %268 = vmatpush1.msra.mxu0 0.0
    %269 = vmatprep.subr.mxu0 0.0
    %270 = vmatpush1.msra.mxu0 0.0
    %271 = vmatprep.subr.mxu0 0.0
    %272 = vmatpush1.msra.mxu0 0.0
    %273 = vmatprep.subr.mxu0 0.0
    %274 = vmatpush1.msra.mxu0 0.0
    %275 = vmatprep.subr.mxu0 0.0
    %276 = vmatpush1.msra.mxu0 0.0
    %277 = vmatprep.subr.mxu0 0.0
    %278 = vmatpush1.msra.mxu0 0.0
    %279 = vmatprep.subr.mxu0 0.0
    %280 = vmatpush1.msra.mxu0 0.0
    %281 = vmatprep.subr.mxu0 0.0
    %282 = vmatpush1.msra.mxu0 0.0
    %283 = vmatprep.subr.mxu0 %v138
    %284 = vmatpush1.msra.mxu0 %v135
    %285 = vmatprep.subr.mxu0 %v75
    %286 = vmatpush1.msra.mxu0 %v74
    %287 = vmatprep.subr.mxu0 %v57
    %288 = vmatpush1.msra.mxu0 %v56
    %289 = vmatprep.subr.mxu0 %v39
    %290 = vmatpush1.msra.mxu0 %v38
    %291 = vmatprep.subr.mxu0 0.0
    %292 = vmatpush2.msra.mxu0 0.0
    %293 = vmatprep.subr.mxu0 0.0
    %294 = vmatpush2.msra.mxu0 0.0
    %295 = vmatprep.subr.mxu0 0.0
    %296 = vmatpush2.msra.mxu0 0.0
    %297 = vmatprep.subr.mxu0 0.0
    %298 = vmatpush2.msra.mxu0 0.0
    %299 = vmatprep.subr.mxu0 0.0
    %300 = vmatpush2.msra.mxu0 0.0
    %301 = vmatprep.subr.mxu0 0.0
    %302 = vmatpush2.msra.mxu0 0.0
    %303 = vmatprep.subr.mxu0 0.0
    %304 = vmatpush2.msra.mxu0 0.0
    %305 = vmatprep.subr.mxu0 0.0
    %306 = vmatpush2.msra.mxu0 0.0
    %307 = vmatprep.subr.mxu0 0.0
    %308 = vmatpush2.msra.mxu0 0.0
    %309 = vmatprep.subr.mxu0 0.0
    %310 = vmatpush2.msra.mxu0 0.0
    %311 = vmatprep.subr.mxu0 0.0
    %312 = vmatpush2.msra.mxu0 0.0
    %313 = vmatprep.subr.mxu0 0.0
    %314 = vmatpush2.msra.mxu0 0.0
    %315 = vmatprep.subr.mxu0 0.0
    %316 = vmatpush2.msra.mxu0 0.0
    %317 = vmatprep.subr.mxu0 0.0
    %318 = vmatpush2.msra.mxu0 0.0
    %319 = vmatprep.subr.mxu0 0.0
    %320 = vmatpush2.msra.mxu0 0.0
    %321 = vmatprep.subr.mxu0 0.0
    %322 = vmatpush2.msra.mxu0 0.0
    %323 = vmatprep.mubr.f32.mxu0 0.0
    %324 = vmatmul.mubr.f32.gmra.mxu0 %v122
    %v325 = vpop.f32.mrf.mxu0
    %v326 = vadd.f32 %v113, %v325
    %v327 = vpop.f32.mrf.mxu0
    %v328 = vadd.f32 %v113, %v327
    %329 = vmatprep.mubr.f32.mxu0 0.0
    %330 = vmatmul.mubr.f32.gmra.mxu0 %v125
    %v331 = vpop.f32.mrf.mxu0
    %v332 = vadd.f32 %v118, %v331
    %v333 = vpop.f32.mrf.mxu0
    %v334 = vadd.f32 %v118, %v333
    %335 = vdwg.mxu0
    %336 = vmatprep.subr.mxu0 0.0
    %337 = vmatpush1.msra.mxu0 0.0
    %338 = vmatprep.subr.mxu0 0.0
    %339 = vmatpush1.msra.mxu0 0.0
    %340 = vmatprep.subr.mxu0 0.0
    %341 = vmatpush1.msra.mxu0 0.0
    %342 = vmatprep.subr.mxu0 0.0
    %343 = vmatpush1.msra.mxu0 0.0
    %344 = vmatprep.subr.mxu0 0.0
    %345 = vmatpush1.msra.mxu0 0.0
    %346 = vmatprep.subr.mxu0 0.0
    %347 = vmatpush1.msra.mxu0 0.0
    %348 = vmatprep.subr.mxu0 0.0
    %349 = vmatpush1.msra.mxu0 0.0
    %350 = vmatprep.subr.mxu0 0.0
    %351 = vmatpush1.msra.mxu0 0.0
    %352 = vmatprep.subr.mxu0 0.0
    %353 = vmatpush1.msra.mxu0 0.0
    %354 = vmatprep.subr.mxu0 0.0
    %355 = vmatpush1.msra.mxu0 0.0
    %356 = vmatprep.subr.mxu0 0.0
    %357 = vmatpush1.msra.mxu0 0.0
    %358 = vmatprep.subr.mxu0 0.0
    %359 = vmatpush1.msra.mxu0 0.0
    %360 = vmatprep.subr.mxu0 %v144
    %361 = vmatpush1.msra.mxu0 %v141
    %362 = vmatprep.subr.mxu0 %v77
    %363 = vmatpush1.msra.mxu0 %v76
    %364 = vmatprep.subr.mxu0 %v59
    %365 = vmatpush1.msra.mxu0 %v58
    %366 = vmatprep.subr.mxu0 %v41
    %367 = vmatpush1.msra.mxu0 %v40
    %368 = vmatprep.subr.mxu0 0.0
    %369 = vmatpush2.msra.mxu0 0.0
    %370 = vmatprep.subr.mxu0 0.0
    %371 = vmatpush2.msra.mxu0 0.0
    %372 = vmatprep.subr.mxu0 0.0
    %373 = vmatpush2.msra.mxu0 0.0
    %374 = vmatprep.subr.mxu0 0.0
    %375 = vmatpush2.msra.mxu0 0.0
    %376 = vmatprep.subr.mxu0 0.0
    %377 = vmatpush2.msra.mxu0 0.0
    %378 = vmatprep.subr.mxu0 0.0
    %379 = vmatpush2.msra.mxu0 0.0
    %380 = vmatprep.subr.mxu0 0.0
    %381 = vmatpush2.msra.mxu0 0.0
    %382 = vmatprep.subr.mxu0 0.0
    %383 = vmatpush2.msra.mxu0 0.0
    %384 = vmatprep.subr.mxu0 0.0
    %385 = vmatpush2.msra.mxu0 0.0
    %386 = vmatprep.subr.mxu0 0.0
    %387 = vmatpush2.msra.mxu0 0.0
    %388 = vmatprep.subr.mxu0 0.0
    %389 = vmatpush2.msra.mxu0 0.0
    %390 = vmatprep.subr.mxu0 0.0
    %391 = vmatpush2.msra.mxu0 0.0
    %392 = vmatprep.subr.mxu0 0.0
    %393 = vmatpush2.msra.mxu0 0.0
    %394 = vmatprep.subr.mxu0 0.0
    %395 = vmatpush2.msra.mxu0 0.0
    %396 = vmatprep.subr.mxu0 0.0
    %397 = vmatpush2.msra.mxu0 0.0
    %398 = vmatprep.subr.mxu0 0.0
    %399 = vmatpush2.msra.mxu0 0.0
    %400 = vmatprep.mubr.f32.mxu0 0.0
    %401 = vmatmul.mubr.f32.gmra.mxu0 %v122
    %v402 = vpop.f32.mrf.mxu0
    %v403 = vadd.f32 %v113, %v402
    %v404 = vpop.f32.mrf.mxu0
    %v405 = vadd.f32 %v113, %v404
    %406 = vmatprep.mubr.f32.mxu0 0.0
    %407 = vmatmul.mubr.f32.gmra.mxu0 %v125
    %v408 = vpop.f32.mrf.mxu0
    %v409 = vadd.f32 %v118, %v408
    %v410 = vpop.f32.mrf.mxu0
    %v411 = vadd.f32 %v118, %v410
    %412 = vdwg.mxu0
    %413 = vmatprep.subr.mxu0 0.0
    %414 = vmatpush1.msra.mxu0 0.0
    %415 = vmatprep.subr.mxu0 0.0
    %416 = vmatpush1.msra.mxu0 0.0
    %417 = vmatprep.subr.mxu0 0.0
    %418 = vmatpush1.msra.mxu0 0.0
    %419 = vmatprep.subr.mxu0 0.0
    %420 = vmatpush1.msra.mxu0 0.0
    %421 = vmatprep.subr.mxu0 0.0
    %422 = vmatpush1.msra.mxu0 0.0
    %423 = vmatprep.subr.mxu0 0.0
    %424 = vmatpush1.msra.mxu0 0.0
    %425 = vmatprep.subr.mxu0 0.0
    %426 = vmatpush1.msra.mxu0 0.0
    %427 = vmatprep.subr.mxu0 0.0
    %428 = vmatpush1.msra.mxu0 0.0
    %429 = vmatprep.subr.mxu0 0.0
    %430 = vmatpush1.msra.mxu0 0.0
    %431 = vmatprep.subr.mxu0 0.0
    %432 = vmatpush1.msra.mxu0 0.0
    %433 = vmatprep.subr.mxu0 0.0
    %434 = vmatpush1.msra.mxu0 0.0
    %435 = vmatprep.subr.mxu0 0.0
    %436 = vmatpush1.msra.mxu0 0.0
    %437 = vmatprep.subr.mxu0 %v150
    %438 = vmatpush1.msra.mxu0 %v147
    %439 = vmatprep.subr.mxu0 %v79
    %440 = vmatpush1.msra.mxu0 %v78
    %441 = vmatprep.subr.mxu0 %v61
    %442 = vmatpush1.msra.mxu0 %v60
    %443 = vmatprep.subr.mxu0 %v43
    %444 = vmatpush1.msra.mxu0 %v42
    %445 = vmatprep.subr.mxu0 0.0
    %446 = vmatpush2.msra.mxu0 0.0
    %447 = vmatprep.subr.mxu0 0.0
    %448 = vmatpush2.msra.mxu0 0.0
    %449 = vmatprep.subr.mxu0 0.0
    %450 = vmatpush2.msra.mxu0 0.0
    %451 = vmatprep.subr.mxu0 0.0
    %452 = vmatpush2.msra.mxu0 0.0
    %453 = vmatprep.subr.mxu0 0.0
    %454 = vmatpush2.msra.mxu0 0.0
    %455 = vmatprep.subr.mxu0 0.0
    %456 = vmatpush2.msra.mxu0 0.0
    %457 = vmatprep.subr.mxu0 0.0
    %458 = vmatpush2.msra.mxu0 0.0
    %459 = vmatprep.subr.mxu0 0.0
    %460 = vmatpush2.msra.mxu0 0.0
    %461 = vmatprep.subr.mxu0 0.0
    %462 = vmatpush2.msra.mxu0 0.0
    %463 = vmatprep.subr.mxu0 0.0
    %464 = vmatpush2.msra.mxu0 0.0
    %465 = vmatprep.subr.mxu0 0.0
    %466 = vmatpush2.msra.mxu0 0.0
    %467 = vmatprep.subr.mxu0 0.0
    %468 = vmatpush2.msra.mxu0 0.0
    %469 = vmatprep.subr.mxu0 0.0
    %470 = vmatpush2.msra.mxu0 0.0
    %471 = vmatprep.subr.mxu0 0.0
    %472 = vmatpush2.msra.mxu0 0.0
    %473 = vmatprep.subr.mxu0 0.0
    %474 = vmatpush2.msra.mxu0 0.0
    %475 = vmatprep.subr.mxu0 0.0
    %476 = vmatpush2.msra.mxu0 0.0
    %477 = vmatprep.mubr.f32.mxu0 0.0
    %478 = vmatmul.mubr.f32.gmra.mxu0 %v122
    %v479 = vpop.f32.mrf.mxu0
    %v480 = vadd.f32 %v113, %v479
    %v481 = vpop.f32.mrf.mxu0
    %v482 = vadd.f32 %v113, %v481
    %483 = vmatprep.mubr.f32.mxu0 0.0
    %484 = vmatmul.mubr.f32.gmra.mxu0 %v125
    %v485 = vpop.f32.mrf.mxu0
    %v486 = vadd.f32 %v118, %v485
    %v487 = vpop.f32.mrf.mxu0
    %v488 = vadd.f32 %v118, %v487
    %489 = vdwg.mxu0
    %490 = vmatprep.subr.mxu0 0.0
    %491 = vmatpush1.msra.mxu0 0.0
    %492 = vmatprep.subr.mxu0 0.0
    %493 = vmatpush1.msra.mxu0 0.0
    %494 = vmatprep.subr.mxu0 0.0
    %495 = vmatpush1.msra.mxu0 0.0
    %496 = vmatprep.subr.mxu0 0.0
    %497 = vmatpush1.msra.mxu0 0.0
    %498 = vmatprep.subr.mxu0 0.0
    %499 = vmatpush1.msra.mxu0 0.0
    %500 = vmatprep.subr.mxu0 0.0
    %501 = vmatpush1.msra.mxu0 0.0
    %502 = vmatprep.subr.mxu0 0.0
    %503 = vmatpush1.msra.mxu0 0.0
    %504 = vmatprep.subr.mxu0 0.0
    %505 = vmatpush1.msra.mxu0 0.0
    %506 = vmatprep.subr.mxu0 0.0
    %507 = vmatpush1.msra.mxu0 0.0
    %508 = vmatprep.subr.mxu0 0.0
    %509 = vmatpush1.msra.mxu0 0.0
    %510 = vmatprep.subr.mxu0 0.0
    %511 = vmatpush1.msra.mxu0 0.0
    %512 = vmatprep.subr.mxu0 0.0
    %513 = vmatpush1.msra.mxu0 0.0
    %514 = vmatprep.subr.mxu0 %v156
    %515 = vmatpush1.msra.mxu0 %v153
    %516 = vmatprep.subr.mxu0 %v81
    %517 = vmatpush1.msra.mxu0 %v80
    %518 = vmatprep.subr.mxu0 %v63
    %519 = vmatpush1.msra.mxu0 %v62
    %520 = vmatprep.subr.mxu0 %v45
    %521 = vmatpush1.msra.mxu0 %v44
    %522 = vmatprep.subr.mxu0 0.0
    %523 = vmatpush2.msra.mxu0 0.0
    %524 = vmatprep.subr.mxu0 0.0
    %525 = vmatpush2.msra.mxu0 0.0
    %526 = vmatprep.subr.mxu0 0.0
    %527 = vmatpush2.msra.mxu0 0.0
    %528 = vmatprep.subr.mxu0 0.0
    %529 = vmatpush2.msra.mxu0 0.0
    %530 = vmatprep.subr.mxu0 0.0
    %531 = vmatpush2.msra.mxu0 0.0
    %532 = vmatprep.subr.mxu0 0.0
    %533 = vmatpush2.msra.mxu0 0.0
    %534 = vmatprep.subr.mxu0 0.0
    %535 = vmatpush2.msra.mxu0 0.0
    %536 = vmatprep.subr.mxu0 0.0
    %537 = vmatpush2.msra.mxu0 0.0
    %538 = vmatprep.subr.mxu0 0.0
    %539 = vmatpush2.msra.mxu0 0.0
    %540 = vmatprep.subr.mxu0 0.0
    %541 = vmatpush2.msra.mxu0 0.0
    %542 = vmatprep.subr.mxu0 0.0
    %543 = vmatpush2.msra.mxu0 0.0
    %544 = vmatprep.subr.mxu0 0.0
    %545 = vmatpush2.msra.mxu0 0.0
    %546 = vmatprep.subr.mxu0 0.0
    %547 = vmatpush2.msra.mxu0 0.0
    %548 = vmatprep.subr.mxu0 0.0
    %549 = vmatpush2.msra.mxu0 0.0
    %550 = vmatprep.subr.mxu0 0.0
    %551 = vmatpush2.msra.mxu0 0.0
    %552 = vmatprep.subr.mxu0 0.0
    %553 = vmatpush2.msra.mxu0 0.0
    %554 = vmatprep.mubr.f32.mxu0 0.0
    %555 = vmatmul.mubr.f32.gmra.mxu0 %v122
    %v556 = vpop.f32.mrf.mxu0
    %v557 = vadd.f32 %v113, %v556
    %v558 = vpop.f32.mrf.mxu0
    %v559 = vadd.f32 %v113, %v558
    %560 = vmatprep.mubr.f32.mxu0 0.0
    %561 = vmatmul.mubr.f32.gmra.mxu0 %v125
    %v562 = vpop.f32.mrf.mxu0
    %v563 = vadd.f32 %v118, %v562
    %v564 = vpop.f32.mrf.mxu0
    %v565 = vadd.f32 %v118, %v564
    %566 = vdwg.mxu0
    %567 = vmatprep.subr.mxu0 0.0
    %568 = vmatpush1.msra.mxu0 0.0
    %569 = vmatprep.subr.mxu0 0.0
    %570 = vmatpush1.msra.mxu0 0.0
    %571 = vmatprep.subr.mxu0 0.0
    %572 = vmatpush1.msra.mxu0 0.0
    %573 = vmatprep.subr.mxu0 0.0
    %574 = vmatpush1.msra.mxu0 0.0
    %575 = vmatprep.subr.mxu0 0.0
    %576 = vmatpush1.msra.mxu0 0.0
    %577 = vmatprep.subr.mxu0 0.0
    %578 = vmatpush1.msra.mxu0 0.0
    %579 = vmatprep.subr.mxu0 0.0
    %580 = vmatpush1.msra.mxu0 0.0
    %581 = vmatprep.subr.mxu0 0.0
    %582 = vmatpush1.msra.mxu0 0.0
    %583 = vmatprep.subr.mxu0 0.0
    %584 = vmatpush1.msra.mxu0 0.0
    %585 = vmatprep.subr.mxu0 0.0
    %586 = vmatpush1.msra.mxu0 0.0
    %587 = vmatprep.subr.mxu0 0.0
    %588 = vmatpush1.msra.mxu0 0.0
    %589 = vmatprep.subr.mxu0 0.0
    %590 = vmatpush1.msra.mxu0 0.0
    %591 = vmatprep.subr.mxu0 %v162
    %592 = vmatpush1.msra.mxu0 %v159
    %593 = vmatprep.subr.mxu0 %v83
    %594 = vmatpush1.msra.mxu0 %v82
    %595 = vmatprep.subr.mxu0 %v65
    %596 = vmatpush1.msra.mxu0 %v64
    %597 = vmatprep.subr.mxu0 %v47
    %598 = vmatpush1.msra.mxu0 %v46
    %599 = vmatprep.subr.mxu0 0.0
    %600 = vmatpush2.msra.mxu0 0.0
    %601 = vmatprep.subr.mxu0 0.0
    %602 = vmatpush2.msra.mxu0 0.0
    %603 = vmatprep.subr.mxu0 0.0
    %604 = vmatpush2.msra.mxu0 0.0
    %605 = vmatprep.subr.mxu0 0.0
    %606 = vmatpush2.msra.mxu0 0.0
    %607 = vmatprep.subr.mxu0 0.0
    %608 = vmatpush2.msra.mxu0 0.0
    %609 = vmatprep.subr.mxu0 0.0
    %610 = vmatpush2.msra.mxu0 0.0
    %611 = vmatprep.subr.mxu0 0.0
    %612 = vmatpush2.msra.mxu0 0.0
    %613 = vmatprep.subr.mxu0 0.0
    %614 = vmatpush2.msra.mxu0 0.0
    %615 = vmatprep.subr.mxu0 0.0
    %616 = vmatpush2.msra.mxu0 0.0
    %617 = vmatprep.subr.mxu0 0.0
    %618 = vmatpush2.msra.mxu0 0.0
    %619 = vmatprep.subr.mxu0 0.0
    %620 = vmatpush2.msra.mxu0 0.0
    %621 = vmatprep.subr.mxu0 0.0
    %622 = vmatpush2.msra.mxu0 0.0
    %623 = vmatprep.subr.mxu0 0.0
    %624 = vmatpush2.msra.mxu0 0.0
    %625 = vmatprep.subr.mxu0 0.0
    %626 = vmatpush2.msra.mxu0 0.0
    %627 = vmatprep.subr.mxu0 0.0
    %628 = vmatpush2.msra.mxu0 0.0
    %629 = vmatprep.subr.mxu0 0.0
    %630 = vmatpush2.msra.mxu0 0.0
    %631 = vmatprep.mubr.f32.mxu0 0.0
    %632 = vmatmul.mubr.f32.gmra.mxu0 %v122
    %v633 = vpop.f32.mrf.mxu0
    %v634 = vadd.f32 %v113, %v633
    %v635 = vpop.f32.mrf.mxu0
    %v636 = vadd.f32 %v113, %v635
    %637 = vmatprep.mubr.f32.mxu0 0.0
    %638 = vmatmul.mubr.f32.gmra.mxu0 %v125
    %v639 = vpop.f32.mrf.mxu0
    %v640 = vadd.f32 %v118, %v639
    %v641 = vpop.f32.mrf.mxu0
    %v642 = vadd.f32 %v118, %v641
    %643 = vdwg.mxu0
    %644 = vmatprep.subr.mxu0 0.0
    %645 = vmatpush1.msra.mxu0 0.0
    %646 = vmatprep.subr.mxu0 0.0
    %647 = vmatpush1.msra.mxu0 0.0
    %648 = vmatprep.subr.mxu0 0.0
    %649 = vmatpush1.msra.mxu0 0.0
    %650 = vmatprep.subr.mxu0 0.0
    %651 = vmatpush1.msra.mxu0 0.0
    %652 = vmatprep.subr.mxu0 0.0
    %653 = vmatpush1.msra.mxu0 0.0
    %654 = vmatprep.subr.mxu0 0.0
    %655 = vmatpush1.msra.mxu0 0.0
    %656 = vmatprep.subr.mxu0 0.0
    %657 = vmatpush1.msra.mxu0 0.0
    %658 = vmatprep.subr.mxu0 0.0
    %659 = vmatpush1.msra.mxu0 0.0
    %660 = vmatprep.subr.mxu0 0.0
    %661 = vmatpush1.msra.mxu0 0.0
    %662 = vmatprep.subr.mxu0 0.0
    %663 = vmatpush1.msra.mxu0 0.0
    %664 = vmatprep.subr.mxu0 0.0
    %665 = vmatpush1.msra.mxu0 0.0
    %666 = vmatprep.subr.mxu0 0.0
    %667 = vmatpush1.msra.mxu0 0.0
    %668 = vmatprep.subr.mxu0 %v168
    %669 = vmatpush1.msra.mxu0 %v165
    %670 = vmatprep.subr.mxu0 %v85
    %671 = vmatpush1.msra.mxu0 %v84
    %672 = vmatprep.subr.mxu0 %v67
    %673 = vmatpush1.msra.mxu0 %v66
    %674 = vmatprep.subr.mxu0 %v49
    %675 = vmatpush1.msra.mxu0 %v48
    %676 = vmatprep.subr.mxu0 0.0
    %677 = vmatpush2.msra.mxu0 0.0
    %678 = vmatprep.subr.mxu0 0.0
    %679 = vmatpush2.msra.mxu0 0.0
    %680 = vmatprep.subr.mxu0 0.0
    %681 = vmatpush2.msra.mxu0 0.0
    %682 = vmatprep.subr.mxu0 0.0
    %683 = vmatpush2.msra.mxu0 0.0
    %684 = vmatprep.subr.mxu0 0.0
    %685 = vmatpush2.msra.mxu0 0.0
    %686 = vmatprep.subr.mxu0 0.0
    %687 = vmatpush2.msra.mxu0 0.0
    %688 = vmatprep.subr.mxu0 0.0
    %689 = vmatpush2.msra.mxu0 0.0
    %690 = vmatprep.subr.mxu0 0.0
    %691 = vmatpush2.msra.mxu0 0.0
    %692 = vmatprep.subr.mxu0 0.0
    %693 = vmatpush2.msra.mxu0 0.0
    %694 = vmatprep.subr.mxu0 0.0
    %695 = vmatpush2.msra.mxu0 0.0
    %696 = vmatprep.subr.mxu0 0.0
    %697 = vmatpush2.msra.mxu0 0.0
    %698 = vmatprep.subr.mxu0 0.0
    %699 = vmatpush2.msra.mxu0 0.0
    %700 = vmatprep.subr.mxu0 0.0
    %701 = vmatpush2.msra.mxu0 0.0
    %702 = vmatprep.subr.mxu0 0.0
    %703 = vmatpush2.msra.mxu0 0.0
    %704 = vmatprep.subr.mxu0 0.0
    %705 = vmatpush2.msra.mxu0 0.0
    %706 = vmatprep.subr.mxu0 0.0
    %707 = vmatpush2.msra.mxu0 0.0
    %708 = vmatprep.mubr.f32.mxu0 0.0
    %709 = vmatmul.mubr.f32.gmra.mxu0 %v122
    %v710 = vpop.f32.mrf.mxu0
    %v711 = vadd.f32 %v113, %v710
    %v712 = vpop.f32.mrf.mxu0
    %v713 = vadd.f32 %v113, %v712
    %714 = vmatprep.mubr.f32.mxu0 0.0
    %715 = vmatmul.mubr.f32.gmra.mxu0 %v125
    %v716 = vpop.f32.mrf.mxu0
    %v717 = vadd.f32 %v118, %v716
    %v718 = vpop.f32.mrf.mxu0
    %v719 = vadd.f32 %v118, %v718
    %720 = vdwg.mxu0
    %721 = vmatprep.subr.mxu0 0.0
    %722 = vmatpush1.msra.mxu0 0.0
    %723 = vmatprep.subr.mxu0 0.0
    %724 = vmatpush1.msra.mxu0 0.0
    %725 = vmatprep.subr.mxu0 0.0
    %726 = vmatpush1.msra.mxu0 0.0
    %727 = vmatprep.subr.mxu0 0.0
    %728 = vmatpush1.msra.mxu0 0.0
    %729 = vmatprep.subr.mxu0 0.0
    %730 = vmatpush1.msra.mxu0 0.0
    %731 = vmatprep.subr.mxu0 0.0
    %732 = vmatpush1.msra.mxu0 0.0
    %733 = vmatprep.subr.mxu0 0.0
    %734 = vmatpush1.msra.mxu0 0.0
    %735 = vmatprep.subr.mxu0 0.0
    %736 = vmatpush1.msra.mxu0 0.0
    %737 = vmatprep.subr.mxu0 0.0
    %738 = vmatpush1.msra.mxu0 0.0
    %739 = vmatprep.subr.mxu0 0.0
    %740 = vmatpush1.msra.mxu0 0.0
    %741 = vmatprep.subr.mxu0 0.0
    %742 = vmatpush1.msra.mxu0 0.0
    %743 = vmatprep.subr.mxu0 0.0
    %744 = vmatpush1.msra.mxu0 0.0
    %745 = vmatprep.subr.mxu0 %v174
    %746 = vmatpush1.msra.mxu0 %v171
    %747 = vmatprep.subr.mxu0 %v87
    %748 = vmatpush1.msra.mxu0 %v86
    %749 = vmatprep.subr.mxu0 %v69
    %750 = vmatpush1.msra.mxu0 %v68
    %751 = vmatprep.subr.mxu0 %v51
    %752 = vmatpush1.msra.mxu0 %v50
    %753 = vmatprep.subr.mxu0 0.0
    %754 = vmatpush2.msra.mxu0 0.0
    %755 = vmatprep.subr.mxu0 0.0
    %756 = vmatpush2.msra.mxu0 0.0
    %757 = vmatprep.subr.mxu0 0.0
    %758 = vmatpush2.msra.mxu0 0.0
    %759 = vmatprep.subr.mxu0 0.0
    %760 = vmatpush2.msra.mxu0 0.0
    %761 = vmatprep.subr.mxu0 0.0
    %762 = vmatpush2.msra.mxu0 0.0
    %763 = vmatprep.subr.mxu0 0.0
    %764 = vmatpush2.msra.mxu0 0.0
    %765 = vmatprep.subr.mxu0 0.0
    %766 = vmatpush2.msra.mxu0 0.0
    %767 = vmatprep.subr.mxu0 0.0
    %768 = vmatpush2.msra.mxu0 0.0
    %769 = vmatprep.subr.mxu0 0.0
    %770 = vmatpush2.msra.mxu0 0.0
    %771 = vmatprep.subr.mxu0 0.0
    %772 = vmatpush2.msra.mxu0 0.0
    %773 = vmatprep.subr.mxu0 0.0
    %774 = vmatpush2.msra.mxu0 0.0
    %775 = vmatprep.subr.mxu0 0.0
    %776 = vmatpush2.msra.mxu0 0.0
    %777 = vmatprep.subr.mxu0 0.0
    %778 = vmatpush2.msra.mxu0 0.0
    %779 = vmatprep.subr.mxu0 0.0
    %780 = vmatpush2.msra.mxu0 0.0
    %781 = vmatprep.subr.mxu0 0.0
    %782 = vmatpush2.msra.mxu0 0.0
    %783 = vmatprep.subr.mxu0 0.0
    %784 = vmatpush2.msra.mxu0 0.0
    %785 = vmatprep.mubr.f32.mxu0 0.0
    %786 = vmatmul.mubr.f32.gmra.mxu0 %v122
    %v787 = vpop.f32.mrf.mxu0
    %v788 = vadd.f32 %v113, %v787
    %v789 = vpop.f32.mrf.mxu0
    %v790 = vadd.f32 %v113, %v789
    %791 = vmatprep.mubr.f32.mxu0 0.0
    %792 = vmatmul.mubr.f32.gmra.mxu0 %v125
    %v793 = vpop.f32.mrf.mxu0
    %v794 = vadd.f32 %v118, %v793
    %v795 = vpop.f32.mrf.mxu0
    %v796 = vadd.f32 %v118, %v795
    %797 = vdwg.mxu0
    %798 = vmatprep.subr.mxu0 0.0
    %799 = vmatpush1.msra.mxu0 0.0
    %800 = vmatprep.subr.mxu0 0.0
    %801 = vmatpush1.msra.mxu0 0.0
    %802 = vmatprep.subr.mxu0 0.0
    %803 = vmatpush1.msra.mxu0 0.0
    %804 = vmatprep.subr.mxu0 0.0
    %805 = vmatpush1.msra.mxu0 0.0
    %806 = vmatprep.subr.mxu0 0.0
    %807 = vmatpush1.msra.mxu0 0.0
    %808 = vmatprep.subr.mxu0 0.0
    %809 = vmatpush1.msra.mxu0 0.0
    %810 = vmatprep.subr.mxu0 0.0
    %811 = vmatpush1.msra.mxu0 0.0
    %812 = vmatprep.subr.mxu0 0.0
    %813 = vmatpush1.msra.mxu0 0.0
    %814 = vmatprep.subr.mxu0 0.0
    %815 = vmatpush1.msra.mxu0 0.0
    %816 = vmatprep.subr.mxu0 0.0
    %817 = vmatpush1.msra.mxu0 0.0
    %818 = vmatprep.subr.mxu0 0.0
    %819 = vmatpush1.msra.mxu0 0.0
    %820 = vmatprep.subr.mxu0 0.0
    %821 = vmatpush1.msra.mxu0 0.0
    %822 = vmatprep.subr.mxu0 %v180
    %823 = vmatpush1.msra.mxu0 %v177
    %824 = vmatprep.subr.mxu0 %v89
    %825 = vmatpush1.msra.mxu0 %v88
    %826 = vmatprep.subr.mxu0 %v71
    %827 = vmatpush1.msra.mxu0 %v70
    %828 = vmatprep.subr.mxu0 %v53
    %829 = vmatpush1.msra.mxu0 %v52
    %830 = vmatprep.subr.mxu0 0.0
    %831 = vmatpush2.msra.mxu0 0.0
    %832 = vmatprep.subr.mxu0 0.0
    %833 = vmatpush2.msra.mxu0 0.0
    %834 = vmatprep.subr.mxu0 0.0
    %835 = vmatpush2.msra.mxu0 0.0
    %836 = vmatprep.subr.mxu0 0.0
    %837 = vmatpush2.msra.mxu0 0.0
    %838 = vmatprep.subr.mxu0 0.0
    %839 = vmatpush2.msra.mxu0 0.0
    %840 = vmatprep.subr.mxu0 0.0
    %841 = vmatpush2.msra.mxu0 0.0
    %842 = vmatprep.subr.mxu0 0.0
    %843 = vmatpush2.msra.mxu0 0.0
    %844 = vmatprep.subr.mxu0 0.0
    %845 = vmatpush2.msra.mxu0 0.0
    %846 = vmatprep.subr.mxu0 0.0
    %847 = vmatpush2.msra.mxu0 0.0
    %848 = vmatprep.subr.mxu0 0.0
    %849 = vmatpush2.msra.mxu0 0.0
    %850 = vmatprep.subr.mxu0 0.0
    %851 = vmatpush2.msra.mxu0 0.0
    %852 = vmatprep.subr.mxu0 0.0
    %853 = vmatpush2.msra.mxu0 0.0
    %854 = vmatprep.subr.mxu0 0.0
    %855 = vmatpush2.msra.mxu0 0.0
    %856 = vmatprep.subr.mxu0 0.0
    %857 = vmatpush2.msra.mxu0 0.0
    %858 = vmatprep.subr.mxu0 0.0
    %859 = vmatpush2.msra.mxu0 0.0
    %860 = vmatprep.subr.mxu0 0.0
    %861 = vmatpush2.msra.mxu0 0.0
    %862 = vmatprep.mubr.f32.mxu0 0.0
    %863 = vmatmul.mubr.f32.gmra.mxu0 %v122
    %v864 = vpop.f32.mrf.mxu0
    %v865 = vadd.f32 %v113, %v864
    %v866 = vpop.f32.mrf.mxu0
    %v867 = vadd.f32 %v113, %v866
    %868 = vmatprep.mubr.f32.mxu0 0.0
    %869 = vmatmul.mubr.f32.gmra.mxu0 %v125
    %v870 = vpop.f32.mrf.mxu0
    %v871 = vadd.f32 %v118, %v870
    %v872 = vpop.f32.mrf.mxu0
    %v873 = vadd.f32 %v118, %v872
    %874 = vdwg.mxu0
    %v875 = vtanh.pop %v249
    %v876 = vtanh.pop %v251
    %v877 = vtanh.pop %v326
    %v878 = vtanh.pop %v328
    %v879 = vtanh.pop %v403
    %v880 = vtanh.pop %v405
    %v881 = vtanh.pop %v480
    %v882 = vtanh.pop %v482
    %v883 = vtanh.pop %v557
    %v884 = vtanh.pop %v559
    %v885 = vtanh.pop %v634
    %v886 = vtanh.pop %v636
    %v887 = vtanh.pop %v711
    %v888 = vtanh.pop %v713
    %v889 = vtanh.pop %v788
    %v890 = vtanh.pop %v790
    %v891 = vtanh.pop %v865
    %v892 = vtanh.pop %v867
    %v893 = vtanh.pop %v255
    %v894 = vtanh.pop %v257
    %v895 = vtanh.pop %v332
    %v896 = vtanh.pop %v334
    %v897 = vtanh.pop %v409
    %v898 = vtanh.pop %v411
    %v899 = vtanh.pop %v486
    %v900 = vtanh.pop %v488
    %v901 = vtanh.pop %v563
    %v902 = vtanh.pop %v565
    %v903 = vtanh.pop %v640
    %v904 = vtanh.pop %v642
    %v905 = vtanh.pop %v717
    %v906 = vtanh.pop %v719
    %v907 = vtanh.pop %v794
    %v908 = vtanh.pop %v796
    %v909 = vtanh.pop %v871
    %v910 = vtanh.pop %v873
    %v911 = vld [vmem:[%s3] sm:$0xff]
    %v912 = vld [vmem:[%s3 + $0x8] sm:$0xff]
    %v913 = vld [vmem:[%s3 + $0x10] sm:$0xff]
    %v914 = vld [vmem:[%s3 + $0x18] sm:$0xff]
    %s915 = scalar_lea.vmem %s3, 32
    %v916 = vld [vmem:[%s915] sm:$0xff]
    %v917 = vld [vmem:[%s915 + $0x8] sm:$0xff]
    %v918 = vld [vmem:[%s915 + $0x10] sm:$0xff]
    %v919 = vld [vmem:[%s915 + $0x18] sm:$0xff]
    %vm920 = vcmask 130048
    %v922 = vsel %vm920, %v916, 0
    %v925 = vsel %vm920, %v917, 0
    %v928 = vsel %vm920, %v918, 0
    %v931 = vsel %vm920, %v919, 0
    %933 = vmatprep.subr.mxu0 0.0
    %934 = vmatpush1.msra.mxu0 0.0
    %935 = vmatprep.subr.mxu0 0.0
    %936 = vmatpush1.msra.mxu0 0.0
    %937 = vmatprep.subr.mxu0 0.0
    %938 = vmatpush1.msra.mxu0 0.0
    %939 = vmatprep.subr.mxu0 0.0
    %940 = vmatpush1.msra.mxu0 0.0
    %941 = vmatprep.subr.mxu0 0.0
    %942 = vmatpush1.msra.mxu0 0.0
    %943 = vmatprep.subr.mxu0 0.0
    %944 = vmatpush1.msra.mxu0 0.0
    %945 = vmatprep.subr.mxu0 0.0
    %946 = vmatpush1.msra.mxu0 0.0
    %947 = vmatprep.subr.mxu0 0.0
    %948 = vmatpush1.msra.mxu0 0.0
    %949 = vmatprep.subr.mxu0 0.0
    %950 = vmatpush1.msra.mxu0 0.0
    %951 = vmatprep.subr.mxu0 0.0
    %952 = vmatpush1.msra.mxu0 0.0
    %953 = vmatprep.subr.mxu0 0.0
    %954 = vmatpush1.msra.mxu0 0.0
    %955 = vmatprep.subr.mxu0 0.0
    %956 = vmatpush1.msra.mxu0 0.0
    %957 = vmatprep.subr.mxu0 0.0
    %958 = vmatpush1.msra.mxu0 0.0
    %959 = vmatprep.subr.mxu0 0.0
    %960 = vmatpush1.msra.mxu0 0.0
    %961 = vmatprep.subr.mxu0 %v896
    %962 = vmatpush1.msra.mxu0 %v895
    %963 = vmatprep.subr.mxu0 %v878
    %964 = vmatpush1.msra.mxu0 %v877
    %965 = vmatprep.subr.mxu0 0.0
    %966 = vmatpush2.msra.mxu0 0.0
    %967 = vmatprep.subr.mxu0 0.0
    %968 = vmatpush2.msra.mxu0 0.0
    %969 = vmatprep.subr.mxu0 0.0
    %970 = vmatpush2.msra.mxu0 0.0
    %971 = vmatprep.subr.mxu0 0.0
    %972 = vmatpush2.msra.mxu0 0.0
    %973 = vmatprep.subr.mxu0 0.0
    %974 = vmatpush2.msra.mxu0 0.0
    %975 = vmatprep.subr.mxu0 0.0
    %976 = vmatpush2.msra.mxu0 0.0
    %977 = vmatprep.subr.mxu0 0.0
    %978 = vmatpush2.msra.mxu0 0.0
    %979 = vmatprep.subr.mxu0 0.0
    %980 = vmatpush2.msra.mxu0 0.0
    %981 = vmatprep.subr.mxu0 0.0
    %982 = vmatpush2.msra.mxu0 0.0
    %983 = vmatprep.subr.mxu0 0.0
    %984 = vmatpush2.msra.mxu0 0.0
    %985 = vmatprep.subr.mxu0 0.0
    %986 = vmatpush2.msra.mxu0 0.0
    %987 = vmatprep.subr.mxu0 0.0
    %988 = vmatpush2.msra.mxu0 0.0
    %989 = vmatprep.subr.mxu0 0.0
    %990 = vmatpush2.msra.mxu0 0.0
    %991 = vmatprep.subr.mxu0 0.0
    %992 = vmatpush2.msra.mxu0 0.0
    %993 = vmatprep.subr.mxu0 0.0
    %994 = vmatpush2.msra.mxu0 0.0
    %995 = vmatprep.subr.mxu0 0.0
    %996 = vmatpush2.msra.mxu0 0.0
    %997 = vmatprep.mubr.f32.mxu0 0.0
    %998 = vmatmul.mubr.f32.gmra.mxu0 %v922
    %v999 = vpop.f32.mrf.mxu0
    %v1000 = vadd.f32 0.0, %v999
    %v1001 = vpop.f32.mrf.mxu0
    %v1002 = vadd.f32 0.0, %v1001
    %1003 = vmatprep.mubr.f32.mxu0 0.0
    %1004 = vmatmul.mubr.f32.gmra.mxu0 %v925
    %v1005 = vpop.f32.mrf.mxu0
    %v1006 = vadd.f32 0.0, %v1005
    %v1007 = vpop.f32.mrf.mxu0
    %v1008 = vadd.f32 0.0, %v1007
    %1009 = vmatprep.mubr.f32.mxu0 0.0
    %1010 = vmatmul.mubr.f32.gmra.mxu0 %v928
    %v1011 = vpop.f32.mrf.mxu0
    %v1012 = vadd.f32 0.0, %v1011
    %v1013 = vpop.f32.mrf.mxu0
    %v1014 = vadd.f32 0.0, %v1013
    %1015 = vmatprep.mubr.f32.mxu0 0.0
    %1016 = vmatmul.mubr.f32.gmra.mxu0 %v931
    %v1017 = vpop.f32.mrf.mxu0
    %v1018 = vadd.f32 0.0, %v1017
    %v1019 = vpop.f32.mrf.mxu0
    %v1020 = vadd.f32 0.0, %v1019
    %1021 = vdwg.mxu0
    %v1023 = vsel %vm920, %v911, 0
    %v1026 = vsel %vm920, %v912, 0
    %v1029 = vsel %vm920, %v913, 0
    %v1032 = vsel %vm920, %v914, 0
    %1034 = vmatprep.subr.mxu0 0.0
    %1035 = vmatpush1.msra.mxu0 0.0
    %1036 = vmatprep.subr.mxu0 0.0
    %1037 = vmatpush1.msra.mxu0 0.0
    %1038 = vmatprep.subr.mxu0 0.0
    %1039 = vmatpush1.msra.mxu0 0.0
    %1040 = vmatprep.subr.mxu0 0.0
    %1041 = vmatpush1.msra.mxu0 0.0
    %1042 = vmatprep.subr.mxu0 0.0
    %1043 = vmatpush1.msra.mxu0 0.0
    %1044 = vmatprep.subr.mxu0 0.0
    %1045 = vmatpush1.msra.mxu0 0.0
    %1046 = vmatprep.subr.mxu0 0.0
    %1047 = vmatpush1.msra.mxu0 0.0
    %1048 = vmatprep.subr.mxu0 0.0
    %1049 = vmatpush1.msra.mxu0 0.0
    %1050 = vmatprep.subr.mxu0 0.0
    %1051 = vmatpush1.msra.mxu0 0.0
    %1052 = vmatprep.subr.mxu0 0.0
    %1053 = vmatpush1.msra.mxu0 0.0
    %1054 = vmatprep.subr.mxu0 0.0
    %1055 = vmatpush1.msra.mxu0 0.0
    %1056 = vmatprep.subr.mxu0 0.0
    %1057 = vmatpush1.msra.mxu0 0.0
    %1058 = vmatprep.subr.mxu0 0.0
    %1059 = vmatpush1.msra.mxu0 0.0
    %1060 = vmatprep.subr.mxu0 0.0
    %1061 = vmatpush1.msra.mxu0 0.0
    %1062 = vmatprep.subr.mxu0 %v894
    %1063 = vmatpush1.msra.mxu0 %v893
    %1064 = vmatprep.subr.mxu0 %v876
    %1065 = vmatpush1.msra.mxu0 %v875
    %1066 = vmatprep.subr.mxu0 0.0
    %1067 = vmatpush2.msra.mxu0 0.0
    %1068 = vmatprep.subr.mxu0 0.0
    %1069 = vmatpush2.msra.mxu0 0.0
    %1070 = vmatprep.subr.mxu0 0.0
    %1071 = vmatpush2.msra.mxu0 0.0
    %1072 = vmatprep.subr.mxu0 0.0
    %1073 = vmatpush2.msra.mxu0 0.0
    %1074 = vmatprep.subr.mxu0 0.0
    %1075 = vmatpush2.msra.mxu0 0.0
    %1076 = vmatprep.subr.mxu0 0.0
    %1077 = vmatpush2.msra.mxu0 0.0
    %1078 = vmatprep.subr.mxu0 0.0
    %1079 = vmatpush2.msra.mxu0 0.0
    %1080 = vmatprep.subr.mxu0 0.0
    %1081 = vmatpush2.msra.mxu0 0.0
    %1082 = vmatprep.subr.mxu0 0.0
    %1083 = vmatpush2.msra.mxu0 0.0
    %1084 = vmatprep.subr.mxu0 0.0
    %1085 = vmatpush2.msra.mxu0 0.0
    %1086 = vmatprep.subr.mxu0 0.0
    %1087 = vmatpush2.msra.mxu0 0.0
    %1088 = vmatprep.subr.mxu0 0.0
    %1089 = vmatpush2.msra.mxu0 0.0
    %1090 = vmatprep.subr.mxu0 0.0
    %1091 = vmatpush2.msra.mxu0 0.0
    %1092 = vmatprep.subr.mxu0 0.0
    %1093 = vmatpush2.msra.mxu0 0.0
    %1094 = vmatprep.subr.mxu0 0.0
    %1095 = vmatpush2.msra.mxu0 0.0
    %1096 = vmatprep.subr.mxu0 0.0
    %1097 = vmatpush2.msra.mxu0 0.0
    %1098 = vmatprep.mubr.f32.mxu0 0.0
    %1099 = vmatmul.mubr.f32.gmra.mxu0 %v1023
    %v1100 = vpop.f32.mrf.mxu0
    %v1101 = vadd.f32 %v1000, %v1100
    %v1102 = vpop.f32.mrf.mxu0
    %v1103 = vadd.f32 %v1002, %v1102
    %1104 = vmatprep.mubr.f32.mxu0 0.0
    %1105 = vmatmul.mubr.f32.gmra.mxu0 %v1026
    %v1106 = vpop.f32.mrf.mxu0
    %v1107 = vadd.f32 %v1006, %v1106
    %v1108 = vpop.f32.mrf.mxu0
    %v1109 = vadd.f32 %v1008, %v1108
    %1110 = vmatprep.mubr.f32.mxu0 0.0
    %1111 = vmatmul.mubr.f32.gmra.mxu0 %v1029
    %v1112 = vpop.f32.mrf.mxu0
    %v1113 = vadd.f32 %v1012, %v1112
    %v1114 = vpop.f32.mrf.mxu0
    %v1115 = vadd.f32 %v1014, %v1114
    %1116 = vmatprep.mubr.f32.mxu0 0.0
    %1117 = vmatmul.mubr.f32.gmra.mxu0 %v1032
    %v1118 = vpop.f32.mrf.mxu0
    %v1119 = vadd.f32 %v1018, %v1118
    %v1120 = vpop.f32.mrf.mxu0
    %v1121 = vadd.f32 %v1020, %v1120
    %1122 = vdwg.mxu0
    %s1123 = scalar_lea.vmem %s3, 64
    %v1124 = vld [vmem:[%s1123] sm:$0xff]
    %v1125 = vld [vmem:[%s1123 + $0x8] sm:$0xff]
    %v1126 = vld [vmem:[%s1123 + $0x10] sm:$0xff]
    %v1127 = vld [vmem:[%s1123 + $0x18] sm:$0xff]
    %v1129 = vsel %vm920, %v1124, 0
    %v1132 = vsel %vm920, %v1125, 0
    %v1135 = vsel %vm920, %v1126, 0
    %v1138 = vsel %vm920, %v1127, 0
    %1140 = vmatprep.subr.mxu0 0.0
    %1141 = vmatpush1.msra.mxu0 0.0
    %1142 = vmatprep.subr.mxu0 0.0
    %1143 = vmatpush1.msra.mxu0 0.0
    %1144 = vmatprep.subr.mxu0 0.0
    %1145 = vmatpush1.msra.mxu0 0.0
    %1146 = vmatprep.subr.mxu0 0.0
    %1147 = vmatpush1.msra.mxu0 0.0
    %1148 = vmatprep.subr.mxu0 0.0
    %1149 = vmatpush1.msra.mxu0 0.0
    %1150 = vmatprep.subr.mxu0 0.0
    %1151 = vmatpush1.msra.mxu0 0.0
    %1152 = vmatprep.subr.mxu0 0.0
    %1153 = vmatpush1.msra.mxu0 0.0
    %1154 = vmatprep.subr.mxu0 0.0
    %1155 = vmatpush1.msra.mxu0 0.0
    %1156 = vmatprep.subr.mxu0 0.0
    %1157 = vmatpush1.msra.mxu0 0.0
    %1158 = vmatprep.subr.mxu0 0.0
    %1159 = vmatpush1.msra.mxu0 0.0
    %1160 = vmatprep.subr.mxu0 0.0
    %1161 = vmatpush1.msra.mxu0 0.0
    %1162 = vmatprep.subr.mxu0 0.0
    %1163 = vmatpush1.msra.mxu0 0.0
    %1164 = vmatprep.subr.mxu0 0.0
    %1165 = vmatpush1.msra.mxu0 0.0
    %1166 = vmatprep.subr.mxu0 0.0
    %1167 = vmatpush1.msra.mxu0 0.0
    %1168 = vmatprep.subr.mxu0 %v898
    %1169 = vmatpush1.msra.mxu0 %v897
    %1170 = vmatprep.subr.mxu0 %v880
    %1171 = vmatpush1.msra.mxu0 %v879
    %1172 = vmatprep.subr.mxu0 0.0
    %1173 = vmatpush2.msra.mxu0 0.0
    %1174 = vmatprep.subr.mxu0 0.0
    %1175 = vmatpush2.msra.mxu0 0.0
    %1176 = vmatprep.subr.mxu0 0.0
    %1177 = vmatpush2.msra.mxu0 0.0
    %1178 = vmatprep.subr.mxu0 0.0
    %1179 = vmatpush2.msra.mxu0 0.0
    %1180 = vmatprep.subr.mxu0 0.0
    %1181 = vmatpush2.msra.mxu0 0.0
    %1182 = vmatprep.subr.mxu0 0.0
    %1183 = vmatpush2.msra.mxu0 0.0
    %1184 = vmatprep.subr.mxu0 0.0
    %1185 = vmatpush2.msra.mxu0 0.0
    %1186 = vmatprep.subr.mxu0 0.0
    %1187 = vmatpush2.msra.mxu0 0.0
    %1188 = vmatprep.subr.mxu0 0.0
    %1189 = vmatpush2.msra.mxu0 0.0
    %1190 = vmatprep.subr.mxu0 0.0
    %1191 = vmatpush2.msra.mxu0 0.0
    %1192 = vmatprep.subr.mxu0 0.0
    %1193 = vmatpush2.msra.mxu0 0.0
    %1194 = vmatprep.subr.mxu0 0.0
    %1195 = vmatpush2.msra.mxu0 0.0
    %1196 = vmatprep.subr.mxu0 0.0
    %1197 = vmatpush2.msra.mxu0 0.0
    %1198 = vmatprep.subr.mxu0 0.0
    %1199 = vmatpush2.msra.mxu0 0.0
    %1200 = vmatprep.subr.mxu0 0.0
    %1201 = vmatpush2.msra.mxu0 0.0
    %1202 = vmatprep.subr.mxu0 0.0
    %1203 = vmatpush2.msra.mxu0 0.0
    %1204 = vmatprep.mubr.f32.mxu0 0.0
    %1205 = vmatmul.mubr.f32.gmra.mxu0 %v1129
    %v1206 = vpop.f32.mrf.mxu0
    %v1207 = vadd.f32 0.0, %v1206
    %v1208 = vpop.f32.mrf.mxu0
    %v1209 = vadd.f32 0.0, %v1208
    %1210 = vmatprep.mubr.f32.mxu0 0.0
    %1211 = vmatmul.mubr.f32.gmra.mxu0 %v1132
    %v1212 = vpop.f32.mrf.mxu0
    %v1213 = vadd.f32 0.0, %v1212
    %v1214 = vpop.f32.mrf.mxu0
    %v1215 = vadd.f32 0.0, %v1214
    %1216 = vmatprep.mubr.f32.mxu0 0.0
    %1217 = vmatmul.mubr.f32.gmra.mxu0 %v1135
    %v1218 = vpop.f32.mrf.mxu0
    %v1219 = vadd.f32 0.0, %v1218
    %v1220 = vpop.f32.mrf.mxu0
    %v1221 = vadd.f32 0.0, %v1220
    %1222 = vmatprep.mubr.f32.mxu0 0.0
    %1223 = vmatmul.mubr.f32.gmra.mxu0 %v1138
    %v1224 = vpop.f32.mrf.mxu0
    %v1225 = vadd.f32 0.0, %v1224
    %v1226 = vpop.f32.mrf.mxu0
    %v1227 = vadd.f32 0.0, %v1226
    %1228 = vdwg.mxu0
    %v1229 = vadd.f32 %v1101, %v1207
    %v1230 = vadd.f32 %v1103, %v1209
    %v1231 = vadd.f32 %v1107, %v1213
    %v1232 = vadd.f32 %v1109, %v1215
    %v1233 = vadd.f32 %v1113, %v1219
    %v1234 = vadd.f32 %v1115, %v1221
    %v1235 = vadd.f32 %v1119, %v1225
    %v1236 = vadd.f32 %v1121, %v1227
    %s1237 = scalar_lea.vmem %s3, 96
    %v1238 = vld [vmem:[%s1237] sm:$0xff]
    %v1239 = vld [vmem:[%s1237 + $0x8] sm:$0xff]
    %v1240 = vld [vmem:[%s1237 + $0x10] sm:$0xff]
    %v1241 = vld [vmem:[%s1237 + $0x18] sm:$0xff]
    %v1243 = vsel %vm920, %v1238, 0
    %v1246 = vsel %vm920, %v1239, 0
    %v1249 = vsel %vm920, %v1240, 0
    %v1252 = vsel %vm920, %v1241, 0
    %1254 = vmatprep.subr.mxu0 0.0
    %1255 = vmatpush1.msra.mxu0 0.0
    %1256 = vmatprep.subr.mxu0 0.0
    %1257 = vmatpush1.msra.mxu0 0.0
    %1258 = vmatprep.subr.mxu0 0.0
    %1259 = vmatpush1.msra.mxu0 0.0
    %1260 = vmatprep.subr.mxu0 0.0
    %1261 = vmatpush1.msra.mxu0 0.0
    %1262 = vmatprep.subr.mxu0 0.0
    %1263 = vmatpush1.msra.mxu0 0.0
    %1264 = vmatprep.subr.mxu0 0.0
    %1265 = vmatpush1.msra.mxu0 0.0
    %1266 = vmatprep.subr.mxu0 0.0
    %1267 = vmatpush1.msra.mxu0 0.0
    %1268 = vmatprep.subr.mxu0 0.0
    %1269 = vmatpush1.msra.mxu0 0.0
    %1270 = vmatprep.subr.mxu0 0.0
    %1271 = vmatpush1.msra.mxu0 0.0
    %1272 = vmatprep.subr.mxu0 0.0
    %1273 = vmatpush1.msra.mxu0 0.0
    %1274 = vmatprep.subr.mxu0 0.0
    %1275 = vmatpush1.msra.mxu0 0.0
    %1276 = vmatprep.subr.mxu0 0.0
    %1277 = vmatpush1.msra.mxu0 0.0
    %1278 = vmatprep.subr.mxu0 0.0
    %1279 = vmatpush1.msra.mxu0 0.0
    %1280 = vmatprep.subr.mxu0 0.0
    %1281 = vmatpush1.msra.mxu0 0.0
    %1282 = vmatprep.subr.mxu0 %v900
    %1283 = vmatpush1.msra.mxu0 %v899
    %1284 = vmatprep.subr.mxu0 %v882
    %1285 = vmatpush1.msra.mxu0 %v881
    %1286 = vmatprep.subr.mxu0 0.0
    %1287 = vmatpush2.msra.mxu0 0.0
    %1288 = vmatprep.subr.mxu0 0.0
    %1289 = vmatpush2.msra.mxu0 0.0
    %1290 = vmatprep.subr.mxu0 0.0
    %1291 = vmatpush2.msra.mxu0 0.0
    %1292 = vmatprep.subr.mxu0 0.0
    %1293 = vmatpush2.msra.mxu0 0.0
    %1294 = vmatprep.subr.mxu0 0.0
    %1295 = vmatpush2.msra.mxu0 0.0
    %1296 = vmatprep.subr.mxu0 0.0
    %1297 = vmatpush2.msra.mxu0 0.0
    %1298 = vmatprep.subr.mxu0 0.0
    %1299 = vmatpush2.msra.mxu0 0.0
    %1300 = vmatprep.subr.mxu0 0.0
    %1301 = vmatpush2.msra.mxu0 0.0
    %1302 = vmatprep.subr.mxu0 0.0
    %1303 = vmatpush2.msra.mxu0 0.0
    %1304 = vmatprep.subr.mxu0 0.0
    %1305 = vmatpush2.msra.mxu0 0.0
    %1306 = vmatprep.subr.mxu0 0.0
    %1307 = vmatpush2.msra.mxu0 0.0
    %1308 = vmatprep.subr.mxu0 0.0
    %1309 = vmatpush2.msra.mxu0 0.0
    %1310 = vmatprep.subr.mxu0 0.0
    %1311 = vmatpush2.msra.mxu0 0.0
    %1312 = vmatprep.subr.mxu0 0.0
    %1313 = vmatpush2.msra.mxu0 0.0
    %1314 = vmatprep.subr.mxu0 0.0
    %1315 = vmatpush2.msra.mxu0 0.0
    %1316 = vmatprep.subr.mxu0 0.0
    %1317 = vmatpush2.msra.mxu0 0.0
    %1318 = vmatprep.mubr.f32.mxu0 0.0
    %1319 = vmatmul.mubr.f32.gmra.mxu0 %v1243
    %v1320 = vpop.f32.mrf.mxu0
    %v1321 = vadd.f32 0.0, %v1320
    %v1322 = vpop.f32.mrf.mxu0
    %v1323 = vadd.f32 0.0, %v1322
    %1324 = vmatprep.mubr.f32.mxu0 0.0
    %1325 = vmatmul.mubr.f32.gmra.mxu0 %v1246
    %v1326 = vpop.f32.mrf.mxu0
    %v1327 = vadd.f32 0.0, %v1326
    %v1328 = vpop.f32.mrf.mxu0
    %v1329 = vadd.f32 0.0, %v1328
    %1330 = vmatprep.mubr.f32.mxu0 0.0
    %1331 = vmatmul.mubr.f32.gmra.mxu0 %v1249
    %v1332 = vpop.f32.mrf.mxu0
    %v1333 = vadd.f32 0.0, %v1332
    %v1334 = vpop.f32.mrf.mxu0
    %v1335 = vadd.f32 0.0, %v1334
    %1336 = vmatprep.mubr.f32.mxu0 0.0
    %1337 = vmatmul.mubr.f32.gmra.mxu0 %v1252
    %v1338 = vpop.f32.mrf.mxu0
    %v1339 = vadd.f32 0.0, %v1338
    %v1340 = vpop.f32.mrf.mxu0
    %v1341 = vadd.f32 0.0, %v1340
    %1342 = vdwg.mxu0
    %v1343 = vadd.f32 %v1229, %v1321
    %v1344 = vadd.f32 %v1230, %v1323
    %v1345 = vadd.f32 %v1231, %v1327
    %v1346 = vadd.f32 %v1232, %v1329
    %v1347 = vadd.f32 %v1233, %v1333
    %v1348 = vadd.f32 %v1234, %v1335
    %v1349 = vadd.f32 %v1235, %v1339
    %v1350 = vadd.f32 %v1236, %v1341
    %s1351 = scalar_lea.vmem %s3, 128
    %v1352 = vld [vmem:[%s1351] sm:$0xff]
    %v1353 = vld [vmem:[%s1351 + $0x8] sm:$0xff]
    %v1354 = vld [vmem:[%s1351 + $0x10] sm:$0xff]
    %v1355 = vld [vmem:[%s1351 + $0x18] sm:$0xff]
    %v1357 = vsel %vm920, %v1352, 0
    %v1360 = vsel %vm920, %v1353, 0
    %v1363 = vsel %vm920, %v1354, 0
    %v1366 = vsel %vm920, %v1355, 0
    %1368 = vmatprep.subr.mxu0 0.0
    %1369 = vmatpush1.msra.mxu0 0.0
    %1370 = vmatprep.subr.mxu0 0.0
    %1371 = vmatpush1.msra.mxu0 0.0
    %1372 = vmatprep.subr.mxu0 0.0
    %1373 = vmatpush1.msra.mxu0 0.0
    %1374 = vmatprep.subr.mxu0 0.0
    %1375 = vmatpush1.msra.mxu0 0.0
    %1376 = vmatprep.subr.mxu0 0.0
    %1377 = vmatpush1.msra.mxu0 0.0
    %1378 = vmatprep.subr.mxu0 0.0
    %1379 = vmatpush1.msra.mxu0 0.0
    %1380 = vmatprep.subr.mxu0 0.0
    %1381 = vmatpush1.msra.mxu0 0.0
    %1382 = vmatprep.subr.mxu0 0.0
    %1383 = vmatpush1.msra.mxu0 0.0
    %1384 = vmatprep.subr.mxu0 0.0
    %1385 = vmatpush1.msra.mxu0 0.0
    %1386 = vmatprep.subr.mxu0 0.0
    %1387 = vmatpush1.msra.mxu0 0.0
    %1388 = vmatprep.subr.mxu0 0.0
    %1389 = vmatpush1.msra.mxu0 0.0
    %1390 = vmatprep.subr.mxu0 0.0
    %1391 = vmatpush1.msra.mxu0 0.0
    %1392 = vmatprep.subr.mxu0 0.0
    %1393 = vmatpush1.msra.mxu0 0.0
    %1394 = vmatprep.subr.mxu0 0.0
    %1395 = vmatpush1.msra.mxu0 0.0
    %1396 = vmatprep.subr.mxu0 %v902
    %1397 = vmatpush1.msra.mxu0 %v901
    %1398 = vmatprep.subr.mxu0 %v884
    %1399 = vmatpush1.msra.mxu0 %v883
    %1400 = vmatprep.subr.mxu0 0.0
    %1401 = vmatpush2.msra.mxu0 0.0
    %1402 = vmatprep.subr.mxu0 0.0
    %1403 = vmatpush2.msra.mxu0 0.0
    %1404 = vmatprep.subr.mxu0 0.0
    %1405 = vmatpush2.msra.mxu0 0.0
    %1406 = vmatprep.subr.mxu0 0.0
    %1407 = vmatpush2.msra.mxu0 0.0
    %1408 = vmatprep.subr.mxu0 0.0
    %1409 = vmatpush2.msra.mxu0 0.0
    %1410 = vmatprep.subr.mxu0 0.0
    %1411 = vmatpush2.msra.mxu0 0.0
    %1412 = vmatprep.subr.mxu0 0.0
    %1413 = vmatpush2.msra.mxu0 0.0
    %1414 = vmatprep.subr.mxu0 0.0
    %1415 = vmatpush2.msra.mxu0 0.0
    %1416 = vmatprep.subr.mxu0 0.0
    %1417 = vmatpush2.msra.mxu0 0.0
    %1418 = vmatprep.subr.mxu0 0.0
    %1419 = vmatpush2.msra.mxu0 0.0
    %1420 = vmatprep.subr.mxu0 0.0
    %1421 = vmatpush2.msra.mxu0 0.0
    %1422 = vmatprep.subr.mxu0 0.0
    %1423 = vmatpush2.msra.mxu0 0.0
    %1424 = vmatprep.subr.mxu0 0.0
    %1425 = vmatpush2.msra.mxu0 0.0
    %1426 = vmatprep.subr.mxu0 0.0
    %1427 = vmatpush2.msra.mxu0 0.0
    %1428 = vmatprep.subr.mxu0 0.0
    %1429 = vmatpush2.msra.mxu0 0.0
    %1430 = vmatprep.subr.mxu0 0.0
    %1431 = vmatpush2.msra.mxu0 0.0
    %1432 = vmatprep.mubr.f32.mxu0 0.0
    %1433 = vmatmul.mubr.f32.gmra.mxu0 %v1357
    %v1434 = vpop.f32.mrf.mxu0
    %v1435 = vadd.f32 0.0, %v1434
    %v1436 = vpop.f32.mrf.mxu0
    %v1437 = vadd.f32 0.0, %v1436
    %1438 = vmatprep.mubr.f32.mxu0 0.0
    %1439 = vmatmul.mubr.f32.gmra.mxu0 %v1360
    %v1440 = vpop.f32.mrf.mxu0
    %v1441 = vadd.f32 0.0, %v1440
    %v1442 = vpop.f32.mrf.mxu0
    %v1443 = vadd.f32 0.0, %v1442
    %1444 = vmatprep.mubr.f32.mxu0 0.0
    %1445 = vmatmul.mubr.f32.gmra.mxu0 %v1363
    %v1446 = vpop.f32.mrf.mxu0
    %v1447 = vadd.f32 0.0, %v1446
    %v1448 = vpop.f32.mrf.mxu0
    %v1449 = vadd.f32 0.0, %v1448
    %1450 = vmatprep.mubr.f32.mxu0 0.0
    %1451 = vmatmul.mubr.f32.gmra.mxu0 %v1366
    %v1452 = vpop.f32.mrf.mxu0
    %v1453 = vadd.f32 0.0, %v1452
    %v1454 = vpop.f32.mrf.mxu0
    %v1455 = vadd.f32 0.0, %v1454
    %1456 = vdwg.mxu0
    %v1457 = vadd.f32 %v1343, %v1435
    %v1458 = vadd.f32 %v1344, %v1437
    %v1459 = vadd.f32 %v1345, %v1441
    %v1460 = vadd.f32 %v1346, %v1443
    %v1461 = vadd.f32 %v1347, %v1447
    %v1462 = vadd.f32 %v1348, %v1449
    %v1463 = vadd.f32 %v1349, %v1453
    %v1464 = vadd.f32 %v1350, %v1455
    %s1465 = scalar_lea.vmem %s3, 160
    %v1466 = vld [vmem:[%s1465] sm:$0xff]
    %v1467 = vld [vmem:[%s1465 + $0x8] sm:$0xff]
    %v1468 = vld [vmem:[%s1465 + $0x10] sm:$0xff]
    %v1469 = vld [vmem:[%s1465 + $0x18] sm:$0xff]
    %v1471 = vsel %vm920, %v1466, 0
    %v1474 = vsel %vm920, %v1467, 0
    %v1477 = vsel %vm920, %v1468, 0
    %v1480 = vsel %vm920, %v1469, 0
    %1482 = vmatprep.subr.mxu0 0.0
    %1483 = vmatpush1.msra.mxu0 0.0
    %1484 = vmatprep.subr.mxu0 0.0
    %1485 = vmatpush1.msra.mxu0 0.0
    %1486 = vmatprep.subr.mxu0 0.0
    %1487 = vmatpush1.msra.mxu0 0.0
    %1488 = vmatprep.subr.mxu0 0.0
    %1489 = vmatpush1.msra.mxu0 0.0
    %1490 = vmatprep.subr.mxu0 0.0
    %1491 = vmatpush1.msra.mxu0 0.0
    %1492 = vmatprep.subr.mxu0 0.0
    %1493 = vmatpush1.msra.mxu0 0.0
    %1494 = vmatprep.subr.mxu0 0.0
    %1495 = vmatpush1.msra.mxu0 0.0
    %1496 = vmatprep.subr.mxu0 0.0
    %1497 = vmatpush1.msra.mxu0 0.0
    %1498 = vmatprep.subr.mxu0 0.0
    %1499 = vmatpush1.msra.mxu0 0.0
    %1500 = vmatprep.subr.mxu0 0.0
    %1501 = vmatpush1.msra.mxu0 0.0
    %1502 = vmatprep.subr.mxu0 0.0
    %1503 = vmatpush1.msra.mxu0 0.0
    %1504 = vmatprep.subr.mxu0 0.0
    %1505 = vmatpush1.msra.mxu0 0.0
    %1506 = vmatprep.subr.mxu0 0.0
    %1507 = vmatpush1.msra.mxu0 0.0
    %1508 = vmatprep.subr.mxu0 0.0
    %1509 = vmatpush1.msra.mxu0 0.0
    %1510 = vmatprep.subr.mxu0 %v904
    %1511 = vmatpush1.msra.mxu0 %v903
    %1512 = vmatprep.subr.mxu0 %v886
    %1513 = vmatpush1.msra.mxu0 %v885
    %1514 = vmatprep.subr.mxu0 0.0
    %1515 = vmatpush2.msra.mxu0 0.0
    %1516 = vmatprep.subr.mxu0 0.0
    %1517 = vmatpush2.msra.mxu0 0.0
    %1518 = vmatprep.subr.mxu0 0.0
    %1519 = vmatpush2.msra.mxu0 0.0
    %1520 = vmatprep.subr.mxu0 0.0
    %1521 = vmatpush2.msra.mxu0 0.0
    %1522 = vmatprep.subr.mxu0 0.0
    %1523 = vmatpush2.msra.mxu0 0.0
    %1524 = vmatprep.subr.mxu0 0.0
    %1525 = vmatpush2.msra.mxu0 0.0
    %1526 = vmatprep.subr.mxu0 0.0
    %1527 = vmatpush2.msra.mxu0 0.0
    %1528 = vmatprep.subr.mxu0 0.0
    %1529 = vmatpush2.msra.mxu0 0.0
    %1530 = vmatprep.subr.mxu0 0.0
    %1531 = vmatpush2.msra.mxu0 0.0
    %1532 = vmatprep.subr.mxu0 0.0
    %1533 = vmatpush2.msra.mxu0 0.0
    %1534 = vmatprep.subr.mxu0 0.0
    %1535 = vmatpush2.msra.mxu0 0.0
    %1536 = vmatprep.subr.mxu0 0.0
    %1537 = vmatpush2.msra.mxu0 0.0
    %1538 = vmatprep.subr.mxu0 0.0
    %1539 = vmatpush2.msra.mxu0 0.0
    %1540 = vmatprep.subr.mxu0 0.0
    %1541 = vmatpush2.msra.mxu0 0.0
    %1542 = vmatprep.subr.mxu0 0.0
    %1543 = vmatpush2.msra.mxu0 0.0
    %1544 = vmatprep.subr.mxu0 0.0
    %1545 = vmatpush2.msra.mxu0 0.0
    %1546 = vmatprep.mubr.f32.mxu0 0.0
    %1547 = vmatmul.mubr.f32.gmra.mxu0 %v1471
    %v1548 = vpop.f32.mrf.mxu0
    %v1549 = vadd.f32 0.0, %v1548
    %v1550 = vpop.f32.mrf.mxu0
    %v1551 = vadd.f32 0.0, %v1550
    %1552 = vmatprep.mubr.f32.mxu0 0.0
    %1553 = vmatmul.mubr.f32.gmra.mxu0 %v1474
    %v1554 = vpop.f32.mrf.mxu0
    %v1555 = vadd.f32 0.0, %v1554
    %v1556 = vpop.f32.mrf.mxu0
    %v1557 = vadd.f32 0.0, %v1556
    %1558 = vmatprep.mubr.f32.mxu0 0.0
    %1559 = vmatmul.mubr.f32.gmra.mxu0 %v1477
    %v1560 = vpop.f32.mrf.mxu0
    %v1561 = vadd.f32 0.0, %v1560
    %v1562 = vpop.f32.mrf.mxu0
    %v1563 = vadd.f32 0.0, %v1562
    %1564 = vmatprep.mubr.f32.mxu0 0.0
    %1565 = vmatmul.mubr.f32.gmra.mxu0 %v1480
    %v1566 = vpop.f32.mrf.mxu0
    %v1567 = vadd.f32 0.0, %v1566
    %v1568 = vpop.f32.mrf.mxu0
    %v1569 = vadd.f32 0.0, %v1568
    %1570 = vdwg.mxu0
    %v1571 = vadd.f32 %v1457, %v1549
    %v1572 = vadd.f32 %v1458, %v1551
    %v1573 = vadd.f32 %v1459, %v1555
    %v1574 = vadd.f32 %v1460, %v1557
    %v1575 = vadd.f32 %v1461, %v1561
    %v1576 = vadd.f32 %v1462, %v1563
    %v1577 = vadd.f32 %v1463, %v1567
    %v1578 = vadd.f32 %v1464, %v1569
    %s1579 = scalar_lea.vmem %s3, 192
    %v1580 = vld [vmem:[%s1579] sm:$0xff]
    %v1581 = vld [vmem:[%s1579 + $0x8] sm:$0xff]
    %v1582 = vld [vmem:[%s1579 + $0x10] sm:$0xff]
    %v1583 = vld [vmem:[%s1579 + $0x18] sm:$0xff]
    %v1585 = vsel %vm920, %v1580, 0
    %v1588 = vsel %vm920, %v1581, 0
    %v1591 = vsel %vm920, %v1582, 0
    %v1594 = vsel %vm920, %v1583, 0
    %1596 = vmatprep.subr.mxu0 0.0
    %1597 = vmatpush1.msra.mxu0 0.0
    %1598 = vmatprep.subr.mxu0 0.0
    %1599 = vmatpush1.msra.mxu0 0.0
    %1600 = vmatprep.subr.mxu0 0.0
    %1601 = vmatpush1.msra.mxu0 0.0
    %1602 = vmatprep.subr.mxu0 0.0
    %1603 = vmatpush1.msra.mxu0 0.0
    %1604 = vmatprep.subr.mxu0 0.0
    %1605 = vmatpush1.msra.mxu0 0.0
    %1606 = vmatprep.subr.mxu0 0.0
    %1607 = vmatpush1.msra.mxu0 0.0
    %1608 = vmatprep.subr.mxu0 0.0
    %1609 = vmatpush1.msra.mxu0 0.0
    %1610 = vmatprep.subr.mxu0 0.0
    %1611 = vmatpush1.msra.mxu0 0.0
    %1612 = vmatprep.subr.mxu0 0.0
    %1613 = vmatpush1.msra.mxu0 0.0
    %1614 = vmatprep.subr.mxu0 0.0
    %1615 = vmatpush1.msra.mxu0 0.0
    %1616 = vmatprep.subr.mxu0 0.0
    %1617 = vmatpush1.msra.mxu0 0.0
    %1618 = vmatprep.subr.mxu0 0.0
    %1619 = vmatpush1.msra.mxu0 0.0
    %1620 = vmatprep.subr.mxu0 0.0
    %1621 = vmatpush1.msra.mxu0 0.0
    %1622 = vmatprep.subr.mxu0 0.0
    %1623 = vmatpush1.msra.mxu0 0.0
    %1624 = vmatprep.subr.mxu0 %v906
    %1625 = vmatpush1.msra.mxu0 %v905
    %1626 = vmatprep.subr.mxu0 %v888
    %1627 = vmatpush1.msra.mxu0 %v887
    %1628 = vmatprep.subr.mxu0 0.0
    %1629 = vmatpush2.msra.mxu0 0.0
    %1630 = vmatprep.subr.mxu0 0.0
    %1631 = vmatpush2.msra.mxu0 0.0
    %1632 = vmatprep.subr.mxu0 0.0
    %1633 = vmatpush2.msra.mxu0 0.0
    %1634 = vmatprep.subr.mxu0 0.0
    %1635 = vmatpush2.msra.mxu0 0.0
    %1636 = vmatprep.subr.mxu0 0.0
    %1637 = vmatpush2.msra.mxu0 0.0
    %1638 = vmatprep.subr.mxu0 0.0
    %1639 = vmatpush2.msra.mxu0 0.0
    %1640 = vmatprep.subr.mxu0 0.0
    %1641 = vmatpush2.msra.mxu0 0.0
    %1642 = vmatprep.subr.mxu0 0.0
    %1643 = vmatpush2.msra.mxu0 0.0
    %1644 = vmatprep.subr.mxu0 0.0
    %1645 = vmatpush2.msra.mxu0 0.0
    %1646 = vmatprep.subr.mxu0 0.0
    %1647 = vmatpush2.msra.mxu0 0.0
    %1648 = vmatprep.subr.mxu0 0.0
    %1649 = vmatpush2.msra.mxu0 0.0
    %1650 = vmatprep.subr.mxu0 0.0
    %1651 = vmatpush2.msra.mxu0 0.0
    %1652 = vmatprep.subr.mxu0 0.0
    %1653 = vmatpush2.msra.mxu0 0.0
    %1654 = vmatprep.subr.mxu0 0.0
    %1655 = vmatpush2.msra.mxu0 0.0
    %1656 = vmatprep.subr.mxu0 0.0
    %1657 = vmatpush2.msra.mxu0 0.0
    %1658 = vmatprep.subr.mxu0 0.0
    %1659 = vmatpush2.msra.mxu0 0.0
    %1660 = vmatprep.mubr.f32.mxu0 0.0
    %1661 = vmatmul.mubr.f32.gmra.mxu0 %v1585
    %v1662 = vpop.f32.mrf.mxu0
    %v1663 = vadd.f32 0.0, %v1662
    %v1664 = vpop.f32.mrf.mxu0
    %v1665 = vadd.f32 0.0, %v1664
    %1666 = vmatprep.mubr.f32.mxu0 0.0
    %1667 = vmatmul.mubr.f32.gmra.mxu0 %v1588
    %v1668 = vpop.f32.mrf.mxu0
    %v1669 = vadd.f32 0.0, %v1668
    %v1670 = vpop.f32.mrf.mxu0
    %v1671 = vadd.f32 0.0, %v1670
    %1672 = vmatprep.mubr.f32.mxu0 0.0
    %1673 = vmatmul.mubr.f32.gmra.mxu0 %v1591
    %v1674 = vpop.f32.mrf.mxu0
    %v1675 = vadd.f32 0.0, %v1674
    %v1676 = vpop.f32.mrf.mxu0
    %v1677 = vadd.f32 0.0, %v1676
    %1678 = vmatprep.mubr.f32.mxu0 0.0
    %1679 = vmatmul.mubr.f32.gmra.mxu0 %v1594
    %v1680 = vpop.f32.mrf.mxu0
    %v1681 = vadd.f32 0.0, %v1680
    %v1682 = vpop.f32.mrf.mxu0
    %v1683 = vadd.f32 0.0, %v1682
    %1684 = vdwg.mxu0
    %v1685 = vadd.f32 %v1571, %v1663
    %v1686 = vadd.f32 %v1572, %v1665
    %v1687 = vadd.f32 %v1573, %v1669
    %v1688 = vadd.f32 %v1574, %v1671
    %v1689 = vadd.f32 %v1575, %v1675
    %v1690 = vadd.f32 %v1576, %v1677
    %v1691 = vadd.f32 %v1577, %v1681
    %v1692 = vadd.f32 %v1578, %v1683
    %s1693 = scalar_lea.vmem %s3, 224
    %v1694 = vld [vmem:[%s1693] sm:$0xff]
    %v1695 = vld [vmem:[%s1693 + $0x8] sm:$0xff]
    %v1696 = vld [vmem:[%s1693 + $0x10] sm:$0xff]
    %v1697 = vld [vmem:[%s1693 + $0x18] sm:$0xff]
    %v1699 = vsel %vm920, %v1694, 0
    %v1702 = vsel %vm920, %v1695, 0
    %v1705 = vsel %vm920, %v1696, 0
    %v1708 = vsel %vm920, %v1697, 0
    %1710 = vmatprep.subr.mxu0 0.0
    %1711 = vmatpush1.msra.mxu0 0.0
    %1712 = vmatprep.subr.mxu0 0.0
    %1713 = vmatpush1.msra.mxu0 0.0
    %1714 = vmatprep.subr.mxu0 0.0
    %1715 = vmatpush1.msra.mxu0 0.0
    %1716 = vmatprep.subr.mxu0 0.0
    %1717 = vmatpush1.msra.mxu0 0.0
    %1718 = vmatprep.subr.mxu0 0.0
    %1719 = vmatpush1.msra.mxu0 0.0
    %1720 = vmatprep.subr.mxu0 0.0
    %1721 = vmatpush1.msra.mxu0 0.0
    %1722 = vmatprep.subr.mxu0 0.0
    %1723 = vmatpush1.msra.mxu0 0.0
    %1724 = vmatprep.subr.mxu0 0.0
    %1725 = vmatpush1.msra.mxu0 0.0
    %1726 = vmatprep.subr.mxu0 0.0
    %1727 = vmatpush1.msra.mxu0 0.0
    %1728 = vmatprep.subr.mxu0 0.0
    %1729 = vmatpush1.msra.mxu0 0.0
    %1730 = vmatprep.subr.mxu0 0.0
    %1731 = vmatpush1.msra.mxu0 0.0
    %1732 = vmatprep.subr.mxu0 0.0
    %1733 = vmatpush1.msra.mxu0 0.0
    %1734 = vmatprep.subr.mxu0 0.0
    %1735 = vmatpush1.msra.mxu0 0.0
    %1736 = vmatprep.subr.mxu0 0.0
    %1737 = vmatpush1.msra.mxu0 0.0
    %1738 = vmatprep.subr.mxu0 %v908
    %1739 = vmatpush1.msra.mxu0 %v907
    %1740 = vmatprep.subr.mxu0 %v890
    %1741 = vmatpush1.msra.mxu0 %v889
    %1742 = vmatprep.subr.mxu0 0.0
    %1743 = vmatpush2.msra.mxu0 0.0
    %1744 = vmatprep.subr.mxu0 0.0
    %1745 = vmatpush2.msra.mxu0 0.0
    %1746 = vmatprep.subr.mxu0 0.0
    %1747 = vmatpush2.msra.mxu0 0.0
    %1748 = vmatprep.subr.mxu0 0.0
    %1749 = vmatpush2.msra.mxu0 0.0
    %1750 = vmatprep.subr.mxu0 0.0
    %1751 = vmatpush2.msra.mxu0 0.0
    %1752 = vmatprep.subr.mxu0 0.0
    %1753 = vmatpush2.msra.mxu0 0.0
    %1754 = vmatprep.subr.mxu0 0.0
    %1755 = vmatpush2.msra.mxu0 0.0
    %1756 = vmatprep.subr.mxu0 0.0
    %1757 = vmatpush2.msra.mxu0 0.0
    %1758 = vmatprep.subr.mxu0 0.0
    %1759 = vmatpush2.msra.mxu0 0.0
    %1760 = vmatprep.subr.mxu0 0.0
    %1761 = vmatpush2.msra.mxu0 0.0
    %1762 = vmatprep.subr.mxu0 0.0
    %1763 = vmatpush2.msra.mxu0 0.0
    %1764 = vmatprep.subr.mxu0 0.0
    %1765 = vmatpush2.msra.mxu0 0.0
    %1766 = vmatprep.subr.mxu0 0.0
    %1767 = vmatpush2.msra.mxu0 0.0
    %1768 = vmatprep.subr.mxu0 0.0
    %1769 = vmatpush2.msra.mxu0 0.0
    %1770 = vmatprep.subr.mxu0 0.0
    %1771 = vmatpush2.msra.mxu0 0.0
    %1772 = vmatprep.subr.mxu0 0.0
    %1773 = vmatpush2.msra.mxu0 0.0
    %1774 = vmatprep.mubr.f32.mxu0 0.0
    %1775 = vmatmul.mubr.f32.gmra.mxu0 %v1699
    %v1776 = vpop.f32.mrf.mxu0
    %v1777 = vadd.f32 0.0, %v1776
    %v1778 = vpop.f32.mrf.mxu0
    %v1779 = vadd.f32 0.0, %v1778
    %1780 = vmatprep.mubr.f32.mxu0 0.0
    %1781 = vmatmul.mubr.f32.gmra.mxu0 %v1702
    %v1782 = vpop.f32.mrf.mxu0
    %v1783 = vadd.f32 0.0, %v1782
    %v1784 = vpop.f32.mrf.mxu0
    %v1785 = vadd.f32 0.0, %v1784
    %1786 = vmatprep.mubr.f32.mxu0 0.0
    %1787 = vmatmul.mubr.f32.gmra.mxu0 %v1705
    %v1788 = vpop.f32.mrf.mxu0
    %v1789 = vadd.f32 0.0, %v1788
    %v1790 = vpop.f32.mrf.mxu0
    %v1791 = vadd.f32 0.0, %v1790
    %1792 = vmatprep.mubr.f32.mxu0 0.0
    %1793 = vmatmul.mubr.f32.gmra.mxu0 %v1708
    %v1794 = vpop.f32.mrf.mxu0
    %v1795 = vadd.f32 0.0, %v1794
    %v1796 = vpop.f32.mrf.mxu0
    %v1797 = vadd.f32 0.0, %v1796
    %1798 = vdwg.mxu0
    %v1799 = vadd.f32 %v1685, %v1777
    %v1800 = vadd.f32 %v1686, %v1779
    %v1801 = vadd.f32 %v1687, %v1783
    %v1802 = vadd.f32 %v1688, %v1785
    %v1803 = vadd.f32 %v1689, %v1789
    %v1804 = vadd.f32 %v1690, %v1791
    %v1805 = vadd.f32 %v1691, %v1795
    %v1806 = vadd.f32 %v1692, %v1797
    %s1807 = scalar_lea.vmem %s3, 256
    %v1808 = vld [vmem:[%s1807] sm:$0xff]
    %v1809 = vld [vmem:[%s1807 + $0x8] sm:$0xff]
    %v1810 = vld [vmem:[%s1807 + $0x10] sm:$0xff]
    %v1811 = vld [vmem:[%s1807 + $0x18] sm:$0xff]
    %v1813 = vsel %vm920, %v1808, 0
    %v1816 = vsel %vm920, %v1809, 0
    %v1819 = vsel %vm920, %v1810, 0
    %v1822 = vsel %vm920, %v1811, 0
    %1824 = vmatprep.subr.mxu0 0.0
    %1825 = vmatpush1.msra.mxu0 0.0
    %1826 = vmatprep.subr.mxu0 0.0
    %1827 = vmatpush1.msra.mxu0 0.0
    %1828 = vmatprep.subr.mxu0 0.0
    %1829 = vmatpush1.msra.mxu0 0.0
    %1830 = vmatprep.subr.mxu0 0.0
    %1831 = vmatpush1.msra.mxu0 0.0
    %1832 = vmatprep.subr.mxu0 0.0
    %1833 = vmatpush1.msra.mxu0 0.0
    %1834 = vmatprep.subr.mxu0 0.0
    %1835 = vmatpush1.msra.mxu0 0.0
    %1836 = vmatprep.subr.mxu0 0.0
    %1837 = vmatpush1.msra.mxu0 0.0
    %1838 = vmatprep.subr.mxu0 0.0
    %1839 = vmatpush1.msra.mxu0 0.0
    %1840 = vmatprep.subr.mxu0 0.0
    %1841 = vmatpush1.msra.mxu0 0.0
    %1842 = vmatprep.subr.mxu0 0.0
    %1843 = vmatpush1.msra.mxu0 0.0
    %1844 = vmatprep.subr.mxu0 0.0
    %1845 = vmatpush1.msra.mxu0 0.0
    %1846 = vmatprep.subr.mxu0 0.0
    %1847 = vmatpush1.msra.mxu0 0.0
    %1848 = vmatprep.subr.mxu0 0.0
    %1849 = vmatpush1.msra.mxu0 0.0
    %1850 = vmatprep.subr.mxu0 0.0
    %1851 = vmatpush1.msra.mxu0 0.0
    %1852 = vmatprep.subr.mxu0 %v910
    %1853 = vmatpush1.msra.mxu0 %v909
    %1854 = vmatprep.subr.mxu0 %v892
    %1855 = vmatpush1.msra.mxu0 %v891
    %1856 = vmatprep.subr.mxu0 0.0
    %1857 = vmatpush2.msra.mxu0 0.0
    %1858 = vmatprep.subr.mxu0 0.0
    %1859 = vmatpush2.msra.mxu0 0.0
    %1860 = vmatprep.subr.mxu0 0.0
    %1861 = vmatpush2.msra.mxu0 0.0
    %1862 = vmatprep.subr.mxu0 0.0
    %1863 = vmatpush2.msra.mxu0 0.0
    %1864 = vmatprep.subr.mxu0 0.0
    %1865 = vmatpush2.msra.mxu0 0.0
    %1866 = vmatprep.subr.mxu0 0.0
    %1867 = vmatpush2.msra.mxu0 0.0
    %1868 = vmatprep.subr.mxu0 0.0
    %1869 = vmatpush2.msra.mxu0 0.0
    %1870 = vmatprep.subr.mxu0 0.0
    %1871 = vmatpush2.msra.mxu0 0.0
    %1872 = vmatprep.subr.mxu0 0.0
    %1873 = vmatpush2.msra.mxu0 0.0
    %1874 = vmatprep.subr.mxu0 0.0
    %1875 = vmatpush2.msra.mxu0 0.0
    %1876 = vmatprep.subr.mxu0 0.0
    %1877 = vmatpush2.msra.mxu0 0.0
    %1878 = vmatprep.subr.mxu0 0.0
    %1879 = vmatpush2.msra.mxu0 0.0
    %1880 = vmatprep.subr.mxu0 0.0
    %1881 = vmatpush2.msra.mxu0 0.0
    %1882 = vmatprep.subr.mxu0 0.0
    %1883 = vmatpush2.msra.mxu0 0.0
    %1884 = vmatprep.subr.mxu0 0.0
    %1885 = vmatpush2.msra.mxu0 0.0
    %1886 = vmatprep.subr.mxu0 0.0
    %1887 = vmatpush2.msra.mxu0 0.0
    %1888 = vmatprep.mubr.f32.mxu0 0.0
    %1889 = vmatmul.mubr.f32.gmra.mxu0 %v1813
    %v1890 = vpop.f32.mrf.mxu0
    %v1891 = vadd.f32 0.0, %v1890
    %v1892 = vpop.f32.mrf.mxu0
    %v1893 = vadd.f32 0.0, %v1892
    %1894 = vmatprep.mubr.f32.mxu0 0.0
    %1895 = vmatmul.mubr.f32.gmra.mxu0 %v1816
    %v1896 = vpop.f32.mrf.mxu0
    %v1897 = vadd.f32 0.0, %v1896
    %v1898 = vpop.f32.mrf.mxu0
    %v1899 = vadd.f32 0.0, %v1898
    %1900 = vmatprep.mubr.f32.mxu0 0.0
    %1901 = vmatmul.mubr.f32.gmra.mxu0 %v1819
    %v1902 = vpop.f32.mrf.mxu0
    %v1903 = vadd.f32 0.0, %v1902
    %v1904 = vpop.f32.mrf.mxu0
    %v1905 = vadd.f32 0.0, %v1904
    %1906 = vmatprep.mubr.f32.mxu0 0.0
    %1907 = vmatmul.mubr.f32.gmra.mxu0 %v1822
    %v1908 = vpop.f32.mrf.mxu0
    %v1909 = vadd.f32 0.0, %v1908
    %v1910 = vpop.f32.mrf.mxu0
    %v1911 = vadd.f32 0.0, %v1910
    %1912 = vdwg.mxu0
    %v1913 = vadd.f32 %v1799, %v1891
    %v1914 = vadd.f32 %v1800, %v1893
    %v1915 = vadd.f32 %v1801, %v1897
    %v1916 = vadd.f32 %v1802, %v1899
    %v1917 = vadd.f32 %v1803, %v1903
    %v1918 = vadd.f32 %v1804, %v1905
    %v1919 = vadd.f32 %v1805, %v1909
    %v1920 = vadd.f32 %v1806, %v1911
    %v1921 = vld [vmem:[%s4] sm:$0xff]
    %v1922 = vld [vmem:[%s4 + $0x8] sm:$0xff]
    %v1923 = vld [vmem:[%s4 + $0x10] sm:$0xff]
    %v1924 = vld [vmem:[%s4 + $0x18] sm:$0xff]
    %1926 = vset.pattern.permute.xlu0 0
    %1927 = vperm.xlu0 %1926, %v1921
    %v1928 = vpop.permute.xlu0 %1927
    %1931 = vset.pattern.permute.xlu0 0
    %1932 = vperm.xlu0 %1931, %v1922
    %v1933 = vpop.permute.xlu0 %1932
    %1936 = vset.pattern.permute.xlu0 0
    %1937 = vperm.xlu0 %1936, %v1923
    %v1938 = vpop.permute.xlu0 %1937
    %1941 = vset.pattern.permute.xlu0 0
    %1942 = vperm.xlu0 %1941, %v1924
    %v1943 = vpop.permute.xlu0 %1942
    %v1945 = vadd.f32 %v1913, %v1928
    %v1946 = vadd.f32 %v1914, %v1928
    %v1947 = vadd.f32 %v1915, %v1933
    %v1948 = vadd.f32 %v1916, %v1933
    %v1949 = vadd.f32 %v1917, %v1938
    %v1950 = vadd.f32 %v1918, %v1938
    %v1951 = vadd.f32 %v1919, %v1943
    %v1952 = vadd.f32 %v1920, %v1943
    %v1953 = vtanh.pop %v1945
    %v1954 = vtanh.pop %v1946
    %v1955 = vtanh.pop %v1947
    %v1956 = vtanh.pop %v1948
    %v1957 = vtanh.pop %v1949
    %v1958 = vtanh.pop %v1950
    %v1959 = vtanh.pop %v1951
    %v1960 = vtanh.pop %v1952
    %v1962 = vrot.slane %v1954, 7
    %vm1964 = vcmask 1040384
    %v1965 = vsel %vm1964, %v1953, %v1962
    %v1966 = vpack.c.bf16 %v1965, %v1965
    %v1967 = vld [vmem:[%s5] sm:$0xff]
    %v1968 = vld [vmem:[%s5 + $0x8] sm:$0xff]
    %v1969 = vld [vmem:[%s5 + $0x10] sm:$0xff]
    %v1970 = vld [vmem:[%s5 + $0x18] sm:$0xff]
    %v1971 = vld [vmem:[%s5 + $0x20] sm:$0xff]
    %v1972 = vld [vmem:[%s5 + $0x28] sm:$0xff]
    %v1973 = vld [vmem:[%s5 + $0x30] sm:$0xff]
    %v1974 = vld [vmem:[%s5 + $0x38] sm:$0xff]
    %v1975 = vld [vmem:[%s5 + $0x40] sm:$0xff]
    %v1976 = vld [vmem:[%s5 + $0x48] sm:$0xff]
    %v1977 = vld [vmem:[%s5 + $0x50] sm:$0xff]
    %v1978 = vld [vmem:[%s5 + $0x58] sm:$0xff]
    %v1979 = vld [vmem:[%s5 + $0x60] sm:$0xff]
    %v1980 = vld [vmem:[%s5 + $0x68] sm:$0xff]
    %v1981 = vld [vmem:[%s5 + $0x70] sm:$0xff]
    %v1982 = vld [vmem:[%s5 + $0x78] sm:$0xff]
    %v1984 = vrot.slane %v1953, 1
    %v1986 = vsel %vm1964, %v1984, %v1954
    %v1987 = vpack.c.bf16 %v1986, %v1986
    %s1988 = scalar_lea.vmem %s5, 128
    %v1989 = vld [vmem:[%s1988] sm:$0xff]
    %v1990 = vld [vmem:[%s1988 + $0x8] sm:$0xff]
    %v1991 = vld [vmem:[%s1988 + $0x10] sm:$0xff]
    %v1992 = vld [vmem:[%s1988 + $0x18] sm:$0xff]
    %v1993 = vld [vmem:[%s1988 + $0x20] sm:$0xff]
    %v1994 = vld [vmem:[%s1988 + $0x28] sm:$0xff]
    %v1995 = vld [vmem:[%s1988 + $0x30] sm:$0xff]
    %v1996 = vld [vmem:[%s1988 + $0x38] sm:$0xff]
    %v1997 = vld [vmem:[%s1988 + $0x40] sm:$0xff]
    %v1998 = vld [vmem:[%s1988 + $0x48] sm:$0xff]
    %v1999 = vld [vmem:[%s1988 + $0x50] sm:$0xff]
    %v2000 = vld [vmem:[%s1988 + $0x58] sm:$0xff]
    %v2001 = vld [vmem:[%s1988 + $0x60] sm:$0xff]
    %v2002 = vld [vmem:[%s1988 + $0x68] sm:$0xff]
    %v2003 = vld [vmem:[%s1988 + $0x70] sm:$0xff]
    %v2004 = vld [vmem:[%s1988 + $0x78] sm:$0xff]
    %v2021 = vunpack.c.l.b16 %v1989
    %v2022 = vunpack.c.h.b16 %v1989
    %v2023 = vunpack.c.l.b16 %v1990
    %v2024 = vunpack.c.h.b16 %v1990
    %v2025 = vunpack.c.l.b16 %v1991
    %v2026 = vunpack.c.h.b16 %v1991
    %v2027 = vunpack.c.l.b16 %v1992
    %v2028 = vunpack.c.h.b16 %v1992
    %v2029 = vunpack.c.l.b16 %v1993
    %v2030 = vunpack.c.h.b16 %v1993
    %v2031 = vunpack.c.l.b16 %v1994
    %v2032 = vunpack.c.h.b16 %v1994
    %v2033 = vunpack.c.l.b16 %v1995
    %v2034 = vunpack.c.h.b16 %v1995
    %v2035 = vunpack.c.l.b16 %v1996
    %v2036 = vunpack.c.h.b16 %v1996
    %v2037 = vunpack.c.l.b16 %v1997
    %v2038 = vunpack.c.h.b16 %v1997
    %v2039 = vunpack.c.l.b16 %v1998
    %v2040 = vunpack.c.h.b16 %v1998
    %v2041 = vunpack.c.l.b16 %v1999
    %v2042 = vunpack.c.h.b16 %v1999
    %v2043 = vunpack.c.l.b16 %v2000
    %v2044 = vunpack.c.h.b16 %v2000
    %v2045 = vunpack.c.l.b16 %v2001
    %v2046 = vunpack.c.h.b16 %v2001
    %v2047 = vunpack.c.l.b16 %v2002
    %v2048 = vunpack.c.h.b16 %v2002
    %v2049 = vunpack.c.l.b16 %v2003
    %v2050 = vunpack.c.h.b16 %v2003
    %v2051 = vunpack.c.l.b16 %v2004
    %v2052 = vunpack.c.h.b16 %v2004
    %v2053 = vpack.c.b16 %v2023, %v2021
    %v2054 = vpack.c.b16 %v2024, %v2022
    %v2055 = vpack.c.b16 %v2027, %v2025
    %v2056 = vpack.c.b16 %v2028, %v2026
    %v2057 = vpack.c.b16 %v2031, %v2029
    %v2058 = vpack.c.b16 %v2032, %v2030
    %v2059 = vpack.c.b16 %v2035, %v2033
    %v2060 = vpack.c.b16 %v2036, %v2034
    %v2061 = vpack.c.b16 %v2039, %v2037
    %v2062 = vpack.c.b16 %v2040, %v2038
    %v2063 = vpack.c.b16 %v2043, %v2041
    %v2064 = vpack.c.b16 %v2044, %v2042
    %v2065 = vpack.c.b16 %v2047, %v2045
    %v2066 = vpack.c.b16 %v2048, %v2046
    %v2067 = vpack.c.b16 %v2051, %v2049
    %v2068 = vpack.c.b16 %v2052, %v2050
    %2085 = vmatprep.subr.bf16.mxu0 %v2068
    %2086 = vmatpush1.bf16.msra.mxu0 %v2067
    %2087 = vmatprep.subr.bf16.mxu0 %v2066
    %2088 = vmatpush1.bf16.msra.mxu0 %v2065
    %2089 = vmatprep.subr.bf16.mxu0 %v2064
    %2090 = vmatpush1.bf16.msra.mxu0 %v2063
    %2091 = vmatprep.subr.bf16.mxu0 %v2062
    %2092 = vmatpush1.bf16.msra.mxu0 %v2061
    %2093 = vmatprep.subr.bf16.mxu0 %v2060
    %2094 = vmatpush1.bf16.msra.mxu0 %v2059
    %2095 = vmatprep.subr.bf16.mxu0 %v2058
    %2096 = vmatpush1.bf16.msra.mxu0 %v2057
    %2097 = vmatprep.subr.bf16.mxu0 %v2056
    %2098 = vmatpush1.bf16.msra.mxu0 %v2055
    %2099 = vmatprep.subr.bf16.mxu0 %v2054
    %2100 = vmatpush1.bf16.msra.mxu0 %v2053
    %2101 = vmatprep.subr.bf16.mxu0 0
    %2102 = vmatpush2.bf16.msra.mxu0 0
    %2103 = vmatprep.subr.bf16.mxu0 0
    %2104 = vmatpush2.bf16.msra.mxu0 0
    %2105 = vmatprep.subr.bf16.mxu0 0
    %2106 = vmatpush2.bf16.msra.mxu0 0
    %2107 = vmatprep.subr.bf16.mxu0 0
    %2108 = vmatpush2.bf16.msra.mxu0 0
    %2109 = vmatprep.subr.bf16.mxu0 0
    %2110 = vmatpush2.bf16.msra.mxu0 0
    %2111 = vmatprep.subr.bf16.mxu0 0
    %2112 = vmatpush2.bf16.msra.mxu0 0
    %2113 = vmatprep.subr.bf16.mxu0 0
    %2114 = vmatpush2.bf16.msra.mxu0 0
    %2115 = vmatprep.subr.bf16.mxu0 0
    %2116 = vmatpush2.bf16.msra.mxu0 0
    %2117 = vmatprep.mubr.bf16.mxu0 0
    %2118 = vmatmul.mubr.bf16.gmra.mxu0 %v1987
    %v2119 = vpop.f32.mrf.mxu0
    %v2120 = vadd.f32 0.0, %v2119
    %v2121 = vpop.f32.mrf.mxu0
    %v2122 = vadd.f32 0.0, %v2121
    %v2123 = vpop.f32.mrf.mxu0
    %v2124 = vpop.f32.mrf.mxu0
    %2125 = vdwg.mxu0
    %v2142 = vunpack.c.l.b16 %v1967
    %v2143 = vunpack.c.h.b16 %v1967
    %v2144 = vunpack.c.l.b16 %v1968
    %v2145 = vunpack.c.h.b16 %v1968
    %v2146 = vunpack.c.l.b16 %v1969
    %v2147 = vunpack.c.h.b16 %v1969
    %v2148 = vunpack.c.l.b16 %v1970
    %v2149 = vunpack.c.h.b16 %v1970
    %v2150 = vunpack.c.l.b16 %v1971
    %v2151 = vunpack.c.h.b16 %v1971
    %v2152 = vunpack.c.l.b16 %v1972
    %v2153 = vunpack.c.h.b16 %v1972
    %v2154 = vunpack.c.l.b16 %v1973
    %v2155 = vunpack.c.h.b16 %v1973
    %v2156 = vunpack.c.l.b16 %v1974
    %v2157 = vunpack.c.h.b16 %v1974
    %v2158 = vunpack.c.l.b16 %v1975
    %v2159 = vunpack.c.h.b16 %v1975
    %v2160 = vunpack.c.l.b16 %v1976
    %v2161 = vunpack.c.h.b16 %v1976
    %v2162 = vunpack.c.l.b16 %v1977
    %v2163 = vunpack.c.h.b16 %v1977
    %v2164 = vunpack.c.l.b16 %v1978
    %v2165 = vunpack.c.h.b16 %v1978
    %v2166 = vunpack.c.l.b16 %v1979
    %v2167 = vunpack.c.h.b16 %v1979
    %v2168 = vunpack.c.l.b16 %v1980
    %v2169 = vunpack.c.h.b16 %v1980
    %v2170 = vunpack.c.l.b16 %v1981
    %v2171 = vunpack.c.h.b16 %v1981
    %v2172 = vunpack.c.l.b16 %v1982
    %v2173 = vunpack.c.h.b16 %v1982
    %v2174 = vpack.c.b16 %v2144, %v2142
    %v2175 = vpack.c.b16 %v2145, %v2143
    %v2176 = vpack.c.b16 %v2148, %v2146
    %v2177 = vpack.c.b16 %v2149, %v2147
    %v2178 = vpack.c.b16 %v2152, %v2150
    %v2179 = vpack.c.b16 %v2153, %v2151
    %v2180 = vpack.c.b16 %v2156, %v2154
    %v2181 = vpack.c.b16 %v2157, %v2155
    %v2182 = vpack.c.b16 %v2160, %v2158
    %v2183 = vpack.c.b16 %v2161, %v2159
    %v2184 = vpack.c.b16 %v2164, %v2162
    %v2185 = vpack.c.b16 %v2165, %v2163
    %v2186 = vpack.c.b16 %v2168, %v2166
    %v2187 = vpack.c.b16 %v2169, %v2167
    %v2188 = vpack.c.b16 %v2172, %v2170
    %v2189 = vpack.c.b16 %v2173, %v2171
    %2206 = vmatprep.subr.bf16.mxu0 %v2189
    %2207 = vmatpush1.bf16.msra.mxu0 %v2188
    %2208 = vmatprep.subr.bf16.mxu0 %v2187
    %2209 = vmatpush1.bf16.msra.mxu0 %v2186
    %2210 = vmatprep.subr.bf16.mxu0 %v2185
    %2211 = vmatpush1.bf16.msra.mxu0 %v2184
    %2212 = vmatprep.subr.bf16.mxu0 %v2183
    %2213 = vmatpush1.bf16.msra.mxu0 %v2182
    %2214 = vmatprep.subr.bf16.mxu0 %v2181
    %2215 = vmatpush1.bf16.msra.mxu0 %v2180
    %2216 = vmatprep.subr.bf16.mxu0 %v2179
    %2217 = vmatpush1.bf16.msra.mxu0 %v2178
    %2218 = vmatprep.subr.bf16.mxu0 %v2177
    %2219 = vmatpush1.bf16.msra.mxu0 %v2176
    %2220 = vmatprep.subr.bf16.mxu0 %v2175
    %2221 = vmatpush1.bf16.msra.mxu0 %v2174
    %2222 = vmatprep.subr.bf16.mxu0 0
    %2223 = vmatpush2.bf16.msra.mxu0 0
    %2224 = vmatprep.subr.bf16.mxu0 0
    %2225 = vmatpush2.bf16.msra.mxu0 0
    %2226 = vmatprep.subr.bf16.mxu0 0
    %2227 = vmatpush2.bf16.msra.mxu0 0
    %2228 = vmatprep.subr.bf16.mxu0 0
    %2229 = vmatpush2.bf16.msra.mxu0 0
    %2230 = vmatprep.subr.bf16.mxu0 0
    %2231 = vmatpush2.bf16.msra.mxu0 0
    %2232 = vmatprep.subr.bf16.mxu0 0
    %2233 = vmatpush2.bf16.msra.mxu0 0
    %2234 = vmatprep.subr.bf16.mxu0 0
    %2235 = vmatpush2.bf16.msra.mxu0 0
    %2236 = vmatprep.subr.bf16.mxu0 0
    %2237 = vmatpush2.bf16.msra.mxu0 0
    %2238 = vmatprep.mubr.bf16.mxu0 0
    %2239 = vmatmul.mubr.bf16.gmra.mxu0 %v1966
    %v2240 = vpop.f32.mrf.mxu0
    %v2241 = vadd.f32 %v2120, %v2240
    %v2242 = vpop.f32.mrf.mxu0
    %v2243 = vadd.f32 %v2122, %v2242
    %v2244 = vpop.f32.mrf.mxu0
    %v2245 = vpop.f32.mrf.mxu0
    %2246 = vdwg.mxu0
    %v2247 = vrot.slane %v1953, 2
    %v2249 = vrot.slane %v1954, 1
    %v2251 = vsel %vm1964, %v2247, %v2249
    %v2252 = vpack.c.bf16 %v2251, %v2251
    %s2253 = scalar_lea.vmem %s5, 256
    %v2254 = vld [vmem:[%s2253] sm:$0xff]
    %v2255 = vld [vmem:[%s2253 + $0x8] sm:$0xff]
    %v2256 = vld [vmem:[%s2253 + $0x10] sm:$0xff]
    %v2257 = vld [vmem:[%s2253 + $0x18] sm:$0xff]
    %v2258 = vld [vmem:[%s2253 + $0x20] sm:$0xff]
    %v2259 = vld [vmem:[%s2253 + $0x28] sm:$0xff]
    %v2260 = vld [vmem:[%s2253 + $0x30] sm:$0xff]
    %v2261 = vld [vmem:[%s2253 + $0x38] sm:$0xff]
    %v2262 = vld [vmem:[%s2253 + $0x40] sm:$0xff]
    %v2263 = vld [vmem:[%s2253 + $0x48] sm:$0xff]
    %v2264 = vld [vmem:[%s2253 + $0x50] sm:$0xff]
    %v2265 = vld [vmem:[%s2253 + $0x58] sm:$0xff]
    %v2266 = vld [vmem:[%s2253 + $0x60] sm:$0xff]
    %v2267 = vld [vmem:[%s2253 + $0x68] sm:$0xff]
    %v2268 = vld [vmem:[%s2253 + $0x70] sm:$0xff]
    %v2269 = vld [vmem:[%s2253 + $0x78] sm:$0xff]
    %v2286 = vunpack.c.l.b16 %v2254
    %v2287 = vunpack.c.h.b16 %v2254
    %v2288 = vunpack.c.l.b16 %v2255
    %v2289 = vunpack.c.h.b16 %v2255
    %v2290 = vunpack.c.l.b16 %v2256
    %v2291 = vunpack.c.h.b16 %v2256
    %v2292 = vunpack.c.l.b16 %v2257
    %v2293 = vunpack.c.h.b16 %v2257
    %v2294 = vunpack.c.l.b16 %v2258
    %v2295 = vunpack.c.h.b16 %v2258
    %v2296 = vunpack.c.l.b16 %v2259
    %v2297 = vunpack.c.h.b16 %v2259
    %v2298 = vunpack.c.l.b16 %v2260
    %v2299 = vunpack.c.h.b16 %v2260
    %v2300 = vunpack.c.l.b16 %v2261
    %v2301 = vunpack.c.h.b16 %v2261
    %v2302 = vunpack.c.l.b16 %v2262
    %v2303 = vunpack.c.h.b16 %v2262
    %v2304 = vunpack.c.l.b16 %v2263
    %v2305 = vunpack.c.h.b16 %v2263
    %v2306 = vunpack.c.l.b16 %v2264
    %v2307 = vunpack.c.h.b16 %v2264
    %v2308 = vunpack.c.l.b16 %v2265
    %v2309 = vunpack.c.h.b16 %v2265
    %v2310 = vunpack.c.l.b16 %v2266
    %v2311 = vunpack.c.h.b16 %v2266
    %v2312 = vunpack.c.l.b16 %v2267
    %v2313 = vunpack.c.h.b16 %v2267
    %v2314 = vunpack.c.l.b16 %v2268
    %v2315 = vunpack.c.h.b16 %v2268
    %v2316 = vunpack.c.l.b16 %v2269
    %v2317 = vunpack.c.h.b16 %v2269
    %v2318 = vpack.c.b16 %v2288, %v2286
    %v2319 = vpack.c.b16 %v2289, %v2287
    %v2320 = vpack.c.b16 %v2292, %v2290
    %v2321 = vpack.c.b16 %v2293, %v2291
    %v2322 = vpack.c.b16 %v2296, %v2294
    %v2323 = vpack.c.b16 %v2297, %v2295
    %v2324 = vpack.c.b16 %v2300, %v2298
    %v2325 = vpack.c.b16 %v2301, %v2299
    %v2326 = vpack.c.b16 %v2304, %v2302
    %v2327 = vpack.c.b16 %v2305, %v2303
    %v2328 = vpack.c.b16 %v2308, %v2306
    %v2329 = vpack.c.b16 %v2309, %v2307
    %v2330 = vpack.c.b16 %v2312, %v2310
    %v2331 = vpack.c.b16 %v2313, %v2311
    %v2332 = vpack.c.b16 %v2316, %v2314
    %v2333 = vpack.c.b16 %v2317, %v2315
    %2350 = vmatprep.subr.bf16.mxu0 %v2333
    %2351 = vmatpush1.bf16.msra.mxu0 %v2332
    %2352 = vmatprep.subr.bf16.mxu0 %v2331
    %2353 = vmatpush1.bf16.msra.mxu0 %v2330
    %2354 = vmatprep.subr.bf16.mxu0 %v2329
    %2355 = vmatpush1.bf16.msra.mxu0 %v2328
    %2356 = vmatprep.subr.bf16.mxu0 %v2327
    %2357 = vmatpush1.bf16.msra.mxu0 %v2326
    %2358 = vmatprep.subr.bf16.mxu0 %v2325
    %2359 = vmatpush1.bf16.msra.mxu0 %v2324
    %2360 = vmatprep.subr.bf16.mxu0 %v2323
    %2361 = vmatpush1.bf16.msra.mxu0 %v2322
    %2362 = vmatprep.subr.bf16.mxu0 %v2321
    %2363 = vmatpush1.bf16.msra.mxu0 %v2320
    %2364 = vmatprep.subr.bf16.mxu0 %v2319
    %2365 = vmatpush1.bf16.msra.mxu0 %v2318
    %2366 = vmatprep.subr.bf16.mxu0 0
    %2367 = vmatpush2.bf16.msra.mxu0 0
    %2368 = vmatprep.subr.bf16.mxu0 0
    %2369 = vmatpush2.bf16.msra.mxu0 0
    %2370 = vmatprep.subr.bf16.mxu0 0
    %2371 = vmatpush2.bf16.msra.mxu0 0
    %2372 = vmatprep.subr.bf16.mxu0 0
    %2373 = vmatpush2.bf16.msra.mxu0 0
    %2374 = vmatprep.subr.bf16.mxu0 0
    %2375 = vmatpush2.bf16.msra.mxu0 0
    %2376 = vmatprep.subr.bf16.mxu0 0
    %2377 = vmatpush2.bf16.msra.mxu0 0
    %2378 = vmatprep.subr.bf16.mxu0 0
    %2379 = vmatpush2.bf16.msra.mxu0 0
    %2380 = vmatprep.subr.bf16.mxu0 0
    %2381 = vmatpush2.bf16.msra.mxu0 0
    %2382 = vmatprep.mubr.bf16.mxu0 0
    %2383 = vmatmul.mubr.bf16.gmra.mxu0 %v2252
    %v2384 = vpop.f32.mrf.mxu0
    %v2385 = vadd.f32 0.0, %v2384
    %v2386 = vpop.f32.mrf.mxu0
    %v2387 = vadd.f32 0.0, %v2386
    %v2388 = vpop.f32.mrf.mxu0
    %v2389 = vpop.f32.mrf.mxu0
    %2390 = vdwg.mxu0
    %v2391 = vadd.f32 %v2241, %v2385
    %v2392 = vadd.f32 %v2243, %v2387
    %v2393 = vrot.slane %v1953, 3
    %v2395 = vrot.slane %v1954, 2
    %v2397 = vsel %vm1964, %v2393, %v2395
    %v2398 = vpack.c.bf16 %v2397, %v2397
    %s2399 = scalar_lea.vmem %s5, 384
    %v2400 = vld [vmem:[%s2399] sm:$0xff]
    %v2401 = vld [vmem:[%s2399 + $0x8] sm:$0xff]
    %v2402 = vld [vmem:[%s2399 + $0x10] sm:$0xff]
    %v2403 = vld [vmem:[%s2399 + $0x18] sm:$0xff]
    %v2404 = vld [vmem:[%s2399 + $0x20] sm:$0xff]
    %v2405 = vld [vmem:[%s2399 + $0x28] sm:$0xff]
    %v2406 = vld [vmem:[%s2399 + $0x30] sm:$0xff]
    %v2407 = vld [vmem:[%s2399 + $0x38] sm:$0xff]
    %v2408 = vld [vmem:[%s2399 + $0x40] sm:$0xff]
    %v2409 = vld [vmem:[%s2399 + $0x48] sm:$0xff]
    %v2410 = vld [vmem:[%s2399 + $0x50] sm:$0xff]
    %v2411 = vld [vmem:[%s2399 + $0x58] sm:$0xff]
    %v2412 = vld [vmem:[%s2399 + $0x60] sm:$0xff]
    %v2413 = vld [vmem:[%s2399 + $0x68] sm:$0xff]
    %v2414 = vld [vmem:[%s2399 + $0x70] sm:$0xff]
    %v2415 = vld [vmem:[%s2399 + $0x78] sm:$0xff]
    %v2432 = vunpack.c.l.b16 %v2400
    %v2433 = vunpack.c.h.b16 %v2400
    %v2434 = vunpack.c.l.b16 %v2401
    %v2435 = vunpack.c.h.b16 %v2401
    %v2436 = vunpack.c.l.b16 %v2402
    %v2437 = vunpack.c.h.b16 %v2402
    %v2438 = vunpack.c.l.b16 %v2403
    %v2439 = vunpack.c.h.b16 %v2403
    %v2440 = vunpack.c.l.b16 %v2404
    %v2441 = vunpack.c.h.b16 %v2404
    %v2442 = vunpack.c.l.b16 %v2405
    %v2443 = vunpack.c.h.b16 %v2405
    %v2444 = vunpack.c.l.b16 %v2406
    %v2445 = vunpack.c.h.b16 %v2406
    %v2446 = vunpack.c.l.b16 %v2407
    %v2447 = vunpack.c.h.b16 %v2407
    %v2448 = vunpack.c.l.b16 %v2408
    %v2449 = vunpack.c.h.b16 %v2408
    %v2450 = vunpack.c.l.b16 %v2409
    %v2451 = vunpack.c.h.b16 %v2409
    %v2452 = vunpack.c.l.b16 %v2410
    %v2453 = vunpack.c.h.b16 %v2410
    %v2454 = vunpack.c.l.b16 %v2411
    %v2455 = vunpack.c.h.b16 %v2411
    %v2456 = vunpack.c.l.b16 %v2412
    %v2457 = vunpack.c.h.b16 %v2412
    %v2458 = vunpack.c.l.b16 %v2413
    %v2459 = vunpack.c.h.b16 %v2413
    %v2460 = vunpack.c.l.b16 %v2414
    %v2461 = vunpack.c.h.b16 %v2414
    %v2462 = vunpack.c.l.b16 %v2415
    %v2463 = vunpack.c.h.b16 %v2415
    %v2464 = vpack.c.b16 %v2434, %v2432
    %v2465 = vpack.c.b16 %v2435, %v2433
    %v2466 = vpack.c.b16 %v2438, %v2436
    %v2467 = vpack.c.b16 %v2439, %v2437
    %v2468 = vpack.c.b16 %v2442, %v2440
    %v2469 = vpack.c.b16 %v2443, %v2441
    %v2470 = vpack.c.b16 %v2446, %v2444
    %v2471 = vpack.c.b16 %v2447, %v2445
    %v2472 = vpack.c.b16 %v2450, %v2448
    %v2473 = vpack.c.b16 %v2451, %v2449
    %v2474 = vpack.c.b16 %v2454, %v2452
    %v2475 = vpack.c.b16 %v2455, %v2453
    %v2476 = vpack.c.b16 %v2458, %v2456
    %v2477 = vpack.c.b16 %v2459, %v2457
    %v2478 = vpack.c.b16 %v2462, %v2460
    %v2479 = vpack.c.b16 %v2463, %v2461
    %2496 = vmatprep.subr.bf16.mxu0 %v2479
    %2497 = vmatpush1.bf16.msra.mxu0 %v2478
    %2498 = vmatprep.subr.bf16.mxu0 %v2477
    %2499 = vmatpush1.bf16.msra.mxu0 %v2476
    %2500 = vmatprep.subr.bf16.mxu0 %v2475
    %2501 = vmatpush1.bf16.msra.mxu0 %v2474
    %2502 = vmatprep.subr.bf16.mxu0 %v2473
    %2503 = vmatpush1.bf16.msra.mxu0 %v2472
    %2504 = vmatprep.subr.bf16.mxu0 %v2471
    %2505 = vmatpush1.bf16.msra.mxu0 %v2470
    %2506 = vmatprep.subr.bf16.mxu0 %v2469
    %2507 = vmatpush1.bf16.msra.mxu0 %v2468
    %2508 = vmatprep.subr.bf16.mxu0 %v2467
    %2509 = vmatpush1.bf16.msra.mxu0 %v2466
    %2510 = vmatprep.subr.bf16.mxu0 %v2465
    %2511 = vmatpush1.bf16.msra.mxu0 %v2464
    %2512 = vmatprep.subr.bf16.mxu0 0
    %2513 = vmatpush2.bf16.msra.mxu0 0
    %2514 = vmatprep.subr.bf16.mxu0 0
    %2515 = vmatpush2.bf16.msra.mxu0 0
    %2516 = vmatprep.subr.bf16.mxu0 0
    %2517 = vmatpush2.bf16.msra.mxu0 0
    %2518 = vmatprep.subr.bf16.mxu0 0
    %2519 = vmatpush2.bf16.msra.mxu0 0
    %2520 = vmatprep.subr.bf16.mxu0 0
    %2521 = vmatpush2.bf16.msra.mxu0 0
    %2522 = vmatprep.subr.bf16.mxu0 0
    %2523 = vmatpush2.bf16.msra.mxu0 0
    %2524 = vmatprep.subr.bf16.mxu0 0
    %2525 = vmatpush2.bf16.msra.mxu0 0
    %2526 = vmatprep.subr.bf16.mxu0 0
    %2527 = vmatpush2.bf16.msra.mxu0 0
    %2528 = vmatprep.mubr.bf16.mxu0 0
    %2529 = vmatmul.mubr.bf16.gmra.mxu0 %v2398
    %v2530 = vpop.f32.mrf.mxu0
    %v2531 = vadd.f32 0.0, %v2530
    %v2532 = vpop.f32.mrf.mxu0
    %v2533 = vadd.f32 0.0, %v2532
    %v2534 = vpop.f32.mrf.mxu0
    %v2535 = vpop.f32.mrf.mxu0
    %2536 = vdwg.mxu0
    %v2537 = vadd.f32 %v2391, %v2531
    %v2538 = vadd.f32 %v2392, %v2533
    %v2539 = vrot.slane %v1953, 4
    %v2541 = vrot.slane %v1954, 3
    %v2543 = vsel %vm1964, %v2539, %v2541
    %v2544 = vpack.c.bf16 %v2543, %v2543
    %s2545 = scalar_lea.vmem %s5, 512
    %v2546 = vld [vmem:[%s2545] sm:$0xff]
    %v2547 = vld [vmem:[%s2545 + $0x8] sm:$0xff]
    %v2548 = vld [vmem:[%s2545 + $0x10] sm:$0xff]
    %v2549 = vld [vmem:[%s2545 + $0x18] sm:$0xff]
    %v2550 = vld [vmem:[%s2545 + $0x20] sm:$0xff]
    %v2551 = vld [vmem:[%s2545 + $0x28] sm:$0xff]
    %v2552 = vld [vmem:[%s2545 + $0x30] sm:$0xff]
    %v2553 = vld [vmem:[%s2545 + $0x38] sm:$0xff]
    %v2554 = vld [vmem:[%s2545 + $0x40] sm:$0xff]
    %v2555 = vld [vmem:[%s2545 + $0x48] sm:$0xff]
    %v2556 = vld [vmem:[%s2545 + $0x50] sm:$0xff]
    %v2557 = vld [vmem:[%s2545 + $0x58] sm:$0xff]
    %v2558 = vld [vmem:[%s2545 + $0x60] sm:$0xff]
    %v2559 = vld [vmem:[%s2545 + $0x68] sm:$0xff]
    %v2560 = vld [vmem:[%s2545 + $0x70] sm:$0xff]
    %v2561 = vld [vmem:[%s2545 + $0x78] sm:$0xff]
    %v2578 = vunpack.c.l.b16 %v2546
    %v2579 = vunpack.c.h.b16 %v2546
    %v2580 = vunpack.c.l.b16 %v2547
    %v2581 = vunpack.c.h.b16 %v2547
    %v2582 = vunpack.c.l.b16 %v2548
    %v2583 = vunpack.c.h.b16 %v2548
    %v2584 = vunpack.c.l.b16 %v2549
    %v2585 = vunpack.c.h.b16 %v2549
    %v2586 = vunpack.c.l.b16 %v2550
    %v2587 = vunpack.c.h.b16 %v2550
    %v2588 = vunpack.c.l.b16 %v2551
    %v2589 = vunpack.c.h.b16 %v2551
    %v2590 = vunpack.c.l.b16 %v2552
    %v2591 = vunpack.c.h.b16 %v2552
    %v2592 = vunpack.c.l.b16 %v2553
    %v2593 = vunpack.c.h.b16 %v2553
    %v2594 = vunpack.c.l.b16 %v2554
    %v2595 = vunpack.c.h.b16 %v2554
    %v2596 = vunpack.c.l.b16 %v2555
    %v2597 = vunpack.c.h.b16 %v2555
    %v2598 = vunpack.c.l.b16 %v2556
    %v2599 = vunpack.c.h.b16 %v2556
    %v2600 = vunpack.c.l.b16 %v2557
    %v2601 = vunpack.c.h.b16 %v2557
    %v2602 = vunpack.c.l.b16 %v2558
    %v2603 = vunpack.c.h.b16 %v2558
    %v2604 = vunpack.c.l.b16 %v2559
    %v2605 = vunpack.c.h.b16 %v2559
    %v2606 = vunpack.c.l.b16 %v2560
    %v2607 = vunpack.c.h.b16 %v2560
    %v2608 = vunpack.c.l.b16 %v2561
    %v2609 = vunpack.c.h.b16 %v2561
    %v2610 = vpack.c.b16 %v2580, %v2578
    %v2611 = vpack.c.b16 %v2581, %v2579
    %v2612 = vpack.c.b16 %v2584, %v2582
    %v2613 = vpack.c.b16 %v2585, %v2583
    %v2614 = vpack.c.b16 %v2588, %v2586
    %v2615 = vpack.c.b16 %v2589, %v2587
    %v2616 = vpack.c.b16 %v2592, %v2590
    %v2617 = vpack.c.b16 %v2593, %v2591
    %v2618 = vpack.c.b16 %v2596, %v2594
    %v2619 = vpack.c.b16 %v2597, %v2595
    %v2620 = vpack.c.b16 %v2600, %v2598
    %v2621 = vpack.c.b16 %v2601, %v2599
    %v2622 = vpack.c.b16 %v2604, %v2602
    %v2623 = vpack.c.b16 %v2605, %v2603
    %v2624 = vpack.c.b16 %v2608, %v2606
    %v2625 = vpack.c.b16 %v2609, %v2607
    %2642 = vmatprep.subr.bf16.mxu0 %v2625
    %2643 = vmatpush1.bf16.msra.mxu0 %v2624
    %2644 = vmatprep.subr.bf16.mxu0 %v2623
    %2645 = vmatpush1.bf16.msra.mxu0 %v2622
    %2646 = vmatprep.subr.bf16.mxu0 %v2621
    %2647 = vmatpush1.bf16.msra.mxu0 %v2620
    %2648 = vmatprep.subr.bf16.mxu0 %v2619
    %2649 = vmatpush1.bf16.msra.mxu0 %v2618
    %2650 = vmatprep.subr.bf16.mxu0 %v2617
    %2651 = vmatpush1.bf16.msra.mxu0 %v2616
    %2652 = vmatprep.subr.bf16.mxu0 %v2615
    %2653 = vmatpush1.bf16.msra.mxu0 %v2614
    %2654 = vmatprep.subr.bf16.mxu0 %v2613
    %2655 = vmatpush1.bf16.msra.mxu0 %v2612
    %2656 = vmatprep.subr.bf16.mxu0 %v2611
    %2657 = vmatpush1.bf16.msra.mxu0 %v2610
    %2658 = vmatprep.subr.bf16.mxu0 0
    %2659 = vmatpush2.bf16.msra.mxu0 0
    %2660 = vmatprep.subr.bf16.mxu0 0
    %2661 = vmatpush2.bf16.msra.mxu0 0
    %2662 = vmatprep.subr.bf16.mxu0 0
    %2663 = vmatpush2.bf16.msra.mxu0 0
    %2664 = vmatprep.subr.bf16.mxu0 0
    %2665 = vmatpush2.bf16.msra.mxu0 0
    %2666 = vmatprep.subr.bf16.mxu0 0
    %2667 = vmatpush2.bf16.msra.mxu0 0
    %2668 = vmatprep.subr.bf16.mxu0 0
    %2669 = vmatpush2.bf16.msra.mxu0 0
    %2670 = vmatprep.subr.bf16.mxu0 0
    %2671 = vmatpush2.bf16.msra.mxu0 0
    %2672 = vmatprep.subr.bf16.mxu0 0
    %2673 = vmatpush2.bf16.msra.mxu0 0
    %2674 = vmatprep.mubr.bf16.mxu0 0
    %2675 = vmatmul.mubr.bf16.gmra.mxu0 %v2544
    %v2676 = vpop.f32.mrf.mxu0
    %v2677 = vadd.f32 0.0, %v2676
    %v2678 = vpop.f32.mrf.mxu0
    %v2679 = vadd.f32 0.0, %v2678
    %v2680 = vpop.f32.mrf.mxu0
    %v2681 = vpop.f32.mrf.mxu0
    %2682 = vdwg.mxu0
    %v2683 = vadd.f32 %v2537, %v2677
    %v2684 = vadd.f32 %v2538, %v2679
    %v2685 = vrot.slane %v1953, 5
    %v2687 = vrot.slane %v1954, 4
    %v2689 = vsel %vm1964, %v2685, %v2687
    %v2690 = vpack.c.bf16 %v2689, %v2689
    %s2691 = scalar_lea.vmem %s5, 640
    %v2692 = vld [vmem:[%s2691] sm:$0xff]
    %v2693 = vld [vmem:[%s2691 + $0x8] sm:$0xff]
    %v2694 = vld [vmem:[%s2691 + $0x10] sm:$0xff]
    %v2695 = vld [vmem:[%s2691 + $0x18] sm:$0xff]
    %v2696 = vld [vmem:[%s2691 + $0x20] sm:$0xff]
    %v2697 = vld [vmem:[%s2691 + $0x28] sm:$0xff]
    %v2698 = vld [vmem:[%s2691 + $0x30] sm:$0xff]
    %v2699 = vld [vmem:[%s2691 + $0x38] sm:$0xff]
    %v2700 = vld [vmem:[%s2691 + $0x40] sm:$0xff]
    %v2701 = vld [vmem:[%s2691 + $0x48] sm:$0xff]
    %v2702 = vld [vmem:[%s2691 + $0x50] sm:$0xff]
    %v2703 = vld [vmem:[%s2691 + $0x58] sm:$0xff]
    %v2704 = vld [vmem:[%s2691 + $0x60] sm:$0xff]
    %v2705 = vld [vmem:[%s2691 + $0x68] sm:$0xff]
    %v2706 = vld [vmem:[%s2691 + $0x70] sm:$0xff]
    %v2707 = vld [vmem:[%s2691 + $0x78] sm:$0xff]
    %v2724 = vunpack.c.l.b16 %v2692
    %v2725 = vunpack.c.h.b16 %v2692
    %v2726 = vunpack.c.l.b16 %v2693
    %v2727 = vunpack.c.h.b16 %v2693
    %v2728 = vunpack.c.l.b16 %v2694
    %v2729 = vunpack.c.h.b16 %v2694
    %v2730 = vunpack.c.l.b16 %v2695
    %v2731 = vunpack.c.h.b16 %v2695
    %v2732 = vunpack.c.l.b16 %v2696
    %v2733 = vunpack.c.h.b16 %v2696
    %v2734 = vunpack.c.l.b16 %v2697
    %v2735 = vunpack.c.h.b16 %v2697
    %v2736 = vunpack.c.l.b16 %v2698
    %v2737 = vunpack.c.h.b16 %v2698
    %v2738 = vunpack.c.l.b16 %v2699
    %v2739 = vunpack.c.h.b16 %v2699
    %v2740 = vunpack.c.l.b16 %v2700
    %v2741 = vunpack.c.h.b16 %v2700
    %v2742 = vunpack.c.l.b16 %v2701
    %v2743 = vunpack.c.h.b16 %v2701
    %v2744 = vunpack.c.l.b16 %v2702
    %v2745 = vunpack.c.h.b16 %v2702
    %v2746 = vunpack.c.l.b16 %v2703
    %v2747 = vunpack.c.h.b16 %v2703
    %v2748 = vunpack.c.l.b16 %v2704
    %v2749 = vunpack.c.h.b16 %v2704
    %v2750 = vunpack.c.l.b16 %v2705
    %v2751 = vunpack.c.h.b16 %v2705
    %v2752 = vunpack.c.l.b16 %v2706
    %v2753 = vunpack.c.h.b16 %v2706
    %v2754 = vunpack.c.l.b16 %v2707
    %v2755 = vunpack.c.h.b16 %v2707
    %v2756 = vpack.c.b16 %v2726, %v2724
    %v2757 = vpack.c.b16 %v2727, %v2725
    %v2758 = vpack.c.b16 %v2730, %v2728
    %v2759 = vpack.c.b16 %v2731, %v2729
    %v2760 = vpack.c.b16 %v2734, %v2732
    %v2761 = vpack.c.b16 %v2735, %v2733
    %v2762 = vpack.c.b16 %v2738, %v2736
    %v2763 = vpack.c.b16 %v2739, %v2737
    %v2764 = vpack.c.b16 %v2742, %v2740
    %v2765 = vpack.c.b16 %v2743, %v2741
    %v2766 = vpack.c.b16 %v2746, %v2744
    %v2767 = vpack.c.b16 %v2747, %v2745
    %v2768 = vpack.c.b16 %v2750, %v2748
    %v2769 = vpack.c.b16 %v2751, %v2749
    %v2770 = vpack.c.b16 %v2754, %v2752
    %v2771 = vpack.c.b16 %v2755, %v2753
    %2788 = vmatprep.subr.bf16.mxu0 %v2771
    %2789 = vmatpush1.bf16.msra.mxu0 %v2770
    %2790 = vmatprep.subr.bf16.mxu0 %v2769
    %2791 = vmatpush1.bf16.msra.mxu0 %v2768
    %2792 = vmatprep.subr.bf16.mxu0 %v2767
    %2793 = vmatpush1.bf16.msra.mxu0 %v2766
    %2794 = vmatprep.subr.bf16.mxu0 %v2765
    %2795 = vmatpush1.bf16.msra.mxu0 %v2764
    %2796 = vmatprep.subr.bf16.mxu0 %v2763
    %2797 = vmatpush1.bf16.msra.mxu0 %v2762
    %2798 = vmatprep.subr.bf16.mxu0 %v2761
    %2799 = vmatpush1.bf16.msra.mxu0 %v2760
    %2800 = vmatprep.subr.bf16.mxu0 %v2759
    %2801 = vmatpush1.bf16.msra.mxu0 %v2758
    %2802 = vmatprep.subr.bf16.mxu0 %v2757
    %2803 = vmatpush1.bf16.msra.mxu0 %v2756
    %2804 = vmatprep.subr.bf16.mxu0 0
    %2805 = vmatpush2.bf16.msra.mxu0 0
    %2806 = vmatprep.subr.bf16.mxu0 0
    %2807 = vmatpush2.bf16.msra.mxu0 0
    %2808 = vmatprep.subr.bf16.mxu0 0
    %2809 = vmatpush2.bf16.msra.mxu0 0
    %2810 = vmatprep.subr.bf16.mxu0 0
    %2811 = vmatpush2.bf16.msra.mxu0 0
    %2812 = vmatprep.subr.bf16.mxu0 0
    %2813 = vmatpush2.bf16.msra.mxu0 0
    %2814 = vmatprep.subr.bf16.mxu0 0
    %2815 = vmatpush2.bf16.msra.mxu0 0
    %2816 = vmatprep.subr.bf16.mxu0 0
    %2817 = vmatpush2.bf16.msra.mxu0 0
    %2818 = vmatprep.subr.bf16.mxu0 0
    %2819 = vmatpush2.bf16.msra.mxu0 0
    %2820 = vmatprep.mubr.bf16.mxu0 0
    %2821 = vmatmul.mubr.bf16.gmra.mxu0 %v2690
    %v2822 = vpop.f32.mrf.mxu0
    %v2823 = vadd.f32 0.0, %v2822
    %v2824 = vpop.f32.mrf.mxu0
    %v2825 = vadd.f32 0.0, %v2824
    %v2826 = vpop.f32.mrf.mxu0
    %v2827 = vpop.f32.mrf.mxu0
    %2828 = vdwg.mxu0
    %v2829 = vadd.f32 %v2683, %v2823
    %v2830 = vadd.f32 %v2684, %v2825
    %v2831 = vrot.slane %v1953, 6
    %v2833 = vrot.slane %v1954, 5
    %v2835 = vsel %vm1964, %v2831, %v2833
    %v2836 = vpack.c.bf16 %v2835, %v2835
    %s2837 = scalar_lea.vmem %s5, 768
    %v2838 = vld [vmem:[%s2837] sm:$0xff]
    %v2839 = vld [vmem:[%s2837 + $0x8] sm:$0xff]
    %v2840 = vld [vmem:[%s2837 + $0x10] sm:$0xff]
    %v2841 = vld [vmem:[%s2837 + $0x18] sm:$0xff]
    %v2842 = vld [vmem:[%s2837 + $0x20] sm:$0xff]
    %v2843 = vld [vmem:[%s2837 + $0x28] sm:$0xff]
    %v2844 = vld [vmem:[%s2837 + $0x30] sm:$0xff]
    %v2845 = vld [vmem:[%s2837 + $0x38] sm:$0xff]
    %v2846 = vld [vmem:[%s2837 + $0x40] sm:$0xff]
    %v2847 = vld [vmem:[%s2837 + $0x48] sm:$0xff]
    %v2848 = vld [vmem:[%s2837 + $0x50] sm:$0xff]
    %v2849 = vld [vmem:[%s2837 + $0x58] sm:$0xff]
    %v2850 = vld [vmem:[%s2837 + $0x60] sm:$0xff]
    %v2851 = vld [vmem:[%s2837 + $0x68] sm:$0xff]
    %v2852 = vld [vmem:[%s2837 + $0x70] sm:$0xff]
    %v2853 = vld [vmem:[%s2837 + $0x78] sm:$0xff]
    %v2870 = vunpack.c.l.b16 %v2838
    %v2871 = vunpack.c.h.b16 %v2838
    %v2872 = vunpack.c.l.b16 %v2839
    %v2873 = vunpack.c.h.b16 %v2839
    %v2874 = vunpack.c.l.b16 %v2840
    %v2875 = vunpack.c.h.b16 %v2840
    %v2876 = vunpack.c.l.b16 %v2841
    %v2877 = vunpack.c.h.b16 %v2841
    %v2878 = vunpack.c.l.b16 %v2842
    %v2879 = vunpack.c.h.b16 %v2842
    %v2880 = vunpack.c.l.b16 %v2843
    %v2881 = vunpack.c.h.b16 %v2843
    %v2882 = vunpack.c.l.b16 %v2844
    %v2883 = vunpack.c.h.b16 %v2844
    %v2884 = vunpack.c.l.b16 %v2845
    %v2885 = vunpack.c.h.b16 %v2845
    %v2886 = vunpack.c.l.b16 %v2846
    %v2887 = vunpack.c.h.b16 %v2846
    %v2888 = vunpack.c.l.b16 %v2847
    %v2889 = vunpack.c.h.b16 %v2847
    %v2890 = vunpack.c.l.b16 %v2848
    %v2891 = vunpack.c.h.b16 %v2848
    %v2892 = vunpack.c.l.b16 %v2849
    %v2893 = vunpack.c.h.b16 %v2849
    %v2894 = vunpack.c.l.b16 %v2850
    %v2895 = vunpack.c.h.b16 %v2850
    %v2896 = vunpack.c.l.b16 %v2851
    %v2897 = vunpack.c.h.b16 %v2851
    %v2898 = vunpack.c.l.b16 %v2852
    %v2899 = vunpack.c.h.b16 %v2852
    %v2900 = vunpack.c.l.b16 %v2853
    %v2901 = vunpack.c.h.b16 %v2853
    %v2902 = vpack.c.b16 %v2872, %v2870
    %v2903 = vpack.c.b16 %v2873, %v2871
    %v2904 = vpack.c.b16 %v2876, %v2874
    %v2905 = vpack.c.b16 %v2877, %v2875
    %v2906 = vpack.c.b16 %v2880, %v2878
    %v2907 = vpack.c.b16 %v2881, %v2879
    %v2908 = vpack.c.b16 %v2884, %v2882
    %v2909 = vpack.c.b16 %v2885, %v2883
    %v2910 = vpack.c.b16 %v2888, %v2886
    %v2911 = vpack.c.b16 %v2889, %v2887
    %v2912 = vpack.c.b16 %v2892, %v2890
    %v2913 = vpack.c.b16 %v2893, %v2891
    %v2914 = vpack.c.b16 %v2896, %v2894
    %v2915 = vpack.c.b16 %v2897, %v2895
    %v2916 = vpack.c.b16 %v2900, %v2898
    %v2917 = vpack.c.b16 %v2901, %v2899
    %2934 = vmatprep.subr.bf16.mxu0 %v2917
    %2935 = vmatpush1.bf16.msra.mxu0 %v2916
    %2936 = vmatprep.subr.bf16.mxu0 %v2915
    %2937 = vmatpush1.bf16.msra.mxu0 %v2914
    %2938 = vmatprep.subr.bf16.mxu0 %v2913
    %2939 = vmatpush1.bf16.msra.mxu0 %v2912
    %2940 = vmatprep.subr.bf16.mxu0 %v2911
    %2941 = vmatpush1.bf16.msra.mxu0 %v2910
    %2942 = vmatprep.subr.bf16.mxu0 %v2909
    %2943 = vmatpush1.bf16.msra.mxu0 %v2908
    %2944 = vmatprep.subr.bf16.mxu0 %v2907
    %2945 = vmatpush1.bf16.msra.mxu0 %v2906
    %2946 = vmatprep.subr.bf16.mxu0 %v2905
    %2947 = vmatpush1.bf16.msra.mxu0 %v2904
    %2948 = vmatprep.subr.bf16.mxu0 %v2903
    %2949 = vmatpush1.bf16.msra.mxu0 %v2902
    %2950 = vmatprep.subr.bf16.mxu0 0
    %2951 = vmatpush2.bf16.msra.mxu0 0
    %2952 = vmatprep.subr.bf16.mxu0 0
    %2953 = vmatpush2.bf16.msra.mxu0 0
    %2954 = vmatprep.subr.bf16.mxu0 0
    %2955 = vmatpush2.bf16.msra.mxu0 0
    %2956 = vmatprep.subr.bf16.mxu0 0
    %2957 = vmatpush2.bf16.msra.mxu0 0
    %2958 = vmatprep.subr.bf16.mxu0 0
    %2959 = vmatpush2.bf16.msra.mxu0 0
    %2960 = vmatprep.subr.bf16.mxu0 0
    %2961 = vmatpush2.bf16.msra.mxu0 0
    %2962 = vmatprep.subr.bf16.mxu0 0
    %2963 = vmatpush2.bf16.msra.mxu0 0
    %2964 = vmatprep.subr.bf16.mxu0 0
    %2965 = vmatpush2.bf16.msra.mxu0 0
    %2966 = vmatprep.mubr.bf16.mxu0 0
    %2967 = vmatmul.mubr.bf16.gmra.mxu0 %v2836
    %v2968 = vpop.f32.mrf.mxu0
    %v2969 = vadd.f32 0.0, %v2968
    %v2970 = vpop.f32.mrf.mxu0
    %v2971 = vadd.f32 0.0, %v2970
    %v2972 = vpop.f32.mrf.mxu0
    %v2973 = vpop.f32.mrf.mxu0
    %2974 = vdwg.mxu0
    %v2975 = vadd.f32 %v2829, %v2969
    %v2976 = vadd.f32 %v2830, %v2971
    %v2977 = vrot.slane %v1953, 7
    %v2979 = vrot.slane %v1954, 6
    %v2981 = vsel %vm1964, %v2977, %v2979
    %v2982 = vpack.c.bf16 %v2981, %v2981
    %s2983 = scalar_lea.vmem %s5, 896
    %v2984 = vld [vmem:[%s2983] sm:$0xff]
    %v2985 = vld [vmem:[%s2983 + $0x8] sm:$0xff]
    %v2986 = vld [vmem:[%s2983 + $0x10] sm:$0xff]
    %v2987 = vld [vmem:[%s2983 + $0x18] sm:$0xff]
    %v2988 = vld [vmem:[%s2983 + $0x20] sm:$0xff]
    %v2989 = vld [vmem:[%s2983 + $0x28] sm:$0xff]
    %v2990 = vld [vmem:[%s2983 + $0x30] sm:$0xff]
    %v2991 = vld [vmem:[%s2983 + $0x38] sm:$0xff]
    %v2992 = vld [vmem:[%s2983 + $0x40] sm:$0xff]
    %v2993 = vld [vmem:[%s2983 + $0x48] sm:$0xff]
    %v2994 = vld [vmem:[%s2983 + $0x50] sm:$0xff]
    %v2995 = vld [vmem:[%s2983 + $0x58] sm:$0xff]
    %v2996 = vld [vmem:[%s2983 + $0x60] sm:$0xff]
    %v2997 = vld [vmem:[%s2983 + $0x68] sm:$0xff]
    %v2998 = vld [vmem:[%s2983 + $0x70] sm:$0xff]
    %v2999 = vld [vmem:[%s2983 + $0x78] sm:$0xff]
    %v3016 = vunpack.c.l.b16 %v2984
    %v3017 = vunpack.c.h.b16 %v2984
    %v3018 = vunpack.c.l.b16 %v2985
    %v3019 = vunpack.c.h.b16 %v2985
    %v3020 = vunpack.c.l.b16 %v2986
    %v3021 = vunpack.c.h.b16 %v2986
    %v3022 = vunpack.c.l.b16 %v2987
    %v3023 = vunpack.c.h.b16 %v2987
    %v3024 = vunpack.c.l.b16 %v2988
    %v3025 = vunpack.c.h.b16 %v2988
    %v3026 = vunpack.c.l.b16 %v2989
    %v3027 = vunpack.c.h.b16 %v2989
    %v3028 = vunpack.c.l.b16 %v2990
    %v3029 = vunpack.c.h.b16 %v2990
    %v3030 = vunpack.c.l.b16 %v2991
    %v3031 = vunpack.c.h.b16 %v2991
    %v3032 = vunpack.c.l.b16 %v2992
    %v3033 = vunpack.c.h.b16 %v2992
    %v3034 = vunpack.c.l.b16 %v2993
    %v3035 = vunpack.c.h.b16 %v2993
    %v3036 = vunpack.c.l.b16 %v2994
    %v3037 = vunpack.c.h.b16 %v2994
    %v3038 = vunpack.c.l.b16 %v2995
    %v3039 = vunpack.c.h.b16 %v2995
    %v3040 = vunpack.c.l.b16 %v2996
    %v3041 = vunpack.c.h.b16 %v2996
    %v3042 = vunpack.c.l.b16 %v2997
    %v3043 = vunpack.c.h.b16 %v2997
    %v3044 = vunpack.c.l.b16 %v2998
    %v3045 = vunpack.c.h.b16 %v2998
    %v3046 = vunpack.c.l.b16 %v2999
    %v3047 = vunpack.c.h.b16 %v2999
    %v3048 = vpack.c.b16 %v3018, %v3016
    %v3049 = vpack.c.b16 %v3019, %v3017
    %v3050 = vpack.c.b16 %v3022, %v3020
    %v3051 = vpack.c.b16 %v3023, %v3021
    %v3052 = vpack.c.b16 %v3026, %v3024
    %v3053 = vpack.c.b16 %v3027, %v3025
    %v3054 = vpack.c.b16 %v3030, %v3028
    %v3055 = vpack.c.b16 %v3031, %v3029
    %v3056 = vpack.c.b16 %v3034, %v3032
    %v3057 = vpack.c.b16 %v3035, %v3033
    %v3058 = vpack.c.b16 %v3038, %v3036
    %v3059 = vpack.c.b16 %v3039, %v3037
    %v3060 = vpack.c.b16 %v3042, %v3040
    %v3061 = vpack.c.b16 %v3043, %v3041
    %v3062 = vpack.c.b16 %v3046, %v3044
    %v3063 = vpack.c.b16 %v3047, %v3045
    %3080 = vmatprep.subr.bf16.mxu0 %v3063
    %3081 = vmatpush1.bf16.msra.mxu0 %v3062
    %3082 = vmatprep.subr.bf16.mxu0 %v3061
    %3083 = vmatpush1.bf16.msra.mxu0 %v3060
    %3084 = vmatprep.subr.bf16.mxu0 %v3059
    %3085 = vmatpush1.bf16.msra.mxu0 %v3058
    %3086 = vmatprep.subr.bf16.mxu0 %v3057
    %3087 = vmatpush1.bf16.msra.mxu0 %v3056
    %3088 = vmatprep.subr.bf16.mxu0 %v3055
    %3089 = vmatpush1.bf16.msra.mxu0 %v3054
    %3090 = vmatprep.subr.bf16.mxu0 %v3053
    %3091 = vmatpush1.bf16.msra.mxu0 %v3052
    %3092 = vmatprep.subr.bf16.mxu0 %v3051
    %3093 = vmatpush1.bf16.msra.mxu0 %v3050
    %3094 = vmatprep.subr.bf16.mxu0 %v3049
    %3095 = vmatpush1.bf16.msra.mxu0 %v3048
    %3096 = vmatprep.subr.bf16.mxu0 0
    %3097 = vmatpush2.bf16.msra.mxu0 0
    %3098 = vmatprep.subr.bf16.mxu0 0
    %3099 = vmatpush2.bf16.msra.mxu0 0
    %3100 = vmatprep.subr.bf16.mxu0 0
    %3101 = vmatpush2.bf16.msra.mxu0 0
    %3102 = vmatprep.subr.bf16.mxu0 0
    %3103 = vmatpush2.bf16.msra.mxu0 0
    %3104 = vmatprep.subr.bf16.mxu0 0
    %3105 = vmatpush2.bf16.msra.mxu0 0
    %3106 = vmatprep.subr.bf16.mxu0 0
    %3107 = vmatpush2.bf16.msra.mxu0 0
    %3108 = vmatprep.subr.bf16.mxu0 0
    %3109 = vmatpush2.bf16.msra.mxu0 0
    %3110 = vmatprep.subr.bf16.mxu0 0
    %3111 = vmatpush2.bf16.msra.mxu0 0
    %3112 = vmatprep.mubr.bf16.mxu0 0
    %3113 = vmatmul.mubr.bf16.gmra.mxu0 %v2982
    %v3114 = vpop.f32.mrf.mxu0
    %v3115 = vadd.f32 0.0, %v3114
    %v3116 = vpop.f32.mrf.mxu0
    %v3117 = vadd.f32 0.0, %v3116
    %v3118 = vpop.f32.mrf.mxu0
    %v3119 = vpop.f32.mrf.mxu0
    %3120 = vdwg.mxu0
    %v3121 = vadd.f32 %v2975, %v3115
    %v3122 = vadd.f32 %v2976, %v3117
    %v3124 = vrot.slane %v1956, 7
    %v3126 = vsel %vm1964, %v1955, %v3124
    %v3127 = vpack.c.bf16 %v3126, %v3126
    %s3128 = scalar_lea.vmem %s5, 1024
    %v3129 = vld [vmem:[%s3128] sm:$0xff]
    %v3130 = vld [vmem:[%s3128 + $0x8] sm:$0xff]
    %v3131 = vld [vmem:[%s3128 + $0x10] sm:$0xff]
    %v3132 = vld [vmem:[%s3128 + $0x18] sm:$0xff]
    %v3133 = vld [vmem:[%s3128 + $0x20] sm:$0xff]
    %v3134 = vld [vmem:[%s3128 + $0x28] sm:$0xff]
    %v3135 = vld [vmem:[%s3128 + $0x30] sm:$0xff]
    %v3136 = vld [vmem:[%s3128 + $0x38] sm:$0xff]
    %v3137 = vld [vmem:[%s3128 + $0x40] sm:$0xff]
    %v3138 = vld [vmem:[%s3128 + $0x48] sm:$0xff]
    %v3139 = vld [vmem:[%s3128 + $0x50] sm:$0xff]
    %v3140 = vld [vmem:[%s3128 + $0x58] sm:$0xff]
    %v3141 = vld [vmem:[%s3128 + $0x60] sm:$0xff]
    %v3142 = vld [vmem:[%s3128 + $0x68] sm:$0xff]
    %v3143 = vld [vmem:[%s3128 + $0x70] sm:$0xff]
    %v3144 = vld [vmem:[%s3128 + $0x78] sm:$0xff]
    %v3161 = vunpack.c.l.b16 %v3129
    %v3162 = vunpack.c.h.b16 %v3129
    %v3163 = vunpack.c.l.b16 %v3130
    %v3164 = vunpack.c.h.b16 %v3130
    %v3165 = vunpack.c.l.b16 %v3131
    %v3166 = vunpack.c.h.b16 %v3131
    %v3167 = vunpack.c.l.b16 %v3132
    %v3168 = vunpack.c.h.b16 %v3132
    %v3169 = vunpack.c.l.b16 %v3133
    %v3170 = vunpack.c.h.b16 %v3133
    %v3171 = vunpack.c.l.b16 %v3134
    %v3172 = vunpack.c.h.b16 %v3134
    %v3173 = vunpack.c.l.b16 %v3135
    %v3174 = vunpack.c.h.b16 %v3135
    %v3175 = vunpack.c.l.b16 %v3136
    %v3176 = vunpack.c.h.b16 %v3136
    %v3177 = vunpack.c.l.b16 %v3137
    %v3178 = vunpack.c.h.b16 %v3137
    %v3179 = vunpack.c.l.b16 %v3138
    %v3180 = vunpack.c.h.b16 %v3138
    %v3181 = vunpack.c.l.b16 %v3139
    %v3182 = vunpack.c.h.b16 %v3139
    %v3183 = vunpack.c.l.b16 %v3140
    %v3184 = vunpack.c.h.b16 %v3140
    %v3185 = vunpack.c.l.b16 %v3141
    %v3186 = vunpack.c.h.b16 %v3141
    %v3187 = vunpack.c.l.b16 %v3142
    %v3188 = vunpack.c.h.b16 %v3142
    %v3189 = vunpack.c.l.b16 %v3143
    %v3190 = vunpack.c.h.b16 %v3143
    %v3191 = vunpack.c.l.b16 %v3144
    %v3192 = vunpack.c.h.b16 %v3144
    %v3193 = vpack.c.b16 %v3163, %v3161
    %v3194 = vpack.c.b16 %v3164, %v3162
    %v3195 = vpack.c.b16 %v3167, %v3165
    %v3196 = vpack.c.b16 %v3168, %v3166
    %v3197 = vpack.c.b16 %v3171, %v3169
    %v3198 = vpack.c.b16 %v3172, %v3170
    %v3199 = vpack.c.b16 %v3175, %v3173
    %v3200 = vpack.c.b16 %v3176, %v3174
    %v3201 = vpack.c.b16 %v3179, %v3177
    %v3202 = vpack.c.b16 %v3180, %v3178
    %v3203 = vpack.c.b16 %v3183, %v3181
    %v3204 = vpack.c.b16 %v3184, %v3182
    %v3205 = vpack.c.b16 %v3187, %v3185
    %v3206 = vpack.c.b16 %v3188, %v3186
    %v3207 = vpack.c.b16 %v3191, %v3189
    %v3208 = vpack.c.b16 %v3192, %v3190
    %3225 = vmatprep.subr.bf16.mxu0 %v3208
    %3226 = vmatpush1.bf16.msra.mxu0 %v3207
    %3227 = vmatprep.subr.bf16.mxu0 %v3206
    %3228 = vmatpush1.bf16.msra.mxu0 %v3205
    %3229 = vmatprep.subr.bf16.mxu0 %v3204
    %3230 = vmatpush1.bf16.msra.mxu0 %v3203
    %3231 = vmatprep.subr.bf16.mxu0 %v3202
    %3232 = vmatpush1.bf16.msra.mxu0 %v3201
    %3233 = vmatprep.subr.bf16.mxu0 %v3200
    %3234 = vmatpush1.bf16.msra.mxu0 %v3199
    %3235 = vmatprep.subr.bf16.mxu0 %v3198
    %3236 = vmatpush1.bf16.msra.mxu0 %v3197
    %3237 = vmatprep.subr.bf16.mxu0 %v3196
    %3238 = vmatpush1.bf16.msra.mxu0 %v3195
    %3239 = vmatprep.subr.bf16.mxu0 %v3194
    %3240 = vmatpush1.bf16.msra.mxu0 %v3193
    %3241 = vmatprep.subr.bf16.mxu0 0
    %3242 = vmatpush2.bf16.msra.mxu0 0
    %3243 = vmatprep.subr.bf16.mxu0 0
    %3244 = vmatpush2.bf16.msra.mxu0 0
    %3245 = vmatprep.subr.bf16.mxu0 0
    %3246 = vmatpush2.bf16.msra.mxu0 0
    %3247 = vmatprep.subr.bf16.mxu0 0
    %3248 = vmatpush2.bf16.msra.mxu0 0
    %3249 = vmatprep.subr.bf16.mxu0 0
    %3250 = vmatpush2.bf16.msra.mxu0 0
    %3251 = vmatprep.subr.bf16.mxu0 0
    %3252 = vmatpush2.bf16.msra.mxu0 0
    %3253 = vmatprep.subr.bf16.mxu0 0
    %3254 = vmatpush2.bf16.msra.mxu0 0
    %3255 = vmatprep.subr.bf16.mxu0 0
    %3256 = vmatpush2.bf16.msra.mxu0 0
    %3257 = vmatprep.mubr.bf16.mxu0 0
    %3258 = vmatmul.mubr.bf16.gmra.mxu0 %v3127
    %v3259 = vpop.f32.mrf.mxu0
    %v3260 = vadd.f32 0.0, %v3259
    %v3261 = vpop.f32.mrf.mxu0
    %v3262 = vadd.f32 0.0, %v3261
    %v3263 = vpop.f32.mrf.mxu0
    %v3264 = vpop.f32.mrf.mxu0
    %3265 = vdwg.mxu0
    %v3266 = vadd.f32 %v3121, %v3260
    %v3267 = vadd.f32 %v3122, %v3262
    %v3269 = vrot.slane %v1955, 1
    %v3271 = vsel %vm1964, %v3269, %v1956
    %v3272 = vpack.c.bf16 %v3271, %v3271
    %s3273 = scalar_lea.vmem %s5, 1152
    %v3274 = vld [vmem:[%s3273] sm:$0xff]
    %v3275 = vld [vmem:[%s3273 + $0x8] sm:$0xff]
    %v3276 = vld [vmem:[%s3273 + $0x10] sm:$0xff]
    %v3277 = vld [vmem:[%s3273 + $0x18] sm:$0xff]
    %v3278 = vld [vmem:[%s3273 + $0x20] sm:$0xff]
    %v3279 = vld [vmem:[%s3273 + $0x28] sm:$0xff]
    %v3280 = vld [vmem:[%s3273 + $0x30] sm:$0xff]
    %v3281 = vld [vmem:[%s3273 + $0x38] sm:$0xff]
    %v3282 = vld [vmem:[%s3273 + $0x40] sm:$0xff]
    %v3283 = vld [vmem:[%s3273 + $0x48] sm:$0xff]
    %v3284 = vld [vmem:[%s3273 + $0x50] sm:$0xff]
    %v3285 = vld [vmem:[%s3273 + $0x58] sm:$0xff]
    %v3286 = vld [vmem:[%s3273 + $0x60] sm:$0xff]
    %v3287 = vld [vmem:[%s3273 + $0x68] sm:$0xff]
    %v3288 = vld [vmem:[%s3273 + $0x70] sm:$0xff]
    %v3289 = vld [vmem:[%s3273 + $0x78] sm:$0xff]
    %v3306 = vunpack.c.l.b16 %v3274
    %v3307 = vunpack.c.h.b16 %v3274
    %v3308 = vunpack.c.l.b16 %v3275
    %v3309 = vunpack.c.h.b16 %v3275
    %v3310 = vunpack.c.l.b16 %v3276
    %v3311 = vunpack.c.h.b16 %v3276
    %v3312 = vunpack.c.l.b16 %v3277
    %v3313 = vunpack.c.h.b16 %v3277
    %v3314 = vunpack.c.l.b16 %v3278
    %v3315 = vunpack.c.h.b16 %v3278
    %v3316 = vunpack.c.l.b16 %v3279
    %v3317 = vunpack.c.h.b16 %v3279
    %v3318 = vunpack.c.l.b16 %v3280
    %v3319 = vunpack.c.h.b16 %v3280
    %v3320 = vunpack.c.l.b16 %v3281
    %v3321 = vunpack.c.h.b16 %v3281
    %v3322 = vunpack.c.l.b16 %v3282
    %v3323 = vunpack.c.h.b16 %v3282
    %v3324 = vunpack.c.l.b16 %v3283
    %v3325 = vunpack.c.h.b16 %v3283
    %v3326 = vunpack.c.l.b16 %v3284
    %v3327 = vunpack.c.h.b16 %v3284
    %v3328 = vunpack.c.l.b16 %v3285
    %v3329 = vunpack.c.h.b16 %v3285
    %v3330 = vunpack.c.l.b16 %v3286
    %v3331 = vunpack.c.h.b16 %v3286
    %v3332 = vunpack.c.l.b16 %v3287
    %v3333 = vunpack.c.h.b16 %v3287
    %v3334 = vunpack.c.l.b16 %v3288
    %v3335 = vunpack.c.h.b16 %v3288
    %v3336 = vunpack.c.l.b16 %v3289
    %v3337 = vunpack.c.h.b16 %v3289
    %v3338 = vpack.c.b16 %v3308, %v3306
    %v3339 = vpack.c.b16 %v3309, %v3307
    %v3340 = vpack.c.b16 %v3312, %v3310
    %v3341 = vpack.c.b16 %v3313, %v3311
    %v3342 = vpack.c.b16 %v3316, %v3314
    %v3343 = vpack.c.b16 %v3317, %v3315
    %v3344 = vpack.c.b16 %v3320, %v3318
    %v3345 = vpack.c.b16 %v3321, %v3319
    %v3346 = vpack.c.b16 %v3324, %v3322
    %v3347 = vpack.c.b16 %v3325, %v3323
    %v3348 = vpack.c.b16 %v3328, %v3326
    %v3349 = vpack.c.b16 %v3329, %v3327
    %v3350 = vpack.c.b16 %v3332, %v3330
    %v3351 = vpack.c.b16 %v3333, %v3331
    %v3352 = vpack.c.b16 %v3336, %v3334
    %v3353 = vpack.c.b16 %v3337, %v3335
    %3370 = vmatprep.subr.bf16.mxu0 %v3353
    %3371 = vmatpush1.bf16.msra.mxu0 %v3352
    %3372 = vmatprep.subr.bf16.mxu0 %v3351
    %3373 = vmatpush1.bf16.msra.mxu0 %v3350
    %3374 = vmatprep.subr.bf16.mxu0 %v3349
    %3375 = vmatpush1.bf16.msra.mxu0 %v3348
    %3376 = vmatprep.subr.bf16.mxu0 %v3347
    %3377 = vmatpush1.bf16.msra.mxu0 %v3346
    %3378 = vmatprep.subr.bf16.mxu0 %v3345
    %3379 = vmatpush1.bf16.msra.mxu0 %v3344
    %3380 = vmatprep.subr.bf16.mxu0 %v3343
    %3381 = vmatpush1.bf16.msra.mxu0 %v3342
    %3382 = vmatprep.subr.bf16.mxu0 %v3341
    %3383 = vmatpush1.bf16.msra.mxu0 %v3340
    %3384 = vmatprep.subr.bf16.mxu0 %v3339
    %3385 = vmatpush1.bf16.msra.mxu0 %v3338
    %3386 = vmatprep.subr.bf16.mxu0 0
    %3387 = vmatpush2.bf16.msra.mxu0 0
    %3388 = vmatprep.subr.bf16.mxu0 0
    %3389 = vmatpush2.bf16.msra.mxu0 0
    %3390 = vmatprep.subr.bf16.mxu0 0
    %3391 = vmatpush2.bf16.msra.mxu0 0
    %3392 = vmatprep.subr.bf16.mxu0 0
    %3393 = vmatpush2.bf16.msra.mxu0 0
    %3394 = vmatprep.subr.bf16.mxu0 0
    %3395 = vmatpush2.bf16.msra.mxu0 0
    %3396 = vmatprep.subr.bf16.mxu0 0
    %3397 = vmatpush2.bf16.msra.mxu0 0
    %3398 = vmatprep.subr.bf16.mxu0 0
    %3399 = vmatpush2.bf16.msra.mxu0 0
    %3400 = vmatprep.subr.bf16.mxu0 0
    %3401 = vmatpush2.bf16.msra.mxu0 0
    %3402 = vmatprep.mubr.bf16.mxu0 0
    %3403 = vmatmul.mubr.bf16.gmra.mxu0 %v3272
    %v3404 = vpop.f32.mrf.mxu0
    %v3405 = vadd.f32 0.0, %v3404
    %v3406 = vpop.f32.mrf.mxu0
    %v3407 = vadd.f32 0.0, %v3406
    %v3408 = vpop.f32.mrf.mxu0
    %v3409 = vpop.f32.mrf.mxu0
    %3410 = vdwg.mxu0
    %v3411 = vadd.f32 %v3266, %v3405
    %v3412 = vadd.f32 %v3267, %v3407
    %v3413 = vrot.slane %v1955, 2
    %v3415 = vrot.slane %v1956, 1
    %v3417 = vsel %vm1964, %v3413, %v3415
    %v3418 = vpack.c.bf16 %v3417, %v3417
    %s3419 = scalar_lea.vmem %s5, 1280
    %v3420 = vld [vmem:[%s3419] sm:$0xff]
    %v3421 = vld [vmem:[%s3419 + $0x8] sm:$0xff]
    %v3422 = vld [vmem:[%s3419 + $0x10] sm:$0xff]
    %v3423 = vld [vmem:[%s3419 + $0x18] sm:$0xff]
    %v3424 = vld [vmem:[%s3419 + $0x20] sm:$0xff]
    %v3425 = vld [vmem:[%s3419 + $0x28] sm:$0xff]
    %v3426 = vld [vmem:[%s3419 + $0x30] sm:$0xff]
    %v3427 = vld [vmem:[%s3419 + $0x38] sm:$0xff]
    %v3428 = vld [vmem:[%s3419 + $0x40] sm:$0xff]
    %v3429 = vld [vmem:[%s3419 + $0x48] sm:$0xff]
    %v3430 = vld [vmem:[%s3419 + $0x50] sm:$0xff]
    %v3431 = vld [vmem:[%s3419 + $0x58] sm:$0xff]
    %v3432 = vld [vmem:[%s3419 + $0x60] sm:$0xff]
    %v3433 = vld [vmem:[%s3419 + $0x68] sm:$0xff]
    %v3434 = vld [vmem:[%s3419 + $0x70] sm:$0xff]
    %v3435 = vld [vmem:[%s3419 + $0x78] sm:$0xff]
    %v3452 = vunpack.c.l.b16 %v3420
    %v3453 = vunpack.c.h.b16 %v3420
    %v3454 = vunpack.c.l.b16 %v3421
    %v3455 = vunpack.c.h.b16 %v3421
    %v3456 = vunpack.c.l.b16 %v3422
    %v3457 = vunpack.c.h.b16 %v3422
    %v3458 = vunpack.c.l.b16 %v3423
    %v3459 = vunpack.c.h.b16 %v3423
    %v3460 = vunpack.c.l.b16 %v3424
    %v3461 = vunpack.c.h.b16 %v3424
    %v3462 = vunpack.c.l.b16 %v3425
    %v3463 = vunpack.c.h.b16 %v3425
    %v3464 = vunpack.c.l.b16 %v3426
    %v3465 = vunpack.c.h.b16 %v3426
    %v3466 = vunpack.c.l.b16 %v3427
    %v3467 = vunpack.c.h.b16 %v3427
    %v3468 = vunpack.c.l.b16 %v3428
    %v3469 = vunpack.c.h.b16 %v3428
    %v3470 = vunpack.c.l.b16 %v3429
    %v3471 = vunpack.c.h.b16 %v3429
    %v3472 = vunpack.c.l.b16 %v3430
    %v3473 = vunpack.c.h.b16 %v3430
    %v3474 = vunpack.c.l.b16 %v3431
    %v3475 = vunpack.c.h.b16 %v3431
    %v3476 = vunpack.c.l.b16 %v3432
    %v3477 = vunpack.c.h.b16 %v3432
    %v3478 = vunpack.c.l.b16 %v3433
    %v3479 = vunpack.c.h.b16 %v3433
    %v3480 = vunpack.c.l.b16 %v3434
    %v3481 = vunpack.c.h.b16 %v3434
    %v3482 = vunpack.c.l.b16 %v3435
    %v3483 = vunpack.c.h.b16 %v3435
    %v3484 = vpack.c.b16 %v3454, %v3452
    %v3485 = vpack.c.b16 %v3455, %v3453
    %v3486 = vpack.c.b16 %v3458, %v3456
    %v3487 = vpack.c.b16 %v3459, %v3457
    %v3488 = vpack.c.b16 %v3462, %v3460
    %v3489 = vpack.c.b16 %v3463, %v3461
    %v3490 = vpack.c.b16 %v3466, %v3464
    %v3491 = vpack.c.b16 %v3467, %v3465
    %v3492 = vpack.c.b16 %v3470, %v3468
    %v3493 = vpack.c.b16 %v3471, %v3469
    %v3494 = vpack.c.b16 %v3474, %v3472
    %v3495 = vpack.c.b16 %v3475, %v3473
    %v3496 = vpack.c.b16 %v3478, %v3476
    %v3497 = vpack.c.b16 %v3479, %v3477
    %v3498 = vpack.c.b16 %v3482, %v3480
    %v3499 = vpack.c.b16 %v3483, %v3481
    %3516 = vmatprep.subr.bf16.mxu0 %v3499
    %3517 = vmatpush1.bf16.msra.mxu0 %v3498
    %3518 = vmatprep.subr.bf16.mxu0 %v3497
    %3519 = vmatpush1.bf16.msra.mxu0 %v3496
    %3520 = vmatprep.subr.bf16.mxu0 %v3495
    %3521 = vmatpush1.bf16.msra.mxu0 %v3494
    %3522 = vmatprep.subr.bf16.mxu0 %v3493
    %3523 = vmatpush1.bf16.msra.mxu0 %v3492
    %3524 = vmatprep.subr.bf16.mxu0 %v3491
    %3525 = vmatpush1.bf16.msra.mxu0 %v3490
    %3526 = vmatprep.subr.bf16.mxu0 %v3489
    %3527 = vmatpush1.bf16.msra.mxu0 %v3488
    %3528 = vmatprep.subr.bf16.mxu0 %v3487
    %3529 = vmatpush1.bf16.msra.mxu0 %v3486
    %3530 = vmatprep.subr.bf16.mxu0 %v3485
    %3531 = vmatpush1.bf16.msra.mxu0 %v3484
    %3532 = vmatprep.subr.bf16.mxu0 0
    %3533 = vmatpush2.bf16.msra.mxu0 0
    %3534 = vmatprep.subr.bf16.mxu0 0
    %3535 = vmatpush2.bf16.msra.mxu0 0
    %3536 = vmatprep.subr.bf16.mxu0 0
    %3537 = vmatpush2.bf16.msra.mxu0 0
    %3538 = vmatprep.subr.bf16.mxu0 0
    %3539 = vmatpush2.bf16.msra.mxu0 0
    %3540 = vmatprep.subr.bf16.mxu0 0
    %3541 = vmatpush2.bf16.msra.mxu0 0
    %3542 = vmatprep.subr.bf16.mxu0 0
    %3543 = vmatpush2.bf16.msra.mxu0 0
    %3544 = vmatprep.subr.bf16.mxu0 0
    %3545 = vmatpush2.bf16.msra.mxu0 0
    %3546 = vmatprep.subr.bf16.mxu0 0
    %3547 = vmatpush2.bf16.msra.mxu0 0
    %3548 = vmatprep.mubr.bf16.mxu0 0
    %3549 = vmatmul.mubr.bf16.gmra.mxu0 %v3418
    %v3550 = vpop.f32.mrf.mxu0
    %v3551 = vadd.f32 0.0, %v3550
    %v3552 = vpop.f32.mrf.mxu0
    %v3553 = vadd.f32 0.0, %v3552
    %v3554 = vpop.f32.mrf.mxu0
    %v3555 = vpop.f32.mrf.mxu0
    %3556 = vdwg.mxu0
    %v3557 = vadd.f32 %v3411, %v3551
    %v3558 = vadd.f32 %v3412, %v3553
    %v3559 = vrot.slane %v1955, 3
    %v3561 = vrot.slane %v1956, 2
    %v3563 = vsel %vm1964, %v3559, %v3561
    %v3564 = vpack.c.bf16 %v3563, %v3563
    %s3565 = scalar_lea.vmem %s5, 1408
    %v3566 = vld [vmem:[%s3565] sm:$0xff]
    %v3567 = vld [vmem:[%s3565 + $0x8] sm:$0xff]
    %v3568 = vld [vmem:[%s3565 + $0x10] sm:$0xff]
    %v3569 = vld [vmem:[%s3565 + $0x18] sm:$0xff]
    %v3570 = vld [vmem:[%s3565 + $0x20] sm:$0xff]
    %v3571 = vld [vmem:[%s3565 + $0x28] sm:$0xff]
    %v3572 = vld [vmem:[%s3565 + $0x30] sm:$0xff]
    %v3573 = vld [vmem:[%s3565 + $0x38] sm:$0xff]
    %v3574 = vld [vmem:[%s3565 + $0x40] sm:$0xff]
    %v3575 = vld [vmem:[%s3565 + $0x48] sm:$0xff]
    %v3576 = vld [vmem:[%s3565 + $0x50] sm:$0xff]
    %v3577 = vld [vmem:[%s3565 + $0x58] sm:$0xff]
    %v3578 = vld [vmem:[%s3565 + $0x60] sm:$0xff]
    %v3579 = vld [vmem:[%s3565 + $0x68] sm:$0xff]
    %v3580 = vld [vmem:[%s3565 + $0x70] sm:$0xff]
    %v3581 = vld [vmem:[%s3565 + $0x78] sm:$0xff]
    %v3598 = vunpack.c.l.b16 %v3566
    %v3599 = vunpack.c.h.b16 %v3566
    %v3600 = vunpack.c.l.b16 %v3567
    %v3601 = vunpack.c.h.b16 %v3567
    %v3602 = vunpack.c.l.b16 %v3568
    %v3603 = vunpack.c.h.b16 %v3568
    %v3604 = vunpack.c.l.b16 %v3569
    %v3605 = vunpack.c.h.b16 %v3569
    %v3606 = vunpack.c.l.b16 %v3570
    %v3607 = vunpack.c.h.b16 %v3570
    %v3608 = vunpack.c.l.b16 %v3571
    %v3609 = vunpack.c.h.b16 %v3571
    %v3610 = vunpack.c.l.b16 %v3572
    %v3611 = vunpack.c.h.b16 %v3572
    %v3612 = vunpack.c.l.b16 %v3573
    %v3613 = vunpack.c.h.b16 %v3573
    %v3614 = vunpack.c.l.b16 %v3574
    %v3615 = vunpack.c.h.b16 %v3574
    %v3616 = vunpack.c.l.b16 %v3575
    %v3617 = vunpack.c.h.b16 %v3575
    %v3618 = vunpack.c.l.b16 %v3576
    %v3619 = vunpack.c.h.b16 %v3576
    %v3620 = vunpack.c.l.b16 %v3577
    %v3621 = vunpack.c.h.b16 %v3577
    %v3622 = vunpack.c.l.b16 %v3578
    %v3623 = vunpack.c.h.b16 %v3578
    %v3624 = vunpack.c.l.b16 %v3579
    %v3625 = vunpack.c.h.b16 %v3579
    %v3626 = vunpack.c.l.b16 %v3580
    %v3627 = vunpack.c.h.b16 %v3580
    %v3628 = vunpack.c.l.b16 %v3581
    %v3629 = vunpack.c.h.b16 %v3581
    %v3630 = vpack.c.b16 %v3600, %v3598
    %v3631 = vpack.c.b16 %v3601, %v3599
    %v3632 = vpack.c.b16 %v3604, %v3602
    %v3633 = vpack.c.b16 %v3605, %v3603
    %v3634 = vpack.c.b16 %v3608, %v3606
    %v3635 = vpack.c.b16 %v3609, %v3607
    %v3636 = vpack.c.b16 %v3612, %v3610
    %v3637 = vpack.c.b16 %v3613, %v3611
    %v3638 = vpack.c.b16 %v3616, %v3614
    %v3639 = vpack.c.b16 %v3617, %v3615
    %v3640 = vpack.c.b16 %v3620, %v3618
    %v3641 = vpack.c.b16 %v3621, %v3619
    %v3642 = vpack.c.b16 %v3624, %v3622
    %v3643 = vpack.c.b16 %v3625, %v3623
    %v3644 = vpack.c.b16 %v3628, %v3626
    %v3645 = vpack.c.b16 %v3629, %v3627
    %3662 = vmatprep.subr.bf16.mxu0 %v3645
    %3663 = vmatpush1.bf16.msra.mxu0 %v3644
    %3664 = vmatprep.subr.bf16.mxu0 %v3643
    %3665 = vmatpush1.bf16.msra.mxu0 %v3642
    %3666 = vmatprep.subr.bf16.mxu0 %v3641
    %3667 = vmatpush1.bf16.msra.mxu0 %v3640
    %3668 = vmatprep.subr.bf16.mxu0 %v3639
    %3669 = vmatpush1.bf16.msra.mxu0 %v3638
    %3670 = vmatprep.subr.bf16.mxu0 %v3637
    %3671 = vmatpush1.bf16.msra.mxu0 %v3636
    %3672 = vmatprep.subr.bf16.mxu0 %v3635
    %3673 = vmatpush1.bf16.msra.mxu0 %v3634
    %3674 = vmatprep.subr.bf16.mxu0 %v3633
    %3675 = vmatpush1.bf16.msra.mxu0 %v3632
    %3676 = vmatprep.subr.bf16.mxu0 %v3631
    %3677 = vmatpush1.bf16.msra.mxu0 %v3630
    %3678 = vmatprep.subr.bf16.mxu0 0
    %3679 = vmatpush2.bf16.msra.mxu0 0
    %3680 = vmatprep.subr.bf16.mxu0 0
    %3681 = vmatpush2.bf16.msra.mxu0 0
    %3682 = vmatprep.subr.bf16.mxu0 0
    %3683 = vmatpush2.bf16.msra.mxu0 0
    %3684 = vmatprep.subr.bf16.mxu0 0
    %3685 = vmatpush2.bf16.msra.mxu0 0
    %3686 = vmatprep.subr.bf16.mxu0 0
    %3687 = vmatpush2.bf16.msra.mxu0 0
    %3688 = vmatprep.subr.bf16.mxu0 0
    %3689 = vmatpush2.bf16.msra.mxu0 0
    %3690 = vmatprep.subr.bf16.mxu0 0
    %3691 = vmatpush2.bf16.msra.mxu0 0
    %3692 = vmatprep.subr.bf16.mxu0 0
    %3693 = vmatpush2.bf16.msra.mxu0 0
    %3694 = vmatprep.mubr.bf16.mxu0 0
    %3695 = vmatmul.mubr.bf16.gmra.mxu0 %v3564
    %v3696 = vpop.f32.mrf.mxu0
    %v3697 = vadd.f32 0.0, %v3696
    %v3698 = vpop.f32.mrf.mxu0
    %v3699 = vadd.f32 0.0, %v3698
    %v3700 = vpop.f32.mrf.mxu0
    %v3701 = vpop.f32.mrf.mxu0
    %3702 = vdwg.mxu0
    %v3703 = vadd.f32 %v3557, %v3697
    %v3704 = vadd.f32 %v3558, %v3699
    %v3705 = vrot.slane %v1955, 4
    %v3707 = vrot.slane %v1956, 3
    %v3709 = vsel %vm1964, %v3705, %v3707
    %v3710 = vpack.c.bf16 %v3709, %v3709
    %s3711 = scalar_lea.vmem %s5, 1536
    %v3712 = vld [vmem:[%s3711] sm:$0xff]
    %v3713 = vld [vmem:[%s3711 + $0x8] sm:$0xff]
    %v3714 = vld [vmem:[%s3711 + $0x10] sm:$0xff]
    %v3715 = vld [vmem:[%s3711 + $0x18] sm:$0xff]
    %v3716 = vld [vmem:[%s3711 + $0x20] sm:$0xff]
    %v3717 = vld [vmem:[%s3711 + $0x28] sm:$0xff]
    %v3718 = vld [vmem:[%s3711 + $0x30] sm:$0xff]
    %v3719 = vld [vmem:[%s3711 + $0x38] sm:$0xff]
    %v3720 = vld [vmem:[%s3711 + $0x40] sm:$0xff]
    %v3721 = vld [vmem:[%s3711 + $0x48] sm:$0xff]
    %v3722 = vld [vmem:[%s3711 + $0x50] sm:$0xff]
    %v3723 = vld [vmem:[%s3711 + $0x58] sm:$0xff]
    %v3724 = vld [vmem:[%s3711 + $0x60] sm:$0xff]
    %v3725 = vld [vmem:[%s3711 + $0x68] sm:$0xff]
    %v3726 = vld [vmem:[%s3711 + $0x70] sm:$0xff]
    %v3727 = vld [vmem:[%s3711 + $0x78] sm:$0xff]
    %v3744 = vunpack.c.l.b16 %v3712
    %v3745 = vunpack.c.h.b16 %v3712
    %v3746 = vunpack.c.l.b16 %v3713
    %v3747 = vunpack.c.h.b16 %v3713
    %v3748 = vunpack.c.l.b16 %v3714
    %v3749 = vunpack.c.h.b16 %v3714
    %v3750 = vunpack.c.l.b16 %v3715
    %v3751 = vunpack.c.h.b16 %v3715
    %v3752 = vunpack.c.l.b16 %v3716
    %v3753 = vunpack.c.h.b16 %v3716
    %v3754 = vunpack.c.l.b16 %v3717
    %v3755 = vunpack.c.h.b16 %v3717
    %v3756 = vunpack.c.l.b16 %v3718
    %v3757 = vunpack.c.h.b16 %v3718
    %v3758 = vunpack.c.l.b16 %v3719
    %v3759 = vunpack.c.h.b16 %v3719
    %v3760 = vunpack.c.l.b16 %v3720
    %v3761 = vunpack.c.h.b16 %v3720
    %v3762 = vunpack.c.l.b16 %v3721
    %v3763 = vunpack.c.h.b16 %v3721
    %v3764 = vunpack.c.l.b16 %v3722
    %v3765 = vunpack.c.h.b16 %v3722
    %v3766 = vunpack.c.l.b16 %v3723
    %v3767 = vunpack.c.h.b16 %v3723
    %v3768 = vunpack.c.l.b16 %v3724
    %v3769 = vunpack.c.h.b16 %v3724
    %v3770 = vunpack.c.l.b16 %v3725
    %v3771 = vunpack.c.h.b16 %v3725
    %v3772 = vunpack.c.l.b16 %v3726
    %v3773 = vunpack.c.h.b16 %v3726
    %v3774 = vunpack.c.l.b16 %v3727
    %v3775 = vunpack.c.h.b16 %v3727
    %v3776 = vpack.c.b16 %v3746, %v3744
    %v3777 = vpack.c.b16 %v3747, %v3745
    %v3778 = vpack.c.b16 %v3750, %v3748
    %v3779 = vpack.c.b16 %v3751, %v3749
    %v3780 = vpack.c.b16 %v3754, %v3752
    %v3781 = vpack.c.b16 %v3755, %v3753
    %v3782 = vpack.c.b16 %v3758, %v3756
    %v3783 = vpack.c.b16 %v3759, %v3757
    %v3784 = vpack.c.b16 %v3762, %v3760
    %v3785 = vpack.c.b16 %v3763, %v3761
    %v3786 = vpack.c.b16 %v3766, %v3764
    %v3787 = vpack.c.b16 %v3767, %v3765
    %v3788 = vpack.c.b16 %v3770, %v3768
    %v3789 = vpack.c.b16 %v3771, %v3769
    %v3790 = vpack.c.b16 %v3774, %v3772
    %v3791 = vpack.c.b16 %v3775, %v3773
    %3808 = vmatprep.subr.bf16.mxu0 %v3791
    %3809 = vmatpush1.bf16.msra.mxu0 %v3790
    %3810 = vmatprep.subr.bf16.mxu0 %v3789
    %3811 = vmatpush1.bf16.msra.mxu0 %v3788
    %3812 = vmatprep.subr.bf16.mxu0 %v3787
    %3813 = vmatpush1.bf16.msra.mxu0 %v3786
    %3814 = vmatprep.subr.bf16.mxu0 %v3785
    %3815 = vmatpush1.bf16.msra.mxu0 %v3784
    %3816 = vmatprep.subr.bf16.mxu0 %v3783
    %3817 = vmatpush1.bf16.msra.mxu0 %v3782
    %3818 = vmatprep.subr.bf16.mxu0 %v3781
    %3819 = vmatpush1.bf16.msra.mxu0 %v3780
    %3820 = vmatprep.subr.bf16.mxu0 %v3779
    %3821 = vmatpush1.bf16.msra.mxu0 %v3778
    %3822 = vmatprep.subr.bf16.mxu0 %v3777
    %3823 = vmatpush1.bf16.msra.mxu0 %v3776
    %3824 = vmatprep.subr.bf16.mxu0 0
    %3825 = vmatpush2.bf16.msra.mxu0 0
    %3826 = vmatprep.subr.bf16.mxu0 0
    %3827 = vmatpush2.bf16.msra.mxu0 0
    %3828 = vmatprep.subr.bf16.mxu0 0
    %3829 = vmatpush2.bf16.msra.mxu0 0
    %3830 = vmatprep.subr.bf16.mxu0 0
    %3831 = vmatpush2.bf16.msra.mxu0 0
    %3832 = vmatprep.subr.bf16.mxu0 0
    %3833 = vmatpush2.bf16.msra.mxu0 0
    %3834 = vmatprep.subr.bf16.mxu0 0
    %3835 = vmatpush2.bf16.msra.mxu0 0
    %3836 = vmatprep.subr.bf16.mxu0 0
    %3837 = vmatpush2.bf16.msra.mxu0 0
    %3838 = vmatprep.subr.bf16.mxu0 0
    %3839 = vmatpush2.bf16.msra.mxu0 0
    %3840 = vmatprep.mubr.bf16.mxu0 0
    %3841 = vmatmul.mubr.bf16.gmra.mxu0 %v3710
    %v3842 = vpop.f32.mrf.mxu0
    %v3843 = vadd.f32 0.0, %v3842
    %v3844 = vpop.f32.mrf.mxu0
    %v3845 = vadd.f32 0.0, %v3844
    %v3846 = vpop.f32.mrf.mxu0
    %v3847 = vpop.f32.mrf.mxu0
    %3848 = vdwg.mxu0
    %v3849 = vadd.f32 %v3703, %v3843
    %v3850 = vadd.f32 %v3704, %v3845
    %v3851 = vrot.slane %v1955, 5
    %v3853 = vrot.slane %v1956, 4
    %v3855 = vsel %vm1964, %v3851, %v3853
    %v3856 = vpack.c.bf16 %v3855, %v3855
    %s3857 = scalar_lea.vmem %s5, 1664
    %v3858 = vld [vmem:[%s3857] sm:$0xff]
    %v3859 = vld [vmem:[%s3857 + $0x8] sm:$0xff]
    %v3860 = vld [vmem:[%s3857 + $0x10] sm:$0xff]
    %v3861 = vld [vmem:[%s3857 + $0x18] sm:$0xff]
    %v3862 = vld [vmem:[%s3857 + $0x20] sm:$0xff]
    %v3863 = vld [vmem:[%s3857 + $0x28] sm:$0xff]
    %v3864 = vld [vmem:[%s3857 + $0x30] sm:$0xff]
    %v3865 = vld [vmem:[%s3857 + $0x38] sm:$0xff]
    %v3866 = vld [vmem:[%s3857 + $0x40] sm:$0xff]
    %v3867 = vld [vmem:[%s3857 + $0x48] sm:$0xff]
    %v3868 = vld [vmem:[%s3857 + $0x50] sm:$0xff]
    %v3869 = vld [vmem:[%s3857 + $0x58] sm:$0xff]
    %v3870 = vld [vmem:[%s3857 + $0x60] sm:$0xff]
    %v3871 = vld [vmem:[%s3857 + $0x68] sm:$0xff]
    %v3872 = vld [vmem:[%s3857 + $0x70] sm:$0xff]
    %v3873 = vld [vmem:[%s3857 + $0x78] sm:$0xff]
    %v3890 = vunpack.c.l.b16 %v3858
    %v3891 = vunpack.c.h.b16 %v3858
    %v3892 = vunpack.c.l.b16 %v3859
    %v3893 = vunpack.c.h.b16 %v3859
    %v3894 = vunpack.c.l.b16 %v3860
    %v3895 = vunpack.c.h.b16 %v3860
    %v3896 = vunpack.c.l.b16 %v3861
    %v3897 = vunpack.c.h.b16 %v3861
    %v3898 = vunpack.c.l.b16 %v3862
    %v3899 = vunpack.c.h.b16 %v3862
    %v3900 = vunpack.c.l.b16 %v3863
    %v3901 = vunpack.c.h.b16 %v3863
    %v3902 = vunpack.c.l.b16 %v3864
    %v3903 = vunpack.c.h.b16 %v3864
    %v3904 = vunpack.c.l.b16 %v3865
    %v3905 = vunpack.c.h.b16 %v3865
    %v3906 = vunpack.c.l.b16 %v3866
    %v3907 = vunpack.c.h.b16 %v3866
    %v3908 = vunpack.c.l.b16 %v3867
    %v3909 = vunpack.c.h.b16 %v3867
    %v3910 = vunpack.c.l.b16 %v3868
    %v3911 = vunpack.c.h.b16 %v3868
    %v3912 = vunpack.c.l.b16 %v3869
    %v3913 = vunpack.c.h.b16 %v3869
    %v3914 = vunpack.c.l.b16 %v3870
    %v3915 = vunpack.c.h.b16 %v3870
    %v3916 = vunpack.c.l.b16 %v3871
    %v3917 = vunpack.c.h.b16 %v3871
    %v3918 = vunpack.c.l.b16 %v3872
    %v3919 = vunpack.c.h.b16 %v3872
    %v3920 = vunpack.c.l.b16 %v3873
    %v3921 = vunpack.c.h.b16 %v3873
    %v3922 = vpack.c.b16 %v3892, %v3890
    %v3923 = vpack.c.b16 %v3893, %v3891
    %v3924 = vpack.c.b16 %v3896, %v3894
    %v3925 = vpack.c.b16 %v3897, %v3895
    %v3926 = vpack.c.b16 %v3900, %v3898
    %v3927 = vpack.c.b16 %v3901, %v3899
    %v3928 = vpack.c.b16 %v3904, %v3902
    %v3929 = vpack.c.b16 %v3905, %v3903
    %v3930 = vpack.c.b16 %v3908, %v3906
    %v3931 = vpack.c.b16 %v3909, %v3907
    %v3932 = vpack.c.b16 %v3912, %v3910
    %v3933 = vpack.c.b16 %v3913, %v3911
    %v3934 = vpack.c.b16 %v3916, %v3914
    %v3935 = vpack.c.b16 %v3917, %v3915
    %v3936 = vpack.c.b16 %v3920, %v3918
    %v3937 = vpack.c.b16 %v3921, %v3919
    %3954 = vmatprep.subr.bf16.mxu0 %v3937
    %3955 = vmatpush1.bf16.msra.mxu0 %v3936
    %3956 = vmatprep.subr.bf16.mxu0 %v3935
    %3957 = vmatpush1.bf16.msra.mxu0 %v3934
    %3958 = vmatprep.subr.bf16.mxu0 %v3933
    %3959 = vmatpush1.bf16.msra.mxu0 %v3932
    %3960 = vmatprep.subr.bf16.mxu0 %v3931
    %3961 = vmatpush1.bf16.msra.mxu0 %v3930
    %3962 = vmatprep.subr.bf16.mxu0 %v3929
    %3963 = vmatpush1.bf16.msra.mxu0 %v3928
    %3964 = vmatprep.subr.bf16.mxu0 %v3927
    %3965 = vmatpush1.bf16.msra.mxu0 %v3926
    %3966 = vmatprep.subr.bf16.mxu0 %v3925
    %3967 = vmatpush1.bf16.msra.mxu0 %v3924
    %3968 = vmatprep.subr.bf16.mxu0 %v3923
    %3969 = vmatpush1.bf16.msra.mxu0 %v3922
    %3970 = vmatprep.subr.bf16.mxu0 0
    %3971 = vmatpush2.bf16.msra.mxu0 0
    %3972 = vmatprep.subr.bf16.mxu0 0
    %3973 = vmatpush2.bf16.msra.mxu0 0
    %3974 = vmatprep.subr.bf16.mxu0 0
    %3975 = vmatpush2.bf16.msra.mxu0 0
    %3976 = vmatprep.subr.bf16.mxu0 0
    %3977 = vmatpush2.bf16.msra.mxu0 0
    %3978 = vmatprep.subr.bf16.mxu0 0
    %3979 = vmatpush2.bf16.msra.mxu0 0
    %3980 = vmatprep.subr.bf16.mxu0 0
    %3981 = vmatpush2.bf16.msra.mxu0 0
    %3982 = vmatprep.subr.bf16.mxu0 0
    %3983 = vmatpush2.bf16.msra.mxu0 0
    %3984 = vmatprep.subr.bf16.mxu0 0
    %3985 = vmatpush2.bf16.msra.mxu0 0
    %3986 = vmatprep.mubr.bf16.mxu0 0
    %3987 = vmatmul.mubr.bf16.gmra.mxu0 %v3856
    %v3988 = vpop.f32.mrf.mxu0
    %v3989 = vadd.f32 0.0, %v3988
    %v3990 = vpop.f32.mrf.mxu0
    %v3991 = vadd.f32 0.0, %v3990
    %v3992 = vpop.f32.mrf.mxu0
    %v3993 = vpop.f32.mrf.mxu0
    %3994 = vdwg.mxu0
    %v3995 = vadd.f32 %v3849, %v3989
    %v3996 = vadd.f32 %v3850, %v3991
    %v3997 = vrot.slane %v1955, 6
    %v3999 = vrot.slane %v1956, 5
    %v4001 = vsel %vm1964, %v3997, %v3999
    %v4002 = vpack.c.bf16 %v4001, %v4001
    %s4003 = scalar_lea.vmem %s5, 1792
    %v4004 = vld [vmem:[%s4003] sm:$0xff]
    %v4005 = vld [vmem:[%s4003 + $0x8] sm:$0xff]
    %v4006 = vld [vmem:[%s4003 + $0x10] sm:$0xff]
    %v4007 = vld [vmem:[%s4003 + $0x18] sm:$0xff]
    %v4008 = vld [vmem:[%s4003 + $0x20] sm:$0xff]
    %v4009 = vld [vmem:[%s4003 + $0x28] sm:$0xff]
    %v4010 = vld [vmem:[%s4003 + $0x30] sm:$0xff]
    %v4011 = vld [vmem:[%s4003 + $0x38] sm:$0xff]
    %v4012 = vld [vmem:[%s4003 + $0x40] sm:$0xff]
    %v4013 = vld [vmem:[%s4003 + $0x48] sm:$0xff]
    %v4014 = vld [vmem:[%s4003 + $0x50] sm:$0xff]
    %v4015 = vld [vmem:[%s4003 + $0x58] sm:$0xff]
    %v4016 = vld [vmem:[%s4003 + $0x60] sm:$0xff]
    %v4017 = vld [vmem:[%s4003 + $0x68] sm:$0xff]
    %v4018 = vld [vmem:[%s4003 + $0x70] sm:$0xff]
    %v4019 = vld [vmem:[%s4003 + $0x78] sm:$0xff]
    %v4036 = vunpack.c.l.b16 %v4004
    %v4037 = vunpack.c.h.b16 %v4004
    %v4038 = vunpack.c.l.b16 %v4005
    %v4039 = vunpack.c.h.b16 %v4005
    %v4040 = vunpack.c.l.b16 %v4006
    %v4041 = vunpack.c.h.b16 %v4006
    %v4042 = vunpack.c.l.b16 %v4007
    %v4043 = vunpack.c.h.b16 %v4007
    %v4044 = vunpack.c.l.b16 %v4008
    %v4045 = vunpack.c.h.b16 %v4008
    %v4046 = vunpack.c.l.b16 %v4009
    %v4047 = vunpack.c.h.b16 %v4009
    %v4048 = vunpack.c.l.b16 %v4010
    %v4049 = vunpack.c.h.b16 %v4010
    %v4050 = vunpack.c.l.b16 %v4011
    %v4051 = vunpack.c.h.b16 %v4011
    %v4052 = vunpack.c.l.b16 %v4012
    %v4053 = vunpack.c.h.b16 %v4012
    %v4054 = vunpack.c.l.b16 %v4013
    %v4055 = vunpack.c.h.b16 %v4013
    %v4056 = vunpack.c.l.b16 %v4014
    %v4057 = vunpack.c.h.b16 %v4014
    %v4058 = vunpack.c.l.b16 %v4015
    %v4059 = vunpack.c.h.b16 %v4015
    %v4060 = vunpack.c.l.b16 %v4016
    %v4061 = vunpack.c.h.b16 %v4016
    %v4062 = vunpack.c.l.b16 %v4017
    %v4063 = vunpack.c.h.b16 %v4017
    %v4064 = vunpack.c.l.b16 %v4018
    %v4065 = vunpack.c.h.b16 %v4018
    %v4066 = vunpack.c.l.b16 %v4019
    %v4067 = vunpack.c.h.b16 %v4019
    %v4068 = vpack.c.b16 %v4038, %v4036
    %v4069 = vpack.c.b16 %v4039, %v4037
    %v4070 = vpack.c.b16 %v4042, %v4040
    %v4071 = vpack.c.b16 %v4043, %v4041
    %v4072 = vpack.c.b16 %v4046, %v4044
    %v4073 = vpack.c.b16 %v4047, %v4045
    %v4074 = vpack.c.b16 %v4050, %v4048
    %v4075 = vpack.c.b16 %v4051, %v4049
    %v4076 = vpack.c.b16 %v4054, %v4052
    %v4077 = vpack.c.b16 %v4055, %v4053
    %v4078 = vpack.c.b16 %v4058, %v4056
    %v4079 = vpack.c.b16 %v4059, %v4057
    %v4080 = vpack.c.b16 %v4062, %v4060
    %v4081 = vpack.c.b16 %v4063, %v4061
    %v4082 = vpack.c.b16 %v4066, %v4064
    %v4083 = vpack.c.b16 %v4067, %v4065
    %4100 = vmatprep.subr.bf16.mxu0 %v4083
    %4101 = vmatpush1.bf16.msra.mxu0 %v4082
    %4102 = vmatprep.subr.bf16.mxu0 %v4081
    %4103 = vmatpush1.bf16.msra.mxu0 %v4080
    %4104 = vmatprep.subr.bf16.mxu0 %v4079
    %4105 = vmatpush1.bf16.msra.mxu0 %v4078
    %4106 = vmatprep.subr.bf16.mxu0 %v4077
    %4107 = vmatpush1.bf16.msra.mxu0 %v4076
    %4108 = vmatprep.subr.bf16.mxu0 %v4075
    %4109 = vmatpush1.bf16.msra.mxu0 %v4074
    %4110 = vmatprep.subr.bf16.mxu0 %v4073
    %4111 = vmatpush1.bf16.msra.mxu0 %v4072
    %4112 = vmatprep.subr.bf16.mxu0 %v4071
    %4113 = vmatpush1.bf16.msra.mxu0 %v4070
    %4114 = vmatprep.subr.bf16.mxu0 %v4069
    %4115 = vmatpush1.bf16.msra.mxu0 %v4068
    %4116 = vmatprep.subr.bf16.mxu0 0
    %4117 = vmatpush2.bf16.msra.mxu0 0
    %4118 = vmatprep.subr.bf16.mxu0 0
    %4119 = vmatpush2.bf16.msra.mxu0 0
    %4120 = vmatprep.subr.bf16.mxu0 0
    %4121 = vmatpush2.bf16.msra.mxu0 0
    %4122 = vmatprep.subr.bf16.mxu0 0
    %4123 = vmatpush2.bf16.msra.mxu0 0
    %4124 = vmatprep.subr.bf16.mxu0 0
    %4125 = vmatpush2.bf16.msra.mxu0 0
    %4126 = vmatprep.subr.bf16.mxu0 0
    %4127 = vmatpush2.bf16.msra.mxu0 0
    %4128 = vmatprep.subr.bf16.mxu0 0
    %4129 = vmatpush2.bf16.msra.mxu0 0
    %4130 = vmatprep.subr.bf16.mxu0 0
    %4131 = vmatpush2.bf16.msra.mxu0 0
    %4132 = vmatprep.mubr.bf16.mxu0 0
    %4133 = vmatmul.mubr.bf16.gmra.mxu0 %v4002
    %v4134 = vpop.f32.mrf.mxu0
    %v4135 = vadd.f32 0.0, %v4134
    %v4136 = vpop.f32.mrf.mxu0
    %v4137 = vadd.f32 0.0, %v4136
    %v4138 = vpop.f32.mrf.mxu0
    %v4139 = vpop.f32.mrf.mxu0
    %4140 = vdwg.mxu0
    %v4141 = vadd.f32 %v3995, %v4135
    %v4142 = vadd.f32 %v3996, %v4137
    %v4143 = vrot.slane %v1955, 7
    %v4145 = vrot.slane %v1956, 6
    %v4147 = vsel %vm1964, %v4143, %v4145
    %v4148 = vpack.c.bf16 %v4147, %v4147
    %s4149 = scalar_lea.vmem %s5, 1920
    %v4150 = vld [vmem:[%s4149] sm:$0xff]
    %v4151 = vld [vmem:[%s4149 + $0x8] sm:$0xff]
    %v4152 = vld [vmem:[%s4149 + $0x10] sm:$0xff]
    %v4153 = vld [vmem:[%s4149 + $0x18] sm:$0xff]
    %v4154 = vld [vmem:[%s4149 + $0x20] sm:$0xff]
    %v4155 = vld [vmem:[%s4149 + $0x28] sm:$0xff]
    %v4156 = vld [vmem:[%s4149 + $0x30] sm:$0xff]
    %v4157 = vld [vmem:[%s4149 + $0x38] sm:$0xff]
    %v4158 = vld [vmem:[%s4149 + $0x40] sm:$0xff]
    %v4159 = vld [vmem:[%s4149 + $0x48] sm:$0xff]
    %v4160 = vld [vmem:[%s4149 + $0x50] sm:$0xff]
    %v4161 = vld [vmem:[%s4149 + $0x58] sm:$0xff]
    %v4162 = vld [vmem:[%s4149 + $0x60] sm:$0xff]
    %v4163 = vld [vmem:[%s4149 + $0x68] sm:$0xff]
    %v4164 = vld [vmem:[%s4149 + $0x70] sm:$0xff]
    %v4165 = vld [vmem:[%s4149 + $0x78] sm:$0xff]
    %v4182 = vunpack.c.l.b16 %v4150
    %v4183 = vunpack.c.h.b16 %v4150
    %v4184 = vunpack.c.l.b16 %v4151
    %v4185 = vunpack.c.h.b16 %v4151
    %v4186 = vunpack.c.l.b16 %v4152
    %v4187 = vunpack.c.h.b16 %v4152
    %v4188 = vunpack.c.l.b16 %v4153
    %v4189 = vunpack.c.h.b16 %v4153
    %v4190 = vunpack.c.l.b16 %v4154
    %v4191 = vunpack.c.h.b16 %v4154
    %v4192 = vunpack.c.l.b16 %v4155
    %v4193 = vunpack.c.h.b16 %v4155
    %v4194 = vunpack.c.l.b16 %v4156
    %v4195 = vunpack.c.h.b16 %v4156
    %v4196 = vunpack.c.l.b16 %v4157
    %v4197 = vunpack.c.h.b16 %v4157
    %v4198 = vunpack.c.l.b16 %v4158
    %v4199 = vunpack.c.h.b16 %v4158
    %v4200 = vunpack.c.l.b16 %v4159
    %v4201 = vunpack.c.h.b16 %v4159
    %v4202 = vunpack.c.l.b16 %v4160
    %v4203 = vunpack.c.h.b16 %v4160
    %v4204 = vunpack.c.l.b16 %v4161
    %v4205 = vunpack.c.h.b16 %v4161
    %v4206 = vunpack.c.l.b16 %v4162
    %v4207 = vunpack.c.h.b16 %v4162
    %v4208 = vunpack.c.l.b16 %v4163
    %v4209 = vunpack.c.h.b16 %v4163
    %v4210 = vunpack.c.l.b16 %v4164
    %v4211 = vunpack.c.h.b16 %v4164
    %v4212 = vunpack.c.l.b16 %v4165
    %v4213 = vunpack.c.h.b16 %v4165
    %v4214 = vpack.c.b16 %v4184, %v4182
    %v4215 = vpack.c.b16 %v4185, %v4183
    %v4216 = vpack.c.b16 %v4188, %v4186
    %v4217 = vpack.c.b16 %v4189, %v4187
    %v4218 = vpack.c.b16 %v4192, %v4190
    %v4219 = vpack.c.b16 %v4193, %v4191
    %v4220 = vpack.c.b16 %v4196, %v4194
    %v4221 = vpack.c.b16 %v4197, %v4195
    %v4222 = vpack.c.b16 %v4200, %v4198
    %v4223 = vpack.c.b16 %v4201, %v4199
    %v4224 = vpack.c.b16 %v4204, %v4202
    %v4225 = vpack.c.b16 %v4205, %v4203
    %v4226 = vpack.c.b16 %v4208, %v4206
    %v4227 = vpack.c.b16 %v4209, %v4207
    %v4228 = vpack.c.b16 %v4212, %v4210
    %v4229 = vpack.c.b16 %v4213, %v4211
    %4246 = vmatprep.subr.bf16.mxu0 %v4229
    %4247 = vmatpush1.bf16.msra.mxu0 %v4228
    %4248 = vmatprep.subr.bf16.mxu0 %v4227
    %4249 = vmatpush1.bf16.msra.mxu0 %v4226
    %4250 = vmatprep.subr.bf16.mxu0 %v4225
    %4251 = vmatpush1.bf16.msra.mxu0 %v4224
    %4252 = vmatprep.subr.bf16.mxu0 %v4223
    %4253 = vmatpush1.bf16.msra.mxu0 %v4222
    %4254 = vmatprep.subr.bf16.mxu0 %v4221
    %4255 = vmatpush1.bf16.msra.mxu0 %v4220
    %4256 = vmatprep.subr.bf16.mxu0 %v4219
    %4257 = vmatpush1.bf16.msra.mxu0 %v4218
    %4258 = vmatprep.subr.bf16.mxu0 %v4217
    %4259 = vmatpush1.bf16.msra.mxu0 %v4216
    %4260 = vmatprep.subr.bf16.mxu0 %v4215
    %4261 = vmatpush1.bf16.msra.mxu0 %v4214
    %4262 = vmatprep.subr.bf16.mxu0 0
    %4263 = vmatpush2.bf16.msra.mxu0 0
    %4264 = vmatprep.subr.bf16.mxu0 0
    %4265 = vmatpush2.bf16.msra.mxu0 0
    %4266 = vmatprep.subr.bf16.mxu0 0
    %4267 = vmatpush2.bf16.msra.mxu0 0
    %4268 = vmatprep.subr.bf16.mxu0 0
    %4269 = vmatpush2.bf16.msra.mxu0 0
    %4270 = vmatprep.subr.bf16.mxu0 0
    %4271 = vmatpush2.bf16.msra.mxu0 0
    %4272 = vmatprep.subr.bf16.mxu0 0
    %4273 = vmatpush2.bf16.msra.mxu0 0
    %4274 = vmatprep.subr.bf16.mxu0 0
    %4275 = vmatpush2.bf16.msra.mxu0 0
    %4276 = vmatprep.subr.bf16.mxu0 0
    %4277 = vmatpush2.bf16.msra.mxu0 0
    %4278 = vmatprep.mubr.bf16.mxu0 0
    %4279 = vmatmul.mubr.bf16.gmra.mxu0 %v4148
    %v4280 = vpop.f32.mrf.mxu0
    %v4281 = vadd.f32 0.0, %v4280
    %v4282 = vpop.f32.mrf.mxu0
    %v4283 = vadd.f32 0.0, %v4282
    %v4284 = vpop.f32.mrf.mxu0
    %v4285 = vpop.f32.mrf.mxu0
    %4286 = vdwg.mxu0
    %v4287 = vadd.f32 %v4141, %v4281
    %v4288 = vadd.f32 %v4142, %v4283
    %v4290 = vrot.slane %v1958, 7
    %v4292 = vsel %vm1964, %v1957, %v4290
    %v4293 = vpack.c.bf16 %v4292, %v4292
    %s4294 = scalar_lea.vmem %s5, 2048
    %v4295 = vld [vmem:[%s4294] sm:$0xff]
    %v4296 = vld [vmem:[%s4294 + $0x8] sm:$0xff]
    %v4297 = vld [vmem:[%s4294 + $0x10] sm:$0xff]
    %v4298 = vld [vmem:[%s4294 + $0x18] sm:$0xff]
    %v4299 = vld [vmem:[%s4294 + $0x20] sm:$0xff]
    %v4300 = vld [vmem:[%s4294 + $0x28] sm:$0xff]
    %v4301 = vld [vmem:[%s4294 + $0x30] sm:$0xff]
    %v4302 = vld [vmem:[%s4294 + $0x38] sm:$0xff]
    %v4303 = vld [vmem:[%s4294 + $0x40] sm:$0xff]
    %v4304 = vld [vmem:[%s4294 + $0x48] sm:$0xff]
    %v4305 = vld [vmem:[%s4294 + $0x50] sm:$0xff]
    %v4306 = vld [vmem:[%s4294 + $0x58] sm:$0xff]
    %v4307 = vld [vmem:[%s4294 + $0x60] sm:$0xff]
    %v4308 = vld [vmem:[%s4294 + $0x68] sm:$0xff]
    %v4309 = vld [vmem:[%s4294 + $0x70] sm:$0xff]
    %v4310 = vld [vmem:[%s4294 + $0x78] sm:$0xff]
    %v4327 = vunpack.c.l.b16 %v4295
    %v4328 = vunpack.c.h.b16 %v4295
    %v4329 = vunpack.c.l.b16 %v4296
    %v4330 = vunpack.c.h.b16 %v4296
    %v4331 = vunpack.c.l.b16 %v4297
    %v4332 = vunpack.c.h.b16 %v4297
    %v4333 = vunpack.c.l.b16 %v4298
    %v4334 = vunpack.c.h.b16 %v4298
    %v4335 = vunpack.c.l.b16 %v4299
    %v4336 = vunpack.c.h.b16 %v4299
    %v4337 = vunpack.c.l.b16 %v4300
    %v4338 = vunpack.c.h.b16 %v4300
    %v4339 = vunpack.c.l.b16 %v4301
    %v4340 = vunpack.c.h.b16 %v4301
    %v4341 = vunpack.c.l.b16 %v4302
    %v4342 = vunpack.c.h.b16 %v4302
    %v4343 = vunpack.c.l.b16 %v4303
    %v4344 = vunpack.c.h.b16 %v4303
    %v4345 = vunpack.c.l.b16 %v4304
    %v4346 = vunpack.c.h.b16 %v4304
    %v4347 = vunpack.c.l.b16 %v4305
    %v4348 = vunpack.c.h.b16 %v4305
    %v4349 = vunpack.c.l.b16 %v4306
    %v4350 = vunpack.c.h.b16 %v4306
    %v4351 = vunpack.c.l.b16 %v4307
    %v4352 = vunpack.c.h.b16 %v4307
    %v4353 = vunpack.c.l.b16 %v4308
    %v4354 = vunpack.c.h.b16 %v4308
    %v4355 = vunpack.c.l.b16 %v4309
    %v4356 = vunpack.c.h.b16 %v4309
    %v4357 = vunpack.c.l.b16 %v4310
    %v4358 = vunpack.c.h.b16 %v4310
    %v4359 = vpack.c.b16 %v4329, %v4327
    %v4360 = vpack.c.b16 %v4330, %v4328
    %v4361 = vpack.c.b16 %v4333, %v4331
    %v4362 = vpack.c.b16 %v4334, %v4332
    %v4363 = vpack.c.b16 %v4337, %v4335
    %v4364 = vpack.c.b16 %v4338, %v4336
    %v4365 = vpack.c.b16 %v4341, %v4339
    %v4366 = vpack.c.b16 %v4342, %v4340
    %v4367 = vpack.c.b16 %v4345, %v4343
    %v4368 = vpack.c.b16 %v4346, %v4344
    %v4369 = vpack.c.b16 %v4349, %v4347
    %v4370 = vpack.c.b16 %v4350, %v4348
    %v4371 = vpack.c.b16 %v4353, %v4351
    %v4372 = vpack.c.b16 %v4354, %v4352
    %v4373 = vpack.c.b16 %v4357, %v4355
    %v4374 = vpack.c.b16 %v4358, %v4356
    %4391 = vmatprep.subr.bf16.mxu0 %v4374
    %4392 = vmatpush1.bf16.msra.mxu0 %v4373
    %4393 = vmatprep.subr.bf16.mxu0 %v4372
    %4394 = vmatpush1.bf16.msra.mxu0 %v4371
    %4395 = vmatprep.subr.bf16.mxu0 %v4370
    %4396 = vmatpush1.bf16.msra.mxu0 %v4369
    %4397 = vmatprep.subr.bf16.mxu0 %v4368
    %4398 = vmatpush1.bf16.msra.mxu0 %v4367
    %4399 = vmatprep.subr.bf16.mxu0 %v4366
    %4400 = vmatpush1.bf16.msra.mxu0 %v4365
    %4401 = vmatprep.subr.bf16.mxu0 %v4364
    %4402 = vmatpush1.bf16.msra.mxu0 %v4363
    %4403 = vmatprep.subr.bf16.mxu0 %v4362
    %4404 = vmatpush1.bf16.msra.mxu0 %v4361
    %4405 = vmatprep.subr.bf16.mxu0 %v4360
    %4406 = vmatpush1.bf16.msra.mxu0 %v4359
    %4407 = vmatprep.subr.bf16.mxu0 0
    %4408 = vmatpush2.bf16.msra.mxu0 0
    %4409 = vmatprep.subr.bf16.mxu0 0
    %4410 = vmatpush2.bf16.msra.mxu0 0
    %4411 = vmatprep.subr.bf16.mxu0 0
    %4412 = vmatpush2.bf16.msra.mxu0 0
    %4413 = vmatprep.subr.bf16.mxu0 0
    %4414 = vmatpush2.bf16.msra.mxu0 0
    %4415 = vmatprep.subr.bf16.mxu0 0
    %4416 = vmatpush2.bf16.msra.mxu0 0
    %4417 = vmatprep.subr.bf16.mxu0 0
    %4418 = vmatpush2.bf16.msra.mxu0 0
    %4419 = vmatprep.subr.bf16.mxu0 0
    %4420 = vmatpush2.bf16.msra.mxu0 0
    %4421 = vmatprep.subr.bf16.mxu0 0
    %4422 = vmatpush2.bf16.msra.mxu0 0
    %4423 = vmatprep.mubr.bf16.mxu0 0
    %4424 = vmatmul.mubr.bf16.gmra.mxu0 %v4293
    %v4425 = vpop.f32.mrf.mxu0
    %v4426 = vadd.f32 0.0, %v4425
    %v4427 = vpop.f32.mrf.mxu0
    %v4428 = vadd.f32 0.0, %v4427
    %v4429 = vpop.f32.mrf.mxu0
    %v4430 = vpop.f32.mrf.mxu0
    %4431 = vdwg.mxu0
    %v4432 = vadd.f32 %v4287, %v4426
    %v4433 = vadd.f32 %v4288, %v4428
    %v4435 = vrot.slane %v1957, 1
    %v4437 = vsel %vm1964, %v4435, %v1958
    %v4438 = vpack.c.bf16 %v4437, %v4437
    %s4439 = scalar_lea.vmem %s5, 2176
    %v4440 = vld [vmem:[%s4439] sm:$0xff]
    %v4441 = vld [vmem:[%s4439 + $0x8] sm:$0xff]
    %v4442 = vld [vmem:[%s4439 + $0x10] sm:$0xff]
    %v4443 = vld [vmem:[%s4439 + $0x18] sm:$0xff]
    %v4444 = vld [vmem:[%s4439 + $0x20] sm:$0xff]
    %v4445 = vld [vmem:[%s4439 + $0x28] sm:$0xff]
    %v4446 = vld [vmem:[%s4439 + $0x30] sm:$0xff]
    %v4447 = vld [vmem:[%s4439 + $0x38] sm:$0xff]
    %v4448 = vld [vmem:[%s4439 + $0x40] sm:$0xff]
    %v4449 = vld [vmem:[%s4439 + $0x48] sm:$0xff]
    %v4450 = vld [vmem:[%s4439 + $0x50] sm:$0xff]
    %v4451 = vld [vmem:[%s4439 + $0x58] sm:$0xff]
    %v4452 = vld [vmem:[%s4439 + $0x60] sm:$0xff]
    %v4453 = vld [vmem:[%s4439 + $0x68] sm:$0xff]
    %v4454 = vld [vmem:[%s4439 + $0x70] sm:$0xff]
    %v4455 = vld [vmem:[%s4439 + $0x78] sm:$0xff]
    %v4472 = vunpack.c.l.b16 %v4440
    %v4473 = vunpack.c.h.b16 %v4440
    %v4474 = vunpack.c.l.b16 %v4441
    %v4475 = vunpack.c.h.b16 %v4441
    %v4476 = vunpack.c.l.b16 %v4442
    %v4477 = vunpack.c.h.b16 %v4442
    %v4478 = vunpack.c.l.b16 %v4443
    %v4479 = vunpack.c.h.b16 %v4443
    %v4480 = vunpack.c.l.b16 %v4444
    %v4481 = vunpack.c.h.b16 %v4444
    %v4482 = vunpack.c.l.b16 %v4445
    %v4483 = vunpack.c.h.b16 %v4445
    %v4484 = vunpack.c.l.b16 %v4446
    %v4485 = vunpack.c.h.b16 %v4446
    %v4486 = vunpack.c.l.b16 %v4447
    %v4487 = vunpack.c.h.b16 %v4447
    %v4488 = vunpack.c.l.b16 %v4448
    %v4489 = vunpack.c.h.b16 %v4448
    %v4490 = vunpack.c.l.b16 %v4449
    %v4491 = vunpack.c.h.b16 %v4449
    %v4492 = vunpack.c.l.b16 %v4450
    %v4493 = vunpack.c.h.b16 %v4450
    %v4494 = vunpack.c.l.b16 %v4451
    %v4495 = vunpack.c.h.b16 %v4451
    %v4496 = vunpack.c.l.b16 %v4452
    %v4497 = vunpack.c.h.b16 %v4452
    %v4498 = vunpack.c.l.b16 %v4453
    %v4499 = vunpack.c.h.b16 %v4453
    %v4500 = vunpack.c.l.b16 %v4454
    %v4501 = vunpack.c.h.b16 %v4454
    %v4502 = vunpack.c.l.b16 %v4455
    %v4503 = vunpack.c.h.b16 %v4455
    %v4504 = vpack.c.b16 %v4474, %v4472
    %v4505 = vpack.c.b16 %v4475, %v4473
    %v4506 = vpack.c.b16 %v4478, %v4476
    %v4507 = vpack.c.b16 %v4479, %v4477
    %v4508 = vpack.c.b16 %v4482, %v4480
    %v4509 = vpack.c.b16 %v4483, %v4481
    %v4510 = vpack.c.b16 %v4486, %v4484
    %v4511 = vpack.c.b16 %v4487, %v4485
    %v4512 = vpack.c.b16 %v4490, %v4488
    %v4513 = vpack.c.b16 %v4491, %v4489
    %v4514 = vpack.c.b16 %v4494, %v4492
    %v4515 = vpack.c.b16 %v4495, %v4493
    %v4516 = vpack.c.b16 %v4498, %v4496
    %v4517 = vpack.c.b16 %v4499, %v4497
    %v4518 = vpack.c.b16 %v4502, %v4500
    %v4519 = vpack.c.b16 %v4503, %v4501
    %4536 = vmatprep.subr.bf16.mxu0 %v4519
    %4537 = vmatpush1.bf16.msra.mxu0 %v4518
    %4538 = vmatprep.subr.bf16.mxu0 %v4517
    %4539 = vmatpush1.bf16.msra.mxu0 %v4516
    %4540 = vmatprep.subr.bf16.mxu0 %v4515
    %4541 = vmatpush1.bf16.msra.mxu0 %v4514
    %4542 = vmatprep.subr.bf16.mxu0 %v4513
    %4543 = vmatpush1.bf16.msra.mxu0 %v4512
    %4544 = vmatprep.subr.bf16.mxu0 %v4511
    %4545 = vmatpush1.bf16.msra.mxu0 %v4510
    %4546 = vmatprep.subr.bf16.mxu0 %v4509
    %4547 = vmatpush1.bf16.msra.mxu0 %v4508
    %4548 = vmatprep.subr.bf16.mxu0 %v4507
    %4549 = vmatpush1.bf16.msra.mxu0 %v4506
    %4550 = vmatprep.subr.bf16.mxu0 %v4505
    %4551 = vmatpush1.bf16.msra.mxu0 %v4504
    %4552 = vmatprep.subr.bf16.mxu0 0
    %4553 = vmatpush2.bf16.msra.mxu0 0
    %4554 = vmatprep.subr.bf16.mxu0 0
    %4555 = vmatpush2.bf16.msra.mxu0 0
    %4556 = vmatprep.subr.bf16.mxu0 0
    %4557 = vmatpush2.bf16.msra.mxu0 0
    %4558 = vmatprep.subr.bf16.mxu0 0
    %4559 = vmatpush2.bf16.msra.mxu0 0
    %4560 = vmatprep.subr.bf16.mxu0 0
    %4561 = vmatpush2.bf16.msra.mxu0 0
    %4562 = vmatprep.subr.bf16.mxu0 0
    %4563 = vmatpush2.bf16.msra.mxu0 0
    %4564 = vmatprep.subr.bf16.mxu0 0
    %4565 = vmatpush2.bf16.msra.mxu0 0
    %4566 = vmatprep.subr.bf16.mxu0 0
    %4567 = vmatpush2.bf16.msra.mxu0 0
    %4568 = vmatprep.mubr.bf16.mxu0 0
    %4569 = vmatmul.mubr.bf16.gmra.mxu0 %v4438
    %v4570 = vpop.f32.mrf.mxu0
    %v4571 = vadd.f32 0.0, %v4570
    %v4572 = vpop.f32.mrf.mxu0
    %v4573 = vadd.f32 0.0, %v4572
    %v4574 = vpop.f32.mrf.mxu0
    %v4575 = vpop.f32.mrf.mxu0
    %4576 = vdwg.mxu0
    %v4577 = vadd.f32 %v4432, %v4571
    %v4578 = vadd.f32 %v4433, %v4573
    %v4579 = vrot.slane %v1957, 2
    %v4581 = vrot.slane %v1958, 1
    %v4583 = vsel %vm1964, %v4579, %v4581
    %v4584 = vpack.c.bf16 %v4583, %v4583
    %s4585 = scalar_lea.vmem %s5, 2304
    %v4586 = vld [vmem:[%s4585] sm:$0xff]
    %v4587 = vld [vmem:[%s4585 + $0x8] sm:$0xff]
    %v4588 = vld [vmem:[%s4585 + $0x10] sm:$0xff]
    %v4589 = vld [vmem:[%s4585 + $0x18] sm:$0xff]
    %v4590 = vld [vmem:[%s4585 + $0x20] sm:$0xff]
    %v4591 = vld [vmem:[%s4585 + $0x28] sm:$0xff]
    %v4592 = vld [vmem:[%s4585 + $0x30] sm:$0xff]
    %v4593 = vld [vmem:[%s4585 + $0x38] sm:$0xff]
    %v4594 = vld [vmem:[%s4585 + $0x40] sm:$0xff]
    %v4595 = vld [vmem:[%s4585 + $0x48] sm:$0xff]
    %v4596 = vld [vmem:[%s4585 + $0x50] sm:$0xff]
    %v4597 = vld [vmem:[%s4585 + $0x58] sm:$0xff]
    %v4598 = vld [vmem:[%s4585 + $0x60] sm:$0xff]
    %v4599 = vld [vmem:[%s4585 + $0x68] sm:$0xff]
    %v4600 = vld [vmem:[%s4585 + $0x70] sm:$0xff]
    %v4601 = vld [vmem:[%s4585 + $0x78] sm:$0xff]
    %v4618 = vunpack.c.l.b16 %v4586
    %v4619 = vunpack.c.h.b16 %v4586
    %v4620 = vunpack.c.l.b16 %v4587
    %v4621 = vunpack.c.h.b16 %v4587
    %v4622 = vunpack.c.l.b16 %v4588
    %v4623 = vunpack.c.h.b16 %v4588
    %v4624 = vunpack.c.l.b16 %v4589
    %v4625 = vunpack.c.h.b16 %v4589
    %v4626 = vunpack.c.l.b16 %v4590
    %v4627 = vunpack.c.h.b16 %v4590
    %v4628 = vunpack.c.l.b16 %v4591
    %v4629 = vunpack.c.h.b16 %v4591
    %v4630 = vunpack.c.l.b16 %v4592
    %v4631 = vunpack.c.h.b16 %v4592
    %v4632 = vunpack.c.l.b16 %v4593
    %v4633 = vunpack.c.h.b16 %v4593
    %v4634 = vunpack.c.l.b16 %v4594
    %v4635 = vunpack.c.h.b16 %v4594
    %v4636 = vunpack.c.l.b16 %v4595
    %v4637 = vunpack.c.h.b16 %v4595
    %v4638 = vunpack.c.l.b16 %v4596
    %v4639 = vunpack.c.h.b16 %v4596
    %v4640 = vunpack.c.l.b16 %v4597
    %v4641 = vunpack.c.h.b16 %v4597
    %v4642 = vunpack.c.l.b16 %v4598
    %v4643 = vunpack.c.h.b16 %v4598
    %v4644 = vunpack.c.l.b16 %v4599
    %v4645 = vunpack.c.h.b16 %v4599
    %v4646 = vunpack.c.l.b16 %v4600
    %v4647 = vunpack.c.h.b16 %v4600
    %v4648 = vunpack.c.l.b16 %v4601
    %v4649 = vunpack.c.h.b16 %v4601
    %v4650 = vpack.c.b16 %v4620, %v4618
    %v4651 = vpack.c.b16 %v4621, %v4619
    %v4652 = vpack.c.b16 %v4624, %v4622
    %v4653 = vpack.c.b16 %v4625, %v4623
    %v4654 = vpack.c.b16 %v4628, %v4626
    %v4655 = vpack.c.b16 %v4629, %v4627
    %v4656 = vpack.c.b16 %v4632, %v4630
    %v4657 = vpack.c.b16 %v4633, %v4631
    %v4658 = vpack.c.b16 %v4636, %v4634
    %v4659 = vpack.c.b16 %v4637, %v4635
    %v4660 = vpack.c.b16 %v4640, %v4638
    %v4661 = vpack.c.b16 %v4641, %v4639
    %v4662 = vpack.c.b16 %v4644, %v4642
    %v4663 = vpack.c.b16 %v4645, %v4643
    %v4664 = vpack.c.b16 %v4648, %v4646
    %v4665 = vpack.c.b16 %v4649, %v4647
    %4682 = vmatprep.subr.bf16.mxu0 %v4665
    %4683 = vmatpush1.bf16.msra.mxu0 %v4664
    %4684 = vmatprep.subr.bf16.mxu0 %v4663
    %4685 = vmatpush1.bf16.msra.mxu0 %v4662
    %4686 = vmatprep.subr.bf16.mxu0 %v4661
    %4687 = vmatpush1.bf16.msra.mxu0 %v4660
    %4688 = vmatprep.subr.bf16.mxu0 %v4659
    %4689 = vmatpush1.bf16.msra.mxu0 %v4658
    %4690 = vmatprep.subr.bf16.mxu0 %v4657
    %4691 = vmatpush1.bf16.msra.mxu0 %v4656
    %4692 = vmatprep.subr.bf16.mxu0 %v4655
    %4693 = vmatpush1.bf16.msra.mxu0 %v4654
    %4694 = vmatprep.subr.bf16.mxu0 %v4653
    %4695 = vmatpush1.bf16.msra.mxu0 %v4652
    %4696 = vmatprep.subr.bf16.mxu0 %v4651
    %4697 = vmatpush1.bf16.msra.mxu0 %v4650
    %4698 = vmatprep.subr.bf16.mxu0 0
    %4699 = vmatpush2.bf16.msra.mxu0 0
    %4700 = vmatprep.subr.bf16.mxu0 0
    %4701 = vmatpush2.bf16.msra.mxu0 0
    %4702 = vmatprep.subr.bf16.mxu0 0
    %4703 = vmatpush2.bf16.msra.mxu0 0
    %4704 = vmatprep.subr.bf16.mxu0 0
    %4705 = vmatpush2.bf16.msra.mxu0 0
    %4706 = vmatprep.subr.bf16.mxu0 0
    %4707 = vmatpush2.bf16.msra.mxu0 0
    %4708 = vmatprep.subr.bf16.mxu0 0
    %4709 = vmatpush2.bf16.msra.mxu0 0
    %4710 = vmatprep.subr.bf16.mxu0 0
    %4711 = vmatpush2.bf16.msra.mxu0 0
    %4712 = vmatprep.subr.bf16.mxu0 0
    %4713 = vmatpush2.bf16.msra.mxu0 0
    %4714 = vmatprep.mubr.bf16.mxu0 0
    %4715 = vmatmul.mubr.bf16.gmra.mxu0 %v4584
    %v4716 = vpop.f32.mrf.mxu0
    %v4717 = vadd.f32 0.0, %v4716
    %v4718 = vpop.f32.mrf.mxu0
    %v4719 = vadd.f32 0.0, %v4718
    %v4720 = vpop.f32.mrf.mxu0
    %v4721 = vpop.f32.mrf.mxu0
    %4722 = vdwg.mxu0
    %v4723 = vadd.f32 %v4577, %v4717
    %v4724 = vadd.f32 %v4578, %v4719
    %v4725 = vrot.slane %v1957, 3
    %v4727 = vrot.slane %v1958, 2
    %v4729 = vsel %vm1964, %v4725, %v4727
    %v4730 = vpack.c.bf16 %v4729, %v4729
    %s4731 = scalar_lea.vmem %s5, 2432
    %v4732 = vld [vmem:[%s4731] sm:$0xff]
    %v4733 = vld [vmem:[%s4731 + $0x8] sm:$0xff]
    %v4734 = vld [vmem:[%s4731 + $0x10] sm:$0xff]
    %v4735 = vld [vmem:[%s4731 + $0x18] sm:$0xff]
    %v4736 = vld [vmem:[%s4731 + $0x20] sm:$0xff]
    %v4737 = vld [vmem:[%s4731 + $0x28] sm:$0xff]
    %v4738 = vld [vmem:[%s4731 + $0x30] sm:$0xff]
    %v4739 = vld [vmem:[%s4731 + $0x38] sm:$0xff]
    %v4740 = vld [vmem:[%s4731 + $0x40] sm:$0xff]
    %v4741 = vld [vmem:[%s4731 + $0x48] sm:$0xff]
    %v4742 = vld [vmem:[%s4731 + $0x50] sm:$0xff]
    %v4743 = vld [vmem:[%s4731 + $0x58] sm:$0xff]
    %v4744 = vld [vmem:[%s4731 + $0x60] sm:$0xff]
    %v4745 = vld [vmem:[%s4731 + $0x68] sm:$0xff]
    %v4746 = vld [vmem:[%s4731 + $0x70] sm:$0xff]
    %v4747 = vld [vmem:[%s4731 + $0x78] sm:$0xff]
    %v4764 = vunpack.c.l.b16 %v4732
    %v4765 = vunpack.c.h.b16 %v4732
    %v4766 = vunpack.c.l.b16 %v4733
    %v4767 = vunpack.c.h.b16 %v4733
    %v4768 = vunpack.c.l.b16 %v4734
    %v4769 = vunpack.c.h.b16 %v4734
    %v4770 = vunpack.c.l.b16 %v4735
    %v4771 = vunpack.c.h.b16 %v4735
    %v4772 = vunpack.c.l.b16 %v4736
    %v4773 = vunpack.c.h.b16 %v4736
    %v4774 = vunpack.c.l.b16 %v4737
    %v4775 = vunpack.c.h.b16 %v4737
    %v4776 = vunpack.c.l.b16 %v4738
    %v4777 = vunpack.c.h.b16 %v4738
    %v4778 = vunpack.c.l.b16 %v4739
    %v4779 = vunpack.c.h.b16 %v4739
    %v4780 = vunpack.c.l.b16 %v4740
    %v4781 = vunpack.c.h.b16 %v4740
    %v4782 = vunpack.c.l.b16 %v4741
    %v4783 = vunpack.c.h.b16 %v4741
    %v4784 = vunpack.c.l.b16 %v4742
    %v4785 = vunpack.c.h.b16 %v4742
    %v4786 = vunpack.c.l.b16 %v4743
    %v4787 = vunpack.c.h.b16 %v4743
    %v4788 = vunpack.c.l.b16 %v4744
    %v4789 = vunpack.c.h.b16 %v4744
    %v4790 = vunpack.c.l.b16 %v4745
    %v4791 = vunpack.c.h.b16 %v4745
    %v4792 = vunpack.c.l.b16 %v4746
    %v4793 = vunpack.c.h.b16 %v4746
    %v4794 = vunpack.c.l.b16 %v4747
    %v4795 = vunpack.c.h.b16 %v4747
    %v4796 = vpack.c.b16 %v4766, %v4764
    %v4797 = vpack.c.b16 %v4767, %v4765
    %v4798 = vpack.c.b16 %v4770, %v4768
    %v4799 = vpack.c.b16 %v4771, %v4769
    %v4800 = vpack.c.b16 %v4774, %v4772
    %v4801 = vpack.c.b16 %v4775, %v4773
    %v4802 = vpack.c.b16 %v4778, %v4776
    %v4803 = vpack.c.b16 %v4779, %v4777
    %v4804 = vpack.c.b16 %v4782, %v4780
    %v4805 = vpack.c.b16 %v4783, %v4781
    %v4806 = vpack.c.b16 %v4786, %v4784
    %v4807 = vpack.c.b16 %v4787, %v4785
    %v4808 = vpack.c.b16 %v4790, %v4788
    %v4809 = vpack.c.b16 %v4791, %v4789
    %v4810 = vpack.c.b16 %v4794, %v4792
    %v4811 = vpack.c.b16 %v4795, %v4793
    %4828 = vmatprep.subr.bf16.mxu0 %v4811
    %4829 = vmatpush1.bf16.msra.mxu0 %v4810
    %4830 = vmatprep.subr.bf16.mxu0 %v4809
    %4831 = vmatpush1.bf16.msra.mxu0 %v4808
    %4832 = vmatprep.subr.bf16.mxu0 %v4807
    %4833 = vmatpush1.bf16.msra.mxu0 %v4806
    %4834 = vmatprep.subr.bf16.mxu0 %v4805
    %4835 = vmatpush1.bf16.msra.mxu0 %v4804
    %4836 = vmatprep.subr.bf16.mxu0 %v4803
    %4837 = vmatpush1.bf16.msra.mxu0 %v4802
    %4838 = vmatprep.subr.bf16.mxu0 %v4801
    %4839 = vmatpush1.bf16.msra.mxu0 %v4800
    %4840 = vmatprep.subr.bf16.mxu0 %v4799
    %4841 = vmatpush1.bf16.msra.mxu0 %v4798
    %4842 = vmatprep.subr.bf16.mxu0 %v4797
    %4843 = vmatpush1.bf16.msra.mxu0 %v4796
    %4844 = vmatprep.subr.bf16.mxu0 0
    %4845 = vmatpush2.bf16.msra.mxu0 0
    %4846 = vmatprep.subr.bf16.mxu0 0
    %4847 = vmatpush2.bf16.msra.mxu0 0
    %4848 = vmatprep.subr.bf16.mxu0 0
    %4849 = vmatpush2.bf16.msra.mxu0 0
    %4850 = vmatprep.subr.bf16.mxu0 0
    %4851 = vmatpush2.bf16.msra.mxu0 0
    %4852 = vmatprep.subr.bf16.mxu0 0
    %4853 = vmatpush2.bf16.msra.mxu0 0
    %4854 = vmatprep.subr.bf16.mxu0 0
    %4855 = vmatpush2.bf16.msra.mxu0 0
    %4856 = vmatprep.subr.bf16.mxu0 0
    %4857 = vmatpush2.bf16.msra.mxu0 0
    %4858 = vmatprep.subr.bf16.mxu0 0
    %4859 = vmatpush2.bf16.msra.mxu0 0
    %4860 = vmatprep.mubr.bf16.mxu0 0
    %4861 = vmatmul.mubr.bf16.gmra.mxu0 %v4730
    %v4862 = vpop.f32.mrf.mxu0
    %v4863 = vadd.f32 0.0, %v4862
    %v4864 = vpop.f32.mrf.mxu0
    %v4865 = vadd.f32 0.0, %v4864
    %v4866 = vpop.f32.mrf.mxu0
    %v4867 = vpop.f32.mrf.mxu0
    %4868 = vdwg.mxu0
    %v4869 = vadd.f32 %v4723, %v4863
    %v4870 = vadd.f32 %v4724, %v4865
    %v4871 = vrot.slane %v1957, 4
    %v4873 = vrot.slane %v1958, 3
    %v4875 = vsel %vm1964, %v4871, %v4873
    %v4876 = vpack.c.bf16 %v4875, %v4875
    %s4877 = scalar_lea.vmem %s5, 2560
    %v4878 = vld [vmem:[%s4877] sm:$0xff]
    %v4879 = vld [vmem:[%s4877 + $0x8] sm:$0xff]
    %v4880 = vld [vmem:[%s4877 + $0x10] sm:$0xff]
    %v4881 = vld [vmem:[%s4877 + $0x18] sm:$0xff]
    %v4882 = vld [vmem:[%s4877 + $0x20] sm:$0xff]
    %v4883 = vld [vmem:[%s4877 + $0x28] sm:$0xff]
    %v4884 = vld [vmem:[%s4877 + $0x30] sm:$0xff]
    %v4885 = vld [vmem:[%s4877 + $0x38] sm:$0xff]
    %v4886 = vld [vmem:[%s4877 + $0x40] sm:$0xff]
    %v4887 = vld [vmem:[%s4877 + $0x48] sm:$0xff]
    %v4888 = vld [vmem:[%s4877 + $0x50] sm:$0xff]
    %v4889 = vld [vmem:[%s4877 + $0x58] sm:$0xff]
    %v4890 = vld [vmem:[%s4877 + $0x60] sm:$0xff]
    %v4891 = vld [vmem:[%s4877 + $0x68] sm:$0xff]
    %v4892 = vld [vmem:[%s4877 + $0x70] sm:$0xff]
    %v4893 = vld [vmem:[%s4877 + $0x78] sm:$0xff]
    %v4910 = vunpack.c.l.b16 %v4878
    %v4911 = vunpack.c.h.b16 %v4878
    %v4912 = vunpack.c.l.b16 %v4879
    %v4913 = vunpack.c.h.b16 %v4879
    %v4914 = vunpack.c.l.b16 %v4880
    %v4915 = vunpack.c.h.b16 %v4880
    %v4916 = vunpack.c.l.b16 %v4881
    %v4917 = vunpack.c.h.b16 %v4881
    %v4918 = vunpack.c.l.b16 %v4882
    %v4919 = vunpack.c.h.b16 %v4882
    %v4920 = vunpack.c.l.b16 %v4883
    %v4921 = vunpack.c.h.b16 %v4883
    %v4922 = vunpack.c.l.b16 %v4884
    %v4923 = vunpack.c.h.b16 %v4884
    %v4924 = vunpack.c.l.b16 %v4885
    %v4925 = vunpack.c.h.b16 %v4885
    %v4926 = vunpack.c.l.b16 %v4886
    %v4927 = vunpack.c.h.b16 %v4886
    %v4928 = vunpack.c.l.b16 %v4887
    %v4929 = vunpack.c.h.b16 %v4887
    %v4930 = vunpack.c.l.b16 %v4888
    %v4931 = vunpack.c.h.b16 %v4888
    %v4932 = vunpack.c.l.b16 %v4889
    %v4933 = vunpack.c.h.b16 %v4889
    %v4934 = vunpack.c.l.b16 %v4890
    %v4935 = vunpack.c.h.b16 %v4890
    %v4936 = vunpack.c.l.b16 %v4891
    %v4937 = vunpack.c.h.b16 %v4891
    %v4938 = vunpack.c.l.b16 %v4892
    %v4939 = vunpack.c.h.b16 %v4892
    %v4940 = vunpack.c.l.b16 %v4893
    %v4941 = vunpack.c.h.b16 %v4893
    %v4942 = vpack.c.b16 %v4912, %v4910
    %v4943 = vpack.c.b16 %v4913, %v4911
    %v4944 = vpack.c.b16 %v4916, %v4914
    %v4945 = vpack.c.b16 %v4917, %v4915
    %v4946 = vpack.c.b16 %v4920, %v4918
    %v4947 = vpack.c.b16 %v4921, %v4919
    %v4948 = vpack.c.b16 %v4924, %v4922
    %v4949 = vpack.c.b16 %v4925, %v4923
    %v4950 = vpack.c.b16 %v4928, %v4926
    %v4951 = vpack.c.b16 %v4929, %v4927
    %v4952 = vpack.c.b16 %v4932, %v4930
    %v4953 = vpack.c.b16 %v4933, %v4931
    %v4954 = vpack.c.b16 %v4936, %v4934
    %v4955 = vpack.c.b16 %v4937, %v4935
    %v4956 = vpack.c.b16 %v4940, %v4938
    %v4957 = vpack.c.b16 %v4941, %v4939
    %4974 = vmatprep.subr.bf16.mxu0 %v4957
    %4975 = vmatpush1.bf16.msra.mxu0 %v4956
    %4976 = vmatprep.subr.bf16.mxu0 %v4955
    %4977 = vmatpush1.bf16.msra.mxu0 %v4954
    %4978 = vmatprep.subr.bf16.mxu0 %v4953
    %4979 = vmatpush1.bf16.msra.mxu0 %v4952
    %4980 = vmatprep.subr.bf16.mxu0 %v4951
    %4981 = vmatpush1.bf16.msra.mxu0 %v4950
    %4982 = vmatprep.subr.bf16.mxu0 %v4949
    %4983 = vmatpush1.bf16.msra.mxu0 %v4948
    %4984 = vmatprep.subr.bf16.mxu0 %v4947
    %4985 = vmatpush1.bf16.msra.mxu0 %v4946
    %4986 = vmatprep.subr.bf16.mxu0 %v4945
    %4987 = vmatpush1.bf16.msra.mxu0 %v4944
    %4988 = vmatprep.subr.bf16.mxu0 %v4943
    %4989 = vmatpush1.bf16.msra.mxu0 %v4942
    %4990 = vmatprep.subr.bf16.mxu0 0
    %4991 = vmatpush2.bf16.msra.mxu0 0
    %4992 = vmatprep.subr.bf16.mxu0 0
    %4993 = vmatpush2.bf16.msra.mxu0 0
    %4994 = vmatprep.subr.bf16.mxu0 0
    %4995 = vmatpush2.bf16.msra.mxu0 0
    %4996 = vmatprep.subr.bf16.mxu0 0
    %4997 = vmatpush2.bf16.msra.mxu0 0
    %4998 = vmatprep.subr.bf16.mxu0 0
    %4999 = vmatpush2.bf16.msra.mxu0 0
    %5000 = vmatprep.subr.bf16.mxu0 0
    %5001 = vmatpush2.bf16.msra.mxu0 0
    %5002 = vmatprep.subr.bf16.mxu0 0
    %5003 = vmatpush2.bf16.msra.mxu0 0
    %5004 = vmatprep.subr.bf16.mxu0 0
    %5005 = vmatpush2.bf16.msra.mxu0 0
    %5006 = vmatprep.mubr.bf16.mxu0 0
    %5007 = vmatmul.mubr.bf16.gmra.mxu0 %v4876
    %v5008 = vpop.f32.mrf.mxu0
    %v5009 = vadd.f32 0.0, %v5008
    %v5010 = vpop.f32.mrf.mxu0
    %v5011 = vadd.f32 0.0, %v5010
    %v5012 = vpop.f32.mrf.mxu0
    %v5013 = vpop.f32.mrf.mxu0
    %5014 = vdwg.mxu0
    %v5015 = vadd.f32 %v4869, %v5009
    %v5016 = vadd.f32 %v4870, %v5011
    %v5017 = vrot.slane %v1957, 5
    %v5019 = vrot.slane %v1958, 4
    %v5021 = vsel %vm1964, %v5017, %v5019
    %v5022 = vpack.c.bf16 %v5021, %v5021
    %s5023 = scalar_lea.vmem %s5, 2688
    %v5024 = vld [vmem:[%s5023] sm:$0xff]
    %v5025 = vld [vmem:[%s5023 + $0x8] sm:$0xff]
    %v5026 = vld [vmem:[%s5023 + $0x10] sm:$0xff]
    %v5027 = vld [vmem:[%s5023 + $0x18] sm:$0xff]
    %v5028 = vld [vmem:[%s5023 + $0x20] sm:$0xff]
    %v5029 = vld [vmem:[%s5023 + $0x28] sm:$0xff]
    %v5030 = vld [vmem:[%s5023 + $0x30] sm:$0xff]
    %v5031 = vld [vmem:[%s5023 + $0x38] sm:$0xff]
    %v5032 = vld [vmem:[%s5023 + $0x40] sm:$0xff]
    %v5033 = vld [vmem:[%s5023 + $0x48] sm:$0xff]
    %v5034 = vld [vmem:[%s5023 + $0x50] sm:$0xff]
    %v5035 = vld [vmem:[%s5023 + $0x58] sm:$0xff]
    %v5036 = vld [vmem:[%s5023 + $0x60] sm:$0xff]
    %v5037 = vld [vmem:[%s5023 + $0x68] sm:$0xff]
    %v5038 = vld [vmem:[%s5023 + $0x70] sm:$0xff]
    %v5039 = vld [vmem:[%s5023 + $0x78] sm:$0xff]
    %v5056 = vunpack.c.l.b16 %v5024
    %v5057 = vunpack.c.h.b16 %v5024
    %v5058 = vunpack.c.l.b16 %v5025
    %v5059 = vunpack.c.h.b16 %v5025
    %v5060 = vunpack.c.l.b16 %v5026
    %v5061 = vunpack.c.h.b16 %v5026
    %v5062 = vunpack.c.l.b16 %v5027
    %v5063 = vunpack.c.h.b16 %v5027
    %v5064 = vunpack.c.l.b16 %v5028
    %v5065 = vunpack.c.h.b16 %v5028
    %v5066 = vunpack.c.l.b16 %v5029
    %v5067 = vunpack.c.h.b16 %v5029
    %v5068 = vunpack.c.l.b16 %v5030
    %v5069 = vunpack.c.h.b16 %v5030
    %v5070 = vunpack.c.l.b16 %v5031
    %v5071 = vunpack.c.h.b16 %v5031
    %v5072 = vunpack.c.l.b16 %v5032
    %v5073 = vunpack.c.h.b16 %v5032
    %v5074 = vunpack.c.l.b16 %v5033
    %v5075 = vunpack.c.h.b16 %v5033
    %v5076 = vunpack.c.l.b16 %v5034
    %v5077 = vunpack.c.h.b16 %v5034
    %v5078 = vunpack.c.l.b16 %v5035
    %v5079 = vunpack.c.h.b16 %v5035
    %v5080 = vunpack.c.l.b16 %v5036
    %v5081 = vunpack.c.h.b16 %v5036
    %v5082 = vunpack.c.l.b16 %v5037
    %v5083 = vunpack.c.h.b16 %v5037
    %v5084 = vunpack.c.l.b16 %v5038
    %v5085 = vunpack.c.h.b16 %v5038
    %v5086 = vunpack.c.l.b16 %v5039
    %v5087 = vunpack.c.h.b16 %v5039
    %v5088 = vpack.c.b16 %v5058, %v5056
    %v5089 = vpack.c.b16 %v5059, %v5057
    %v5090 = vpack.c.b16 %v5062, %v5060
    %v5091 = vpack.c.b16 %v5063, %v5061
    %v5092 = vpack.c.b16 %v5066, %v5064
    %v5093 = vpack.c.b16 %v5067, %v5065
    %v5094 = vpack.c.b16 %v5070, %v5068
    %v5095 = vpack.c.b16 %v5071, %v5069
    %v5096 = vpack.c.b16 %v5074, %v5072
    %v5097 = vpack.c.b16 %v5075, %v5073
    %v5098 = vpack.c.b16 %v5078, %v5076
    %v5099 = vpack.c.b16 %v5079, %v5077
    %v5100 = vpack.c.b16 %v5082, %v5080
    %v5101 = vpack.c.b16 %v5083, %v5081
    %v5102 = vpack.c.b16 %v5086, %v5084
    %v5103 = vpack.c.b16 %v5087, %v5085
    %5120 = vmatprep.subr.bf16.mxu0 %v5103
    %5121 = vmatpush1.bf16.msra.mxu0 %v5102
    %5122 = vmatprep.subr.bf16.mxu0 %v5101
    %5123 = vmatpush1.bf16.msra.mxu0 %v5100
    %5124 = vmatprep.subr.bf16.mxu0 %v5099
    %5125 = vmatpush1.bf16.msra.mxu0 %v5098
    %5126 = vmatprep.subr.bf16.mxu0 %v5097
    %5127 = vmatpush1.bf16.msra.mxu0 %v5096
    %5128 = vmatprep.subr.bf16.mxu0 %v5095
    %5129 = vmatpush1.bf16.msra.mxu0 %v5094
    %5130 = vmatprep.subr.bf16.mxu0 %v5093
    %5131 = vmatpush1.bf16.msra.mxu0 %v5092
    %5132 = vmatprep.subr.bf16.mxu0 %v5091
    %5133 = vmatpush1.bf16.msra.mxu0 %v5090
    %5134 = vmatprep.subr.bf16.mxu0 %v5089
    %5135 = vmatpush1.bf16.msra.mxu0 %v5088
    %5136 = vmatprep.subr.bf16.mxu0 0
    %5137 = vmatpush2.bf16.msra.mxu0 0
    %5138 = vmatprep.subr.bf16.mxu0 0
    %5139 = vmatpush2.bf16.msra.mxu0 0
    %5140 = vmatprep.subr.bf16.mxu0 0
    %5141 = vmatpush2.bf16.msra.mxu0 0
    %5142 = vmatprep.subr.bf16.mxu0 0
    %5143 = vmatpush2.bf16.msra.mxu0 0
    %5144 = vmatprep.subr.bf16.mxu0 0
    %5145 = vmatpush2.bf16.msra.mxu0 0
    %5146 = vmatprep.subr.bf16.mxu0 0
    %5147 = vmatpush2.bf16.msra.mxu0 0
    %5148 = vmatprep.subr.bf16.mxu0 0
    %5149 = vmatpush2.bf16.msra.mxu0 0
    %5150 = vmatprep.subr.bf16.mxu0 0
    %5151 = vmatpush2.bf16.msra.mxu0 0
    %5152 = vmatprep.mubr.bf16.mxu0 0
    %5153 = vmatmul.mubr.bf16.gmra.mxu0 %v5022
    %v5154 = vpop.f32.mrf.mxu0
    %v5155 = vadd.f32 0.0, %v5154
    %v5156 = vpop.f32.mrf.mxu0
    %v5157 = vadd.f32 0.0, %v5156
    %v5158 = vpop.f32.mrf.mxu0
    %v5159 = vpop.f32.mrf.mxu0
    %5160 = vdwg.mxu0
    %v5161 = vadd.f32 %v5015, %v5155
    %v5162 = vadd.f32 %v5016, %v5157
    %v5163 = vrot.slane %v1957, 6
    %v5165 = vrot.slane %v1958, 5
    %v5167 = vsel %vm1964, %v5163, %v5165
    %v5168 = vpack.c.bf16 %v5167, %v5167
    %s5169 = scalar_lea.vmem %s5, 2816
    %v5170 = vld [vmem:[%s5169] sm:$0xff]
    %v5171 = vld [vmem:[%s5169 + $0x8] sm:$0xff]
    %v5172 = vld [vmem:[%s5169 + $0x10] sm:$0xff]
    %v5173 = vld [vmem:[%s5169 + $0x18] sm:$0xff]
    %v5174 = vld [vmem:[%s5169 + $0x20] sm:$0xff]
    %v5175 = vld [vmem:[%s5169 + $0x28] sm:$0xff]
    %v5176 = vld [vmem:[%s5169 + $0x30] sm:$0xff]
    %v5177 = vld [vmem:[%s5169 + $0x38] sm:$0xff]
    %v5178 = vld [vmem:[%s5169 + $0x40] sm:$0xff]
    %v5179 = vld [vmem:[%s5169 + $0x48] sm:$0xff]
    %v5180 = vld [vmem:[%s5169 + $0x50] sm:$0xff]
    %v5181 = vld [vmem:[%s5169 + $0x58] sm:$0xff]
    %v5182 = vld [vmem:[%s5169 + $0x60] sm:$0xff]
    %v5183 = vld [vmem:[%s5169 + $0x68] sm:$0xff]
    %v5184 = vld [vmem:[%s5169 + $0x70] sm:$0xff]
    %v5185 = vld [vmem:[%s5169 + $0x78] sm:$0xff]
    %v5202 = vunpack.c.l.b16 %v5170
    %v5203 = vunpack.c.h.b16 %v5170
    %v5204 = vunpack.c.l.b16 %v5171
    %v5205 = vunpack.c.h.b16 %v5171
    %v5206 = vunpack.c.l.b16 %v5172
    %v5207 = vunpack.c.h.b16 %v5172
    %v5208 = vunpack.c.l.b16 %v5173
    %v5209 = vunpack.c.h.b16 %v5173
    %v5210 = vunpack.c.l.b16 %v5174
    %v5211 = vunpack.c.h.b16 %v5174
    %v5212 = vunpack.c.l.b16 %v5175
    %v5213 = vunpack.c.h.b16 %v5175
    %v5214 = vunpack.c.l.b16 %v5176
    %v5215 = vunpack.c.h.b16 %v5176
    %v5216 = vunpack.c.l.b16 %v5177
    %v5217 = vunpack.c.h.b16 %v5177
    %v5218 = vunpack.c.l.b16 %v5178
    %v5219 = vunpack.c.h.b16 %v5178
    %v5220 = vunpack.c.l.b16 %v5179
    %v5221 = vunpack.c.h.b16 %v5179
    %v5222 = vunpack.c.l.b16 %v5180
    %v5223 = vunpack.c.h.b16 %v5180
    %v5224 = vunpack.c.l.b16 %v5181
    %v5225 = vunpack.c.h.b16 %v5181
    %v5226 = vunpack.c.l.b16 %v5182
    %v5227 = vunpack.c.h.b16 %v5182
    %v5228 = vunpack.c.l.b16 %v5183
    %v5229 = vunpack.c.h.b16 %v5183
    %v5230 = vunpack.c.l.b16 %v5184
    %v5231 = vunpack.c.h.b16 %v5184
    %v5232 = vunpack.c.l.b16 %v5185
    %v5233 = vunpack.c.h.b16 %v5185
    %v5234 = vpack.c.b16 %v5204, %v5202
    %v5235 = vpack.c.b16 %v5205, %v5203
    %v5236 = vpack.c.b16 %v5208, %v5206
    %v5237 = vpack.c.b16 %v5209, %v5207
    %v5238 = vpack.c.b16 %v5212, %v5210
    %v5239 = vpack.c.b16 %v5213, %v5211
    %v5240 = vpack.c.b16 %v5216, %v5214
    %v5241 = vpack.c.b16 %v5217, %v5215
    %v5242 = vpack.c.b16 %v5220, %v5218
    %v5243 = vpack.c.b16 %v5221, %v5219
    %v5244 = vpack.c.b16 %v5224, %v5222
    %v5245 = vpack.c.b16 %v5225, %v5223
    %v5246 = vpack.c.b16 %v5228, %v5226
    %v5247 = vpack.c.b16 %v5229, %v5227
    %v5248 = vpack.c.b16 %v5232, %v5230
    %v5249 = vpack.c.b16 %v5233, %v5231
    %5266 = vmatprep.subr.bf16.mxu0 %v5249
    %5267 = vmatpush1.bf16.msra.mxu0 %v5248
    %5268 = vmatprep.subr.bf16.mxu0 %v5247
    %5269 = vmatpush1.bf16.msra.mxu0 %v5246
    %5270 = vmatprep.subr.bf16.mxu0 %v5245
    %5271 = vmatpush1.bf16.msra.mxu0 %v5244
    %5272 = vmatprep.subr.bf16.mxu0 %v5243
    %5273 = vmatpush1.bf16.msra.mxu0 %v5242
    %5274 = vmatprep.subr.bf16.mxu0 %v5241
    %5275 = vmatpush1.bf16.msra.mxu0 %v5240
    %5276 = vmatprep.subr.bf16.mxu0 %v5239
    %5277 = vmatpush1.bf16.msra.mxu0 %v5238
    %5278 = vmatprep.subr.bf16.mxu0 %v5237
    %5279 = vmatpush1.bf16.msra.mxu0 %v5236
    %5280 = vmatprep.subr.bf16.mxu0 %v5235
    %5281 = vmatpush1.bf16.msra.mxu0 %v5234
    %5282 = vmatprep.subr.bf16.mxu0 0
    %5283 = vmatpush2.bf16.msra.mxu0 0
    %5284 = vmatprep.subr.bf16.mxu0 0
    %5285 = vmatpush2.bf16.msra.mxu0 0
    %5286 = vmatprep.subr.bf16.mxu0 0
    %5287 = vmatpush2.bf16.msra.mxu0 0
    %5288 = vmatprep.subr.bf16.mxu0 0
    %5289 = vmatpush2.bf16.msra.mxu0 0
    %5290 = vmatprep.subr.bf16.mxu0 0
    %5291 = vmatpush2.bf16.msra.mxu0 0
    %5292 = vmatprep.subr.bf16.mxu0 0
    %5293 = vmatpush2.bf16.msra.mxu0 0
    %5294 = vmatprep.subr.bf16.mxu0 0
    %5295 = vmatpush2.bf16.msra.mxu0 0
    %5296 = vmatprep.subr.bf16.mxu0 0
    %5297 = vmatpush2.bf16.msra.mxu0 0
    %5298 = vmatprep.mubr.bf16.mxu0 0
    %5299 = vmatmul.mubr.bf16.gmra.mxu0 %v5168
    %v5300 = vpop.f32.mrf.mxu0
    %v5301 = vadd.f32 0.0, %v5300
    %v5302 = vpop.f32.mrf.mxu0
    %v5303 = vadd.f32 0.0, %v5302
    %v5304 = vpop.f32.mrf.mxu0
    %v5305 = vpop.f32.mrf.mxu0
    %5306 = vdwg.mxu0
    %v5307 = vadd.f32 %v5161, %v5301
    %v5308 = vadd.f32 %v5162, %v5303
    %v5309 = vrot.slane %v1957, 7
    %v5311 = vrot.slane %v1958, 6
    %v5313 = vsel %vm1964, %v5309, %v5311
    %v5314 = vpack.c.bf16 %v5313, %v5313
    %s5315 = scalar_lea.vmem %s5, 2944
    %v5316 = vld [vmem:[%s5315] sm:$0xff]
    %v5317 = vld [vmem:[%s5315 + $0x8] sm:$0xff]
    %v5318 = vld [vmem:[%s5315 + $0x10] sm:$0xff]
    %v5319 = vld [vmem:[%s5315 + $0x18] sm:$0xff]
    %v5320 = vld [vmem:[%s5315 + $0x20] sm:$0xff]
    %v5321 = vld [vmem:[%s5315 + $0x28] sm:$0xff]
    %v5322 = vld [vmem:[%s5315 + $0x30] sm:$0xff]
    %v5323 = vld [vmem:[%s5315 + $0x38] sm:$0xff]
    %v5324 = vld [vmem:[%s5315 + $0x40] sm:$0xff]
    %v5325 = vld [vmem:[%s5315 + $0x48] sm:$0xff]
    %v5326 = vld [vmem:[%s5315 + $0x50] sm:$0xff]
    %v5327 = vld [vmem:[%s5315 + $0x58] sm:$0xff]
    %v5328 = vld [vmem:[%s5315 + $0x60] sm:$0xff]
    %v5329 = vld [vmem:[%s5315 + $0x68] sm:$0xff]
    %v5330 = vld [vmem:[%s5315 + $0x70] sm:$0xff]
    %v5331 = vld [vmem:[%s5315 + $0x78] sm:$0xff]
    %v5348 = vunpack.c.l.b16 %v5316
    %v5349 = vunpack.c.h.b16 %v5316
    %v5350 = vunpack.c.l.b16 %v5317
    %v5351 = vunpack.c.h.b16 %v5317
    %v5352 = vunpack.c.l.b16 %v5318
    %v5353 = vunpack.c.h.b16 %v5318
    %v5354 = vunpack.c.l.b16 %v5319
    %v5355 = vunpack.c.h.b16 %v5319
    %v5356 = vunpack.c.l.b16 %v5320
    %v5357 = vunpack.c.h.b16 %v5320
    %v5358 = vunpack.c.l.b16 %v5321
    %v5359 = vunpack.c.h.b16 %v5321
    %v5360 = vunpack.c.l.b16 %v5322
    %v5361 = vunpack.c.h.b16 %v5322
    %v5362 = vunpack.c.l.b16 %v5323
    %v5363 = vunpack.c.h.b16 %v5323
    %v5364 = vunpack.c.l.b16 %v5324
    %v5365 = vunpack.c.h.b16 %v5324
    %v5366 = vunpack.c.l.b16 %v5325
    %v5367 = vunpack.c.h.b16 %v5325
    %v5368 = vunpack.c.l.b16 %v5326
    %v5369 = vunpack.c.h.b16 %v5326
    %v5370 = vunpack.c.l.b16 %v5327
    %v5371 = vunpack.c.h.b16 %v5327
    %v5372 = vunpack.c.l.b16 %v5328
    %v5373 = vunpack.c.h.b16 %v5328
    %v5374 = vunpack.c.l.b16 %v5329
    %v5375 = vunpack.c.h.b16 %v5329
    %v5376 = vunpack.c.l.b16 %v5330
    %v5377 = vunpack.c.h.b16 %v5330
    %v5378 = vunpack.c.l.b16 %v5331
    %v5379 = vunpack.c.h.b16 %v5331
    %v5380 = vpack.c.b16 %v5350, %v5348
    %v5381 = vpack.c.b16 %v5351, %v5349
    %v5382 = vpack.c.b16 %v5354, %v5352
    %v5383 = vpack.c.b16 %v5355, %v5353
    %v5384 = vpack.c.b16 %v5358, %v5356
    %v5385 = vpack.c.b16 %v5359, %v5357
    %v5386 = vpack.c.b16 %v5362, %v5360
    %v5387 = vpack.c.b16 %v5363, %v5361
    %v5388 = vpack.c.b16 %v5366, %v5364
    %v5389 = vpack.c.b16 %v5367, %v5365
    %v5390 = vpack.c.b16 %v5370, %v5368
    %v5391 = vpack.c.b16 %v5371, %v5369
    %v5392 = vpack.c.b16 %v5374, %v5372
    %v5393 = vpack.c.b16 %v5375, %v5373
    %v5394 = vpack.c.b16 %v5378, %v5376
    %v5395 = vpack.c.b16 %v5379, %v5377
    %5412 = vmatprep.subr.bf16.mxu0 %v5395
    %5413 = vmatpush1.bf16.msra.mxu0 %v5394
    %5414 = vmatprep.subr.bf16.mxu0 %v5393
    %5415 = vmatpush1.bf16.msra.mxu0 %v5392
    %5416 = vmatprep.subr.bf16.mxu0 %v5391
    %5417 = vmatpush1.bf16.msra.mxu0 %v5390
    %5418 = vmatprep.subr.bf16.mxu0 %v5389
    %5419 = vmatpush1.bf16.msra.mxu0 %v5388
    %5420 = vmatprep.subr.bf16.mxu0 %v5387
    %5421 = vmatpush1.bf16.msra.mxu0 %v5386
    %5422 = vmatprep.subr.bf16.mxu0 %v5385
    %5423 = vmatpush1.bf16.msra.mxu0 %v5384
    %5424 = vmatprep.subr.bf16.mxu0 %v5383
    %5425 = vmatpush1.bf16.msra.mxu0 %v5382
    %5426 = vmatprep.subr.bf16.mxu0 %v5381
    %5427 = vmatpush1.bf16.msra.mxu0 %v5380
    %5428 = vmatprep.subr.bf16.mxu0 0
    %5429 = vmatpush2.bf16.msra.mxu0 0
    %5430 = vmatprep.subr.bf16.mxu0 0
    %5431 = vmatpush2.bf16.msra.mxu0 0
    %5432 = vmatprep.subr.bf16.mxu0 0
    %5433 = vmatpush2.bf16.msra.mxu0 0
    %5434 = vmatprep.subr.bf16.mxu0 0
    %5435 = vmatpush2.bf16.msra.mxu0 0
    %5436 = vmatprep.subr.bf16.mxu0 0
    %5437 = vmatpush2.bf16.msra.mxu0 0
    %5438 = vmatprep.subr.bf16.mxu0 0
    %5439 = vmatpush2.bf16.msra.mxu0 0
    %5440 = vmatprep.subr.bf16.mxu0 0
    %5441 = vmatpush2.bf16.msra.mxu0 0
    %5442 = vmatprep.subr.bf16.mxu0 0
    %5443 = vmatpush2.bf16.msra.mxu0 0
    %5444 = vmatprep.mubr.bf16.mxu0 0
    %5445 = vmatmul.mubr.bf16.gmra.mxu0 %v5314
    %v5446 = vpop.f32.mrf.mxu0
    %v5447 = vadd.f32 0.0, %v5446
    %v5448 = vpop.f32.mrf.mxu0
    %v5449 = vadd.f32 0.0, %v5448
    %v5450 = vpop.f32.mrf.mxu0
    %v5451 = vpop.f32.mrf.mxu0
    %5452 = vdwg.mxu0
    %v5453 = vadd.f32 %v5307, %v5447
    %v5454 = vadd.f32 %v5308, %v5449
    %v5456 = vrot.slane %v1960, 7
    %v5458 = vsel %vm1964, %v1959, %v5456
    %v5459 = vpack.c.bf16 %v5458, %v5458
    %s5460 = scalar_lea.vmem %s5, 3072
    %v5461 = vld [vmem:[%s5460] sm:$0xff]
    %v5462 = vld [vmem:[%s5460 + $0x8] sm:$0xff]
    %v5463 = vld [vmem:[%s5460 + $0x10] sm:$0xff]
    %v5464 = vld [vmem:[%s5460 + $0x18] sm:$0xff]
    %v5465 = vld [vmem:[%s5460 + $0x20] sm:$0xff]
    %v5466 = vld [vmem:[%s5460 + $0x28] sm:$0xff]
    %v5467 = vld [vmem:[%s5460 + $0x30] sm:$0xff]
    %v5468 = vld [vmem:[%s5460 + $0x38] sm:$0xff]
    %v5469 = vld [vmem:[%s5460 + $0x40] sm:$0xff]
    %v5470 = vld [vmem:[%s5460 + $0x48] sm:$0xff]
    %v5471 = vld [vmem:[%s5460 + $0x50] sm:$0xff]
    %v5472 = vld [vmem:[%s5460 + $0x58] sm:$0xff]
    %v5473 = vld [vmem:[%s5460 + $0x60] sm:$0xff]
    %v5474 = vld [vmem:[%s5460 + $0x68] sm:$0xff]
    %v5475 = vld [vmem:[%s5460 + $0x70] sm:$0xff]
    %v5476 = vld [vmem:[%s5460 + $0x78] sm:$0xff]
    %v5493 = vunpack.c.l.b16 %v5461
    %v5494 = vunpack.c.h.b16 %v5461
    %v5495 = vunpack.c.l.b16 %v5462
    %v5496 = vunpack.c.h.b16 %v5462
    %v5497 = vunpack.c.l.b16 %v5463
    %v5498 = vunpack.c.h.b16 %v5463
    %v5499 = vunpack.c.l.b16 %v5464
    %v5500 = vunpack.c.h.b16 %v5464
    %v5501 = vunpack.c.l.b16 %v5465
    %v5502 = vunpack.c.h.b16 %v5465
    %v5503 = vunpack.c.l.b16 %v5466
    %v5504 = vunpack.c.h.b16 %v5466
    %v5505 = vunpack.c.l.b16 %v5467
    %v5506 = vunpack.c.h.b16 %v5467
    %v5507 = vunpack.c.l.b16 %v5468
    %v5508 = vunpack.c.h.b16 %v5468
    %v5509 = vunpack.c.l.b16 %v5469
    %v5510 = vunpack.c.h.b16 %v5469
    %v5511 = vunpack.c.l.b16 %v5470
    %v5512 = vunpack.c.h.b16 %v5470
    %v5513 = vunpack.c.l.b16 %v5471
    %v5514 = vunpack.c.h.b16 %v5471
    %v5515 = vunpack.c.l.b16 %v5472
    %v5516 = vunpack.c.h.b16 %v5472
    %v5517 = vunpack.c.l.b16 %v5473
    %v5518 = vunpack.c.h.b16 %v5473
    %v5519 = vunpack.c.l.b16 %v5474
    %v5520 = vunpack.c.h.b16 %v5474
    %v5521 = vunpack.c.l.b16 %v5475
    %v5522 = vunpack.c.h.b16 %v5475
    %v5523 = vunpack.c.l.b16 %v5476
    %v5524 = vunpack.c.h.b16 %v5476
    %v5525 = vpack.c.b16 %v5495, %v5493
    %v5526 = vpack.c.b16 %v5496, %v5494
    %v5527 = vpack.c.b16 %v5499, %v5497
    %v5528 = vpack.c.b16 %v5500, %v5498
    %v5529 = vpack.c.b16 %v5503, %v5501
    %v5530 = vpack.c.b16 %v5504, %v5502
    %v5531 = vpack.c.b16 %v5507, %v5505
    %v5532 = vpack.c.b16 %v5508, %v5506
    %v5533 = vpack.c.b16 %v5511, %v5509
    %v5534 = vpack.c.b16 %v5512, %v5510
    %v5535 = vpack.c.b16 %v5515, %v5513
    %v5536 = vpack.c.b16 %v5516, %v5514
    %v5537 = vpack.c.b16 %v5519, %v5517
    %v5538 = vpack.c.b16 %v5520, %v5518
    %v5539 = vpack.c.b16 %v5523, %v5521
    %v5540 = vpack.c.b16 %v5524, %v5522
    %5557 = vmatprep.subr.bf16.mxu0 %v5540
    %5558 = vmatpush1.bf16.msra.mxu0 %v5539
    %5559 = vmatprep.subr.bf16.mxu0 %v5538
    %5560 = vmatpush1.bf16.msra.mxu0 %v5537
    %5561 = vmatprep.subr.bf16.mxu0 %v5536
    %5562 = vmatpush1.bf16.msra.mxu0 %v5535
    %5563 = vmatprep.subr.bf16.mxu0 %v5534
    %5564 = vmatpush1.bf16.msra.mxu0 %v5533
    %5565 = vmatprep.subr.bf16.mxu0 %v5532
    %5566 = vmatpush1.bf16.msra.mxu0 %v5531
    %5567 = vmatprep.subr.bf16.mxu0 %v5530
    %5568 = vmatpush1.bf16.msra.mxu0 %v5529
    %5569 = vmatprep.subr.bf16.mxu0 %v5528
    %5570 = vmatpush1.bf16.msra.mxu0 %v5527
    %5571 = vmatprep.subr.bf16.mxu0 %v5526
    %5572 = vmatpush1.bf16.msra.mxu0 %v5525
    %5573 = vmatprep.subr.bf16.mxu0 0
    %5574 = vmatpush2.bf16.msra.mxu0 0
    %5575 = vmatprep.subr.bf16.mxu0 0
    %5576 = vmatpush2.bf16.msra.mxu0 0
    %5577 = vmatprep.subr.bf16.mxu0 0
    %5578 = vmatpush2.bf16.msra.mxu0 0
    %5579 = vmatprep.subr.bf16.mxu0 0
    %5580 = vmatpush2.bf16.msra.mxu0 0
    %5581 = vmatprep.subr.bf16.mxu0 0
    %5582 = vmatpush2.bf16.msra.mxu0 0
    %5583 = vmatprep.subr.bf16.mxu0 0
    %5584 = vmatpush2.bf16.msra.mxu0 0
    %5585 = vmatprep.subr.bf16.mxu0 0
    %5586 = vmatpush2.bf16.msra.mxu0 0
    %5587 = vmatprep.subr.bf16.mxu0 0
    %5588 = vmatpush2.bf16.msra.mxu0 0
    %5589 = vmatprep.mubr.bf16.mxu0 0
    %5590 = vmatmul.mubr.bf16.gmra.mxu0 %v5459
    %v5591 = vpop.f32.mrf.mxu0
    %v5592 = vadd.f32 0.0, %v5591
    %v5593 = vpop.f32.mrf.mxu0
    %v5594 = vadd.f32 0.0, %v5593
    %v5595 = vpop.f32.mrf.mxu0
    %v5596 = vpop.f32.mrf.mxu0
    %5597 = vdwg.mxu0
    %v5598 = vadd.f32 %v5453, %v5592
    %v5599 = vadd.f32 %v5454, %v5594
    %v5601 = vrot.slane %v1959, 1
    %v5603 = vsel %vm1964, %v5601, %v1960
    %v5604 = vpack.c.bf16 %v5603, %v5603
    %s5605 = scalar_lea.vmem %s5, 3200
    %v5606 = vld [vmem:[%s5605] sm:$0xff]
    %v5607 = vld [vmem:[%s5605 + $0x8] sm:$0xff]
    %v5608 = vld [vmem:[%s5605 + $0x10] sm:$0xff]
    %v5609 = vld [vmem:[%s5605 + $0x18] sm:$0xff]
    %v5610 = vld [vmem:[%s5605 + $0x20] sm:$0xff]
    %v5611 = vld [vmem:[%s5605 + $0x28] sm:$0xff]
    %v5612 = vld [vmem:[%s5605 + $0x30] sm:$0xff]
    %v5613 = vld [vmem:[%s5605 + $0x38] sm:$0xff]
    %v5614 = vld [vmem:[%s5605 + $0x40] sm:$0xff]
    %v5615 = vld [vmem:[%s5605 + $0x48] sm:$0xff]
    %v5616 = vld [vmem:[%s5605 + $0x50] sm:$0xff]
    %v5617 = vld [vmem:[%s5605 + $0x58] sm:$0xff]
    %v5618 = vld [vmem:[%s5605 + $0x60] sm:$0xff]
    %v5619 = vld [vmem:[%s5605 + $0x68] sm:$0xff]
    %v5620 = vld [vmem:[%s5605 + $0x70] sm:$0xff]
    %v5621 = vld [vmem:[%s5605 + $0x78] sm:$0xff]
    %v5638 = vunpack.c.l.b16 %v5606
    %v5639 = vunpack.c.h.b16 %v5606
    %v5640 = vunpack.c.l.b16 %v5607
    %v5641 = vunpack.c.h.b16 %v5607
    %v5642 = vunpack.c.l.b16 %v5608
    %v5643 = vunpack.c.h.b16 %v5608
    %v5644 = vunpack.c.l.b16 %v5609
    %v5645 = vunpack.c.h.b16 %v5609
    %v5646 = vunpack.c.l.b16 %v5610
    %v5647 = vunpack.c.h.b16 %v5610
    %v5648 = vunpack.c.l.b16 %v5611
    %v5649 = vunpack.c.h.b16 %v5611
    %v5650 = vunpack.c.l.b16 %v5612
    %v5651 = vunpack.c.h.b16 %v5612
    %v5652 = vunpack.c.l.b16 %v5613
    %v5653 = vunpack.c.h.b16 %v5613
    %v5654 = vunpack.c.l.b16 %v5614
    %v5655 = vunpack.c.h.b16 %v5614
    %v5656 = vunpack.c.l.b16 %v5615
    %v5657 = vunpack.c.h.b16 %v5615
    %v5658 = vunpack.c.l.b16 %v5616
    %v5659 = vunpack.c.h.b16 %v5616
    %v5660 = vunpack.c.l.b16 %v5617
    %v5661 = vunpack.c.h.b16 %v5617
    %v5662 = vunpack.c.l.b16 %v5618
    %v5663 = vunpack.c.h.b16 %v5618
    %v5664 = vunpack.c.l.b16 %v5619
    %v5665 = vunpack.c.h.b16 %v5619
    %v5666 = vunpack.c.l.b16 %v5620
    %v5667 = vunpack.c.h.b16 %v5620
    %v5668 = vunpack.c.l.b16 %v5621
    %v5669 = vunpack.c.h.b16 %v5621
    %v5670 = vpack.c.b16 %v5640, %v5638
    %v5671 = vpack.c.b16 %v5641, %v5639
    %v5672 = vpack.c.b16 %v5644, %v5642
    %v5673 = vpack.c.b16 %v5645, %v5643
    %v5674 = vpack.c.b16 %v5648, %v5646
    %v5675 = vpack.c.b16 %v5649, %v5647
    %v5676 = vpack.c.b16 %v5652, %v5650
    %v5677 = vpack.c.b16 %v5653, %v5651
    %v5678 = vpack.c.b16 %v5656, %v5654
    %v5679 = vpack.c.b16 %v5657, %v5655
    %v5680 = vpack.c.b16 %v5660, %v5658
    %v5681 = vpack.c.b16 %v5661, %v5659
    %v5682 = vpack.c.b16 %v5664, %v5662
    %v5683 = vpack.c.b16 %v5665, %v5663
    %v5684 = vpack.c.b16 %v5668, %v5666
    %v5685 = vpack.c.b16 %v5669, %v5667
    %5702 = vmatprep.subr.bf16.mxu0 %v5685
    %5703 = vmatpush1.bf16.msra.mxu0 %v5684
    %5704 = vmatprep.subr.bf16.mxu0 %v5683
    %5705 = vmatpush1.bf16.msra.mxu0 %v5682
    %5706 = vmatprep.subr.bf16.mxu0 %v5681
    %5707 = vmatpush1.bf16.msra.mxu0 %v5680
    %5708 = vmatprep.subr.bf16.mxu0 %v5679
    %5709 = vmatpush1.bf16.msra.mxu0 %v5678
    %5710 = vmatprep.subr.bf16.mxu0 %v5677
    %5711 = vmatpush1.bf16.msra.mxu0 %v5676
    %5712 = vmatprep.subr.bf16.mxu0 %v5675
    %5713 = vmatpush1.bf16.msra.mxu0 %v5674
    %5714 = vmatprep.subr.bf16.mxu0 %v5673
    %5715 = vmatpush1.bf16.msra.mxu0 %v5672
    %5716 = vmatprep.subr.bf16.mxu0 %v5671
    %5717 = vmatpush1.bf16.msra.mxu0 %v5670
    %5718 = vmatprep.subr.bf16.mxu0 0
    %5719 = vmatpush2.bf16.msra.mxu0 0
    %5720 = vmatprep.subr.bf16.mxu0 0
    %5721 = vmatpush2.bf16.msra.mxu0 0
    %5722 = vmatprep.subr.bf16.mxu0 0
    %5723 = vmatpush2.bf16.msra.mxu0 0
    %5724 = vmatprep.subr.bf16.mxu0 0
    %5725 = vmatpush2.bf16.msra.mxu0 0
    %5726 = vmatprep.subr.bf16.mxu0 0
    %5727 = vmatpush2.bf16.msra.mxu0 0
    %5728 = vmatprep.subr.bf16.mxu0 0
    %5729 = vmatpush2.bf16.msra.mxu0 0
    %5730 = vmatprep.subr.bf16.mxu0 0
    %5731 = vmatpush2.bf16.msra.mxu0 0
    %5732 = vmatprep.subr.bf16.mxu0 0
    %5733 = vmatpush2.bf16.msra.mxu0 0
    %5734 = vmatprep.mubr.bf16.mxu0 0
    %5735 = vmatmul.mubr.bf16.gmra.mxu0 %v5604
    %v5736 = vpop.f32.mrf.mxu0
    %v5737 = vadd.f32 0.0, %v5736
    %v5738 = vpop.f32.mrf.mxu0
    %v5739 = vadd.f32 0.0, %v5738
    %v5740 = vpop.f32.mrf.mxu0
    %v5741 = vpop.f32.mrf.mxu0
    %5742 = vdwg.mxu0
    %v5743 = vadd.f32 %v5598, %v5737
    %v5744 = vadd.f32 %v5599, %v5739
    %v5745 = vrot.slane %v1959, 2
    %v5747 = vrot.slane %v1960, 1
    %v5749 = vsel %vm1964, %v5745, %v5747
    %v5750 = vpack.c.bf16 %v5749, %v5749
    %s5751 = scalar_lea.vmem %s5, 3328
    %v5752 = vld [vmem:[%s5751] sm:$0xff]
    %v5753 = vld [vmem:[%s5751 + $0x8] sm:$0xff]
    %v5754 = vld [vmem:[%s5751 + $0x10] sm:$0xff]
    %v5755 = vld [vmem:[%s5751 + $0x18] sm:$0xff]
    %v5756 = vld [vmem:[%s5751 + $0x20] sm:$0xff]
    %v5757 = vld [vmem:[%s5751 + $0x28] sm:$0xff]
    %v5758 = vld [vmem:[%s5751 + $0x30] sm:$0xff]
    %v5759 = vld [vmem:[%s5751 + $0x38] sm:$0xff]
    %v5760 = vld [vmem:[%s5751 + $0x40] sm:$0xff]
    %v5761 = vld [vmem:[%s5751 + $0x48] sm:$0xff]
    %v5762 = vld [vmem:[%s5751 + $0x50] sm:$0xff]
    %v5763 = vld [vmem:[%s5751 + $0x58] sm:$0xff]
    %v5764 = vld [vmem:[%s5751 + $0x60] sm:$0xff]
    %v5765 = vld [vmem:[%s5751 + $0x68] sm:$0xff]
    %v5766 = vld [vmem:[%s5751 + $0x70] sm:$0xff]
    %v5767 = vld [vmem:[%s5751 + $0x78] sm:$0xff]
    %v5784 = vunpack.c.l.b16 %v5752
    %v5785 = vunpack.c.h.b16 %v5752
    %v5786 = vunpack.c.l.b16 %v5753
    %v5787 = vunpack.c.h.b16 %v5753
    %v5788 = vunpack.c.l.b16 %v5754
    %v5789 = vunpack.c.h.b16 %v5754
    %v5790 = vunpack.c.l.b16 %v5755
    %v5791 = vunpack.c.h.b16 %v5755
    %v5792 = vunpack.c.l.b16 %v5756
    %v5793 = vunpack.c.h.b16 %v5756
    %v5794 = vunpack.c.l.b16 %v5757
    %v5795 = vunpack.c.h.b16 %v5757
    %v5796 = vunpack.c.l.b16 %v5758
    %v5797 = vunpack.c.h.b16 %v5758
    %v5798 = vunpack.c.l.b16 %v5759
    %v5799 = vunpack.c.h.b16 %v5759
    %v5800 = vunpack.c.l.b16 %v5760
    %v5801 = vunpack.c.h.b16 %v5760
    %v5802 = vunpack.c.l.b16 %v5761
    %v5803 = vunpack.c.h.b16 %v5761
    %v5804 = vunpack.c.l.b16 %v5762
    %v5805 = vunpack.c.h.b16 %v5762
    %v5806 = vunpack.c.l.b16 %v5763
    %v5807 = vunpack.c.h.b16 %v5763
    %v5808 = vunpack.c.l.b16 %v5764
    %v5809 = vunpack.c.h.b16 %v5764
    %v5810 = vunpack.c.l.b16 %v5765
    %v5811 = vunpack.c.h.b16 %v5765
    %v5812 = vunpack.c.l.b16 %v5766
    %v5813 = vunpack.c.h.b16 %v5766
    %v5814 = vunpack.c.l.b16 %v5767
    %v5815 = vunpack.c.h.b16 %v5767
    %v5816 = vpack.c.b16 %v5786, %v5784
    %v5817 = vpack.c.b16 %v5787, %v5785
    %v5818 = vpack.c.b16 %v5790, %v5788
    %v5819 = vpack.c.b16 %v5791, %v5789
    %v5820 = vpack.c.b16 %v5794, %v5792
    %v5821 = vpack.c.b16 %v5795, %v5793
    %v5822 = vpack.c.b16 %v5798, %v5796
    %v5823 = vpack.c.b16 %v5799, %v5797
    %v5824 = vpack.c.b16 %v5802, %v5800
    %v5825 = vpack.c.b16 %v5803, %v5801
    %v5826 = vpack.c.b16 %v5806, %v5804
    %v5827 = vpack.c.b16 %v5807, %v5805
    %v5828 = vpack.c.b16 %v5810, %v5808
    %v5829 = vpack.c.b16 %v5811, %v5809
    %v5830 = vpack.c.b16 %v5814, %v5812
    %v5831 = vpack.c.b16 %v5815, %v5813
    %5848 = vmatprep.subr.bf16.mxu0 %v5831
    %5849 = vmatpush1.bf16.msra.mxu0 %v5830
    %5850 = vmatprep.subr.bf16.mxu0 %v5829
    %5851 = vmatpush1.bf16.msra.mxu0 %v5828
    %5852 = vmatprep.subr.bf16.mxu0 %v5827
    %5853 = vmatpush1.bf16.msra.mxu0 %v5826
    %5854 = vmatprep.subr.bf16.mxu0 %v5825
    %5855 = vmatpush1.bf16.msra.mxu0 %v5824
    %5856 = vmatprep.subr.bf16.mxu0 %v5823
    %5857 = vmatpush1.bf16.msra.mxu0 %v5822
    %5858 = vmatprep.subr.bf16.mxu0 %v5821
    %5859 = vmatpush1.bf16.msra.mxu0 %v5820
    %5860 = vmatprep.subr.bf16.mxu0 %v5819
    %5861 = vmatpush1.bf16.msra.mxu0 %v5818
    %5862 = vmatprep.subr.bf16.mxu0 %v5817
    %5863 = vmatpush1.bf16.msra.mxu0 %v5816
    %5864 = vmatprep.subr.bf16.mxu0 0
    %5865 = vmatpush2.bf16.msra.mxu0 0
    %5866 = vmatprep.subr.bf16.mxu0 0
    %5867 = vmatpush2.bf16.msra.mxu0 0
    %5868 = vmatprep.subr.bf16.mxu0 0
    %5869 = vmatpush2.bf16.msra.mxu0 0
    %5870 = vmatprep.subr.bf16.mxu0 0
    %5871 = vmatpush2.bf16.msra.mxu0 0
    %5872 = vmatprep.subr.bf16.mxu0 0
    %5873 = vmatpush2.bf16.msra.mxu0 0
    %5874 = vmatprep.subr.bf16.mxu0 0
    %5875 = vmatpush2.bf16.msra.mxu0 0
    %5876 = vmatprep.subr.bf16.mxu0 0
    %5877 = vmatpush2.bf16.msra.mxu0 0
    %5878 = vmatprep.subr.bf16.mxu0 0
    %5879 = vmatpush2.bf16.msra.mxu0 0
    %5880 = vmatprep.mubr.bf16.mxu0 0
    %5881 = vmatmul.mubr.bf16.gmra.mxu0 %v5750
    %v5882 = vpop.f32.mrf.mxu0
    %v5883 = vadd.f32 0.0, %v5882
    %v5884 = vpop.f32.mrf.mxu0
    %v5885 = vadd.f32 0.0, %v5884
    %v5886 = vpop.f32.mrf.mxu0
    %v5887 = vpop.f32.mrf.mxu0
    %5888 = vdwg.mxu0
    %v5889 = vadd.f32 %v5743, %v5883
    %v5890 = vadd.f32 %v5744, %v5885
    %v5891 = vrot.slane %v1959, 3
    %v5893 = vrot.slane %v1960, 2
    %v5895 = vsel %vm1964, %v5891, %v5893
    %v5896 = vpack.c.bf16 %v5895, %v5895
    %s5897 = scalar_lea.vmem %s5, 3456
    %v5898 = vld [vmem:[%s5897] sm:$0xff]
    %v5899 = vld [vmem:[%s5897 + $0x8] sm:$0xff]
    %v5900 = vld [vmem:[%s5897 + $0x10] sm:$0xff]
    %v5901 = vld [vmem:[%s5897 + $0x18] sm:$0xff]
    %v5902 = vld [vmem:[%s5897 + $0x20] sm:$0xff]
    %v5903 = vld [vmem:[%s5897 + $0x28] sm:$0xff]
    %v5904 = vld [vmem:[%s5897 + $0x30] sm:$0xff]
    %v5905 = vld [vmem:[%s5897 + $0x38] sm:$0xff]
    %v5906 = vld [vmem:[%s5897 + $0x40] sm:$0xff]
    %v5907 = vld [vmem:[%s5897 + $0x48] sm:$0xff]
    %v5908 = vld [vmem:[%s5897 + $0x50] sm:$0xff]
    %v5909 = vld [vmem:[%s5897 + $0x58] sm:$0xff]
    %v5910 = vld [vmem:[%s5897 + $0x60] sm:$0xff]
    %v5911 = vld [vmem:[%s5897 + $0x68] sm:$0xff]
    %v5912 = vld [vmem:[%s5897 + $0x70] sm:$0xff]
    %v5913 = vld [vmem:[%s5897 + $0x78] sm:$0xff]
    %v5930 = vunpack.c.l.b16 %v5898
    %v5931 = vunpack.c.h.b16 %v5898
    %v5932 = vunpack.c.l.b16 %v5899
    %v5933 = vunpack.c.h.b16 %v5899
    %v5934 = vunpack.c.l.b16 %v5900
    %v5935 = vunpack.c.h.b16 %v5900
    %v5936 = vunpack.c.l.b16 %v5901
    %v5937 = vunpack.c.h.b16 %v5901
    %v5938 = vunpack.c.l.b16 %v5902
    %v5939 = vunpack.c.h.b16 %v5902
    %v5940 = vunpack.c.l.b16 %v5903
    %v5941 = vunpack.c.h.b16 %v5903
    %v5942 = vunpack.c.l.b16 %v5904
    %v5943 = vunpack.c.h.b16 %v5904
    %v5944 = vunpack.c.l.b16 %v5905
    %v5945 = vunpack.c.h.b16 %v5905
    %v5946 = vunpack.c.l.b16 %v5906
    %v5947 = vunpack.c.h.b16 %v5906
    %v5948 = vunpack.c.l.b16 %v5907
    %v5949 = vunpack.c.h.b16 %v5907
    %v5950 = vunpack.c.l.b16 %v5908
    %v5951 = vunpack.c.h.b16 %v5908
    %v5952 = vunpack.c.l.b16 %v5909
    %v5953 = vunpack.c.h.b16 %v5909
    %v5954 = vunpack.c.l.b16 %v5910
    %v5955 = vunpack.c.h.b16 %v5910
    %v5956 = vunpack.c.l.b16 %v5911
    %v5957 = vunpack.c.h.b16 %v5911
    %v5958 = vunpack.c.l.b16 %v5912
    %v5959 = vunpack.c.h.b16 %v5912
    %v5960 = vunpack.c.l.b16 %v5913
    %v5961 = vunpack.c.h.b16 %v5913
    %v5962 = vpack.c.b16 %v5932, %v5930
    %v5963 = vpack.c.b16 %v5933, %v5931
    %v5964 = vpack.c.b16 %v5936, %v5934
    %v5965 = vpack.c.b16 %v5937, %v5935
    %v5966 = vpack.c.b16 %v5940, %v5938
    %v5967 = vpack.c.b16 %v5941, %v5939
    %v5968 = vpack.c.b16 %v5944, %v5942
    %v5969 = vpack.c.b16 %v5945, %v5943
    %v5970 = vpack.c.b16 %v5948, %v5946
    %v5971 = vpack.c.b16 %v5949, %v5947
    %v5972 = vpack.c.b16 %v5952, %v5950
    %v5973 = vpack.c.b16 %v5953, %v5951
    %v5974 = vpack.c.b16 %v5956, %v5954
    %v5975 = vpack.c.b16 %v5957, %v5955
    %v5976 = vpack.c.b16 %v5960, %v5958
    %v5977 = vpack.c.b16 %v5961, %v5959
    %5994 = vmatprep.subr.bf16.mxu0 %v5977
    %5995 = vmatpush1.bf16.msra.mxu0 %v5976
    %5996 = vmatprep.subr.bf16.mxu0 %v5975
    %5997 = vmatpush1.bf16.msra.mxu0 %v5974
    %5998 = vmatprep.subr.bf16.mxu0 %v5973
    %5999 = vmatpush1.bf16.msra.mxu0 %v5972
    %6000 = vmatprep.subr.bf16.mxu0 %v5971
    %6001 = vmatpush1.bf16.msra.mxu0 %v5970
    %6002 = vmatprep.subr.bf16.mxu0 %v5969
    %6003 = vmatpush1.bf16.msra.mxu0 %v5968
    %6004 = vmatprep.subr.bf16.mxu0 %v5967
    %6005 = vmatpush1.bf16.msra.mxu0 %v5966
    %6006 = vmatprep.subr.bf16.mxu0 %v5965
    %6007 = vmatpush1.bf16.msra.mxu0 %v5964
    %6008 = vmatprep.subr.bf16.mxu0 %v5963
    %6009 = vmatpush1.bf16.msra.mxu0 %v5962
    %6010 = vmatprep.subr.bf16.mxu0 0
    %6011 = vmatpush2.bf16.msra.mxu0 0
    %6012 = vmatprep.subr.bf16.mxu0 0
    %6013 = vmatpush2.bf16.msra.mxu0 0
    %6014 = vmatprep.subr.bf16.mxu0 0
    %6015 = vmatpush2.bf16.msra.mxu0 0
    %6016 = vmatprep.subr.bf16.mxu0 0
    %6017 = vmatpush2.bf16.msra.mxu0 0
    %6018 = vmatprep.subr.bf16.mxu0 0
    %6019 = vmatpush2.bf16.msra.mxu0 0
    %6020 = vmatprep.subr.bf16.mxu0 0
    %6021 = vmatpush2.bf16.msra.mxu0 0
    %6022 = vmatprep.subr.bf16.mxu0 0
    %6023 = vmatpush2.bf16.msra.mxu0 0
    %6024 = vmatprep.subr.bf16.mxu0 0
    %6025 = vmatpush2.bf16.msra.mxu0 0
    %6026 = vmatprep.mubr.bf16.mxu0 0
    %6027 = vmatmul.mubr.bf16.gmra.mxu0 %v5896
    %v6028 = vpop.f32.mrf.mxu0
    %v6029 = vadd.f32 0.0, %v6028
    %v6030 = vpop.f32.mrf.mxu0
    %v6031 = vadd.f32 0.0, %v6030
    %v6032 = vpop.f32.mrf.mxu0
    %v6033 = vpop.f32.mrf.mxu0
    %6034 = vdwg.mxu0
    %v6035 = vadd.f32 %v5889, %v6029
    %v6036 = vadd.f32 %v5890, %v6031
    %v6037 = vrot.slane %v1959, 4
    %v6039 = vrot.slane %v1960, 3
    %v6041 = vsel %vm1964, %v6037, %v6039
    %v6042 = vpack.c.bf16 %v6041, %v6041
    %s6043 = scalar_lea.vmem %s5, 3584
    %v6044 = vld [vmem:[%s6043] sm:$0xff]
    %v6045 = vld [vmem:[%s6043 + $0x8] sm:$0xff]
    %v6046 = vld [vmem:[%s6043 + $0x10] sm:$0xff]
    %v6047 = vld [vmem:[%s6043 + $0x18] sm:$0xff]
    %v6048 = vld [vmem:[%s6043 + $0x20] sm:$0xff]
    %v6049 = vld [vmem:[%s6043 + $0x28] sm:$0xff]
    %v6050 = vld [vmem:[%s6043 + $0x30] sm:$0xff]
    %v6051 = vld [vmem:[%s6043 + $0x38] sm:$0xff]
    %v6052 = vld [vmem:[%s6043 + $0x40] sm:$0xff]
    %v6053 = vld [vmem:[%s6043 + $0x48] sm:$0xff]
    %v6054 = vld [vmem:[%s6043 + $0x50] sm:$0xff]
    %v6055 = vld [vmem:[%s6043 + $0x58] sm:$0xff]
    %v6056 = vld [vmem:[%s6043 + $0x60] sm:$0xff]
    %v6057 = vld [vmem:[%s6043 + $0x68] sm:$0xff]
    %v6058 = vld [vmem:[%s6043 + $0x70] sm:$0xff]
    %v6059 = vld [vmem:[%s6043 + $0x78] sm:$0xff]
    %v6076 = vunpack.c.l.b16 %v6044
    %v6077 = vunpack.c.h.b16 %v6044
    %v6078 = vunpack.c.l.b16 %v6045
    %v6079 = vunpack.c.h.b16 %v6045
    %v6080 = vunpack.c.l.b16 %v6046
    %v6081 = vunpack.c.h.b16 %v6046
    %v6082 = vunpack.c.l.b16 %v6047
    %v6083 = vunpack.c.h.b16 %v6047
    %v6084 = vunpack.c.l.b16 %v6048
    %v6085 = vunpack.c.h.b16 %v6048
    %v6086 = vunpack.c.l.b16 %v6049
    %v6087 = vunpack.c.h.b16 %v6049
    %v6088 = vunpack.c.l.b16 %v6050
    %v6089 = vunpack.c.h.b16 %v6050
    %v6090 = vunpack.c.l.b16 %v6051
    %v6091 = vunpack.c.h.b16 %v6051
    %v6092 = vunpack.c.l.b16 %v6052
    %v6093 = vunpack.c.h.b16 %v6052
    %v6094 = vunpack.c.l.b16 %v6053
    %v6095 = vunpack.c.h.b16 %v6053
    %v6096 = vunpack.c.l.b16 %v6054
    %v6097 = vunpack.c.h.b16 %v6054
    %v6098 = vunpack.c.l.b16 %v6055
    %v6099 = vunpack.c.h.b16 %v6055
    %v6100 = vunpack.c.l.b16 %v6056
    %v6101 = vunpack.c.h.b16 %v6056
    %v6102 = vunpack.c.l.b16 %v6057
    %v6103 = vunpack.c.h.b16 %v6057
    %v6104 = vunpack.c.l.b16 %v6058
    %v6105 = vunpack.c.h.b16 %v6058
    %v6106 = vunpack.c.l.b16 %v6059
    %v6107 = vunpack.c.h.b16 %v6059
    %v6108 = vpack.c.b16 %v6078, %v6076
    %v6109 = vpack.c.b16 %v6079, %v6077
    %v6110 = vpack.c.b16 %v6082, %v6080
    %v6111 = vpack.c.b16 %v6083, %v6081
    %v6112 = vpack.c.b16 %v6086, %v6084
    %v6113 = vpack.c.b16 %v6087, %v6085
    %v6114 = vpack.c.b16 %v6090, %v6088
    %v6115 = vpack.c.b16 %v6091, %v6089
    %v6116 = vpack.c.b16 %v6094, %v6092
    %v6117 = vpack.c.b16 %v6095, %v6093
    %v6118 = vpack.c.b16 %v6098, %v6096
    %v6119 = vpack.c.b16 %v6099, %v6097
    %v6120 = vpack.c.b16 %v6102, %v6100
    %v6121 = vpack.c.b16 %v6103, %v6101
    %v6122 = vpack.c.b16 %v6106, %v6104
    %v6123 = vpack.c.b16 %v6107, %v6105
    %6140 = vmatprep.subr.bf16.mxu0 %v6123
    %6141 = vmatpush1.bf16.msra.mxu0 %v6122
    %6142 = vmatprep.subr.bf16.mxu0 %v6121
    %6143 = vmatpush1.bf16.msra.mxu0 %v6120
    %6144 = vmatprep.subr.bf16.mxu0 %v6119
    %6145 = vmatpush1.bf16.msra.mxu0 %v6118
    %6146 = vmatprep.subr.bf16.mxu0 %v6117
    %6147 = vmatpush1.bf16.msra.mxu0 %v6116
    %6148 = vmatprep.subr.bf16.mxu0 %v6115
    %6149 = vmatpush1.bf16.msra.mxu0 %v6114
    %6150 = vmatprep.subr.bf16.mxu0 %v6113
    %6151 = vmatpush1.bf16.msra.mxu0 %v6112
    %6152 = vmatprep.subr.bf16.mxu0 %v6111
    %6153 = vmatpush1.bf16.msra.mxu0 %v6110
    %6154 = vmatprep.subr.bf16.mxu0 %v6109
    %6155 = vmatpush1.bf16.msra.mxu0 %v6108
    %6156 = vmatprep.subr.bf16.mxu0 0
    %6157 = vmatpush2.bf16.msra.mxu0 0
    %6158 = vmatprep.subr.bf16.mxu0 0
    %6159 = vmatpush2.bf16.msra.mxu0 0
    %6160 = vmatprep.subr.bf16.mxu0 0
    %6161 = vmatpush2.bf16.msra.mxu0 0
    %6162 = vmatprep.subr.bf16.mxu0 0
    %6163 = vmatpush2.bf16.msra.mxu0 0
    %6164 = vmatprep.subr.bf16.mxu0 0
    %6165 = vmatpush2.bf16.msra.mxu0 0
    %6166 = vmatprep.subr.bf16.mxu0 0
    %6167 = vmatpush2.bf16.msra.mxu0 0
    %6168 = vmatprep.subr.bf16.mxu0 0
    %6169 = vmatpush2.bf16.msra.mxu0 0
    %6170 = vmatprep.subr.bf16.mxu0 0
    %6171 = vmatpush2.bf16.msra.mxu0 0
    %6172 = vmatprep.mubr.bf16.mxu0 0
    %6173 = vmatmul.mubr.bf16.gmra.mxu0 %v6042
    %v6174 = vpop.f32.mrf.mxu0
    %v6175 = vadd.f32 0.0, %v6174
    %v6176 = vpop.f32.mrf.mxu0
    %v6177 = vadd.f32 0.0, %v6176
    %v6178 = vpop.f32.mrf.mxu0
    %v6179 = vpop.f32.mrf.mxu0
    %6180 = vdwg.mxu0
    %v6181 = vadd.f32 %v6035, %v6175
    %v6182 = vadd.f32 %v6036, %v6177
    %v6183 = vrot.slane %v1959, 5
    %v6185 = vrot.slane %v1960, 4
    %v6187 = vsel %vm1964, %v6183, %v6185
    %v6188 = vpack.c.bf16 %v6187, %v6187
    %s6189 = scalar_lea.vmem %s5, 3712
    %v6190 = vld [vmem:[%s6189] sm:$0xff]
    %v6191 = vld [vmem:[%s6189 + $0x8] sm:$0xff]
    %v6192 = vld [vmem:[%s6189 + $0x10] sm:$0xff]
    %v6193 = vld [vmem:[%s6189 + $0x18] sm:$0xff]
    %v6194 = vld [vmem:[%s6189 + $0x20] sm:$0xff]
    %v6195 = vld [vmem:[%s6189 + $0x28] sm:$0xff]
    %v6196 = vld [vmem:[%s6189 + $0x30] sm:$0xff]
    %v6197 = vld [vmem:[%s6189 + $0x38] sm:$0xff]
    %v6198 = vld [vmem:[%s6189 + $0x40] sm:$0xff]
    %v6199 = vld [vmem:[%s6189 + $0x48] sm:$0xff]
    %v6200 = vld [vmem:[%s6189 + $0x50] sm:$0xff]
    %v6201 = vld [vmem:[%s6189 + $0x58] sm:$0xff]
    %v6202 = vld [vmem:[%s6189 + $0x60] sm:$0xff]
    %v6203 = vld [vmem:[%s6189 + $0x68] sm:$0xff]
    %v6204 = vld [vmem:[%s6189 + $0x70] sm:$0xff]
    %v6205 = vld [vmem:[%s6189 + $0x78] sm:$0xff]
    %v6222 = vunpack.c.l.b16 %v6190
    %v6223 = vunpack.c.h.b16 %v6190
    %v6224 = vunpack.c.l.b16 %v6191
    %v6225 = vunpack.c.h.b16 %v6191
    %v6226 = vunpack.c.l.b16 %v6192
    %v6227 = vunpack.c.h.b16 %v6192
    %v6228 = vunpack.c.l.b16 %v6193
    %v6229 = vunpack.c.h.b16 %v6193
    %v6230 = vunpack.c.l.b16 %v6194
    %v6231 = vunpack.c.h.b16 %v6194
    %v6232 = vunpack.c.l.b16 %v6195
    %v6233 = vunpack.c.h.b16 %v6195
    %v6234 = vunpack.c.l.b16 %v6196
    %v6235 = vunpack.c.h.b16 %v6196
    %v6236 = vunpack.c.l.b16 %v6197
    %v6237 = vunpack.c.h.b16 %v6197
    %v6238 = vunpack.c.l.b16 %v6198
    %v6239 = vunpack.c.h.b16 %v6198
    %v6240 = vunpack.c.l.b16 %v6199
    %v6241 = vunpack.c.h.b16 %v6199
    %v6242 = vunpack.c.l.b16 %v6200
    %v6243 = vunpack.c.h.b16 %v6200
    %v6244 = vunpack.c.l.b16 %v6201
    %v6245 = vunpack.c.h.b16 %v6201
    %v6246 = vunpack.c.l.b16 %v6202
    %v6247 = vunpack.c.h.b16 %v6202
    %v6248 = vunpack.c.l.b16 %v6203
    %v6249 = vunpack.c.h.b16 %v6203
    %v6250 = vunpack.c.l.b16 %v6204
    %v6251 = vunpack.c.h.b16 %v6204
    %v6252 = vunpack.c.l.b16 %v6205
    %v6253 = vunpack.c.h.b16 %v6205
    %v6254 = vpack.c.b16 %v6224, %v6222
    %v6255 = vpack.c.b16 %v6225, %v6223
    %v6256 = vpack.c.b16 %v6228, %v6226
    %v6257 = vpack.c.b16 %v6229, %v6227
    %v6258 = vpack.c.b16 %v6232, %v6230
    %v6259 = vpack.c.b16 %v6233, %v6231
    %v6260 = vpack.c.b16 %v6236, %v6234
    %v6261 = vpack.c.b16 %v6237, %v6235
    %v6262 = vpack.c.b16 %v6240, %v6238
    %v6263 = vpack.c.b16 %v6241, %v6239
    %v6264 = vpack.c.b16 %v6244, %v6242
    %v6265 = vpack.c.b16 %v6245, %v6243
    %v6266 = vpack.c.b16 %v6248, %v6246
    %v6267 = vpack.c.b16 %v6249, %v6247
    %v6268 = vpack.c.b16 %v6252, %v6250
    %v6269 = vpack.c.b16 %v6253, %v6251
    %6286 = vmatprep.subr.bf16.mxu0 %v6269
    %6287 = vmatpush1.bf16.msra.mxu0 %v6268
    %6288 = vmatprep.subr.bf16.mxu0 %v6267
    %6289 = vmatpush1.bf16.msra.mxu0 %v6266
    %6290 = vmatprep.subr.bf16.mxu0 %v6265
    %6291 = vmatpush1.bf16.msra.mxu0 %v6264
    %6292 = vmatprep.subr.bf16.mxu0 %v6263
    %6293 = vmatpush1.bf16.msra.mxu0 %v6262
    %6294 = vmatprep.subr.bf16.mxu0 %v6261
    %6295 = vmatpush1.bf16.msra.mxu0 %v6260
    %6296 = vmatprep.subr.bf16.mxu0 %v6259
    %6297 = vmatpush1.bf16.msra.mxu0 %v6258
    %6298 = vmatprep.subr.bf16.mxu0 %v6257
    %6299 = vmatpush1.bf16.msra.mxu0 %v6256
    %6300 = vmatprep.subr.bf16.mxu0 %v6255
    %6301 = vmatpush1.bf16.msra.mxu0 %v6254
    %6302 = vmatprep.subr.bf16.mxu0 0
    %6303 = vmatpush2.bf16.msra.mxu0 0
    %6304 = vmatprep.subr.bf16.mxu0 0
    %6305 = vmatpush2.bf16.msra.mxu0 0
    %6306 = vmatprep.subr.bf16.mxu0 0
    %6307 = vmatpush2.bf16.msra.mxu0 0
    %6308 = vmatprep.subr.bf16.mxu0 0
    %6309 = vmatpush2.bf16.msra.mxu0 0
    %6310 = vmatprep.subr.bf16.mxu0 0
    %6311 = vmatpush2.bf16.msra.mxu0 0
    %6312 = vmatprep.subr.bf16.mxu0 0
    %6313 = vmatpush2.bf16.msra.mxu0 0
    %6314 = vmatprep.subr.bf16.mxu0 0
    %6315 = vmatpush2.bf16.msra.mxu0 0
    %6316 = vmatprep.subr.bf16.mxu0 0
    %6317 = vmatpush2.bf16.msra.mxu0 0
    %6318 = vmatprep.mubr.bf16.mxu0 0
    %6319 = vmatmul.mubr.bf16.gmra.mxu0 %v6188
    %v6320 = vpop.f32.mrf.mxu0
    %v6321 = vadd.f32 0.0, %v6320
    %v6322 = vpop.f32.mrf.mxu0
    %v6323 = vadd.f32 0.0, %v6322
    %v6324 = vpop.f32.mrf.mxu0
    %v6325 = vpop.f32.mrf.mxu0
    %6326 = vdwg.mxu0
    %v6327 = vadd.f32 %v6181, %v6321
    %v6328 = vadd.f32 %v6182, %v6323
    %v6329 = vrot.slane %v1959, 6
    %v6331 = vrot.slane %v1960, 5
    %v6333 = vsel %vm1964, %v6329, %v6331
    %v6334 = vpack.c.bf16 %v6333, %v6333
    %s6335 = scalar_lea.vmem %s5, 3840
    %v6336 = vld [vmem:[%s6335] sm:$0xff]
    %v6337 = vld [vmem:[%s6335 + $0x8] sm:$0xff]
    %v6338 = vld [vmem:[%s6335 + $0x10] sm:$0xff]
    %v6339 = vld [vmem:[%s6335 + $0x18] sm:$0xff]
    %v6340 = vld [vmem:[%s6335 + $0x20] sm:$0xff]
    %v6341 = vld [vmem:[%s6335 + $0x28] sm:$0xff]
    %v6342 = vld [vmem:[%s6335 + $0x30] sm:$0xff]
    %v6343 = vld [vmem:[%s6335 + $0x38] sm:$0xff]
    %v6344 = vld [vmem:[%s6335 + $0x40] sm:$0xff]
    %v6345 = vld [vmem:[%s6335 + $0x48] sm:$0xff]
    %v6346 = vld [vmem:[%s6335 + $0x50] sm:$0xff]
    %v6347 = vld [vmem:[%s6335 + $0x58] sm:$0xff]
    %v6348 = vld [vmem:[%s6335 + $0x60] sm:$0xff]
    %v6349 = vld [vmem:[%s6335 + $0x68] sm:$0xff]
    %v6350 = vld [vmem:[%s6335 + $0x70] sm:$0xff]
    %v6351 = vld [vmem:[%s6335 + $0x78] sm:$0xff]
    %v6368 = vunpack.c.l.b16 %v6336
    %v6369 = vunpack.c.h.b16 %v6336
    %v6370 = vunpack.c.l.b16 %v6337
    %v6371 = vunpack.c.h.b16 %v6337
    %v6372 = vunpack.c.l.b16 %v6338
    %v6373 = vunpack.c.h.b16 %v6338
    %v6374 = vunpack.c.l.b16 %v6339
    %v6375 = vunpack.c.h.b16 %v6339
    %v6376 = vunpack.c.l.b16 %v6340
    %v6377 = vunpack.c.h.b16 %v6340
    %v6378 = vunpack.c.l.b16 %v6341
    %v6379 = vunpack.c.h.b16 %v6341
    %v6380 = vunpack.c.l.b16 %v6342
    %v6381 = vunpack.c.h.b16 %v6342
    %v6382 = vunpack.c.l.b16 %v6343
    %v6383 = vunpack.c.h.b16 %v6343
    %v6384 = vunpack.c.l.b16 %v6344
    %v6385 = vunpack.c.h.b16 %v6344
    %v6386 = vunpack.c.l.b16 %v6345
    %v6387 = vunpack.c.h.b16 %v6345
    %v6388 = vunpack.c.l.b16 %v6346
    %v6389 = vunpack.c.h.b16 %v6346
    %v6390 = vunpack.c.l.b16 %v6347
    %v6391 = vunpack.c.h.b16 %v6347
    %v6392 = vunpack.c.l.b16 %v6348
    %v6393 = vunpack.c.h.b16 %v6348
    %v6394 = vunpack.c.l.b16 %v6349
    %v6395 = vunpack.c.h.b16 %v6349
    %v6396 = vunpack.c.l.b16 %v6350
    %v6397 = vunpack.c.h.b16 %v6350
    %v6398 = vunpack.c.l.b16 %v6351
    %v6399 = vunpack.c.h.b16 %v6351
    %v6400 = vpack.c.b16 %v6370, %v6368
    %v6401 = vpack.c.b16 %v6371, %v6369
    %v6402 = vpack.c.b16 %v6374, %v6372
    %v6403 = vpack.c.b16 %v6375, %v6373
    %v6404 = vpack.c.b16 %v6378, %v6376
    %v6405 = vpack.c.b16 %v6379, %v6377
    %v6406 = vpack.c.b16 %v6382, %v6380
    %v6407 = vpack.c.b16 %v6383, %v6381
    %v6408 = vpack.c.b16 %v6386, %v6384
    %v6409 = vpack.c.b16 %v6387, %v6385
    %v6410 = vpack.c.b16 %v6390, %v6388
    %v6411 = vpack.c.b16 %v6391, %v6389
    %v6412 = vpack.c.b16 %v6394, %v6392
    %v6413 = vpack.c.b16 %v6395, %v6393
    %v6414 = vpack.c.b16 %v6398, %v6396
    %v6415 = vpack.c.b16 %v6399, %v6397
    %6432 = vmatprep.subr.bf16.mxu0 %v6415
    %6433 = vmatpush1.bf16.msra.mxu0 %v6414
    %6434 = vmatprep.subr.bf16.mxu0 %v6413
    %6435 = vmatpush1.bf16.msra.mxu0 %v6412
    %6436 = vmatprep.subr.bf16.mxu0 %v6411
    %6437 = vmatpush1.bf16.msra.mxu0 %v6410
    %6438 = vmatprep.subr.bf16.mxu0 %v6409
    %6439 = vmatpush1.bf16.msra.mxu0 %v6408
    %6440 = vmatprep.subr.bf16.mxu0 %v6407
    %6441 = vmatpush1.bf16.msra.mxu0 %v6406
    %6442 = vmatprep.subr.bf16.mxu0 %v6405
    %6443 = vmatpush1.bf16.msra.mxu0 %v6404
    %6444 = vmatprep.subr.bf16.mxu0 %v6403
    %6445 = vmatpush1.bf16.msra.mxu0 %v6402
    %6446 = vmatprep.subr.bf16.mxu0 %v6401
    %6447 = vmatpush1.bf16.msra.mxu0 %v6400
    %6448 = vmatprep.subr.bf16.mxu0 0
    %6449 = vmatpush2.bf16.msra.mxu0 0
    %6450 = vmatprep.subr.bf16.mxu0 0
    %6451 = vmatpush2.bf16.msra.mxu0 0
    %6452 = vmatprep.subr.bf16.mxu0 0
    %6453 = vmatpush2.bf16.msra.mxu0 0
    %6454 = vmatprep.subr.bf16.mxu0 0
    %6455 = vmatpush2.bf16.msra.mxu0 0
    %6456 = vmatprep.subr.bf16.mxu0 0
    %6457 = vmatpush2.bf16.msra.mxu0 0
    %6458 = vmatprep.subr.bf16.mxu0 0
    %6459 = vmatpush2.bf16.msra.mxu0 0
    %6460 = vmatprep.subr.bf16.mxu0 0
    %6461 = vmatpush2.bf16.msra.mxu0 0
    %6462 = vmatprep.subr.bf16.mxu0 0
    %6463 = vmatpush2.bf16.msra.mxu0 0
    %6464 = vmatprep.mubr.bf16.mxu0 0
    %6465 = vmatmul.mubr.bf16.gmra.mxu0 %v6334
    %v6466 = vpop.f32.mrf.mxu0
    %v6467 = vadd.f32 0.0, %v6466
    %v6468 = vpop.f32.mrf.mxu0
    %v6469 = vadd.f32 0.0, %v6468
    %v6470 = vpop.f32.mrf.mxu0
    %v6471 = vpop.f32.mrf.mxu0
    %6472 = vdwg.mxu0
    %v6473 = vadd.f32 %v6327, %v6467
    %v6474 = vadd.f32 %v6328, %v6469
    %v6475 = vrot.slane %v1959, 7
    %v6477 = vrot.slane %v1960, 6
    %v6479 = vsel %vm1964, %v6475, %v6477
    %v6480 = vpack.c.bf16 %v6479, %v6479
    %s6481 = scalar_lea.vmem %s5, 3968
    %v6482 = vld [vmem:[%s6481] sm:$0xff]
    %v6483 = vld [vmem:[%s6481 + $0x8] sm:$0xff]
    %v6484 = vld [vmem:[%s6481 + $0x10] sm:$0xff]
    %v6485 = vld [vmem:[%s6481 + $0x18] sm:$0xff]
    %v6486 = vld [vmem:[%s6481 + $0x20] sm:$0xff]
    %v6487 = vld [vmem:[%s6481 + $0x28] sm:$0xff]
    %v6488 = vld [vmem:[%s6481 + $0x30] sm:$0xff]
    %v6489 = vld [vmem:[%s6481 + $0x38] sm:$0xff]
    %v6490 = vld [vmem:[%s6481 + $0x40] sm:$0xff]
    %v6491 = vld [vmem:[%s6481 + $0x48] sm:$0xff]
    %v6492 = vld [vmem:[%s6481 + $0x50] sm:$0xff]
    %v6493 = vld [vmem:[%s6481 + $0x58] sm:$0xff]
    %v6494 = vld [vmem:[%s6481 + $0x60] sm:$0xff]
    %v6495 = vld [vmem:[%s6481 + $0x68] sm:$0xff]
    %v6496 = vld [vmem:[%s6481 + $0x70] sm:$0xff]
    %v6497 = vld [vmem:[%s6481 + $0x78] sm:$0xff]
    %v6514 = vunpack.c.l.b16 %v6482
    %v6515 = vunpack.c.h.b16 %v6482
    %v6516 = vunpack.c.l.b16 %v6483
    %v6517 = vunpack.c.h.b16 %v6483
    %v6518 = vunpack.c.l.b16 %v6484
    %v6519 = vunpack.c.h.b16 %v6484
    %v6520 = vunpack.c.l.b16 %v6485
    %v6521 = vunpack.c.h.b16 %v6485
    %v6522 = vunpack.c.l.b16 %v6486
    %v6523 = vunpack.c.h.b16 %v6486
    %v6524 = vunpack.c.l.b16 %v6487
    %v6525 = vunpack.c.h.b16 %v6487
    %v6526 = vunpack.c.l.b16 %v6488
    %v6527 = vunpack.c.h.b16 %v6488
    %v6528 = vunpack.c.l.b16 %v6489
    %v6529 = vunpack.c.h.b16 %v6489
    %v6530 = vunpack.c.l.b16 %v6490
    %v6531 = vunpack.c.h.b16 %v6490
    %v6532 = vunpack.c.l.b16 %v6491
    %v6533 = vunpack.c.h.b16 %v6491
    %v6534 = vunpack.c.l.b16 %v6492
    %v6535 = vunpack.c.h.b16 %v6492
    %v6536 = vunpack.c.l.b16 %v6493
    %v6537 = vunpack.c.h.b16 %v6493
    %v6538 = vunpack.c.l.b16 %v6494
    %v6539 = vunpack.c.h.b16 %v6494
    %v6540 = vunpack.c.l.b16 %v6495
    %v6541 = vunpack.c.h.b16 %v6495
    %v6542 = vunpack.c.l.b16 %v6496
    %v6543 = vunpack.c.h.b16 %v6496
    %v6544 = vunpack.c.l.b16 %v6497
    %v6545 = vunpack.c.h.b16 %v6497
    %v6546 = vpack.c.b16 %v6516, %v6514
    %v6547 = vpack.c.b16 %v6517, %v6515
    %v6548 = vpack.c.b16 %v6520, %v6518
    %v6549 = vpack.c.b16 %v6521, %v6519
    %v6550 = vpack.c.b16 %v6524, %v6522
    %v6551 = vpack.c.b16 %v6525, %v6523
    %v6552 = vpack.c.b16 %v6528, %v6526
    %v6553 = vpack.c.b16 %v6529, %v6527
    %v6554 = vpack.c.b16 %v6532, %v6530
    %v6555 = vpack.c.b16 %v6533, %v6531
    %v6556 = vpack.c.b16 %v6536, %v6534
    %v6557 = vpack.c.b16 %v6537, %v6535
    %v6558 = vpack.c.b16 %v6540, %v6538
    %v6559 = vpack.c.b16 %v6541, %v6539
    %v6560 = vpack.c.b16 %v6544, %v6542
    %v6561 = vpack.c.b16 %v6545, %v6543
    %6578 = vmatprep.subr.bf16.mxu0 %v6561
    %6579 = vmatpush1.bf16.msra.mxu0 %v6560
    %6580 = vmatprep.subr.bf16.mxu0 %v6559
    %6581 = vmatpush1.bf16.msra.mxu0 %v6558
    %6582 = vmatprep.subr.bf16.mxu0 %v6557
    %6583 = vmatpush1.bf16.msra.mxu0 %v6556
    %6584 = vmatprep.subr.bf16.mxu0 %v6555
    %6585 = vmatpush1.bf16.msra.mxu0 %v6554
    %6586 = vmatprep.subr.bf16.mxu0 %v6553
    %6587 = vmatpush1.bf16.msra.mxu0 %v6552
    %6588 = vmatprep.subr.bf16.mxu0 %v6551
    %6589 = vmatpush1.bf16.msra.mxu0 %v6550
    %6590 = vmatprep.subr.bf16.mxu0 %v6549
    %6591 = vmatpush1.bf16.msra.mxu0 %v6548
    %6592 = vmatprep.subr.bf16.mxu0 %v6547
    %6593 = vmatpush1.bf16.msra.mxu0 %v6546
    %6594 = vmatprep.subr.bf16.mxu0 0
    %6595 = vmatpush2.bf16.msra.mxu0 0
    %6596 = vmatprep.subr.bf16.mxu0 0
    %6597 = vmatpush2.bf16.msra.mxu0 0
    %6598 = vmatprep.subr.bf16.mxu0 0
    %6599 = vmatpush2.bf16.msra.mxu0 0
    %6600 = vmatprep.subr.bf16.mxu0 0
    %6601 = vmatpush2.bf16.msra.mxu0 0
    %6602 = vmatprep.subr.bf16.mxu0 0
    %6603 = vmatpush2.bf16.msra.mxu0 0
    %6604 = vmatprep.subr.bf16.mxu0 0
    %6605 = vmatpush2.bf16.msra.mxu0 0
    %6606 = vmatprep.subr.bf16.mxu0 0
    %6607 = vmatpush2.bf16.msra.mxu0 0
    %6608 = vmatprep.subr.bf16.mxu0 0
    %6609 = vmatpush2.bf16.msra.mxu0 0
    %6610 = vmatprep.mubr.bf16.mxu0 0
    %6611 = vmatmul.mubr.bf16.gmra.mxu0 %v6480
    %v6612 = vpop.f32.mrf.mxu0
    %v6613 = vadd.f32 0.0, %v6612
    %v6614 = vpop.f32.mrf.mxu0
    %v6615 = vadd.f32 0.0, %v6614
    %v6616 = vpop.f32.mrf.mxu0
    %v6617 = vpop.f32.mrf.mxu0
    %6618 = vdwg.mxu0
    %v6619 = vadd.f32 %v6473, %v6613
    %v6620 = vadd.f32 %v6474, %v6615
    %v6621 = vld [vmem:[%s6] sm:$0x3]
    %v6623 = vlaneseq
    %v6624 = vshrl.u32 %v6623, 7
    %v6625 = vsub.s32 0, %v6624
    %v6626 = vrot.slane %v6621, %v6625
    %v6627 = vlaneseq
    %v6628 = vshrl.u32 %v6627, 7
    %v6629 = vsub.s32 1, %v6628
    %v6630 = vrot.slane %v6621, %v6629
    %v6633 = vadd.f32 %v6619, %v6626
    %v6634 = vadd.f32 %v6620, %v6630
    %v6635 = vmax.f32 %v6633, 0.0
    %v6636 = vmax.f32 %v6634, 0.0
    %v6637 = vld [vmem:[%s7] sm:$0xff]
    %v6638 = vld [vmem:[%s7 + $0x8] sm:$0xff]
    %v6639 = vld [vmem:[%s7 + $0x10] sm:$0xff]
    %v6640 = vld [vmem:[%s7 + $0x18] sm:$0xff]
    %v6641 = vld [vmem:[%s7 + $0x20] sm:$0xff]
    %v6642 = vld [vmem:[%s7 + $0x28] sm:$0xff]
    %v6643 = vld [vmem:[%s7 + $0x30] sm:$0xff]
    %v6644 = vld [vmem:[%s7 + $0x38] sm:$0xff]
    %v6645 = vld [vmem:[%s7 + $0x40] sm:$0xff]
    %v6646 = vld [vmem:[%s7 + $0x48] sm:$0xff]
    %v6647 = vld [vmem:[%s7 + $0x50] sm:$0xff]
    %v6648 = vld [vmem:[%s7 + $0x58] sm:$0xff]
    %v6649 = vld [vmem:[%s7 + $0x60] sm:$0xff]
    %v6650 = vld [vmem:[%s7 + $0x68] sm:$0xff]
    %v6651 = vld [vmem:[%s7 + $0x70] sm:$0xff]
    %v6652 = vld [vmem:[%s7 + $0x78] sm:$0xff]
    %v6653 = vld [vmem:[%s7 + $0x80] sm:$0xff]
    %v6654 = vld [vmem:[%s7 + $0x88] sm:$0xff]
    %v6655 = vld [vmem:[%s7 + $0x90] sm:$0xff]
    %v6656 = vld [vmem:[%s7 + $0x98] sm:$0xff]
    %v6657 = vld [vmem:[%s7 + $0xa0] sm:$0xff]
    %v6658 = vld [vmem:[%s7 + $0xa8] sm:$0xff]
    %v6659 = vld [vmem:[%s7 + $0xb0] sm:$0xff]
    %v6660 = vld [vmem:[%s7 + $0xb8] sm:$0xff]
    %v6661 = vld [vmem:[%s7 + $0xc0] sm:$0xff]
    %v6662 = vld [vmem:[%s7 + $0xc8] sm:$0xff]
    %v6663 = vld [vmem:[%s7 + $0xd0] sm:$0xff]
    %v6664 = vld [vmem:[%s7 + $0xd8] sm:$0xff]
    %v6665 = vld [vmem:[%s7 + $0xe0] sm:$0xff]
    %v6666 = vld [vmem:[%s7 + $0xe8] sm:$0xff]
    %v6667 = vld [vmem:[%s7 + $0xf0] sm:$0xff]
    %v6668 = vld [vmem:[%s7 + $0xf8] sm:$0xff]
    %v6669 = vld [vmem:[%s8] sm:$0x1]
    %v6671 = vlaneseq
    %v6672 = vshrl.u32 %v6671, 7
    %v6673 = vsub.s32 0, %v6672
    %v6674 = vrot.slane %v6669, %v6673
    %6676 = vmatprep.subr.mxu0 0.0
    %6677 = vmatpush1.msra.mxu0 %v6652
    %6678 = vmatprep.subr.mxu0 0.0
    %6679 = vmatpush1.msra.mxu0 %v6651
    %6680 = vmatprep.subr.mxu0 0.0
    %6681 = vmatpush1.msra.mxu0 %v6650
    %6682 = vmatprep.subr.mxu0 0.0
    %6683 = vmatpush1.msra.mxu0 %v6649
    %6684 = vmatprep.subr.mxu0 0.0
    %6685 = vmatpush1.msra.mxu0 %v6648
    %6686 = vmatprep.subr.mxu0 0.0
    %6687 = vmatpush1.msra.mxu0 %v6647
    %6688 = vmatprep.subr.mxu0 0.0
    %6689 = vmatpush1.msra.mxu0 %v6646
    %6690 = vmatprep.subr.mxu0 0.0
    %6691 = vmatpush1.msra.mxu0 %v6645
    %6692 = vmatprep.subr.mxu0 0.0
    %6693 = vmatpush1.msra.mxu0 %v6644
    %6694 = vmatprep.subr.mxu0 0.0
    %6695 = vmatpush1.msra.mxu0 %v6643
    %6696 = vmatprep.subr.mxu0 0.0
    %6697 = vmatpush1.msra.mxu0 %v6642
    %6698 = vmatprep.subr.mxu0 0.0
    %6699 = vmatpush1.msra.mxu0 %v6641
    %6700 = vmatprep.subr.mxu0 0.0
    %6701 = vmatpush1.msra.mxu0 %v6640
    %6702 = vmatprep.subr.mxu0 0.0
    %6703 = vmatpush1.msra.mxu0 %v6639
    %6704 = vmatprep.subr.mxu0 0.0
    %6705 = vmatpush1.msra.mxu0 %v6638
    %6706 = vmatprep.subr.mxu0 0.0
    %6707 = vmatpush1.msra.mxu0 %v6637
    %6708 = vmatprep.subr.mxu0 0.0
    %6709 = vmatpush2.msra.mxu0 %v6668
    %6710 = vmatprep.subr.mxu0 0.0
    %6711 = vmatpush2.msra.mxu0 %v6667
    %6712 = vmatprep.subr.mxu0 0.0
    %6713 = vmatpush2.msra.mxu0 %v6666
    %6714 = vmatprep.subr.mxu0 0.0
    %6715 = vmatpush2.msra.mxu0 %v6665
    %6716 = vmatprep.subr.mxu0 0.0
    %6717 = vmatpush2.msra.mxu0 %v6664
    %6718 = vmatprep.subr.mxu0 0.0
    %6719 = vmatpush2.msra.mxu0 %v6663
    %6720 = vmatprep.subr.mxu0 0.0
    %6721 = vmatpush2.msra.mxu0 %v6662
    %6722 = vmatprep.subr.mxu0 0.0
    %6723 = vmatpush2.msra.mxu0 %v6661
    %6724 = vmatprep.subr.mxu0 0.0
    %6725 = vmatpush2.msra.mxu0 %v6660
    %6726 = vmatprep.subr.mxu0 0.0
    %6727 = vmatpush2.msra.mxu0 %v6659
    %6728 = vmatprep.subr.mxu0 0.0
    %6729 = vmatpush2.msra.mxu0 %v6658
    %6730 = vmatprep.subr.mxu0 0.0
    %6731 = vmatpush2.msra.mxu0 %v6657
    %6732 = vmatprep.subr.mxu0 0.0
    %6733 = vmatpush2.msra.mxu0 %v6656
    %6734 = vmatprep.subr.mxu0 0.0
    %6735 = vmatpush2.msra.mxu0 %v6655
    %6736 = vmatprep.subr.mxu0 0.0
    %6737 = vmatpush2.msra.mxu0 %v6654
    %6738 = vmatprep.subr.mxu0 0.0
    %6739 = vmatpush2.msra.mxu0 %v6653
    %6740 = vmatprep.mubr.f32.mxu0 %v6636
    %6741 = vmatmul.mubr.f32.gmra.mxu0 %v6635
    %v6742 = vpop.f32.mrf.mxu0
    %v6743 = vadd.f32 %v6674, %v6742
    %v6744 = vpop.f32.mrf.mxu0
    %6745 = vdwg.mxu0
    %vm6746 = vcmask 41984
    %6747 = vst.msk [vmem:[#allocation2] sm:$0x3] %vm6746, %v6743
    // Predicated region
    $region38: #{rnn_forward.1} parent=1 // pred_check
      _
    $region39: #{rnn_forward.1} parent=1 // pred_check_branch
      %6749 = sbr.rel (0) target = $region41
    $region40: #{rnn_forward.1} parent=1 // pred_region
      %s6751 = ssub.s32 32, 32
      %6752 = vsyncadd [#allocation3], %s6751
      %s6754 = sshll.u32 [#allocation2], 4
      %s6755 = int_to_ptr.vmem [resolvable:$true] %s6754
      %6757 = dma.vmem_to_hbm [thread:$0]  %s6755, 32, %s9, [#allocation3]
    $region41: #{rnn_forward.1} parent=1 // pred_fallthru
      _
    // Predicated region
    $region42: #{rnn_forward.1} parent=1 // pred_check
      _
    $region43: #{rnn_forward.1} parent=1 // pred_check_branch
      %6759 = sbr.rel (0) target = $region45
    $region44: #{rnn_forward.1} parent=1 // pred_region
      %6760 = dma.done [#allocation3], 32
    $region45: #{rnn_forward.1} parent=1 // pred_fallthru
      _
    %6761 = vsyncpa [#allocation3], 1

</llo_original>
